<compile_context>
chip_gen: v7x
topology: tpu7x:2x2x1
jax: 0.10.0
libtpu: 0.0.40
codegen_flags: <defaults>
</compile_context>

<pallas_src>
import jax
import jax.numpy as jnp
from jax.experimental import pallas as pl
from jax.experimental.pallas import tpu as pltpu


def _round_up(x, m):
    return ((x + m - 1) // m) * m


def langid_kernel(ids_ref, emb_ref, wblk_ref, bblk_ref, h0_ref, c0_ref,
                  wout_ref, bout_ref, out_ref):
    """One batch tile of the LangID forward pass.

    ids_ref : (TB, n)           int32 token ids
    emb_ref : (Vp, Hp)          f32 zero-padded embedding table (VMEM resident)
    wblk_ref: (2*L*Hp, 4*L*Hp)  block-diagonal [W_ih; W_hh] per layer,
                                gates lane-aligned (each gate padded to Hp)
    bblk_ref: (1, 4*L*Hp)       combined bias (b_ih + b_hh), lane-aligned
    h0_ref, c0_ref: (L, TB, Hp) initial states (zero in padded lanes)
    wout_ref: (Hp, Cp)          output projection (zero-padded)
    bout_ref: (1, Cp)           output bias; padded class lanes hold -1e30
    out_ref : (TB, Cp)          log-probs at the LAST timestep of the top layer
    """
    TB, n = ids_ref.shape
    Vp, Hp = emb_ref.shape
    L = h0_ref.shape[0]
    L4Hp = 4 * L * Hp

    # ---- embedding gather: ONE one-hot MXU matmul, off the recurrence chain.
    # ids out of [0, V) match nothing -> zero embedding row, no OOB read.
    ids = ids_ref[...]                                        # (TB, n)
    viota = jax.lax.broadcasted_iota(jnp.int32, (TB, Vp), 1)
    onehot = jnp.concatenate(
        [(viota == ids[:, t:t + 1]).astype(jnp.float32) for t in range(n)],
        axis=0)                                               # (n*TB, Vp), time-major rows
    embedded = jnp.dot(onehot, emb_ref[...],
                       preferred_element_type=jnp.float32)    # (n*TB, Hp)

    wblk = wblk_ref[...]                                      # loop-invariant MXU RHS
    bias = jnp.broadcast_to(bblk_ref[...], (TB, L4Hp))        # hoisted broadcast
    zero = jnp.zeros((TB, Hp), jnp.float32)

    h = [h0_ref[l] for l in range(L)]                         # register-resident (TB, Hp)
    c = [c0_ref[l] for l in range(L)]

    # ---- layer-wavefront recurrence: n + L - 1 serial MXU rounds.
    # At wavefront step s, layer l processes timestep t = s - l; its input is
    # the embedding (l == 0) or h[l-1], which at the top of step s holds layer
    # l-1's output for exactly that timestep.
    for s in range(n + L - 1):
        blocks = []
        for l in range(L):
            t = s - l
            if 0 <= t < n:
                x = embedded[t * TB:(t + 1) * TB, :] if l == 0 else h[l - 1]
            else:
                x = zero                                      # inactive layer this step
            blocks.append(x)
            blocks.append(h[l])
        lhs = jnp.concatenate(blocks, axis=1)                 # (TB, 2*L*Hp), lane-aligned
        gates = jnp.dot(lhs, wblk,
                        preferred_element_type=jnp.float32) + bias   # (TB, 4*L*Hp)
        sig = jax.nn.sigmoid(gates)                           # i, f, o for every layer

        for l in range(L):
            t = s - l
            if not (0 <= t < n):
                continue                                      # layer inactive: skip commit
            base = 4 * l * Hp                                 # lane-aligned gate slices
            i = sig[:, base:base + Hp]
            f = sig[:, base + Hp:base + 2 * Hp]
            g = jnp.tanh(gates[:, base + 2 * Hp:base + 3 * Hp])
            o = sig[:, base + 3 * Hp:base + 4 * Hp]
            c[l] = f * c[l] + i * g
            h[l] = o * jnp.tanh(c[l])

    # ---- Linear + LogSoftmax at the last timestep of the top layer.
    # Padded logit lanes carry a -1e30 bias, so they vanish from the logsumexp.
    logits = jnp.dot(h[L - 1], wout_ref[...],
                     preferred_element_type=jnp.float32) + bout_ref[...]
    m = jnp.max(logits, axis=-1, keepdims=True)
    lse = jnp.log(jnp.sum(jnp.exp(logits - m), axis=-1, keepdims=True)) + m
    out_ref[...] = logits - lse


def pack_params(emb, wih, whh, b, wout, bout, Hp, Vp, Cp):
    """Host-side packing: pad gates to Hp lanes each and build the per-layer
    block-diagonal [W_ih; W_hh] weight used by the wavefront matmul."""
    V, E = emb.shape
    L, H = whh.shape[0], whh.shape[1]
    C = wout.shape[1]

    emb_p = jnp.zeros((Vp, Hp), jnp.float32).at[:V, :E].set(emb)

    def pad_gate_mat(w):                       # (in, 4H) -> (Hp, 4*Hp)
        m = jnp.zeros((Hp, 4 * Hp), jnp.float32)
        for g in range(4):
            m = m.at[:w.shape[0], g * Hp:g * Hp + H].set(w[:, g * H:(g + 1) * H])
        return m

    def pad_gate_bias(v):                      # (4H,) -> (4*Hp,)
        u = jnp.zeros((4 * Hp,), jnp.float32)
        for g in range(4):
            u = u.at[g * Hp:g * Hp + H].set(v[g * H:(g + 1) * H])
        return u

    wblk = jnp.zeros((2 * L * Hp, 4 * L * Hp), jnp.float32)
    bblk = jnp.zeros((1, 4 * L * Hp), jnp.float32)
    for l in range(L):
        wblk = wblk.at[2 * l * Hp:2 * l * Hp + Hp,
                       4 * l * Hp:4 * (l + 1) * Hp].set(pad_gate_mat(wih[l]))
        wblk = wblk.at[2 * l * Hp + Hp:2 * (l + 1) * Hp,
                       4 * l * Hp:4 * (l + 1) * Hp].set(pad_gate_mat(whh[l]))
        bblk = bblk.at[0, 4 * l * Hp:4 * (l + 1) * Hp].set(pad_gate_bias(b[l]))

    wout_p = jnp.zeros((Hp, Cp), jnp.float32).at[:H, :C].set(wout)
    bout_p = jnp.full((1, Cp), -1e30, jnp.float32).at[0, :C].set(bout)
    return emb_p, wblk, bblk, wout_p, bout_p


def langid_forward_batched(sentences, emb, params, h0, c0, *, tb=8):
    """Batched Pallas LangID forward.  sentences: (B, n) int32; h0/c0: (L, B, H).
    Returns (B, C) log-probs of the last timestep (== B independent module calls)."""
    wih, whh, b, wout, bout = params
    L, H = whh.shape[0], whh.shape[1]
    E, V, C = wih.shape[1], emb.shape[0], wout.shape[1]
    assert L >= 1, "need at least one LSTM layer"
    assert E == H, "kernel feeds every layer with the same-width sequence"
    B, n = sentences.shape
    assert B % tb == 0 and tb % 8 == 0, "batch tile must fill whole sublanes"

    Hp, Vp, Cp = _round_up(H, 128), _round_up(V, 128), _round_up(C, 128)

    emb_p, wblk, bblk, wout_p, bout_p = pack_params(emb, wih, whh, b, wout, bout,
                                                    Hp, Vp, Cp)
    h0_p = jnp.zeros((L, B, Hp), jnp.float32).at[:, :, :H].set(h0)
    c0_p = jnp.zeros((L, B, Hp), jnp.float32).at[:, :, :H].set(c0)
    ids = sentences.astype(jnp.int32)

    out_p = pl.pallas_call(
        langid_kernel,
        out_shape=jax.ShapeDtypeStruct((B, Cp), jnp.float32),
        grid=(B // tb,),
        in_specs=[
            pl.BlockSpec((tb, n), lambda bi: (bi, 0)),                     # token ids
            pl.BlockSpec((Vp, Hp), lambda bi: (0, 0)),                     # embedding table
            pl.BlockSpec((2 * L * Hp, 4 * L * Hp), lambda bi: (0, 0)),     # block-diag weights
            pl.BlockSpec((1, 4 * L * Hp), lambda bi: (0, 0)),              # bias
            pl.BlockSpec((L, tb, Hp), lambda bi: (0, bi, 0)),              # h0
            pl.BlockSpec((L, tb, Hp), lambda bi: (0, bi, 0)),              # c0
            pl.BlockSpec((Hp, Cp), lambda bi: (0, 0)),                     # W_out
            pl.BlockSpec((1, Cp), lambda bi: (0, 0)),                      # b_out
        ],
        out_specs=pl.BlockSpec((tb, Cp), lambda bi: (bi, 0)),
        compiler_params=pltpu.CompilerParams(
            dimension_semantics=("parallel",)),   # shard batch tiles across TCs (v7x: 2)
    )(ids, emb_p, wblk, bblk, h0_p, c0_p, wout_p, bout_p)
    return out_p[:, :C]


def init_params(key, vocab_n, E, H, L, C):
    """Deterministic synthetic parameters, shapes matching nn.Embedding/nn.LSTM/nn.Linear
    (weights pre-transposed to [in, 4H]; gate order i, f, g, o as in torch.nn.LSTM)."""
    assert E == H
    ks = jax.random.split(key, 6)
    s = 0.1
    emb = jax.random.normal(ks[0], (vocab_n, E), jnp.float32) * s
    wih = jax.random.normal(ks[1], (L, E, 4 * H), jnp.float32) * s    # W_ih^T per layer
    whh = jax.random.normal(ks[2], (L, H, 4 * H), jnp.float32) * s    # W_hh^T per layer
    b = jax.random.normal(ks[3], (L, 4 * H), jnp.float32) * s         # b_ih + b_hh combined
    wout = jax.random.normal(ks[4], (H, C), jnp.float32) * s
    bout = jax.random.normal(ks[5], (C,), jnp.float32) * s
    return emb, (wih, whh, b, wout, bout)


def langid_ref(sentences, emb, params, h0, c0):
    """Pure-JAX reference (unpadded, layer-sequential) for the correctness check."""
    wih, whh, b, wout, bout = params
    L, H = whh.shape[0], whh.shape[1]
    B, n = sentences.shape
    outs = []
    for bi in range(B):
        seq = emb[sentences[bi]]                                      # (n, E)
        for l in range(L):
            hh, cc = h0[l, bi], c0[l, bi]
            layer_out = []
            for t in range(n):
                gates = seq[t] @ wih[l] + hh @ whh[l] + b[l]
                i = jax.nn.sigmoid(gates[0 * H:1 * H])
                f = jax.nn.sigmoid(gates[1 * H:2 * H])
                g = jnp.tanh(gates[2 * H:3 * H])
                o = jax.nn.sigmoid(gates[3 * H:4 * H])
                cc = f * cc + i * g
                hh = o * jnp.tanh(cc)
                layer_out.append(hh)
            seq = jnp.stack(layer_out)
        logits = seq[-1] @ wout + bout
        outs.append(jax.nn.log_softmax(logits))
    return jnp.stack(outs)                                            # (B, C)


if __name__ == "__main__":
    VOCAB, E, H, L, C = 16, 32, 32, 2, 8
    SEQ, B = 8, 16
    key = jax.random.PRNGKey(0)
    k_sent, k_param, k_h, k_c = jax.random.split(key, 4)

    sentences = jax.random.randint(k_sent, (B, SEQ), 0, VOCAB, dtype=jnp.int32)
    emb, params = init_params(k_param, VOCAB, E, H, L, C)
    # The PyTorch forward draws torch.randn h0/c0 each call (batch=1); here each
    # batched sentence gets its own deterministic stand-in initial state.
    h0 = jax.random.normal(k_h, (L, B, H), jnp.float32)
    c0 = jax.random.normal(k_c, (L, B, H), jnp.float32)

    out = jax.block_until_ready(langid_forward_batched(sentences, emb, params, h0, c0))
    ref = langid_ref(sentences, emb, params, h0, c0)

    assert out.shape == (B, C)
    assert bool(jnp.allclose(out, ref, atol=2e-4, rtol=2e-4)), "mismatch vs JAX reference"
    print("KERNEL_OK")
</pallas_src>

<mosaic_0001>
module attributes {stable_mosaic.version = 11 : i64} {
  func.func @langid_kernel(%arg0: i32, %arg1: memref<8x8xi32, #tpu.memory_space<vmem>>, %arg2: memref<128x128xf32, #tpu.memory_space<vmem>>, %arg3: memref<512x1024xf32, #tpu.memory_space<vmem>>, %arg4: memref<1x1024xf32, #tpu.memory_space<vmem>>, %arg5: memref<2x8x128xf32, #tpu.memory_space<vmem>>, %arg6: memref<2x8x128xf32, #tpu.memory_space<vmem>>, %arg7: memref<128x128xf32, #tpu.memory_space<vmem>>, %arg8: memref<1x128xf32, #tpu.memory_space<vmem>>, %arg9: memref<8x128xf32, #tpu.memory_space<vmem>>) attributes {dimension_semantics = [#tpu.dimension_semantics<parallel>], iteration_bounds = array<i64: 2>, scalar_prefetch = 0 : i64, scratch_operands = 0 : i64, tpu.core_type = #tpu.core_type<tc>, window_params = [{transform_indices = @transform_0, window_bounds = array<i64: 8, 8>}, {pipeline_mode = #tpu.pipeline_mode<synchronous>, transform_indices = @transform_1, window_bounds = array<i64: 128, 128>}, {pipeline_mode = #tpu.pipeline_mode<synchronous>, transform_indices = @transform_2, window_bounds = array<i64: 512, 1024>}, {pipeline_mode = #tpu.pipeline_mode<synchronous>, transform_indices = @transform_3, window_bounds = array<i64: 1, 1024>}, {transform_indices = @transform_4, window_bounds = array<i64: 2, 8, 128>}, {transform_indices = @transform_5, window_bounds = array<i64: 2, 8, 128>}, {pipeline_mode = #tpu.pipeline_mode<synchronous>, transform_indices = @transform_6, window_bounds = array<i64: 128, 128>}, {pipeline_mode = #tpu.pipeline_mode<synchronous>, transform_indices = @transform_7, window_bounds = array<i64: 1, 128>}, {transform_indices = @transform_8, window_bounds = array<i64: 8, 128>}]} {
    %c0 = arith.constant 0 : index
    %c0_0 = arith.constant 0 : index
    %0 = vector.load %arg1[%c0, %c0_0] : memref<8x8xi32, #tpu.memory_space<vmem>>, vector<8x8xi32>
    %1 = tpu.iota {dimensions = array<i32: 1>} : vector<8x128xi32>
    %2 = vector.extract_strided_slice %0 {offsets = [0, 0], sizes = [8, 1], strides = [1, 1]} : vector<8x8xi32> to vector<8x1xi32>
    %3 = vector.broadcast %2 : vector<8x1xi32> to vector<8x128xi32>
    %4 = arith.cmpi eq, %1, %3 : vector<8x128xi32>
    %5 = arith.extui %4 : vector<8x128xi1> to vector<8x128xi32>
    %6 = arith.sitofp %5 : vector<8x128xi32> to vector<8x128xf32>
    %7 = vector.extract_strided_slice %0 {offsets = [0, 1], sizes = [8, 1], strides = [1, 1]} : vector<8x8xi32> to vector<8x1xi32>
    %8 = vector.broadcast %7 : vector<8x1xi32> to vector<8x128xi32>
    %9 = arith.cmpi eq, %1, %8 : vector<8x128xi32>
    %10 = arith.extui %9 : vector<8x128xi1> to vector<8x128xi32>
    %11 = arith.sitofp %10 : vector<8x128xi32> to vector<8x128xf32>
    %12 = vector.extract_strided_slice %0 {offsets = [0, 2], sizes = [8, 1], strides = [1, 1]} : vector<8x8xi32> to vector<8x1xi32>
    %13 = vector.broadcast %12 : vector<8x1xi32> to vector<8x128xi32>
    %14 = arith.cmpi eq, %1, %13 : vector<8x128xi32>
    %15 = arith.extui %14 : vector<8x128xi1> to vector<8x128xi32>
    %16 = arith.sitofp %15 : vector<8x128xi32> to vector<8x128xf32>
    %17 = vector.extract_strided_slice %0 {offsets = [0, 3], sizes = [8, 1], strides = [1, 1]} : vector<8x8xi32> to vector<8x1xi32>
    %18 = vector.broadcast %17 : vector<8x1xi32> to vector<8x128xi32>
    %19 = arith.cmpi eq, %1, %18 : vector<8x128xi32>
    %20 = arith.extui %19 : vector<8x128xi1> to vector<8x128xi32>
    %21 = arith.sitofp %20 : vector<8x128xi32> to vector<8x128xf32>
    %22 = vector.extract_strided_slice %0 {offsets = [0, 4], sizes = [8, 1], strides = [1, 1]} : vector<8x8xi32> to vector<8x1xi32>
    %23 = vector.broadcast %22 : vector<8x1xi32> to vector<8x128xi32>
    %24 = arith.cmpi eq, %1, %23 : vector<8x128xi32>
    %25 = arith.extui %24 : vector<8x128xi1> to vector<8x128xi32>
    %26 = arith.sitofp %25 : vector<8x128xi32> to vector<8x128xf32>
    %27 = vector.extract_strided_slice %0 {offsets = [0, 5], sizes = [8, 1], strides = [1, 1]} : vector<8x8xi32> to vector<8x1xi32>
    %28 = vector.broadcast %27 : vector<8x1xi32> to vector<8x128xi32>
    %29 = arith.cmpi eq, %1, %28 : vector<8x128xi32>
    %30 = arith.extui %29 : vector<8x128xi1> to vector<8x128xi32>
    %31 = arith.sitofp %30 : vector<8x128xi32> to vector<8x128xf32>
    %32 = vector.extract_strided_slice %0 {offsets = [0, 6], sizes = [8, 1], strides = [1, 1]} : vector<8x8xi32> to vector<8x1xi32>
    %33 = vector.broadcast %32 : vector<8x1xi32> to vector<8x128xi32>
    %34 = arith.cmpi eq, %1, %33 : vector<8x128xi32>
    %35 = arith.extui %34 : vector<8x128xi1> to vector<8x128xi32>
    %36 = arith.sitofp %35 : vector<8x128xi32> to vector<8x128xf32>
    %37 = vector.extract_strided_slice %0 {offsets = [0, 7], sizes = [8, 1], strides = [1, 1]} : vector<8x8xi32> to vector<8x1xi32>
    %38 = vector.broadcast %37 : vector<8x1xi32> to vector<8x128xi32>
    %39 = arith.cmpi eq, %1, %38 : vector<8x128xi32>
    %40 = arith.extui %39 : vector<8x128xi1> to vector<8x128xi32>
    %41 = arith.sitofp %40 : vector<8x128xi32> to vector<8x128xf32>
    %42 = tpu.concatenate %6, %11, %16, %21, %26, %31, %36, %41 in 0 : vector<8x128xf32>, vector<8x128xf32>, vector<8x128xf32>, vector<8x128xf32>, vector<8x128xf32>, vector<8x128xf32>, vector<8x128xf32>, vector<8x128xf32> -> vector<64x128xf32>
    %c0_1 = arith.constant 0 : index
    %c0_2 = arith.constant 0 : index
    %43 = vector.load %arg2[%c0_1, %c0_2] : memref<128x128xf32, #tpu.memory_space<vmem>>, vector<128x128xf32>
    %cst = arith.constant dense<0.000000e+00> : vector<64x128xf32>
    %44 = tpu.matmul %42, %43, %cst {dimension_numbers = #tpu.dot_dimension_numbers<[1], [0], [0], [1], [0, 0, 1, 1], [], []>} : vector<64x128xf32>, vector<128x128xf32>, vector<64x128xf32> -> vector<64x128xf32>
    %c0_3 = arith.constant 0 : index
    %c0_4 = arith.constant 0 : index
    %45 = vector.load %arg3[%c0_3, %c0_4] : memref<512x1024xf32, #tpu.memory_space<vmem>>, vector<512x1024xf32>
    %c0_5 = arith.constant 0 : index
    %c0_6 = arith.constant 0 : index
    %46 = vector.load %arg4[%c0_5, %c0_6] : memref<1x1024xf32, #tpu.memory_space<vmem>>, vector<1x1024xf32>
    %47 = vector.shape_cast %46 : vector<1x1024xf32> to vector<1x1024xf32>
    %48 = vector.broadcast %47 : vector<1x1024xf32> to vector<8x1024xf32>
    %cst_7 = arith.constant 0.000000e+00 : f32
    %49 = vector.broadcast %cst_7 : f32 to vector<8x128xf32>
    %c0_8 = arith.constant 0 : index
    %c0_9 = arith.constant 0 : index
    %c0_10 = arith.constant 0 : index
    %50 = vector.load %arg5[%c0_8, %c0_9, %c0_10] : memref<2x8x128xf32, #tpu.memory_space<vmem>>, vector<1x8x128xf32>
    %51 = vector.shape_cast %50 : vector<1x8x128xf32> to vector<8x128xf32>
    %c1 = arith.constant 1 : index
    %c0_11 = arith.constant 0 : index
    %c0_12 = arith.constant 0 : index
    %52 = vector.load %arg5[%c1, %c0_11, %c0_12] : memref<2x8x128xf32, #tpu.memory_space<vmem>>, vector<1x8x128xf32>
    %53 = vector.shape_cast %52 : vector<1x8x128xf32> to vector<8x128xf32>
    %c0_13 = arith.constant 0 : index
    %c0_14 = arith.constant 0 : index
    %c0_15 = arith.constant 0 : index
    %54 = vector.load %arg6[%c0_13, %c0_14, %c0_15] : memref<2x8x128xf32, #tpu.memory_space<vmem>>, vector<1x8x128xf32>
    %55 = vector.shape_cast %54 : vector<1x8x128xf32> to vector<8x128xf32>
    %c1_16 = arith.constant 1 : index
    %c0_17 = arith.constant 0 : index
    %c0_18 = arith.constant 0 : index
    %56 = vector.load %arg6[%c1_16, %c0_17, %c0_18] : memref<2x8x128xf32, #tpu.memory_space<vmem>>, vector<1x8x128xf32>
    %57 = vector.shape_cast %56 : vector<1x8x128xf32> to vector<8x128xf32>
    %58 = vector.extract_strided_slice %44 {offsets = [0, 0], sizes = [8, 128], strides = [1, 1]} : vector<64x128xf32> to vector<8x128xf32>
    %59 = tpu.concatenate %58, %51, %49, %53 in 1 : vector<8x128xf32>, vector<8x128xf32>, vector<8x128xf32>, vector<8x128xf32> -> vector<8x512xf32>
    %cst_19 = arith.constant dense<0.000000e+00> : vector<8x1024xf32>
    %60 = tpu.matmul %59, %45, %cst_19 {dimension_numbers = #tpu.dot_dimension_numbers<[1], [0], [0], [1], [0, 0, 1, 1], [], []>} : vector<8x512xf32>, vector<512x1024xf32>, vector<8x1024xf32> -> vector<8x1024xf32>
    %61 = arith.addf %60, %48 : vector<8x1024xf32>
    %62 = arith.negf %61 : vector<8x1024xf32>
    %63 = math.exp %62 : vector<8x1024xf32>
    %cst_20 = arith.constant 1.000000e+00 : f32
    %64 = vector.broadcast %cst_20 : f32 to vector<8x1024xf32>
    %65 = arith.addf %64, %63 : vector<8x1024xf32>
    %66 = arith.divf %64, %65 : vector<8x1024xf32>
    %67 = vector.extract_strided_slice %66 {offsets = [0, 0], sizes = [8, 128], strides = [1, 1]} : vector<8x1024xf32> to vector<8x128xf32>
    %68 = vector.extract_strided_slice %66 {offsets = [0, 128], sizes = [8, 128], strides = [1, 1]} : vector<8x1024xf32> to vector<8x128xf32>
    %69 = vector.extract_strided_slice %61 {offsets = [0, 256], sizes = [8, 128], strides = [1, 1]} : vector<8x1024xf32> to vector<8x128xf32>
    %70 = math.tanh %69 : vector<8x128xf32>
    %71 = vector.extract_strided_slice %66 {offsets = [0, 384], sizes = [8, 128], strides = [1, 1]} : vector<8x1024xf32> to vector<8x128xf32>
    %72 = arith.mulf %68, %55 : vector<8x128xf32>
    %73 = arith.mulf %67, %70 : vector<8x128xf32>
    %74 = arith.addf %72, %73 : vector<8x128xf32>
    %75 = math.tanh %74 : vector<8x128xf32>
    %76 = arith.mulf %71, %75 : vector<8x128xf32>
    %77 = vector.extract_strided_slice %44 {offsets = [8, 0], sizes = [8, 128], strides = [1, 1]} : vector<64x128xf32> to vector<8x128xf32>
    %78 = tpu.concatenate %77, %76, %76, %53 in 1 : vector<8x128xf32>, vector<8x128xf32>, vector<8x128xf32>, vector<8x128xf32> -> vector<8x512xf32>
    %cst_21 = arith.constant dense<0.000000e+00> : vector<8x1024xf32>
    %79 = tpu.matmul %78, %45, %cst_21 {dimension_numbers = #tpu.dot_dimension_numbers<[1], [0], [0], [1], [0, 0, 1, 1], [], []>} : vector<8x512xf32>, vector<512x1024xf32>, vector<8x1024xf32> -> vector<8x1024xf32>
    %80 = arith.addf %79, %48 : vector<8x1024xf32>
    %81 = arith.negf %80 : vector<8x1024xf32>
    %82 = math.exp %81 : vector<8x1024xf32>
    %cst_22 = arith.constant 1.000000e+00 : f32
    %83 = vector.broadcast %cst_22 : f32 to vector<8x1024xf32>
    %84 = arith.addf %83, %82 : vector<8x1024xf32>
    %85 = arith.divf %83, %84 : vector<8x1024xf32>
    %86 = vector.extract_strided_slice %85 {offsets = [0, 0], sizes = [8, 128], strides = [1, 1]} : vector<8x1024xf32> to vector<8x128xf32>
    %87 = vector.extract_strided_slice %85 {offsets = [0, 128], sizes = [8, 128], strides = [1, 1]} : vector<8x1024xf32> to vector<8x128xf32>
    %88 = vector.extract_strided_slice %80 {offsets = [0, 256], sizes = [8, 128], strides = [1, 1]} : vector<8x1024xf32> to vector<8x128xf32>
    %89 = math.tanh %88 : vector<8x128xf32>
    %90 = vector.extract_strided_slice %85 {offsets = [0, 384], sizes = [8, 128], strides = [1, 1]} : vector<8x1024xf32> to vector<8x128xf32>
    %91 = arith.mulf %87, %74 : vector<8x128xf32>
    %92 = arith.mulf %86, %89 : vector<8x128xf32>
    %93 = arith.addf %91, %92 : vector<8x128xf32>
    %94 = math.tanh %93 : vector<8x128xf32>
    %95 = arith.mulf %90, %94 : vector<8x128xf32>
    %96 = vector.extract_strided_slice %85 {offsets = [0, 512], sizes = [8, 128], strides = [1, 1]} : vector<8x1024xf32> to vector<8x128xf32>
    %97 = vector.extract_strided_slice %85 {offsets = [0, 640], sizes = [8, 128], strides = [1, 1]} : vector<8x1024xf32> to vector<8x128xf32>
    %98 = vector.extract_strided_slice %80 {offsets = [0, 768], sizes = [8, 128], strides = [1, 1]} : vector<8x1024xf32> to vector<8x128xf32>
    %99 = math.tanh %98 : vector<8x128xf32>
    %100 = vector.extract_strided_slice %85 {offsets = [0, 896], sizes = [8, 128], strides = [1, 1]} : vector<8x1024xf32> to vector<8x128xf32>
    %101 = arith.mulf %97, %57 : vector<8x128xf32>
    %102 = arith.mulf %96, %99 : vector<8x128xf32>
    %103 = arith.addf %101, %102 : vector<8x128xf32>
    %104 = math.tanh %103 : vector<8x128xf32>
    %105 = arith.mulf %100, %104 : vector<8x128xf32>
    %106 = vector.extract_strided_slice %44 {offsets = [16, 0], sizes = [8, 128], strides = [1, 1]} : vector<64x128xf32> to vector<8x128xf32>
    %107 = tpu.concatenate %106, %95, %95, %105 in 1 : vector<8x128xf32>, vector<8x128xf32>, vector<8x128xf32>, vector<8x128xf32> -> vector<8x512xf32>
    %cst_23 = arith.constant dense<0.000000e+00> : vector<8x1024xf32>
    %108 = tpu.matmul %107, %45, %cst_23 {dimension_numbers = #tpu.dot_dimension_numbers<[1], [0], [0], [1], [0, 0, 1, 1], [], []>} : vector<8x512xf32>, vector<512x1024xf32>, vector<8x1024xf32> -> vector<8x1024xf32>
    %109 = arith.addf %108, %48 : vector<8x1024xf32>
    %110 = arith.negf %109 : vector<8x1024xf32>
    %111 = math.exp %110 : vector<8x1024xf32>
    %cst_24 = arith.constant 1.000000e+00 : f32
    %112 = vector.broadcast %cst_24 : f32 to vector<8x1024xf32>
    %113 = arith.addf %112, %111 : vector<8x1024xf32>
    %114 = arith.divf %112, %113 : vector<8x1024xf32>
    %115 = vector.extract_strided_slice %114 {offsets = [0, 0], sizes = [8, 128], strides = [1, 1]} : vector<8x1024xf32> to vector<8x128xf32>
    %116 = vector.extract_strided_slice %114 {offsets = [0, 128], sizes = [8, 128], strides = [1, 1]} : vector<8x1024xf32> to vector<8x128xf32>
    %117 = vector.extract_strided_slice %109 {offsets = [0, 256], sizes = [8, 128], strides = [1, 1]} : vector<8x1024xf32> to vector<8x128xf32>
    %118 = math.tanh %117 : vector<8x128xf32>
    %119 = vector.extract_strided_slice %114 {offsets = [0, 384], sizes = [8, 128], strides = [1, 1]} : vector<8x1024xf32> to vector<8x128xf32>
    %120 = arith.mulf %116, %93 : vector<8x128xf32>
    %121 = arith.mulf %115, %118 : vector<8x128xf32>
    %122 = arith.addf %120, %121 : vector<8x128xf32>
    %123 = math.tanh %122 : vector<8x128xf32>
    %124 = arith.mulf %119, %123 : vector<8x128xf32>
    %125 = vector.extract_strided_slice %114 {offsets = [0, 512], sizes = [8, 128], strides = [1, 1]} : vector<8x1024xf32> to vector<8x128xf32>
    %126 = vector.extract_strided_slice %114 {offsets = [0, 640], sizes = [8, 128], strides = [1, 1]} : vector<8x1024xf32> to vector<8x128xf32>
    %127 = vector.extract_strided_slice %109 {offsets = [0, 768], sizes = [8, 128], strides = [1, 1]} : vector<8x1024xf32> to vector<8x128xf32>
    %128 = math.tanh %127 : vector<8x128xf32>
    %129 = vector.extract_strided_slice %114 {offsets = [0, 896], sizes = [8, 128], strides = [1, 1]} : vector<8x1024xf32> to vector<8x128xf32>
    %130 = arith.mulf %126, %103 : vector<8x128xf32>
    %131 = arith.mulf %125, %128 : vector<8x128xf32>
    %132 = arith.addf %130, %131 : vector<8x128xf32>
    %133 = math.tanh %132 : vector<8x128xf32>
    %134 = arith.mulf %129, %133 : vector<8x128xf32>
    %135 = vector.extract_strided_slice %44 {offsets = [24, 0], sizes = [8, 128], strides = [1, 1]} : vector<64x128xf32> to vector<8x128xf32>
    %136 = tpu.concatenate %135, %124, %124, %134 in 1 : vector<8x128xf32>, vector<8x128xf32>, vector<8x128xf32>, vector<8x128xf32> -> vector<8x512xf32>
    %cst_25 = arith.constant dense<0.000000e+00> : vector<8x1024xf32>
    %137 = tpu.matmul %136, %45, %cst_25 {dimension_numbers = #tpu.dot_dimension_numbers<[1], [0], [0], [1], [0, 0, 1, 1], [], []>} : vector<8x512xf32>, vector<512x1024xf32>, vector<8x1024xf32> -> vector<8x1024xf32>
    %138 = arith.addf %137, %48 : vector<8x1024xf32>
    %139 = arith.negf %138 : vector<8x1024xf32>
    %140 = math.exp %139 : vector<8x1024xf32>
    %cst_26 = arith.constant 1.000000e+00 : f32
    %141 = vector.broadcast %cst_26 : f32 to vector<8x1024xf32>
    %142 = arith.addf %141, %140 : vector<8x1024xf32>
    %143 = arith.divf %141, %142 : vector<8x1024xf32>
    %144 = vector.extract_strided_slice %143 {offsets = [0, 0], sizes = [8, 128], strides = [1, 1]} : vector<8x1024xf32> to vector<8x128xf32>
    %145 = vector.extract_strided_slice %143 {offsets = [0, 128], sizes = [8, 128], strides = [1, 1]} : vector<8x1024xf32> to vector<8x128xf32>
    %146 = vector.extract_strided_slice %138 {offsets = [0, 256], sizes = [8, 128], strides = [1, 1]} : vector<8x1024xf32> to vector<8x128xf32>
    %147 = math.tanh %146 : vector<8x128xf32>
    %148 = vector.extract_strided_slice %143 {offsets = [0, 384], sizes = [8, 128], strides = [1, 1]} : vector<8x1024xf32> to vector<8x128xf32>
    %149 = arith.mulf %145, %122 : vector<8x128xf32>
    %150 = arith.mulf %144, %147 : vector<8x128xf32>
    %151 = arith.addf %149, %150 : vector<8x128xf32>
    %152 = math.tanh %151 : vector<8x128xf32>
    %153 = arith.mulf %148, %152 : vector<8x128xf32>
    %154 = vector.extract_strided_slice %143 {offsets = [0, 512], sizes = [8, 128], strides = [1, 1]} : vector<8x1024xf32> to vector<8x128xf32>
    %155 = vector.extract_strided_slice %143 {offsets = [0, 640], sizes = [8, 128], strides = [1, 1]} : vector<8x1024xf32> to vector<8x128xf32>
    %156 = vector.extract_strided_slice %138 {offsets = [0, 768], sizes = [8, 128], strides = [1, 1]} : vector<8x1024xf32> to vector<8x128xf32>
    %157 = math.tanh %156 : vector<8x128xf32>
    %158 = vector.extract_strided_slice %143 {offsets = [0, 896], sizes = [8, 128], strides = [1, 1]} : vector<8x1024xf32> to vector<8x128xf32>
    %159 = arith.mulf %155, %132 : vector<8x128xf32>
    %160 = arith.mulf %154, %157 : vector<8x128xf32>
    %161 = arith.addf %159, %160 : vector<8x128xf32>
    %162 = math.tanh %161 : vector<8x128xf32>
    %163 = arith.mulf %158, %162 : vector<8x128xf32>
    %164 = vector.extract_strided_slice %44 {offsets = [32, 0], sizes = [8, 128], strides = [1, 1]} : vector<64x128xf32> to vector<8x128xf32>
    %165 = tpu.concatenate %164, %153, %153, %163 in 1 : vector<8x128xf32>, vector<8x128xf32>, vector<8x128xf32>, vector<8x128xf32> -> vector<8x512xf32>
    %cst_27 = arith.constant dense<0.000000e+00> : vector<8x1024xf32>
    %166 = tpu.matmul %165, %45, %cst_27 {dimension_numbers = #tpu.dot_dimension_numbers<[1], [0], [0], [1], [0, 0, 1, 1], [], []>} : vector<8x512xf32>, vector<512x1024xf32>, vector<8x1024xf32> -> vector<8x1024xf32>
    %167 = arith.addf %166, %48 : vector<8x1024xf32>
    %168 = arith.negf %167 : vector<8x1024xf32>
    %169 = math.exp %168 : vector<8x1024xf32>
    %cst_28 = arith.constant 1.000000e+00 : f32
    %170 = vector.broadcast %cst_28 : f32 to vector<8x1024xf32>
    %171 = arith.addf %170, %169 : vector<8x1024xf32>
    %172 = arith.divf %170, %171 : vector<8x1024xf32>
    %173 = vector.extract_strided_slice %172 {offsets = [0, 0], sizes = [8, 128], strides = [1, 1]} : vector<8x1024xf32> to vector<8x128xf32>
    %174 = vector.extract_strided_slice %172 {offsets = [0, 128], sizes = [8, 128], strides = [1, 1]} : vector<8x1024xf32> to vector<8x128xf32>
    %175 = vector.extract_strided_slice %167 {offsets = [0, 256], sizes = [8, 128], strides = [1, 1]} : vector<8x1024xf32> to vector<8x128xf32>
    %176 = math.tanh %175 : vector<8x128xf32>
    %177 = vector.extract_strided_slice %172 {offsets = [0, 384], sizes = [8, 128], strides = [1, 1]} : vector<8x1024xf32> to vector<8x128xf32>
    %178 = arith.mulf %174, %151 : vector<8x128xf32>
    %179 = arith.mulf %173, %176 : vector<8x128xf32>
    %180 = arith.addf %178, %179 : vector<8x128xf32>
    %181 = math.tanh %180 : vector<8x128xf32>
    %182 = arith.mulf %177, %181 : vector<8x128xf32>
    %183 = vector.extract_strided_slice %172 {offsets = [0, 512], sizes = [8, 128], strides = [1, 1]} : vector<8x1024xf32> to vector<8x128xf32>
    %184 = vector.extract_strided_slice %172 {offsets = [0, 640], sizes = [8, 128], strides = [1, 1]} : vector<8x1024xf32> to vector<8x128xf32>
    %185 = vector.extract_strided_slice %167 {offsets = [0, 768], sizes = [8, 128], strides = [1, 1]} : vector<8x1024xf32> to vector<8x128xf32>
    %186 = math.tanh %185 : vector<8x128xf32>
    %187 = vector.extract_strided_slice %172 {offsets = [0, 896], sizes = [8, 128], strides = [1, 1]} : vector<8x1024xf32> to vector<8x128xf32>
    %188 = arith.mulf %184, %161 : vector<8x128xf32>
    %189 = arith.mulf %183, %186 : vector<8x128xf32>
    %190 = arith.addf %188, %189 : vector<8x128xf32>
    %191 = math.tanh %190 : vector<8x128xf32>
    %192 = arith.mulf %187, %191 : vector<8x128xf32>
    %193 = vector.extract_strided_slice %44 {offsets = [40, 0], sizes = [8, 128], strides = [1, 1]} : vector<64x128xf32> to vector<8x128xf32>
    %194 = tpu.concatenate %193, %182, %182, %192 in 1 : vector<8x128xf32>, vector<8x128xf32>, vector<8x128xf32>, vector<8x128xf32> -> vector<8x512xf32>
    %cst_29 = arith.constant dense<0.000000e+00> : vector<8x1024xf32>
    %195 = tpu.matmul %194, %45, %cst_29 {dimension_numbers = #tpu.dot_dimension_numbers<[1], [0], [0], [1], [0, 0, 1, 1], [], []>} : vector<8x512xf32>, vector<512x1024xf32>, vector<8x1024xf32> -> vector<8x1024xf32>
    %196 = arith.addf %195, %48 : vector<8x1024xf32>
    %197 = arith.negf %196 : vector<8x1024xf32>
    %198 = math.exp %197 : vector<8x1024xf32>
    %cst_30 = arith.constant 1.000000e+00 : f32
    %199 = vector.broadcast %cst_30 : f32 to vector<8x1024xf32>
    %200 = arith.addf %199, %198 : vector<8x1024xf32>
    %201 = arith.divf %199, %200 : vector<8x1024xf32>
    %202 = vector.extract_strided_slice %201 {offsets = [0, 0], sizes = [8, 128], strides = [1, 1]} : vector<8x1024xf32> to vector<8x128xf32>
    %203 = vector.extract_strided_slice %201 {offsets = [0, 128], sizes = [8, 128], strides = [1, 1]} : vector<8x1024xf32> to vector<8x128xf32>
    %204 = vector.extract_strided_slice %196 {offsets = [0, 256], sizes = [8, 128], strides = [1, 1]} : vector<8x1024xf32> to vector<8x128xf32>
    %205 = math.tanh %204 : vector<8x128xf32>
    %206 = vector.extract_strided_slice %201 {offsets = [0, 384], sizes = [8, 128], strides = [1, 1]} : vector<8x1024xf32> to vector<8x128xf32>
    %207 = arith.mulf %203, %180 : vector<8x128xf32>
    %208 = arith.mulf %202, %205 : vector<8x128xf32>
    %209 = arith.addf %207, %208 : vector<8x128xf32>
    %210 = math.tanh %209 : vector<8x128xf32>
    %211 = arith.mulf %206, %210 : vector<8x128xf32>
    %212 = vector.extract_strided_slice %201 {offsets = [0, 512], sizes = [8, 128], strides = [1, 1]} : vector<8x1024xf32> to vector<8x128xf32>
    %213 = vector.extract_strided_slice %201 {offsets = [0, 640], sizes = [8, 128], strides = [1, 1]} : vector<8x1024xf32> to vector<8x128xf32>
    %214 = vector.extract_strided_slice %196 {offsets = [0, 768], sizes = [8, 128], strides = [1, 1]} : vector<8x1024xf32> to vector<8x128xf32>
    %215 = math.tanh %214 : vector<8x128xf32>
    %216 = vector.extract_strided_slice %201 {offsets = [0, 896], sizes = [8, 128], strides = [1, 1]} : vector<8x1024xf32> to vector<8x128xf32>
    %217 = arith.mulf %213, %190 : vector<8x128xf32>
    %218 = arith.mulf %212, %215 : vector<8x128xf32>
    %219 = arith.addf %217, %218 : vector<8x128xf32>
    %220 = math.tanh %219 : vector<8x128xf32>
    %221 = arith.mulf %216, %220 : vector<8x128xf32>
    %222 = vector.extract_strided_slice %44 {offsets = [48, 0], sizes = [8, 128], strides = [1, 1]} : vector<64x128xf32> to vector<8x128xf32>
    %223 = tpu.concatenate %222, %211, %211, %221 in 1 : vector<8x128xf32>, vector<8x128xf32>, vector<8x128xf32>, vector<8x128xf32> -> vector<8x512xf32>
    %cst_31 = arith.constant dense<0.000000e+00> : vector<8x1024xf32>
    %224 = tpu.matmul %223, %45, %cst_31 {dimension_numbers = #tpu.dot_dimension_numbers<[1], [0], [0], [1], [0, 0, 1, 1], [], []>} : vector<8x512xf32>, vector<512x1024xf32>, vector<8x1024xf32> -> vector<8x1024xf32>
    %225 = arith.addf %224, %48 : vector<8x1024xf32>
    %226 = arith.negf %225 : vector<8x1024xf32>
    %227 = math.exp %226 : vector<8x1024xf32>
    %cst_32 = arith.constant 1.000000e+00 : f32
    %228 = vector.broadcast %cst_32 : f32 to vector<8x1024xf32>
    %229 = arith.addf %228, %227 : vector<8x1024xf32>
    %230 = arith.divf %228, %229 : vector<8x1024xf32>
    %231 = vector.extract_strided_slice %230 {offsets = [0, 0], sizes = [8, 128], strides = [1, 1]} : vector<8x1024xf32> to vector<8x128xf32>
    %232 = vector.extract_strided_slice %230 {offsets = [0, 128], sizes = [8, 128], strides = [1, 1]} : vector<8x1024xf32> to vector<8x128xf32>
    %233 = vector.extract_strided_slice %225 {offsets = [0, 256], sizes = [8, 128], strides = [1, 1]} : vector<8x1024xf32> to vector<8x128xf32>
    %234 = math.tanh %233 : vector<8x128xf32>
    %235 = vector.extract_strided_slice %230 {offsets = [0, 384], sizes = [8, 128], strides = [1, 1]} : vector<8x1024xf32> to vector<8x128xf32>
    %236 = arith.mulf %232, %209 : vector<8x128xf32>
    %237 = arith.mulf %231, %234 : vector<8x128xf32>
    %238 = arith.addf %236, %237 : vector<8x128xf32>
    %239 = math.tanh %238 : vector<8x128xf32>
    %240 = arith.mulf %235, %239 : vector<8x128xf32>
    %241 = vector.extract_strided_slice %230 {offsets = [0, 512], sizes = [8, 128], strides = [1, 1]} : vector<8x1024xf32> to vector<8x128xf32>
    %242 = vector.extract_strided_slice %230 {offsets = [0, 640], sizes = [8, 128], strides = [1, 1]} : vector<8x1024xf32> to vector<8x128xf32>
    %243 = vector.extract_strided_slice %225 {offsets = [0, 768], sizes = [8, 128], strides = [1, 1]} : vector<8x1024xf32> to vector<8x128xf32>
    %244 = math.tanh %243 : vector<8x128xf32>
    %245 = vector.extract_strided_slice %230 {offsets = [0, 896], sizes = [8, 128], strides = [1, 1]} : vector<8x1024xf32> to vector<8x128xf32>
    %246 = arith.mulf %242, %219 : vector<8x128xf32>
    %247 = arith.mulf %241, %244 : vector<8x128xf32>
    %248 = arith.addf %246, %247 : vector<8x128xf32>
    %249 = math.tanh %248 : vector<8x128xf32>
    %250 = arith.mulf %245, %249 : vector<8x128xf32>
    %251 = vector.extract_strided_slice %44 {offsets = [56, 0], sizes = [8, 128], strides = [1, 1]} : vector<64x128xf32> to vector<8x128xf32>
    %252 = tpu.concatenate %251, %240, %240, %250 in 1 : vector<8x128xf32>, vector<8x128xf32>, vector<8x128xf32>, vector<8x128xf32> -> vector<8x512xf32>
    %cst_33 = arith.constant dense<0.000000e+00> : vector<8x1024xf32>
    %253 = tpu.matmul %252, %45, %cst_33 {dimension_numbers = #tpu.dot_dimension_numbers<[1], [0], [0], [1], [0, 0, 1, 1], [], []>} : vector<8x512xf32>, vector<512x1024xf32>, vector<8x1024xf32> -> vector<8x1024xf32>
    %254 = arith.addf %253, %48 : vector<8x1024xf32>
    %255 = arith.negf %254 : vector<8x1024xf32>
    %256 = math.exp %255 : vector<8x1024xf32>
    %cst_34 = arith.constant 1.000000e+00 : f32
    %257 = vector.broadcast %cst_34 : f32 to vector<8x1024xf32>
    %258 = arith.addf %257, %256 : vector<8x1024xf32>
    %259 = arith.divf %257, %258 : vector<8x1024xf32>
    %260 = vector.extract_strided_slice %259 {offsets = [0, 0], sizes = [8, 128], strides = [1, 1]} : vector<8x1024xf32> to vector<8x128xf32>
    %261 = vector.extract_strided_slice %259 {offsets = [0, 128], sizes = [8, 128], strides = [1, 1]} : vector<8x1024xf32> to vector<8x128xf32>
    %262 = vector.extract_strided_slice %254 {offsets = [0, 256], sizes = [8, 128], strides = [1, 1]} : vector<8x1024xf32> to vector<8x128xf32>
    %263 = math.tanh %262 : vector<8x128xf32>
    %264 = vector.extract_strided_slice %259 {offsets = [0, 384], sizes = [8, 128], strides = [1, 1]} : vector<8x1024xf32> to vector<8x128xf32>
    %265 = arith.mulf %261, %238 : vector<8x128xf32>
    %266 = arith.mulf %260, %263 : vector<8x128xf32>
    %267 = arith.addf %265, %266 : vector<8x128xf32>
    %268 = math.tanh %267 : vector<8x128xf32>
    %269 = arith.mulf %264, %268 : vector<8x128xf32>
    %270 = vector.extract_strided_slice %259 {offsets = [0, 512], sizes = [8, 128], strides = [1, 1]} : vector<8x1024xf32> to vector<8x128xf32>
    %271 = vector.extract_strided_slice %259 {offsets = [0, 640], sizes = [8, 128], strides = [1, 1]} : vector<8x1024xf32> to vector<8x128xf32>
    %272 = vector.extract_strided_slice %254 {offsets = [0, 768], sizes = [8, 128], strides = [1, 1]} : vector<8x1024xf32> to vector<8x128xf32>
    %273 = math.tanh %272 : vector<8x128xf32>
    %274 = vector.extract_strided_slice %259 {offsets = [0, 896], sizes = [8, 128], strides = [1, 1]} : vector<8x1024xf32> to vector<8x128xf32>
    %275 = arith.mulf %271, %248 : vector<8x128xf32>
    %276 = arith.mulf %270, %273 : vector<8x128xf32>
    %277 = arith.addf %275, %276 : vector<8x128xf32>
    %278 = math.tanh %277 : vector<8x128xf32>
    %279 = arith.mulf %274, %278 : vector<8x128xf32>
    %280 = tpu.concatenate %49, %269, %269, %279 in 1 : vector<8x128xf32>, vector<8x128xf32>, vector<8x128xf32>, vector<8x128xf32> -> vector<8x512xf32>
    %cst_35 = arith.constant dense<0.000000e+00> : vector<8x1024xf32>
    %281 = tpu.matmul %280, %45, %cst_35 {dimension_numbers = #tpu.dot_dimension_numbers<[1], [0], [0], [1], [0, 0, 1, 1], [], []>} : vector<8x512xf32>, vector<512x1024xf32>, vector<8x1024xf32> -> vector<8x1024xf32>
    %282 = arith.addf %281, %48 : vector<8x1024xf32>
    %283 = arith.negf %282 : vector<8x1024xf32>
    %284 = math.exp %283 : vector<8x1024xf32>
    %cst_36 = arith.constant 1.000000e+00 : f32
    %285 = vector.broadcast %cst_36 : f32 to vector<8x1024xf32>
    %286 = arith.addf %285, %284 : vector<8x1024xf32>
    %287 = arith.divf %285, %286 : vector<8x1024xf32>
    %288 = vector.extract_strided_slice %287 {offsets = [0, 512], sizes = [8, 128], strides = [1, 1]} : vector<8x1024xf32> to vector<8x128xf32>
    %289 = vector.extract_strided_slice %287 {offsets = [0, 640], sizes = [8, 128], strides = [1, 1]} : vector<8x1024xf32> to vector<8x128xf32>
    %290 = vector.extract_strided_slice %282 {offsets = [0, 768], sizes = [8, 128], strides = [1, 1]} : vector<8x1024xf32> to vector<8x128xf32>
    %291 = math.tanh %290 : vector<8x128xf32>
    %292 = vector.extract_strided_slice %287 {offsets = [0, 896], sizes = [8, 128], strides = [1, 1]} : vector<8x1024xf32> to vector<8x128xf32>
    %293 = arith.mulf %289, %277 : vector<8x128xf32>
    %294 = arith.mulf %288, %291 : vector<8x128xf32>
    %295 = arith.addf %293, %294 : vector<8x128xf32>
    %296 = math.tanh %295 : vector<8x128xf32>
    %297 = arith.mulf %292, %296 : vector<8x128xf32>
    %c0_37 = arith.constant 0 : index
    %c0_38 = arith.constant 0 : index
    %298 = vector.load %arg7[%c0_37, %c0_38] : memref<128x128xf32, #tpu.memory_space<vmem>>, vector<128x128xf32>
    %cst_39 = arith.constant dense<0.000000e+00> : vector<8x128xf32>
    %299 = tpu.matmul %297, %298, %cst_39 {dimension_numbers = #tpu.dot_dimension_numbers<[1], [0], [0], [1], [0, 0, 1, 1], [], []>} : vector<8x128xf32>, vector<128x128xf32>, vector<8x128xf32> -> vector<8x128xf32>
    %c0_40 = arith.constant 0 : index
    %c0_41 = arith.constant 0 : index
    %300 = vector.load %arg8[%c0_40, %c0_41] : memref<1x128xf32, #tpu.memory_space<vmem>>, vector<1x128xf32>
    %301 = vector.broadcast %300 : vector<1x128xf32> to vector<8x128xf32>
    %302 = arith.addf %299, %301 : vector<8x128xf32>
    %cst_42 = arith.constant dense<0xFF800000> : vector<8xf32>
    %303 = vector.multi_reduction <maximumf>, %302, %cst_42 [1] : vector<8x128xf32> to vector<8xf32>
    %304 = vector.shape_cast %303 : vector<8xf32> to vector<8x1xf32>
    %305 = vector.broadcast %304 : vector<8x1xf32> to vector<8x128xf32>
    %306 = arith.subf %302, %305 : vector<8x128xf32>
    %307 = math.exp %306 : vector<8x128xf32>
    %cst_43 = arith.constant dense<0.000000e+00> : vector<8xf32>
    %308 = vector.multi_reduction <add>, %307, %cst_43 [1] : vector<8x128xf32> to vector<8xf32>
    %309 = vector.shape_cast %308 : vector<8xf32> to vector<8x1xf32>
    %310 = math.log %309 : vector<8x1xf32>
    %311 = arith.addf %310, %304 : vector<8x1xf32>
    %312 = vector.broadcast %311 : vector<8x1xf32> to vector<8x128xf32>
    %313 = arith.subf %302, %312 : vector<8x128xf32>
    %c0_44 = arith.constant 0 : index
    %c0_45 = arith.constant 0 : index
    %314 = vector.load %arg9[%c0_44, %c0_45] : memref<8x128xf32, #tpu.memory_space<vmem>>, vector<8x128xf32>
    tpu.vector_store %arg9[%c0_44, %c0_45], %313 {strides = array<i32>} : memref<8x128xf32, #tpu.memory_space<vmem>>, vector<8x128xf32>,
    return
  }
  func.func @transform_0(%arg0: i32) -> (i32, i32) {
    %c0_i32 = arith.constant 0 : i32
    %c0_i32_0 = arith.constant 0 : i32
    return %arg0, %c0_i32 : i32, i32
  }
  func.func @transform_1(%arg0: i32) -> (i32, i32) {
    %c0_i32 = arith.constant 0 : i32
    %c0_i32_0 = arith.constant 0 : i32
    %c0_i32_1 = arith.constant 0 : i32
    return %c0_i32, %c0_i32_0 : i32, i32
  }
  func.func @transform_2(%arg0: i32) -> (i32, i32) {
    %c0_i32 = arith.constant 0 : i32
    %c0_i32_0 = arith.constant 0 : i32
    %c0_i32_1 = arith.constant 0 : i32
    return %c0_i32, %c0_i32_0 : i32, i32
  }
  func.func @transform_3(%arg0: i32) -> (i32, i32) {
    %c0_i32 = arith.constant 0 : i32
    %c0_i32_0 = arith.constant 0 : i32
    %c0_i32_1 = arith.constant 0 : i32
    return %c0_i32, %c0_i32_0 : i32, i32
  }
  func.func @transform_4(%arg0: i32) -> (i32, i32, i32) {
    %c0_i32 = arith.constant 0 : i32
    %c0_i32_0 = arith.constant 0 : i32
    %c0_i32_1 = arith.constant 0 : i32
    return %c0_i32, %arg0, %c0_i32_0 : i32, i32, i32
  }
  func.func @transform_5(%arg0: i32) -> (i32, i32, i32) {
    %c0_i32 = arith.constant 0 : i32
    %c0_i32_0 = arith.constant 0 : i32
    %c0_i32_1 = arith.constant 0 : i32
    return %c0_i32, %arg0, %c0_i32_0 : i32, i32, i32
  }
  func.func @transform_6(%arg0: i32) -> (i32, i32) {
    %c0_i32 = arith.constant 0 : i32
    %c0_i32_0 = arith.constant 0 : i32
    %c0_i32_1 = arith.constant 0 : i32
    return %c0_i32, %c0_i32_0 : i32, i32
  }
  func.func @transform_7(%arg0: i32) -> (i32, i32) {
    %c0_i32 = arith.constant 0 : i32
    %c0_i32_0 = arith.constant 0 : i32
    %c0_i32_1 = arith.constant 0 : i32
    return %c0_i32, %c0_i32_0 : i32, i32
  }
  func.func @transform_8(%arg0: i32) -> (i32, i32) {
    %c0_i32 = arith.constant 0 : i32
    %c0_i32_0 = arith.constant 0 : i32
    return %arg0, %c0_i32 : i32, i32
  }
}

</mosaic_0001>

<llo_original>
// kernel: tpu_custom_call.1
$region0: #{tpu_custom_call.1}
  #allocation0 [shape = 'u32[]', space=smem, size = 0x4, offset = 0x4, fixed_abs, tag = 'smem constant byte address 0x4 - core index']
  #allocation1 [shape = 'u32[144,128]{1,0:T(1,128)}', space=vmem, size = 0x12000, scoped, tag = 'internal scratch']
  %s0 = inlined_call_operand.vmem [shape: s32[16,8], index: 0, kind: input, shape index: {}]
  %s1 = inlined_call_operand.hbm [shape: f32[128,128], index: 1, kind: input, shape index: {}]
  %s2 = inlined_call_operand.hbm [shape: f32[512,1024], index: 2, kind: input, shape index: {}]
  %s3 = inlined_call_operand.hbm [shape: f32[1,1024], index: 3, kind: input, shape index: {}]
  %s4 = inlined_call_operand.hbm [shape: f32[2,16,128], index: 4, kind: input, shape index: {}]
  %s5 = inlined_call_operand.hbm [shape: f32[2,16,128], index: 5, kind: input, shape index: {}]
  %s6 = inlined_call_operand.hbm [shape: f32[128,128], index: 6, kind: input, shape index: {}]
  %s7 = inlined_call_operand.hbm [shape: f32[1,128], index: 7, kind: input, shape index: {}]
  %s8 = inlined_call_operand.hbm [shape: f32[16,128], index: 8, kind: output, shape index: {}]
  %s9 = sld [smem:[#allocation0]]
  $region93: #{tpu_custom_call.1} parent=0
    _
  %s11 = ssub.s32 1, %s9
  %s12 = scalar_select 0, %s11, %s9
  $region1: #{tpu_custom_call.1} parent=0
    #allocation2 [shape = 'u8[65536]{0}', space=vmem, size = 0x10000, scoped, tag = 'input window, operand 1, single buffered']
    #allocation3 [shape = 's32[2]{0}', space=sflag, size = 0x8, scoped, tag = 'scoped memory for tpu_custom_call.1']
    #allocation4 [shape = 's32[2]{0}', space=sflag, size = 0x8, scoped, tag = 'scoped memory for tpu_custom_call.1']
    #allocation5 [shape = 'u8[2097152]{0}', space=vmem, size = 0x200000, scoped, tag = 'input window, operand 2, single buffered']
    #allocation6 [shape = 's32[1]{0}', space=sflag, size = 0x4, scoped, tag = 'scoped memory for tpu_custom_call.1']
    #allocation7 [shape = 'u8[4096]{0}', space=vmem, size = 0x1000, scoped, tag = 'input window, operand 3, single buffered']
    #allocation8 [shape = 'u8[16384]{0}', space=vmem, size = 0x4000, scoped, tag = 'input window, operand 4']
    #allocation9 [shape = 's32[2]{0}', space=sflag, size = 0x8, scoped, tag = 'scoped memory for tpu_custom_call.1']
    #allocation10 [shape = 'u8[16384]{0}', space=vmem, size = 0x4000, scoped, tag = 'input window, operand 5']
    #allocation11 [shape = 'u8[65536]{0}', space=vmem, size = 0x10000, scoped, tag = 'input window, operand 6, single buffered']
    #allocation12 [shape = 's32[1]{0}', space=sflag, size = 0x4, scoped, tag = 'scoped memory for tpu_custom_call.1']
    #allocation13 [shape = 'u8[512]{0}', space=vmem, size = 0x400, scoped, tag = 'input window, operand 7, single buffered']
    #allocation14 [shape = 'u8[8192]{0}', space=vmem, size = 0x2000, scoped, tag = 'output window, operand 0']
    %13 = vsyncpa [#allocation3], 0
    %14 = vsyncpa [#allocation6], 0
    %15 = vsyncpa [#allocation9], 0
    %s16 = scalar_lea.sflag [#allocation9], 1
    %17 = vsyncpa %s16, 0
    %18 = vsyncpa [#allocation12], 0
    %19 = vsyncpa [#allocation4], 0
    %s20 = scalar_lea.sflag [#allocation4], 1
    %21 = vsyncpa %s20, 0
    loop: start=0, step=1, limit=4
    $region2: #{tpu_custom_call.1} parent=1 // loop_pre_header
      _
    $region3: #{tpu_custom_call.1} parent=1 // loop_header
      %s23 = sphi 0, %s27
      %p24 = scmp.ge.s32.totalorder %s23, 4
      %s33 = sphi 0, %s35
      %s36 = sphi 0, %s33
      %s37 = sphi 0, %s36
      %s53 = sphi 0, %s37
      %s57 = sphi 0, %s57
      %s59 = sphi 0, %s57
      %s60 = sphi 0, %s59
      %s74 = sphi 0, %s60
      %s78 = sphi 0, %s78
      %s80 = sphi 0, %s78
      %s81 = sphi 0, %s80
      %s95 = sphi 0, %s81
      %s99 = sphi 0, %s99
      %s101 = sphi 0, %s99
      %s102 = sphi 0, %s101
      %s116 = sphi 0, %s102
      %s122 = sphi 0, %s124
      %s125 = sphi 0, %s122
      %s126 = sphi 0, %s125
      %s142 = sphi 0, %s126
      %s148 = sphi 0, %s150
      %s151 = sphi 0, %s148
      %s152 = sphi 0, %s151
      %s168 = sphi 0, %s152
      %s172 = sphi 0, %s172
      %s174 = sphi 0, %s172
      %s175 = sphi 0, %s174
      %s189 = sphi 0, %s175
      %s193 = sphi 0, %s193
      %s195 = sphi 0, %s193
      %s196 = sphi 0, %s195
      %s210 = sphi 0, %s196
      %s216 = sphi 0, %s218
      %s219 = sphi 0, %s216
      %s220 = sphi 0, %s219
      %s236 = sphi 0, %s220
    $region4: #{tpu_custom_call.1} parent=1 // loop_header_branch
      %26 = sbr.rel (%p24) target = $region8
    $region5: #{tpu_custom_call.1} parent=1 // loop_body
      %s28 = ssub.s32 %s23, 1
      %s29 = ssub.s32 %s23, 2
      %s30 = sadd.s32 %s23, 1
      %s31 = ssub.s32 %s23, %s30
      %p32 = scmp.eq.s32.totalorder %s31, 0
      %s34 = sadd.s32 %s33, 1
      %s35 = scalar_select %p32, %s33, %s34
      %p38 = pneg %p32
      %p39 = scmp.eq.s32.totalorder %s23, 1
      %p40 = por %p38, %p39
      %p41 = scmp.ne.s32.totalorder %s33, %s36
      %p42 = scmp.eq.s32.totalorder %s23, 0
      %p43 = por %p41, %p42
      %p44 = scmp.ne.s32.totalorder %s33, %s36
      %p45 = scmp.eq.s32.totalorder %s28, 1
      %p46 = por %p44, %p45
      %p47 = scmp.ne.s32.totalorder %s36, %s37
      %p48 = scmp.eq.s32.totalorder %s28, 0
      %p49 = por %p47, %p48
      %p50 = scmp.ne.s32.totalorder %s36, %s37
      %p51 = scmp.eq.s32.totalorder %s29, 1
      %p52 = por %p50, %p51
      %p54 = scmp.ne.s32.totalorder %s37, %s53
      %p55 = scmp.eq.s32.totalorder %s29, 0
      %p56 = por %p54, %p55
      %s58 = sadd.s32 %s57, 1
      %p61 = scmp.eq.s32.totalorder %s23, 1
      %p62 = scmp.ne.s32.totalorder %s57, %s59
      %p63 = scmp.eq.s32.totalorder %s23, 0
      %p64 = por %p62, %p63
      %p65 = scmp.ne.s32.totalorder %s57, %s59
      %p66 = scmp.eq.s32.totalorder %s28, 1
      %p67 = por %p65, %p66
      %p68 = scmp.ne.s32.totalorder %s59, %s60
      %p69 = scmp.eq.s32.totalorder %s28, 0
      %p70 = por %p68, %p69
      %p71 = scmp.ne.s32.totalorder %s59, %s60
      %p72 = scmp.eq.s32.totalorder %s29, 1
      %p73 = por %p71, %p72
      %p75 = scmp.ne.s32.totalorder %s60, %s74
      %p76 = scmp.eq.s32.totalorder %s29, 0
      %p77 = por %p75, %p76
      %s79 = sadd.s32 %s78, 1
      %p82 = scmp.eq.s32.totalorder %s23, 1
      %p83 = scmp.ne.s32.totalorder %s78, %s80
      %p84 = scmp.eq.s32.totalorder %s23, 0
      %p85 = por %p83, %p84
      %p86 = scmp.ne.s32.totalorder %s78, %s80
      %p87 = scmp.eq.s32.totalorder %s28, 1
      %p88 = por %p86, %p87
      %p89 = scmp.ne.s32.totalorder %s80, %s81
      %p90 = scmp.eq.s32.totalorder %s28, 0
      %p91 = por %p89, %p90
      %p92 = scmp.ne.s32.totalorder %s80, %s81
      %p93 = scmp.eq.s32.totalorder %s29, 1
      %p94 = por %p92, %p93
      %p96 = scmp.ne.s32.totalorder %s81, %s95
      %p97 = scmp.eq.s32.totalorder %s29, 0
      %p98 = por %p96, %p97
      %s100 = sadd.s32 %s99, 1
      %p103 = scmp.eq.s32.totalorder %s23, 1
      %p104 = scmp.ne.s32.totalorder %s99, %s101
      %p105 = scmp.eq.s32.totalorder %s23, 0
      %p106 = por %p104, %p105
      %p107 = scmp.ne.s32.totalorder %s99, %s101
      %p108 = scmp.eq.s32.totalorder %s28, 1
      %p109 = por %p107, %p108
      %p110 = scmp.ne.s32.totalorder %s101, %s102
      %p111 = scmp.eq.s32.totalorder %s28, 0
      %p112 = por %p110, %p111
      %p113 = scmp.ne.s32.totalorder %s101, %s102
      %p114 = scmp.eq.s32.totalorder %s29, 1
      %p115 = por %p113, %p114
      %p117 = scmp.ne.s32.totalorder %s102, %s116
      %p118 = scmp.eq.s32.totalorder %s29, 0
      %p119 = por %p117, %p118
      %s120 = ssub.s32 %s23, %s30
      %p121 = scmp.eq.s32.totalorder %s120, 0
      %s123 = sadd.s32 %s122, 1
      %s124 = scalar_select %p121, %s122, %s123
      %p127 = pneg %p121
      %p128 = scmp.eq.s32.totalorder %s23, 1
      %p129 = por %p127, %p128
      %p130 = scmp.ne.s32.totalorder %s122, %s125
      %p131 = scmp.eq.s32.totalorder %s23, 0
      %p132 = por %p130, %p131
      %p133 = scmp.ne.s32.totalorder %s122, %s125
      %p134 = scmp.eq.s32.totalorder %s28, 1
      %p135 = por %p133, %p134
      %p136 = scmp.ne.s32.totalorder %s125, %s126
      %p137 = scmp.eq.s32.totalorder %s28, 0
      %p138 = por %p136, %p137
      %p139 = scmp.ne.s32.totalorder %s125, %s126
      %p140 = scmp.eq.s32.totalorder %s29, 1
      %p141 = por %p139, %p140
      %p143 = scmp.ne.s32.totalorder %s126, %s142
      %p144 = scmp.eq.s32.totalorder %s29, 0
      %p145 = por %p143, %p144
      %s146 = ssub.s32 %s23, %s30
      %p147 = scmp.eq.s32.totalorder %s146, 0
      %s149 = sadd.s32 %s148, 1
      %s150 = scalar_select %p147, %s148, %s149
      %p153 = pneg %p147
      %p154 = scmp.eq.s32.totalorder %s23, 1
      %p155 = por %p153, %p154
      %p156 = scmp.ne.s32.totalorder %s148, %s151
      %p157 = scmp.eq.s32.totalorder %s23, 0
      %p158 = por %p156, %p157
      %p159 = scmp.ne.s32.totalorder %s148, %s151
      %p160 = scmp.eq.s32.totalorder %s28, 1
      %p161 = por %p159, %p160
      %p162 = scmp.ne.s32.totalorder %s151, %s152
      %p163 = scmp.eq.s32.totalorder %s28, 0
      %p164 = por %p162, %p163
      %p165 = scmp.ne.s32.totalorder %s151, %s152
      %p166 = scmp.eq.s32.totalorder %s29, 1
      %p167 = por %p165, %p166
      %p169 = scmp.ne.s32.totalorder %s152, %s168
      %p170 = scmp.eq.s32.totalorder %s29, 0
      %p171 = por %p169, %p170
      %s173 = sadd.s32 %s172, 1
      %p176 = scmp.eq.s32.totalorder %s23, 1
      %p177 = scmp.ne.s32.totalorder %s172, %s174
      %p178 = scmp.eq.s32.totalorder %s23, 0
      %p179 = por %p177, %p178
      %p180 = scmp.ne.s32.totalorder %s172, %s174
      %p181 = scmp.eq.s32.totalorder %s28, 1
      %p182 = por %p180, %p181
      %p183 = scmp.ne.s32.totalorder %s174, %s175
      %p184 = scmp.eq.s32.totalorder %s28, 0
      %p185 = por %p183, %p184
      %p186 = scmp.ne.s32.totalorder %s174, %s175
      %p187 = scmp.eq.s32.totalorder %s29, 1
      %p188 = por %p186, %p187
      %p190 = scmp.ne.s32.totalorder %s175, %s189
      %p191 = scmp.eq.s32.totalorder %s29, 0
      %p192 = por %p190, %p191
      %s194 = sadd.s32 %s193, 1
      %p197 = scmp.eq.s32.totalorder %s23, 1
      %p198 = scmp.ne.s32.totalorder %s193, %s195
      %p199 = scmp.eq.s32.totalorder %s23, 0
      %p200 = por %p198, %p199
      %p201 = scmp.ne.s32.totalorder %s193, %s195
      %p202 = scmp.eq.s32.totalorder %s28, 1
      %p203 = por %p201, %p202
      %p204 = scmp.ne.s32.totalorder %s195, %s196
      %p205 = scmp.eq.s32.totalorder %s28, 0
      %p206 = por %p204, %p205
      %p207 = scmp.ne.s32.totalorder %s195, %s196
      %p208 = scmp.eq.s32.totalorder %s29, 1
      %p209 = por %p207, %p208
      %p211 = scmp.ne.s32.totalorder %s196, %s210
      %p212 = scmp.eq.s32.totalorder %s29, 0
      %p213 = por %p211, %p212
      %s214 = ssub.s32 %s23, %s30
      %p215 = scmp.eq.s32.totalorder %s214, 0
      %s217 = sadd.s32 %s216, 1
      %s218 = scalar_select %p215, %s216, %s217
      %p221 = pneg %p215
      %p222 = scmp.eq.s32.totalorder %s23, 1
      %p223 = por %p221, %p222
      %p224 = scmp.ne.s32.totalorder %s216, %s219
      %p225 = scmp.eq.s32.totalorder %s23, 0
      %p226 = por %p224, %p225
      %p227 = scmp.ne.s32.totalorder %s216, %s219
      %p228 = scmp.eq.s32.totalorder %s28, 1
      %p229 = por %p227, %p228
      %p230 = scmp.ne.s32.totalorder %s219, %s220
      %p231 = scmp.eq.s32.totalorder %s28, 0
      %p232 = por %p230, %p231
      %p233 = scmp.ne.s32.totalorder %s219, %s220
      %p234 = scmp.eq.s32.totalorder %s29, 1
      %p235 = por %p233, %p234
      %p237 = scmp.ne.s32.totalorder %s220, %s236
      %p238 = scmp.eq.s32.totalorder %s29, 0
      %p239 = por %p237, %p238
      %p240 = scmp.le.s32.totalorder 1, %s23
      %p241 = scmp.lt.s32.totalorder %s23, 3
      %p242 = pnand %p240, %p241
      %p243 = pneg %p242
      // Predicated region
      $region9: #{tpu_custom_call.1} parent=5 // pred_check
        _
      $region10: #{tpu_custom_call.1} parent=5 // pred_check_branch
        %245 = sbr.rel (%p242) target = $region12
      $region11: #{tpu_custom_call.1} parent=5 // pred_region
        %s246 = ssub.s32 %s23, 1
        // Predicated region
        $region13: #{tpu_custom_call.1} parent=11 // pred_check
          %p247 = pneg %p70
        $region14: #{tpu_custom_call.1} parent=11 // pred_check_branch
          %249 = sbr.rel (%p247) target = $region16
        $region15: #{tpu_custom_call.1} parent=11 // pred_region
          %s251 = ssub.s32 2048, 2048
          %252 = vsyncadd [#allocation3], %s251
          %s253 = sshll.u32 [#allocation2], 4
          %s254 = int_to_ptr.vmem [resolvable:$true] %s253
          %259 = dma.hbm_to_vmem [thread:$0]  %s1, 2048, %s254, [#allocation3], 128, 128, 8
        $region16: #{tpu_custom_call.1} parent=11 // pred_fallthru
          _
        // Predicated region
        $region17: #{tpu_custom_call.1} parent=11 // pred_check
          %p260 = pneg %p91
        $region18: #{tpu_custom_call.1} parent=11 // pred_check_branch
          %262 = sbr.rel (%p260) target = $region20
        $region19: #{tpu_custom_call.1} parent=11 // pred_region
          %s264 = ssub.s32 65536, 65536
          %265 = vsyncadd [#allocation6], %s264
          %s266 = sshll.u32 [#allocation5], 4
          %s267 = int_to_ptr.vmem [resolvable:$true] %s266
          %272 = dma.hbm_to_vmem [thread:$0]  %s2, 65536, %s267, [#allocation6], 1024, 1024, 64
        $region20: #{tpu_custom_call.1} parent=11 // pred_fallthru
          _
        // Predicated region
        $region21: #{tpu_custom_call.1} parent=11 // pred_check
          %p273 = pneg %p112
        $region22: #{tpu_custom_call.1} parent=11 // pred_check_branch
          %275 = sbr.rel (%p273) target = $region24
        $region23: #{tpu_custom_call.1} parent=11 // pred_region
          %s277 = ssub.s32 128, 128
          %278 = vsyncadd [#allocation6], %s277
          %s280 = sshll.u32 [#allocation7], 4
          %s281 = int_to_ptr.vmem [resolvable:$true] %s280
          %283 = dma.hbm_to_vmem [thread:$0]  %s3, 128, %s281, [#allocation6]
        $region24: #{tpu_custom_call.1} parent=11 // pred_fallthru
          _
        // Predicated region
        $region25: #{tpu_custom_call.1} parent=11 // pred_check
          %p284 = pneg %p185
        $region26: #{tpu_custom_call.1} parent=11 // pred_check_branch
          %286 = sbr.rel (%p284) target = $region28
        $region27: #{tpu_custom_call.1} parent=11 // pred_region
          %s288 = ssub.s32 2048, 2048
          %289 = vsyncadd [#allocation12], %s288
          %s290 = sshll.u32 [#allocation11], 4
          %s291 = int_to_ptr.vmem [resolvable:$true] %s290
          %296 = dma.hbm_to_vmem [thread:$0]  %s6, 2048, %s291, [#allocation12], 128, 128, 8
        $region28: #{tpu_custom_call.1} parent=11 // pred_fallthru
          _
        // Predicated region
        $region29: #{tpu_custom_call.1} parent=11 // pred_check
          %p297 = pneg %p206
        $region30: #{tpu_custom_call.1} parent=11 // pred_check_branch
          %299 = sbr.rel (%p297) target = $region32
        $region31: #{tpu_custom_call.1} parent=11 // pred_region
          %s301 = ssub.s32 16, 16
          %302 = vsyncadd [#allocation12], %s301
          %s304 = sshll.u32 [#allocation13], 4
          %s305 = int_to_ptr.vmem [resolvable:$true] %s304
          %307 = dma.hbm_to_vmem [thread:$0]  %s7, 16, %s305, [#allocation12]
        $region32: #{tpu_custom_call.1} parent=11 // pred_fallthru
          _
      $region12: #{tpu_custom_call.1} parent=5 // pred_fallthru
        _
      %p308 = scmp.lt.s32.totalorder %s23, 2
      // Predicated region
      $region33: #{tpu_custom_call.1} parent=5 // pred_check
        %p309 = pneg %p308
      $region34: #{tpu_custom_call.1} parent=5 // pred_check_branch
        %311 = sbr.rel (%p309) target = $region36
      $region35: #{tpu_custom_call.1} parent=5 // pred_region
        // Predicated region
        $region37: #{tpu_custom_call.1} parent=35 // pred_check
          %p312 = pneg %p43
        $region38: #{tpu_custom_call.1} parent=35 // pred_check_branch
          %314 = sbr.rel (%p312) target = $region40
        $region39: #{tpu_custom_call.1} parent=35 // pred_region
          %p315 = scmp.lt.s32.totalorder %s23, 1
          %s316 = scalar_select %p315, %s23, 1
          %s317 = smul.addr %s316, 8
          %s318 = scalar_lea.vmem %s0, %s317
        $region40: #{tpu_custom_call.1} parent=35 // pred_fallthru
          _
        // Predicated region
        $region41: #{tpu_custom_call.1} parent=35 // pred_check
          %p319 = pneg %p132
        $region42: #{tpu_custom_call.1} parent=35 // pred_check_branch
          %321 = sbr.rel (%p319) target = $region44
        $region43: #{tpu_custom_call.1} parent=35 // pred_region
          %s322 = sand.u32 %s23, 1
          %s323 = scalar_lea.sflag [#allocation9], %s322
          %s324 = sand.u32 %s122, 1
          %s325 = smul.addr %s324, 16
          %s326 = scalar_lea.vmem [#allocation8], %s325
          %s328 = ssub.s32 256, 256
          %329 = vsyncadd %s323, %s328
          %s330 = smul.addr %s23, 128
          %s331 = scalar_lea.hbm %s4, %s330
          %s332 = sshll.u32 %s326, 4
          %s333 = int_to_ptr.vmem [resolvable:$true] %s332
          %338 = dma.hbm_to_vmem [thread:$0]  %s331, 256, %s333, %s323, 256, 128, 8
        $region44: #{tpu_custom_call.1} parent=35 // pred_fallthru
          _
        // Predicated region
        $region45: #{tpu_custom_call.1} parent=35 // pred_check
          %p339 = pneg %p158
        $region46: #{tpu_custom_call.1} parent=35 // pred_check_branch
          %341 = sbr.rel (%p339) target = $region48
        $region47: #{tpu_custom_call.1} parent=35 // pred_region
          %s342 = sand.u32 %s23, 1
          %s343 = scalar_lea.sflag [#allocation9], %s342
          %s344 = sand.u32 %s148, 1
          %s345 = smul.addr %s344, 16
          %s346 = scalar_lea.vmem [#allocation10], %s345
          %s348 = ssub.s32 256, 256
          %349 = vsyncadd %s343, %s348
          %s350 = smul.addr %s23, 128
          %s351 = scalar_lea.hbm %s5, %s350
          %s352 = sshll.u32 %s346, 4
          %s353 = int_to_ptr.vmem [resolvable:$true] %s352
          %358 = dma.hbm_to_vmem [thread:$0]  %s351, 256, %s353, %s343, 256, 128, 8
        $region48: #{tpu_custom_call.1} parent=35 // pred_fallthru
          _
      $region36: #{tpu_custom_call.1} parent=5 // pred_fallthru
        _
      %p359 = scmp.le.s32.totalorder 1, %s23
      %p360 = scmp.lt.s32.totalorder %s23, 3
      %p361 = pnand %p359, %p360
      %p362 = pneg %p361
      // Predicated region
      $region49: #{tpu_custom_call.1} parent=5 // pred_check
        _
      $region50: #{tpu_custom_call.1} parent=5 // pred_check_branch
        %364 = sbr.rel (%p361) target = $region52
      $region51: #{tpu_custom_call.1} parent=5 // pred_region
        %s365 = ssub.s32 %s23, 1
        // Predicated region
        $region53: #{tpu_custom_call.1} parent=51 // pred_check
          %p366 = pneg %p70
        $region54: #{tpu_custom_call.1} parent=51 // pred_check_branch
          %368 = sbr.rel (%p366) target = $region56
        $region55: #{tpu_custom_call.1} parent=51 // pred_region
          %369 = dma.done [#allocation3], 2048
        $region56: #{tpu_custom_call.1} parent=51 // pred_fallthru
          _
        // Predicated region
        $region57: #{tpu_custom_call.1} parent=51 // pred_check
          %p370 = pneg %p91
        $region58: #{tpu_custom_call.1} parent=51 // pred_check_branch
          %372 = sbr.rel (%p370) target = $region60
        $region59: #{tpu_custom_call.1} parent=51 // pred_region
          %373 = dma.done [#allocation6], 65536
        $region60: #{tpu_custom_call.1} parent=51 // pred_fallthru
          _
        // Predicated region
        $region61: #{tpu_custom_call.1} parent=51 // pred_check
          %p374 = pneg %p112
        $region62: #{tpu_custom_call.1} parent=51 // pred_check_branch
          %376 = sbr.rel (%p374) target = $region64
        $region63: #{tpu_custom_call.1} parent=51 // pred_region
          %377 = dma.done [#allocation6], 128
        $region64: #{tpu_custom_call.1} parent=51 // pred_fallthru
          _
        %s378 = sand.u32 %s28, 1
        %s379 = scalar_lea.sflag [#allocation9], %s378
        %s380 = sand.u32 %s125, 1
        %s381 = smul.addr %s380, 16
        %s382 = scalar_lea.vmem [#allocation8], %s381
        // Predicated region
        $region65: #{tpu_custom_call.1} parent=51 // pred_check
          %p383 = pneg %p138
        $region66: #{tpu_custom_call.1} parent=51 // pred_check_branch
          %385 = sbr.rel (%p383) target = $region68
        $region67: #{tpu_custom_call.1} parent=51 // pred_region
          %386 = dma.done %s379, 256
        $region68: #{tpu_custom_call.1} parent=51 // pred_fallthru
          _
        %s387 = sand.u32 %s28, 1
        %s388 = scalar_lea.sflag [#allocation9], %s387
        %s389 = sand.u32 %s151, 1
        %s390 = smul.addr %s389, 16
        %s391 = scalar_lea.vmem [#allocation10], %s390
        // Predicated region
        $region69: #{tpu_custom_call.1} parent=51 // pred_check
          %p392 = pneg %p164
        $region70: #{tpu_custom_call.1} parent=51 // pred_check_branch
          %394 = sbr.rel (%p392) target = $region72
        $region71: #{tpu_custom_call.1} parent=51 // pred_region
          %395 = dma.done %s388, 256
        $region72: #{tpu_custom_call.1} parent=51 // pred_fallthru
          _
        // Predicated region
        $region73: #{tpu_custom_call.1} parent=51 // pred_check
          %p396 = pneg %p185
        $region74: #{tpu_custom_call.1} parent=51 // pred_check_branch
          %398 = sbr.rel (%p396) target = $region76
        $region75: #{tpu_custom_call.1} parent=51 // pred_region
          %399 = dma.done [#allocation12], 2048
        $region76: #{tpu_custom_call.1} parent=51 // pred_fallthru
          _
        // Predicated region
        $region77: #{tpu_custom_call.1} parent=51 // pred_check
          %p400 = pneg %p206
        $region78: #{tpu_custom_call.1} parent=51 // pred_check_branch
          %402 = sbr.rel (%p400) target = $region80
        $region79: #{tpu_custom_call.1} parent=51 // pred_region
          %403 = dma.done [#allocation12], 16
        $region80: #{tpu_custom_call.1} parent=51 // pred_fallthru
          _
        %p404 = scmp.lt.s32.totalorder %s28, 1
        %s405 = scalar_select %p404, %s28, 1
        %s406 = smul.addr %s405, 8
        %s407 = scalar_lea.vmem %s0, %s406
        %p408 = pneg %p49
        %p409 = pneg %p46
        %p410 = pneg %p70
        %p411 = pneg %p67
        %p412 = pneg %p91
        %p413 = pneg %p88
        %p414 = pneg %p112
        %p415 = pneg %p109
        %s416 = sand.u32 %s28, 1
        %s417 = scalar_lea.sflag [#allocation9], %s416
        %s418 = sand.u32 %s125, 1
        %s419 = smul.addr %s418, 16
        %s420 = scalar_lea.vmem [#allocation8], %s419
        %p421 = pneg %p138
        %p422 = pneg %p135
        %s423 = sand.u32 %s28, 1
        %s424 = scalar_lea.sflag [#allocation9], %s423
        %s425 = sand.u32 %s151, 1
        %s426 = smul.addr %s425, 16
        %s427 = scalar_lea.vmem [#allocation10], %s426
        %p428 = pneg %p164
        %p429 = pneg %p161
        %p430 = pneg %p185
        %p431 = pneg %p182
        %p432 = pneg %p206
        %p433 = pneg %p203
        %p434 = pneg %p232
        %p435 = pneg %p229
        %s436 = sand.u32 %s219, 1
        %s437 = scalar_lea.sflag [#allocation4], %s436
        %s438 = sand.u32 %s219, 1
        %s439 = smul.addr %s438, 8
        %s440 = scalar_lea.vmem [#allocation14], %s439
        %p441 = scmp.lt.s32.totalorder %s28, 1
        %s442 = scalar_select %p441, %s28, 1
        %s443 = smul.addr %s442, 8
        %s444 = scalar_lea.vmem %s0, %s443
        %v445 = vld [vmem:[%s444] sm:$0xff]
        %v446 = vlaneseq
        %v447 = vand.u32 %v446, 127
        %448 = vset.pattern.permute.xlu0 0
        %449 = vperm.xlu0 %448, %v445
        %v450 = vpop.permute.xlu0 %449
        %vm451 = vcmp.eq.s32.totalorder %v447, %v450
        %v452 = vsel %vm451, 1, 0
        %v453 = vcvt.s32.f32 %v452
        %454 = vset.pattern.permute.xlu0 1
        %455 = vperm.xlu0 %454, %v445
        %v456 = vpop.permute.xlu0 %455
        %vm457 = vcmp.eq.s32.totalorder %v447, %v456
        %v458 = vsel %vm457, 1, 0
        %v459 = vcvt.s32.f32 %v458
        %460 = vset.pattern.permute.xlu0 2
        %461 = vperm.xlu0 %460, %v445
        %v462 = vpop.permute.xlu0 %461
        %vm463 = vcmp.eq.s32.totalorder %v447, %v462
        %v464 = vsel %vm463, 1, 0
        %v465 = vcvt.s32.f32 %v464
        %466 = vset.pattern.permute.xlu0 3
        %467 = vperm.xlu0 %466, %v445
        %v468 = vpop.permute.xlu0 %467
        %vm469 = vcmp.eq.s32.totalorder %v447, %v468
        %v470 = vsel %vm469, 1, 0
        %v471 = vcvt.s32.f32 %v470
        %472 = vset.pattern.permute.xlu0 4
        %473 = vperm.xlu0 %472, %v445
        %v474 = vpop.permute.xlu0 %473
        %vm475 = vcmp.eq.s32.totalorder %v447, %v474
        %v476 = vsel %vm475, 1, 0
        %v477 = vcvt.s32.f32 %v476
        %478 = vset.pattern.permute.xlu0 5
        %479 = vperm.xlu0 %478, %v445
        %v480 = vpop.permute.xlu0 %479
        %vm481 = vcmp.eq.s32.totalorder %v447, %v480
        %v482 = vsel %vm481, 1, 0
        %v483 = vcvt.s32.f32 %v482
        %484 = vset.pattern.permute.xlu0 6
        %485 = vperm.xlu0 %484, %v445
        %v486 = vpop.permute.xlu0 %485
        %vm487 = vcmp.eq.s32.totalorder %v447, %v486
        %v488 = vsel %vm487, 1, 0
        %v489 = vcvt.s32.f32 %v488
        %490 = vset.pattern.permute.xlu0 7
        %491 = vperm.xlu0 %490, %v445
        %v492 = vpop.permute.xlu0 %491
        %vm493 = vcmp.eq.s32.totalorder %v447, %v492
        %v494 = vsel %vm493, 1, 0
        %v495 = vcvt.s32.f32 %v494
        %v496 = vld [vmem:[#allocation2] sm:$0xff]
        %v497 = vld [vmem:[#allocation2 + $0x8] sm:$0xff]
        %v498 = vld [vmem:[#allocation2 + $0x10] sm:$0xff]
        %v499 = vld [vmem:[#allocation2 + $0x18] sm:$0xff]
        %v500 = vld [vmem:[#allocation2 + $0x20] sm:$0xff]
        %v501 = vld [vmem:[#allocation2 + $0x28] sm:$0xff]
        %v502 = vld [vmem:[#allocation2 + $0x30] sm:$0xff]
        %v503 = vld [vmem:[#allocation2 + $0x38] sm:$0xff]
        %v504 = vld [vmem:[#allocation2 + $0x40] sm:$0xff]
        %v505 = vld [vmem:[#allocation2 + $0x48] sm:$0xff]
        %v506 = vld [vmem:[#allocation2 + $0x50] sm:$0xff]
        %v507 = vld [vmem:[#allocation2 + $0x58] sm:$0xff]
        %v508 = vld [vmem:[#allocation2 + $0x60] sm:$0xff]
        %v509 = vld [vmem:[#allocation2 + $0x68] sm:$0xff]
        %v510 = vld [vmem:[#allocation2 + $0x70] sm:$0xff]
        %v511 = vld [vmem:[#allocation2 + $0x78] sm:$0xff]
        %512 = vmatprep.subr.mxu0 0.0
        %513 = vmatpush1.msra.mxu0 %v496
        %514 = vmatprep.subr.mxu0 0.0
        %515 = vmatpush1.msra.mxu0 %v497
        %516 = vmatprep.subr.mxu0 0.0
        %517 = vmatpush1.msra.mxu0 %v498
        %518 = vmatprep.subr.mxu0 0.0
        %519 = vmatpush1.msra.mxu0 %v499
        %520 = vmatprep.subr.mxu0 0.0
        %521 = vmatpush1.msra.mxu0 %v500
        %522 = vmatprep.subr.mxu0 0.0
        %523 = vmatpush1.msra.mxu0 %v501
        %524 = vmatprep.subr.mxu0 0.0
        %525 = vmatpush1.msra.mxu0 %v502
        %526 = vmatprep.subr.mxu0 0.0
        %527 = vmatpush1.msra.mxu0 %v503
        %528 = vmatprep.subr.mxu0 0.0
        %529 = vmatpush1.msra.mxu0 %v504
        %530 = vmatprep.subr.mxu0 0.0
        %531 = vmatpush1.msra.mxu0 %v505
        %532 = vmatprep.subr.mxu0 0.0
        %533 = vmatpush1.msra.mxu0 %v506
        %534 = vmatprep.subr.mxu0 0.0
        %535 = vmatpush1.msra.mxu0 %v507
        %536 = vmatprep.subr.mxu0 0.0
        %537 = vmatpush1.msra.mxu0 %v508
        %538 = vmatprep.subr.mxu0 0.0
        %539 = vmatpush1.msra.mxu0 %v509
        %540 = vmatprep.subr.mxu0 0.0
        %541 = vmatpush1.msra.mxu0 %v510
        %542 = vmatprep.subr.mxu0 0.0
        %543 = vmatpush1.msra.mxu0 %v511
        %544 = vmatprep.subr.mxu0 0.0
        %545 = vmatpush1.msra.mxu0 0.0
        %546 = vmatprep.subr.mxu0 0.0
        %547 = vmatpush1.msra.mxu0 0.0
        %548 = vmatprep.subr.mxu0 0.0
        %549 = vmatpush1.msra.mxu0 0.0
        %550 = vmatprep.subr.mxu0 0.0
        %551 = vmatpush1.msra.mxu0 0.0
        %552 = vmatprep.subr.mxu0 0.0
        %553 = vmatpush1.msra.mxu0 0.0
        %554 = vmatprep.subr.mxu0 0.0
        %555 = vmatpush1.msra.mxu0 0.0
        %556 = vmatprep.subr.mxu0 0.0
        %557 = vmatpush1.msra.mxu0 0.0
        %558 = vmatprep.subr.mxu0 0.0
        %559 = vmatpush1.msra.mxu0 0.0
        %560 = vmatprep.subr.mxu0 0.0
        %561 = vmatpush1.msra.mxu0 0.0
        %562 = vmatprep.subr.mxu0 0.0
        %563 = vmatpush1.msra.mxu0 0.0
        %564 = vmatprep.subr.mxu0 0.0
        %565 = vmatpush1.msra.mxu0 0.0
        %566 = vmatprep.subr.mxu0 0.0
        %567 = vmatpush1.msra.mxu0 0.0
        %568 = vmatprep.subr.mxu0 0.0
        %569 = vmatpush1.msra.mxu0 0.0
        %570 = vmatprep.subr.mxu0 0.0
        %571 = vmatpush1.msra.mxu0 0.0
        %572 = vmatprep.subr.mxu0 0.0
        %573 = vmatpush1.msra.mxu0 0.0
        %574 = vmatprep.subr.mxu0 0.0
        %575 = vmatpush1.msra.mxu0 0.0
        %576 = vmatprep.mubr.f32.mxu0 0.0
        %577 = vmatmul.mubr.f32.gmra.mrb[0].mxu0 %v453
        %v578 = vpop.f32.mrb[0].mxu0
        %v579 = vadd.f32 0.0, %v578
        %v580 = vpop.f32.mrb[0].mxu0
        %581 = vmatprep.mubr.f32.mxu0 0.0
        %582 = vmatmul.mubr.f32.gmra.mrb[0].mxu0 %v459
        %v583 = vpop.f32.mrb[0].mxu0
        %v584 = vadd.f32 0.0, %v583
        %v585 = vpop.f32.mrb[0].mxu0
        %586 = vmatprep.mubr.f32.mxu0 0.0
        %587 = vmatmul.mubr.f32.gmra.mrb[0].mxu0 %v465
        %v588 = vpop.f32.mrb[0].mxu0
        %v589 = vadd.f32 0.0, %v588
        %v590 = vpop.f32.mrb[0].mxu0
        %591 = vmatprep.mubr.f32.mxu0 0.0
        %592 = vmatmul.mubr.f32.gmra.mrb[0].mxu0 %v471
        %v593 = vpop.f32.mrb[0].mxu0
        %v594 = vadd.f32 0.0, %v593
        %v595 = vpop.f32.mrb[0].mxu0
        %596 = vmatprep.mubr.f32.mxu0 0.0
        %597 = vmatmul.mubr.f32.gmra.mrb[0].mxu0 %v477
        %v598 = vpop.f32.mrb[0].mxu0
        %v599 = vadd.f32 0.0, %v598
        %v600 = vpop.f32.mrb[0].mxu0
        %601 = vmatprep.mubr.f32.mxu0 0.0
        %602 = vmatmul.mubr.f32.gmra.mrb[0].mxu0 %v483
        %v603 = vpop.f32.mrb[0].mxu0
        %v604 = vadd.f32 0.0, %v603
        %v605 = vpop.f32.mrb[0].mxu0
        %606 = vmatprep.mubr.f32.mxu0 0.0
        %607 = vmatmul.mubr.f32.gmra.mrb[0].mxu0 %v489
        %v608 = vpop.f32.mrb[0].mxu0
        %v609 = vadd.f32 0.0, %v608
        %v610 = vpop.f32.mrb[0].mxu0
        %611 = vmatprep.mubr.f32.mxu0 0.0
        %612 = vmatmul.mubr.f32.gmra.mrb[0].mxu0 %v495
        %v613 = vpop.f32.mrb[0].mxu0
        %v614 = vadd.f32 0.0, %v613
        %v615 = vpop.f32.mrb[0].mxu0
        %616 = vdwg.mxu0
        %v617 = vld [vmem:[#allocation5] sm:$0xff]
        %v618 = vld [vmem:[#allocation5 + $0x8] sm:$0xff]
        %v619 = vld [vmem:[#allocation5 + $0x10] sm:$0xff]
        %v620 = vld [vmem:[#allocation5 + $0x18] sm:$0xff]
        %v621 = vld [vmem:[#allocation5 + $0x20] sm:$0xff]
        %v622 = vld [vmem:[#allocation5 + $0x28] sm:$0xff]
        %v623 = vld [vmem:[#allocation5 + $0x30] sm:$0xff]
        %v624 = vld [vmem:[#allocation5 + $0x38] sm:$0xff]
        %v625 = vld [vmem:[#allocation5 + $0x40] sm:$0xff]
        %v626 = vld [vmem:[#allocation5 + $0x48] sm:$0xff]
        %v627 = vld [vmem:[#allocation5 + $0x50] sm:$0xff]
        %v628 = vld [vmem:[#allocation5 + $0x58] sm:$0xff]
        %v629 = vld [vmem:[#allocation5 + $0x60] sm:$0xff]
        %v630 = vld [vmem:[#allocation5 + $0x68] sm:$0xff]
        %v631 = vld [vmem:[#allocation5 + $0x70] sm:$0xff]
        %v632 = vld [vmem:[#allocation5 + $0x78] sm:$0xff]
        %v633 = vld [vmem:[#allocation5 + $0x80] sm:$0xff]
        %v634 = vld [vmem:[#allocation5 + $0x88] sm:$0xff]
        %v635 = vld [vmem:[#allocation5 + $0x90] sm:$0xff]
        %v636 = vld [vmem:[#allocation5 + $0x98] sm:$0xff]
        %v637 = vld [vmem:[#allocation5 + $0xa0] sm:$0xff]
        %v638 = vld [vmem:[#allocation5 + $0xa8] sm:$0xff]
        %v639 = vld [vmem:[#allocation5 + $0xb0] sm:$0xff]
        %v640 = vld [vmem:[#allocation5 + $0xb8] sm:$0xff]
        %v641 = vld [vmem:[#allocation5 + $0xc0] sm:$0xff]
        %v642 = vld [vmem:[#allocation5 + $0xc8] sm:$0xff]
        %v643 = vld [vmem:[#allocation5 + $0xd0] sm:$0xff]
        %v644 = vld [vmem:[#allocation5 + $0xd8] sm:$0xff]
        %v645 = vld [vmem:[#allocation5 + $0xe0] sm:$0xff]
        %v646 = vld [vmem:[#allocation5 + $0xe8] sm:$0xff]
        %v647 = vld [vmem:[#allocation5 + $0xf0] sm:$0xff]
        %v648 = vld [vmem:[#allocation5 + $0xf8] sm:$0xff]
        %v649 = vld [vmem:[#allocation5 + $0x100] sm:$0xff]
        %v650 = vld [vmem:[#allocation5 + $0x108] sm:$0xff]
        %v651 = vld [vmem:[#allocation5 + $0x110] sm:$0xff]
        %v652 = vld [vmem:[#allocation5 + $0x118] sm:$0xff]
        %v653 = vld [vmem:[#allocation5 + $0x120] sm:$0xff]
        %v654 = vld [vmem:[#allocation5 + $0x128] sm:$0xff]
        %v655 = vld [vmem:[#allocation5 + $0x130] sm:$0xff]
        %v656 = vld [vmem:[#allocation5 + $0x138] sm:$0xff]
        %v657 = vld [vmem:[#allocation5 + $0x140] sm:$0xff]
        %v658 = vld [vmem:[#allocation5 + $0x148] sm:$0xff]
        %v659 = vld [vmem:[#allocation5 + $0x150] sm:$0xff]
        %v660 = vld [vmem:[#allocation5 + $0x158] sm:$0xff]
        %v661 = vld [vmem:[#allocation5 + $0x160] sm:$0xff]
        %v662 = vld [vmem:[#allocation5 + $0x168] sm:$0xff]
        %v663 = vld [vmem:[#allocation5 + $0x170] sm:$0xff]
        %v664 = vld [vmem:[#allocation5 + $0x178] sm:$0xff]
        %v665 = vld [vmem:[#allocation5 + $0x180] sm:$0xff]
        %v666 = vld [vmem:[#allocation5 + $0x188] sm:$0xff]
        %v667 = vld [vmem:[#allocation5 + $0x190] sm:$0xff]
        %v668 = vld [vmem:[#allocation5 + $0x198] sm:$0xff]
        %v669 = vld [vmem:[#allocation5 + $0x1a0] sm:$0xff]
        %v670 = vld [vmem:[#allocation5 + $0x1a8] sm:$0xff]
        %v671 = vld [vmem:[#allocation5 + $0x1b0] sm:$0xff]
        %v672 = vld [vmem:[#allocation5 + $0x1b8] sm:$0xff]
        %v673 = vld [vmem:[#allocation5 + $0x1c0] sm:$0xff]
        %v674 = vld [vmem:[#allocation5 + $0x1c8] sm:$0xff]
        %v675 = vld [vmem:[#allocation5 + $0x1d0] sm:$0xff]
        %v676 = vld [vmem:[#allocation5 + $0x1d8] sm:$0xff]
        %v677 = vld [vmem:[#allocation5 + $0x1e0] sm:$0xff]
        %v678 = vld [vmem:[#allocation5 + $0x1e8] sm:$0xff]
        %v679 = vld [vmem:[#allocation5 + $0x1f0] sm:$0xff]
        %v680 = vld [vmem:[#allocation5 + $0x1f8] sm:$0xff]
        %v681 = vld [vmem:[#allocation5 + $0x200] sm:$0xff]
        %v682 = vld [vmem:[#allocation5 + $0x208] sm:$0xff]
        %v683 = vld [vmem:[#allocation5 + $0x210] sm:$0xff]
        %v684 = vld [vmem:[#allocation5 + $0x218] sm:$0xff]
        %v685 = vld [vmem:[#allocation5 + $0x220] sm:$0xff]
        %v686 = vld [vmem:[#allocation5 + $0x228] sm:$0xff]
        %v687 = vld [vmem:[#allocation5 + $0x230] sm:$0xff]
        %v688 = vld [vmem:[#allocation5 + $0x238] sm:$0xff]
        %v689 = vld [vmem:[#allocation5 + $0x240] sm:$0xff]
        %v690 = vld [vmem:[#allocation5 + $0x248] sm:$0xff]
        %v691 = vld [vmem:[#allocation5 + $0x250] sm:$0xff]
        %v692 = vld [vmem:[#allocation5 + $0x258] sm:$0xff]
        %v693 = vld [vmem:[#allocation5 + $0x260] sm:$0xff]
        %v694 = vld [vmem:[#allocation5 + $0x268] sm:$0xff]
        %v695 = vld [vmem:[#allocation5 + $0x270] sm:$0xff]
        %v696 = vld [vmem:[#allocation5 + $0x278] sm:$0xff]
        %v697 = vld [vmem:[#allocation5 + $0x280] sm:$0xff]
        %v698 = vld [vmem:[#allocation5 + $0x288] sm:$0xff]
        %v699 = vld [vmem:[#allocation5 + $0x290] sm:$0xff]
        %v700 = vld [vmem:[#allocation5 + $0x298] sm:$0xff]
        %v701 = vld [vmem:[#allocation5 + $0x2a0] sm:$0xff]
        %v702 = vld [vmem:[#allocation5 + $0x2a8] sm:$0xff]
        %v703 = vld [vmem:[#allocation5 + $0x2b0] sm:$0xff]
        %v704 = vld [vmem:[#allocation5 + $0x2b8] sm:$0xff]
        %v705 = vld [vmem:[#allocation5 + $0x2c0] sm:$0xff]
        %v706 = vld [vmem:[#allocation5 + $0x2c8] sm:$0xff]
        %v707 = vld [vmem:[#allocation5 + $0x2d0] sm:$0xff]
        %v708 = vld [vmem:[#allocation5 + $0x2d8] sm:$0xff]
        %v709 = vld [vmem:[#allocation5 + $0x2e0] sm:$0xff]
        %v710 = vld [vmem:[#allocation5 + $0x2e8] sm:$0xff]
        %v711 = vld [vmem:[#allocation5 + $0x2f0] sm:$0xff]
        %v712 = vld [vmem:[#allocation5 + $0x2f8] sm:$0xff]
        %v713 = vld [vmem:[#allocation5 + $0x300] sm:$0xff]
        %v714 = vld [vmem:[#allocation5 + $0x308] sm:$0xff]
        %v715 = vld [vmem:[#allocation5 + $0x310] sm:$0xff]
        %v716 = vld [vmem:[#allocation5 + $0x318] sm:$0xff]
        %v717 = vld [vmem:[#allocation5 + $0x320] sm:$0xff]
        %v718 = vld [vmem:[#allocation5 + $0x328] sm:$0xff]
        %v719 = vld [vmem:[#allocation5 + $0x330] sm:$0xff]
        %v720 = vld [vmem:[#allocation5 + $0x338] sm:$0xff]
        %v721 = vld [vmem:[#allocation5 + $0x340] sm:$0xff]
        %v722 = vld [vmem:[#allocation5 + $0x348] sm:$0xff]
        %v723 = vld [vmem:[#allocation5 + $0x350] sm:$0xff]
        %v724 = vld [vmem:[#allocation5 + $0x358] sm:$0xff]
        %v725 = vld [vmem:[#allocation5 + $0x360] sm:$0xff]
        %v726 = vld [vmem:[#allocation5 + $0x368] sm:$0xff]
        %v727 = vld [vmem:[#allocation5 + $0x370] sm:$0xff]
        %v728 = vld [vmem:[#allocation5 + $0x378] sm:$0xff]
        %v729 = vld [vmem:[#allocation5 + $0x380] sm:$0xff]
        %v730 = vld [vmem:[#allocation5 + $0x388] sm:$0xff]
        %v731 = vld [vmem:[#allocation5 + $0x390] sm:$0xff]
        %v732 = vld [vmem:[#allocation5 + $0x398] sm:$0xff]
        %v733 = vld [vmem:[#allocation5 + $0x3a0] sm:$0xff]
        %v734 = vld [vmem:[#allocation5 + $0x3a8] sm:$0xff]
        %v735 = vld [vmem:[#allocation5 + $0x3b0] sm:$0xff]
        %v736 = vld [vmem:[#allocation5 + $0x3b8] sm:$0xff]
        %v737 = vld [vmem:[#allocation5 + $0x3c0] sm:$0xff]
        %v738 = vld [vmem:[#allocation5 + $0x3c8] sm:$0xff]
        %v739 = vld [vmem:[#allocation5 + $0x3d0] sm:$0xff]
        %v740 = vld [vmem:[#allocation5 + $0x3d8] sm:$0xff]
        %v741 = vld [vmem:[#allocation5 + $0x3e0] sm:$0xff]
        %v742 = vld [vmem:[#allocation5 + $0x3e8] sm:$0xff]
        %v743 = vld [vmem:[#allocation5 + $0x3f0] sm:$0xff]
        %v744 = vld [vmem:[#allocation5 + $0x3f8] sm:$0xff]
        %v745 = vld [vmem:[#allocation5 + $0x400] sm:$0xff]
        %v746 = vld [vmem:[#allocation5 + $0x408] sm:$0xff]
        %v747 = vld [vmem:[#allocation5 + $0x410] sm:$0xff]
        %v748 = vld [vmem:[#allocation5 + $0x418] sm:$0xff]
        %v749 = vld [vmem:[#allocation5 + $0x420] sm:$0xff]
        %v750 = vld [vmem:[#allocation5 + $0x428] sm:$0xff]
        %v751 = vld [vmem:[#allocation5 + $0x430] sm:$0xff]
        %v752 = vld [vmem:[#allocation5 + $0x438] sm:$0xff]
        %v753 = vld [vmem:[#allocation5 + $0x440] sm:$0xff]
        %v754 = vld [vmem:[#allocation5 + $0x448] sm:$0xff]
        %v755 = vld [vmem:[#allocation5 + $0x450] sm:$0xff]
        %v756 = vld [vmem:[#allocation5 + $0x458] sm:$0xff]
        %v757 = vld [vmem:[#allocation5 + $0x460] sm:$0xff]
        %v758 = vld [vmem:[#allocation5 + $0x468] sm:$0xff]
        %v759 = vld [vmem:[#allocation5 + $0x470] sm:$0xff]
        %v760 = vld [vmem:[#allocation5 + $0x478] sm:$0xff]
        %v761 = vld [vmem:[#allocation5 + $0x480] sm:$0xff]
        %v762 = vld [vmem:[#allocation5 + $0x488] sm:$0xff]
        %v763 = vld [vmem:[#allocation5 + $0x490] sm:$0xff]
        %v764 = vld [vmem:[#allocation5 + $0x498] sm:$0xff]
        %v765 = vld [vmem:[#allocation5 + $0x4a0] sm:$0xff]
        %v766 = vld [vmem:[#allocation5 + $0x4a8] sm:$0xff]
        %v767 = vld [vmem:[#allocation5 + $0x4b0] sm:$0xff]
        %v768 = vld [vmem:[#allocation5 + $0x4b8] sm:$0xff]
        %v769 = vld [vmem:[#allocation5 + $0x4c0] sm:$0xff]
        %v770 = vld [vmem:[#allocation5 + $0x4c8] sm:$0xff]
        %v771 = vld [vmem:[#allocation5 + $0x4d0] sm:$0xff]
        %v772 = vld [vmem:[#allocation5 + $0x4d8] sm:$0xff]
        %v773 = vld [vmem:[#allocation5 + $0x4e0] sm:$0xff]
        %v774 = vld [vmem:[#allocation5 + $0x4e8] sm:$0xff]
        %v775 = vld [vmem:[#allocation5 + $0x4f0] sm:$0xff]
        %v776 = vld [vmem:[#allocation5 + $0x4f8] sm:$0xff]
        %v777 = vld [vmem:[#allocation5 + $0x500] sm:$0xff]
        %v778 = vld [vmem:[#allocation5 + $0x508] sm:$0xff]
        %v779 = vld [vmem:[#allocation5 + $0x510] sm:$0xff]
        %v780 = vld [vmem:[#allocation5 + $0x518] sm:$0xff]
        %v781 = vld [vmem:[#allocation5 + $0x520] sm:$0xff]
        %v782 = vld [vmem:[#allocation5 + $0x528] sm:$0xff]
        %v783 = vld [vmem:[#allocation5 + $0x530] sm:$0xff]
        %v784 = vld [vmem:[#allocation5 + $0x538] sm:$0xff]
        %v785 = vld [vmem:[#allocation5 + $0x540] sm:$0xff]
        %v786 = vld [vmem:[#allocation5 + $0x548] sm:$0xff]
        %v787 = vld [vmem:[#allocation5 + $0x550] sm:$0xff]
        %v788 = vld [vmem:[#allocation5 + $0x558] sm:$0xff]
        %v789 = vld [vmem:[#allocation5 + $0x560] sm:$0xff]
        %v790 = vld [vmem:[#allocation5 + $0x568] sm:$0xff]
        %v791 = vld [vmem:[#allocation5 + $0x570] sm:$0xff]
        %v792 = vld [vmem:[#allocation5 + $0x578] sm:$0xff]
        %v793 = vld [vmem:[#allocation5 + $0x580] sm:$0xff]
        %v794 = vld [vmem:[#allocation5 + $0x588] sm:$0xff]
        %v795 = vld [vmem:[#allocation5 + $0x590] sm:$0xff]
        %v796 = vld [vmem:[#allocation5 + $0x598] sm:$0xff]
        %v797 = vld [vmem:[#allocation5 + $0x5a0] sm:$0xff]
        %v798 = vld [vmem:[#allocation5 + $0x5a8] sm:$0xff]
        %v799 = vld [vmem:[#allocation5 + $0x5b0] sm:$0xff]
        %v800 = vld [vmem:[#allocation5 + $0x5b8] sm:$0xff]
        %v801 = vld [vmem:[#allocation5 + $0x5c0] sm:$0xff]
        %v802 = vld [vmem:[#allocation5 + $0x5c8] sm:$0xff]
        %v803 = vld [vmem:[#allocation5 + $0x5d0] sm:$0xff]
        %v804 = vld [vmem:[#allocation5 + $0x5d8] sm:$0xff]
        %v805 = vld [vmem:[#allocation5 + $0x5e0] sm:$0xff]
        %v806 = vld [vmem:[#allocation5 + $0x5e8] sm:$0xff]
        %v807 = vld [vmem:[#allocation5 + $0x5f0] sm:$0xff]
        %v808 = vld [vmem:[#allocation5 + $0x5f8] sm:$0xff]
        %v809 = vld [vmem:[#allocation5 + $0x600] sm:$0xff]
        %v810 = vld [vmem:[#allocation5 + $0x608] sm:$0xff]
        %v811 = vld [vmem:[#allocation5 + $0x610] sm:$0xff]
        %v812 = vld [vmem:[#allocation5 + $0x618] sm:$0xff]
        %v813 = vld [vmem:[#allocation5 + $0x620] sm:$0xff]
        %v814 = vld [vmem:[#allocation5 + $0x628] sm:$0xff]
        %v815 = vld [vmem:[#allocation5 + $0x630] sm:$0xff]
        %v816 = vld [vmem:[#allocation5 + $0x638] sm:$0xff]
        %v817 = vld [vmem:[#allocation5 + $0x640] sm:$0xff]
        %v818 = vld [vmem:[#allocation5 + $0x648] sm:$0xff]
        %v819 = vld [vmem:[#allocation5 + $0x650] sm:$0xff]
        %v820 = vld [vmem:[#allocation5 + $0x658] sm:$0xff]
        %v821 = vld [vmem:[#allocation5 + $0x660] sm:$0xff]
        %v822 = vld [vmem:[#allocation5 + $0x668] sm:$0xff]
        %v823 = vld [vmem:[#allocation5 + $0x670] sm:$0xff]
        %v824 = vld [vmem:[#allocation5 + $0x678] sm:$0xff]
        %v825 = vld [vmem:[#allocation5 + $0x680] sm:$0xff]
        %v826 = vld [vmem:[#allocation5 + $0x688] sm:$0xff]
        %v827 = vld [vmem:[#allocation5 + $0x690] sm:$0xff]
        %v828 = vld [vmem:[#allocation5 + $0x698] sm:$0xff]
        %v829 = vld [vmem:[#allocation5 + $0x6a0] sm:$0xff]
        %v830 = vld [vmem:[#allocation5 + $0x6a8] sm:$0xff]
        %v831 = vld [vmem:[#allocation5 + $0x6b0] sm:$0xff]
        %v832 = vld [vmem:[#allocation5 + $0x6b8] sm:$0xff]
        %v833 = vld [vmem:[#allocation5 + $0x6c0] sm:$0xff]
        %v834 = vld [vmem:[#allocation5 + $0x6c8] sm:$0xff]
        %v835 = vld [vmem:[#allocation5 + $0x6d0] sm:$0xff]
        %v836 = vld [vmem:[#allocation5 + $0x6d8] sm:$0xff]
        %v837 = vld [vmem:[#allocation5 + $0x6e0] sm:$0xff]
        %v838 = vld [vmem:[#allocation5 + $0x6e8] sm:$0xff]
        %v839 = vld [vmem:[#allocation5 + $0x6f0] sm:$0xff]
        %v840 = vld [vmem:[#allocation5 + $0x6f8] sm:$0xff]
        %v841 = vld [vmem:[#allocation5 + $0x700] sm:$0xff]
        %v842 = vld [vmem:[#allocation5 + $0x708] sm:$0xff]
        %v843 = vld [vmem:[#allocation5 + $0x710] sm:$0xff]
        %v844 = vld [vmem:[#allocation5 + $0x718] sm:$0xff]
        %v845 = vld [vmem:[#allocation5 + $0x720] sm:$0xff]
        %v846 = vld [vmem:[#allocation5 + $0x728] sm:$0xff]
        %v847 = vld [vmem:[#allocation5 + $0x730] sm:$0xff]
        %v848 = vld [vmem:[#allocation5 + $0x738] sm:$0xff]
        %v849 = vld [vmem:[#allocation5 + $0x740] sm:$0xff]
        %v850 = vld [vmem:[#allocation5 + $0x748] sm:$0xff]
        %v851 = vld [vmem:[#allocation5 + $0x750] sm:$0xff]
        %v852 = vld [vmem:[#allocation5 + $0x758] sm:$0xff]
        %v853 = vld [vmem:[#allocation5 + $0x760] sm:$0xff]
        %v854 = vld [vmem:[#allocation5 + $0x768] sm:$0xff]
        %v855 = vld [vmem:[#allocation5 + $0x770] sm:$0xff]
        %v856 = vld [vmem:[#allocation5 + $0x778] sm:$0xff]
        %v857 = vld [vmem:[#allocation5 + $0x780] sm:$0xff]
        %v858 = vld [vmem:[#allocation5 + $0x788] sm:$0xff]
        %v859 = vld [vmem:[#allocation5 + $0x790] sm:$0xff]
        %v860 = vld [vmem:[#allocation5 + $0x798] sm:$0xff]
        %v861 = vld [vmem:[#allocation5 + $0x7a0] sm:$0xff]
        %v862 = vld [vmem:[#allocation5 + $0x7a8] sm:$0xff]
        %v863 = vld [vmem:[#allocation5 + $0x7b0] sm:$0xff]
        %v864 = vld [vmem:[#allocation5 + $0x7b8] sm:$0xff]
        %v865 = vld [vmem:[#allocation5 + $0x7c0] sm:$0xff]
        %v866 = vld [vmem:[#allocation5 + $0x7c8] sm:$0xff]
        %v867 = vld [vmem:[#allocation5 + $0x7d0] sm:$0xff]
        %v868 = vld [vmem:[#allocation5 + $0x7d8] sm:$0xff]
        %v869 = vld [vmem:[#allocation5 + $0x7e0] sm:$0xff]
        %v870 = vld [vmem:[#allocation5 + $0x7e8] sm:$0xff]
        %v871 = vld [vmem:[#allocation5 + $0x7f0] sm:$0xff]
        %v872 = vld [vmem:[#allocation5 + $0x7f8] sm:$0xff]
        %v873 = vld [vmem:[#allocation5 + $0x800] sm:$0xff]
        %v874 = vld [vmem:[#allocation5 + $0x808] sm:$0xff]
        %v875 = vld [vmem:[#allocation5 + $0x810] sm:$0xff]
        %v876 = vld [vmem:[#allocation5 + $0x818] sm:$0xff]
        %v877 = vld [vmem:[#allocation5 + $0x820] sm:$0xff]
        %v878 = vld [vmem:[#allocation5 + $0x828] sm:$0xff]
        %v879 = vld [vmem:[#allocation5 + $0x830] sm:$0xff]
        %v880 = vld [vmem:[#allocation5 + $0x838] sm:$0xff]
        %v881 = vld [vmem:[#allocation5 + $0x840] sm:$0xff]
        %v882 = vld [vmem:[#allocation5 + $0x848] sm:$0xff]
        %v883 = vld [vmem:[#allocation5 + $0x850] sm:$0xff]
        %v884 = vld [vmem:[#allocation5 + $0x858] sm:$0xff]
        %v885 = vld [vmem:[#allocation5 + $0x860] sm:$0xff]
        %v886 = vld [vmem:[#allocation5 + $0x868] sm:$0xff]
        %v887 = vld [vmem:[#allocation5 + $0x870] sm:$0xff]
        %v888 = vld [vmem:[#allocation5 + $0x878] sm:$0xff]
        %v889 = vld [vmem:[#allocation5 + $0x880] sm:$0xff]
        %v890 = vld [vmem:[#allocation5 + $0x888] sm:$0xff]
        %v891 = vld [vmem:[#allocation5 + $0x890] sm:$0xff]
        %v892 = vld [vmem:[#allocation5 + $0x898] sm:$0xff]
        %v893 = vld [vmem:[#allocation5 + $0x8a0] sm:$0xff]
        %v894 = vld [vmem:[#allocation5 + $0x8a8] sm:$0xff]
        %v895 = vld [vmem:[#allocation5 + $0x8b0] sm:$0xff]
        %v896 = vld [vmem:[#allocation5 + $0x8b8] sm:$0xff]
        %v897 = vld [vmem:[#allocation5 + $0x8c0] sm:$0xff]
        %v898 = vld [vmem:[#allocation5 + $0x8c8] sm:$0xff]
        %v899 = vld [vmem:[#allocation5 + $0x8d0] sm:$0xff]
        %v900 = vld [vmem:[#allocation5 + $0x8d8] sm:$0xff]
        %v901 = vld [vmem:[#allocation5 + $0x8e0] sm:$0xff]
        %v902 = vld [vmem:[#allocation5 + $0x8e8] sm:$0xff]
        %v903 = vld [vmem:[#allocation5 + $0x8f0] sm:$0xff]
        %v904 = vld [vmem:[#allocation5 + $0x8f8] sm:$0xff]
        %v905 = vld [vmem:[#allocation5 + $0x900] sm:$0xff]
        %v906 = vld [vmem:[#allocation5 + $0x908] sm:$0xff]
        %v907 = vld [vmem:[#allocation5 + $0x910] sm:$0xff]
        %v908 = vld [vmem:[#allocation5 + $0x918] sm:$0xff]
        %v909 = vld [vmem:[#allocation5 + $0x920] sm:$0xff]
        %v910 = vld [vmem:[#allocation5 + $0x928] sm:$0xff]
        %v911 = vld [vmem:[#allocation5 + $0x930] sm:$0xff]
        %v912 = vld [vmem:[#allocation5 + $0x938] sm:$0xff]
        %v913 = vld [vmem:[#allocation5 + $0x940] sm:$0xff]
        %v914 = vld [vmem:[#allocation5 + $0x948] sm:$0xff]
        %v915 = vld [vmem:[#allocation5 + $0x950] sm:$0xff]
        %v916 = vld [vmem:[#allocation5 + $0x958] sm:$0xff]
        %v917 = vld [vmem:[#allocation5 + $0x960] sm:$0xff]
        %v918 = vld [vmem:[#allocation5 + $0x968] sm:$0xff]
        %v919 = vld [vmem:[#allocation5 + $0x970] sm:$0xff]
        %v920 = vld [vmem:[#allocation5 + $0x978] sm:$0xff]
        %v921 = vld [vmem:[#allocation5 + $0x980] sm:$0xff]
        %v922 = vld [vmem:[#allocation5 + $0x988] sm:$0xff]
        %v923 = vld [vmem:[#allocation5 + $0x990] sm:$0xff]
        %v924 = vld [vmem:[#allocation5 + $0x998] sm:$0xff]
        %v925 = vld [vmem:[#allocation5 + $0x9a0] sm:$0xff]
        %v926 = vld [vmem:[#allocation5 + $0x9a8] sm:$0xff]
        %v927 = vld [vmem:[#allocation5 + $0x9b0] sm:$0xff]
        %v928 = vld [vmem:[#allocation5 + $0x9b8] sm:$0xff]
        %v929 = vld [vmem:[#allocation5 + $0x9c0] sm:$0xff]
        %v930 = vld [vmem:[#allocation5 + $0x9c8] sm:$0xff]
        %v931 = vld [vmem:[#allocation5 + $0x9d0] sm:$0xff]
        %v932 = vld [vmem:[#allocation5 + $0x9d8] sm:$0xff]
        %v933 = vld [vmem:[#allocation5 + $0x9e0] sm:$0xff]
        %v934 = vld [vmem:[#allocation5 + $0x9e8] sm:$0xff]
        %v935 = vld [vmem:[#allocation5 + $0x9f0] sm:$0xff]
        %v936 = vld [vmem:[#allocation5 + $0x9f8] sm:$0xff]
        %v937 = vld [vmem:[#allocation5 + $0xa00] sm:$0xff]
        %v938 = vld [vmem:[#allocation5 + $0xa08] sm:$0xff]
        %v939 = vld [vmem:[#allocation5 + $0xa10] sm:$0xff]
        %v940 = vld [vmem:[#allocation5 + $0xa18] sm:$0xff]
        %v941 = vld [vmem:[#allocation5 + $0xa20] sm:$0xff]
        %v942 = vld [vmem:[#allocation5 + $0xa28] sm:$0xff]
        %v943 = vld [vmem:[#allocation5 + $0xa30] sm:$0xff]
        %v944 = vld [vmem:[#allocation5 + $0xa38] sm:$0xff]
        %v945 = vld [vmem:[#allocation5 + $0xa40] sm:$0xff]
        %v946 = vld [vmem:[#allocation5 + $0xa48] sm:$0xff]
        %v947 = vld [vmem:[#allocation5 + $0xa50] sm:$0xff]
        %v948 = vld [vmem:[#allocation5 + $0xa58] sm:$0xff]
        %v949 = vld [vmem:[#allocation5 + $0xa60] sm:$0xff]
        %v950 = vld [vmem:[#allocation5 + $0xa68] sm:$0xff]
        %v951 = vld [vmem:[#allocation5 + $0xa70] sm:$0xff]
        %v952 = vld [vmem:[#allocation5 + $0xa78] sm:$0xff]
        %v953 = vld [vmem:[#allocation5 + $0xa80] sm:$0xff]
        %v954 = vld [vmem:[#allocation5 + $0xa88] sm:$0xff]
        %v955 = vld [vmem:[#allocation5 + $0xa90] sm:$0xff]
        %v956 = vld [vmem:[#allocation5 + $0xa98] sm:$0xff]
        %v957 = vld [vmem:[#allocation5 + $0xaa0] sm:$0xff]
        %v958 = vld [vmem:[#allocation5 + $0xaa8] sm:$0xff]
        %v959 = vld [vmem:[#allocation5 + $0xab0] sm:$0xff]
        %v960 = vld [vmem:[#allocation5 + $0xab8] sm:$0xff]
        %v961 = vld [vmem:[#allocation5 + $0xac0] sm:$0xff]
        %v962 = vld [vmem:[#allocation5 + $0xac8] sm:$0xff]
        %v963 = vld [vmem:[#allocation5 + $0xad0] sm:$0xff]
        %v964 = vld [vmem:[#allocation5 + $0xad8] sm:$0xff]
        %v965 = vld [vmem:[#allocation5 + $0xae0] sm:$0xff]
        %v966 = vld [vmem:[#allocation5 + $0xae8] sm:$0xff]
        %v967 = vld [vmem:[#allocation5 + $0xaf0] sm:$0xff]
        %v968 = vld [vmem:[#allocation5 + $0xaf8] sm:$0xff]
        %v969 = vld [vmem:[#allocation5 + $0xb00] sm:$0xff]
        %v970 = vld [vmem:[#allocation5 + $0xb08] sm:$0xff]
        %v971 = vld [vmem:[#allocation5 + $0xb10] sm:$0xff]
        %v972 = vld [vmem:[#allocation5 + $0xb18] sm:$0xff]
        %v973 = vld [vmem:[#allocation5 + $0xb20] sm:$0xff]
        %v974 = vld [vmem:[#allocation5 + $0xb28] sm:$0xff]
        %v975 = vld [vmem:[#allocation5 + $0xb30] sm:$0xff]
        %v976 = vld [vmem:[#allocation5 + $0xb38] sm:$0xff]
        %v977 = vld [vmem:[#allocation5 + $0xb40] sm:$0xff]
        %v978 = vld [vmem:[#allocation5 + $0xb48] sm:$0xff]
        %v979 = vld [vmem:[#allocation5 + $0xb50] sm:$0xff]
        %v980 = vld [vmem:[#allocation5 + $0xb58] sm:$0xff]
        %v981 = vld [vmem:[#allocation5 + $0xb60] sm:$0xff]
        %v982 = vld [vmem:[#allocation5 + $0xb68] sm:$0xff]
        %v983 = vld [vmem:[#allocation5 + $0xb70] sm:$0xff]
        %v984 = vld [vmem:[#allocation5 + $0xb78] sm:$0xff]
        %v985 = vld [vmem:[#allocation5 + $0xb80] sm:$0xff]
        %v986 = vld [vmem:[#allocation5 + $0xb88] sm:$0xff]
        %v987 = vld [vmem:[#allocation5 + $0xb90] sm:$0xff]
        %v988 = vld [vmem:[#allocation5 + $0xb98] sm:$0xff]
        %v989 = vld [vmem:[#allocation5 + $0xba0] sm:$0xff]
        %v990 = vld [vmem:[#allocation5 + $0xba8] sm:$0xff]
        %v991 = vld [vmem:[#allocation5 + $0xbb0] sm:$0xff]
        %v992 = vld [vmem:[#allocation5 + $0xbb8] sm:$0xff]
        %v993 = vld [vmem:[#allocation5 + $0xbc0] sm:$0xff]
        %v994 = vld [vmem:[#allocation5 + $0xbc8] sm:$0xff]
        %v995 = vld [vmem:[#allocation5 + $0xbd0] sm:$0xff]
        %v996 = vld [vmem:[#allocation5 + $0xbd8] sm:$0xff]
        %v997 = vld [vmem:[#allocation5 + $0xbe0] sm:$0xff]
        %v998 = vld [vmem:[#allocation5 + $0xbe8] sm:$0xff]
        %v999 = vld [vmem:[#allocation5 + $0xbf0] sm:$0xff]
        %v1000 = vld [vmem:[#allocation5 + $0xbf8] sm:$0xff]
        %v1001 = vld [vmem:[#allocation5 + $0xc00] sm:$0xff]
        %v1002 = vld [vmem:[#allocation5 + $0xc08] sm:$0xff]
        %v1003 = vld [vmem:[#allocation5 + $0xc10] sm:$0xff]
        %v1004 = vld [vmem:[#allocation5 + $0xc18] sm:$0xff]
        %v1005 = vld [vmem:[#allocation5 + $0xc20] sm:$0xff]
        %v1006 = vld [vmem:[#allocation5 + $0xc28] sm:$0xff]
        %v1007 = vld [vmem:[#allocation5 + $0xc30] sm:$0xff]
        %v1008 = vld [vmem:[#allocation5 + $0xc38] sm:$0xff]
        %v1009 = vld [vmem:[#allocation5 + $0xc40] sm:$0xff]
        %v1010 = vld [vmem:[#allocation5 + $0xc48] sm:$0xff]
        %v1011 = vld [vmem:[#allocation5 + $0xc50] sm:$0xff]
        %v1012 = vld [vmem:[#allocation5 + $0xc58] sm:$0xff]
        %v1013 = vld [vmem:[#allocation5 + $0xc60] sm:$0xff]
        %v1014 = vld [vmem:[#allocation5 + $0xc68] sm:$0xff]
        %v1015 = vld [vmem:[#allocation5 + $0xc70] sm:$0xff]
        %v1016 = vld [vmem:[#allocation5 + $0xc78] sm:$0xff]
        %v1017 = vld [vmem:[#allocation5 + $0xc80] sm:$0xff]
        %v1018 = vld [vmem:[#allocation5 + $0xc88] sm:$0xff]
        %v1019 = vld [vmem:[#allocation5 + $0xc90] sm:$0xff]
        %v1020 = vld [vmem:[#allocation5 + $0xc98] sm:$0xff]
        %v1021 = vld [vmem:[#allocation5 + $0xca0] sm:$0xff]
        %v1022 = vld [vmem:[#allocation5 + $0xca8] sm:$0xff]
        %v1023 = vld [vmem:[#allocation5 + $0xcb0] sm:$0xff]
        %v1024 = vld [vmem:[#allocation5 + $0xcb8] sm:$0xff]
        %v1025 = vld [vmem:[#allocation5 + $0xcc0] sm:$0xff]
        %v1026 = vld [vmem:[#allocation5 + $0xcc8] sm:$0xff]
        %v1027 = vld [vmem:[#allocation5 + $0xcd0] sm:$0xff]
        %v1028 = vld [vmem:[#allocation5 + $0xcd8] sm:$0xff]
        %v1029 = vld [vmem:[#allocation5 + $0xce0] sm:$0xff]
        %v1030 = vld [vmem:[#allocation5 + $0xce8] sm:$0xff]
        %v1031 = vld [vmem:[#allocation5 + $0xcf0] sm:$0xff]
        %v1032 = vld [vmem:[#allocation5 + $0xcf8] sm:$0xff]
        %v1033 = vld [vmem:[#allocation5 + $0xd00] sm:$0xff]
        %v1034 = vld [vmem:[#allocation5 + $0xd08] sm:$0xff]
        %v1035 = vld [vmem:[#allocation5 + $0xd10] sm:$0xff]
        %v1036 = vld [vmem:[#allocation5 + $0xd18] sm:$0xff]
        %v1037 = vld [vmem:[#allocation5 + $0xd20] sm:$0xff]
        %v1038 = vld [vmem:[#allocation5 + $0xd28] sm:$0xff]
        %v1039 = vld [vmem:[#allocation5 + $0xd30] sm:$0xff]
        %v1040 = vld [vmem:[#allocation5 + $0xd38] sm:$0xff]
        %v1041 = vld [vmem:[#allocation5 + $0xd40] sm:$0xff]
        %v1042 = vld [vmem:[#allocation5 + $0xd48] sm:$0xff]
        %v1043 = vld [vmem:[#allocation5 + $0xd50] sm:$0xff]
        %v1044 = vld [vmem:[#allocation5 + $0xd58] sm:$0xff]
        %v1045 = vld [vmem:[#allocation5 + $0xd60] sm:$0xff]
        %v1046 = vld [vmem:[#allocation5 + $0xd68] sm:$0xff]
        %v1047 = vld [vmem:[#allocation5 + $0xd70] sm:$0xff]
        %v1048 = vld [vmem:[#allocation5 + $0xd78] sm:$0xff]
        %v1049 = vld [vmem:[#allocation5 + $0xd80] sm:$0xff]
        %v1050 = vld [vmem:[#allocation5 + $0xd88] sm:$0xff]
        %v1051 = vld [vmem:[#allocation5 + $0xd90] sm:$0xff]
        %v1052 = vld [vmem:[#allocation5 + $0xd98] sm:$0xff]
        %v1053 = vld [vmem:[#allocation5 + $0xda0] sm:$0xff]
        %v1054 = vld [vmem:[#allocation5 + $0xda8] sm:$0xff]
        %v1055 = vld [vmem:[#allocation5 + $0xdb0] sm:$0xff]
        %v1056 = vld [vmem:[#allocation5 + $0xdb8] sm:$0xff]
        %v1057 = vld [vmem:[#allocation5 + $0xdc0] sm:$0xff]
        %v1058 = vld [vmem:[#allocation5 + $0xdc8] sm:$0xff]
        %v1059 = vld [vmem:[#allocation5 + $0xdd0] sm:$0xff]
        %v1060 = vld [vmem:[#allocation5 + $0xdd8] sm:$0xff]
        %v1061 = vld [vmem:[#allocation5 + $0xde0] sm:$0xff]
        %v1062 = vld [vmem:[#allocation5 + $0xde8] sm:$0xff]
        %v1063 = vld [vmem:[#allocation5 + $0xdf0] sm:$0xff]
        %v1064 = vld [vmem:[#allocation5 + $0xdf8] sm:$0xff]
        %v1065 = vld [vmem:[#allocation5 + $0xe00] sm:$0xff]
        %v1066 = vld [vmem:[#allocation5 + $0xe08] sm:$0xff]
        %v1067 = vld [vmem:[#allocation5 + $0xe10] sm:$0xff]
        %v1068 = vld [vmem:[#allocation5 + $0xe18] sm:$0xff]
        %v1069 = vld [vmem:[#allocation5 + $0xe20] sm:$0xff]
        %v1070 = vld [vmem:[#allocation5 + $0xe28] sm:$0xff]
        %v1071 = vld [vmem:[#allocation5 + $0xe30] sm:$0xff]
        %v1072 = vld [vmem:[#allocation5 + $0xe38] sm:$0xff]
        %v1073 = vld [vmem:[#allocation5 + $0xe40] sm:$0xff]
        %v1074 = vld [vmem:[#allocation5 + $0xe48] sm:$0xff]
        %v1075 = vld [vmem:[#allocation5 + $0xe50] sm:$0xff]
        %v1076 = vld [vmem:[#allocation5 + $0xe58] sm:$0xff]
        %v1077 = vld [vmem:[#allocation5 + $0xe60] sm:$0xff]
        %v1078 = vld [vmem:[#allocation5 + $0xe68] sm:$0xff]
        %v1079 = vld [vmem:[#allocation5 + $0xe70] sm:$0xff]
        %v1080 = vld [vmem:[#allocation5 + $0xe78] sm:$0xff]
        %v1081 = vld [vmem:[#allocation5 + $0xe80] sm:$0xff]
        %v1082 = vld [vmem:[#allocation5 + $0xe88] sm:$0xff]
        %v1083 = vld [vmem:[#allocation5 + $0xe90] sm:$0xff]
        %v1084 = vld [vmem:[#allocation5 + $0xe98] sm:$0xff]
        %v1085 = vld [vmem:[#allocation5 + $0xea0] sm:$0xff]
        %v1086 = vld [vmem:[#allocation5 + $0xea8] sm:$0xff]
        %v1087 = vld [vmem:[#allocation5 + $0xeb0] sm:$0xff]
        %v1088 = vld [vmem:[#allocation5 + $0xeb8] sm:$0xff]
        %v1089 = vld [vmem:[#allocation5 + $0xec0] sm:$0xff]
        %v1090 = vld [vmem:[#allocation5 + $0xec8] sm:$0xff]
        %v1091 = vld [vmem:[#allocation5 + $0xed0] sm:$0xff]
        %v1092 = vld [vmem:[#allocation5 + $0xed8] sm:$0xff]
        %v1093 = vld [vmem:[#allocation5 + $0xee0] sm:$0xff]
        %v1094 = vld [vmem:[#allocation5 + $0xee8] sm:$0xff]
        %v1095 = vld [vmem:[#allocation5 + $0xef0] sm:$0xff]
        %v1096 = vld [vmem:[#allocation5 + $0xef8] sm:$0xff]
        %v1097 = vld [vmem:[#allocation5 + $0xf00] sm:$0xff]
        %v1098 = vld [vmem:[#allocation5 + $0xf08] sm:$0xff]
        %v1099 = vld [vmem:[#allocation5 + $0xf10] sm:$0xff]
        %v1100 = vld [vmem:[#allocation5 + $0xf18] sm:$0xff]
        %v1101 = vld [vmem:[#allocation5 + $0xf20] sm:$0xff]
        %v1102 = vld [vmem:[#allocation5 + $0xf28] sm:$0xff]
        %v1103 = vld [vmem:[#allocation5 + $0xf30] sm:$0xff]
        %v1104 = vld [vmem:[#allocation5 + $0xf38] sm:$0xff]
        %v1105 = vld [vmem:[#allocation5 + $0xf40] sm:$0xff]
        %v1106 = vld [vmem:[#allocation5 + $0xf48] sm:$0xff]
        %v1107 = vld [vmem:[#allocation5 + $0xf50] sm:$0xff]
        %v1108 = vld [vmem:[#allocation5 + $0xf58] sm:$0xff]
        %v1109 = vld [vmem:[#allocation5 + $0xf60] sm:$0xff]
        %v1110 = vld [vmem:[#allocation5 + $0xf68] sm:$0xff]
        %v1111 = vld [vmem:[#allocation5 + $0xf70] sm:$0xff]
        %v1112 = vld [vmem:[#allocation5 + $0xf78] sm:$0xff]
        %v1113 = vld [vmem:[#allocation5 + $0xf80] sm:$0xff]
        %v1114 = vld [vmem:[#allocation5 + $0xf88] sm:$0xff]
        %v1115 = vld [vmem:[#allocation5 + $0xf90] sm:$0xff]
        %v1116 = vld [vmem:[#allocation5 + $0xf98] sm:$0xff]
        %v1117 = vld [vmem:[#allocation5 + $0xfa0] sm:$0xff]
        %v1118 = vld [vmem:[#allocation5 + $0xfa8] sm:$0xff]
        %v1119 = vld [vmem:[#allocation5 + $0xfb0] sm:$0xff]
        %v1120 = vld [vmem:[#allocation5 + $0xfb8] sm:$0xff]
        %v1121 = vld [vmem:[#allocation5 + $0xfc0] sm:$0xff]
        %v1122 = vld [vmem:[#allocation5 + $0xfc8] sm:$0xff]
        %v1123 = vld [vmem:[#allocation5 + $0xfd0] sm:$0xff]
        %v1124 = vld [vmem:[#allocation5 + $0xfd8] sm:$0xff]
        %v1125 = vld [vmem:[#allocation5 + $0xfe0] sm:$0xff]
        %v1126 = vld [vmem:[#allocation5 + $0xfe8] sm:$0xff]
        %v1127 = vld [vmem:[#allocation5 + $0xff0] sm:$0xff]
        %v1128 = vld [vmem:[#allocation5 + $0xff8] sm:$0xff]
        %v1129 = vld [vmem:[#allocation7] sm:$0xff]
        %v1131 = vlaneseq
        %v1132 = vshrl.u32 %v1131, 7
        %v1133 = vsub.s32 0, %v1132
        %v1134 = vrot.slane %v1129, %v1133
        %v1135 = vlaneseq
        %v1136 = vshrl.u32 %v1135, 7
        %v1137 = vsub.s32 1, %v1136
        %v1138 = vrot.slane %v1129, %v1137
        %v1139 = vlaneseq
        %v1140 = vshrl.u32 %v1139, 7
        %v1141 = vsub.s32 2, %v1140
        %v1142 = vrot.slane %v1129, %v1141
        %v1143 = vlaneseq
        %v1144 = vshrl.u32 %v1143, 7
        %v1145 = vsub.s32 3, %v1144
        %v1146 = vrot.slane %v1129, %v1145
        %v1147 = vlaneseq
        %v1148 = vshrl.u32 %v1147, 7
        %v1149 = vsub.s32 4, %v1148
        %v1150 = vrot.slane %v1129, %v1149
        %v1151 = vlaneseq
        %v1152 = vshrl.u32 %v1151, 7
        %v1153 = vsub.s32 5, %v1152
        %v1154 = vrot.slane %v1129, %v1153
        %v1155 = vlaneseq
        %v1156 = vshrl.u32 %v1155, 7
        %v1157 = vsub.s32 6, %v1156
        %v1158 = vrot.slane %v1129, %v1157
        %v1159 = vlaneseq
        %v1160 = vshrl.u32 %v1159, 7
        %v1161 = vsub.s32 7, %v1160
        %v1162 = vrot.slane %v1129, %v1161
        %v1171 = vld [vmem:[%s382] sm:$0xff]
        %s1172 = scalar_lea.vmem %s382, 8 [#allocation8]
        %v1173 = vld [vmem:[%s1172] sm:$0xff]
        %v1174 = vld [vmem:[%s391] sm:$0xff]
        %s1175 = scalar_lea.vmem %s391, 8 [#allocation10]
        %v1176 = vld [vmem:[%s1175] sm:$0xff]
        %1177 = vmatprep.subr.mxu0 %v618
        %1178 = vmatpush1.msra.mxu0 %v617
        %1179 = vmatprep.subr.mxu0 %v626
        %1180 = vmatpush1.msra.mxu0 %v625
        %1181 = vmatprep.subr.mxu0 %v634
        %1182 = vmatpush1.msra.mxu0 %v633
        %1183 = vmatprep.subr.mxu0 %v642
        %1184 = vmatpush1.msra.mxu0 %v641
        %1185 = vmatprep.subr.mxu0 %v650
        %1186 = vmatpush1.msra.mxu0 %v649
        %1187 = vmatprep.subr.mxu0 %v658
        %1188 = vmatpush1.msra.mxu0 %v657
        %1189 = vmatprep.subr.mxu0 %v666
        %1190 = vmatpush1.msra.mxu0 %v665
        %1191 = vmatprep.subr.mxu0 %v674
        %1192 = vmatpush1.msra.mxu0 %v673
        %1193 = vmatprep.subr.mxu0 %v682
        %1194 = vmatpush1.msra.mxu0 %v681
        %1195 = vmatprep.subr.mxu0 %v690
        %1196 = vmatpush1.msra.mxu0 %v689
        %1197 = vmatprep.subr.mxu0 %v698
        %1198 = vmatpush1.msra.mxu0 %v697
        %1199 = vmatprep.subr.mxu0 %v706
        %1200 = vmatpush1.msra.mxu0 %v705
        %1201 = vmatprep.subr.mxu0 %v714
        %1202 = vmatpush1.msra.mxu0 %v713
        %1203 = vmatprep.subr.mxu0 %v722
        %1204 = vmatpush1.msra.mxu0 %v721
        %1205 = vmatprep.subr.mxu0 %v730
        %1206 = vmatpush1.msra.mxu0 %v729
        %1207 = vmatprep.subr.mxu0 %v738
        %1208 = vmatpush1.msra.mxu0 %v737
        %1209 = vmatprep.subr.mxu0 %v746
        %1210 = vmatpush1.msra.mxu0 %v745
        %1211 = vmatprep.subr.mxu0 %v754
        %1212 = vmatpush1.msra.mxu0 %v753
        %1213 = vmatprep.subr.mxu0 %v762
        %1214 = vmatpush1.msra.mxu0 %v761
        %1215 = vmatprep.subr.mxu0 %v770
        %1216 = vmatpush1.msra.mxu0 %v769
        %1217 = vmatprep.subr.mxu0 %v778
        %1218 = vmatpush1.msra.mxu0 %v777
        %1219 = vmatprep.subr.mxu0 %v786
        %1220 = vmatpush1.msra.mxu0 %v785
        %1221 = vmatprep.subr.mxu0 %v794
        %1222 = vmatpush1.msra.mxu0 %v793
        %1223 = vmatprep.subr.mxu0 %v802
        %1224 = vmatpush1.msra.mxu0 %v801
        %1225 = vmatprep.subr.mxu0 %v810
        %1226 = vmatpush1.msra.mxu0 %v809
        %1227 = vmatprep.subr.mxu0 %v818
        %1228 = vmatpush1.msra.mxu0 %v817
        %1229 = vmatprep.subr.mxu0 %v826
        %1230 = vmatpush1.msra.mxu0 %v825
        %1231 = vmatprep.subr.mxu0 %v834
        %1232 = vmatpush1.msra.mxu0 %v833
        %1233 = vmatprep.subr.mxu0 %v842
        %1234 = vmatpush1.msra.mxu0 %v841
        %1235 = vmatprep.subr.mxu0 %v850
        %1236 = vmatpush1.msra.mxu0 %v849
        %1237 = vmatprep.subr.mxu0 %v858
        %1238 = vmatpush1.msra.mxu0 %v857
        %1239 = vmatprep.subr.mxu0 %v866
        %1240 = vmatpush1.msra.mxu0 %v865
        %1241 = vmatprep.mubr.f32.mxu0 %v1171
        %1242 = vmatmul.mubr.f32.gmra.mrb[0].mxu0 %v579
        %v1243 = vpop.f32.mrb[0].mxu0
        %v1244 = vadd.f32 %v1134, %v1243
        %v1245 = vpop.f32.mrb[0].mxu0
        %v1246 = vadd.f32 %v1138, %v1245
        %1247 = vdwg.mxu0
        %1248 = vmatprep.subr.mxu0 %v874
        %1249 = vmatpush1.msra.mxu0 %v873
        %1250 = vmatprep.subr.mxu0 %v882
        %1251 = vmatpush1.msra.mxu0 %v881
        %1252 = vmatprep.subr.mxu0 %v890
        %1253 = vmatpush1.msra.mxu0 %v889
        %1254 = vmatprep.subr.mxu0 %v898
        %1255 = vmatpush1.msra.mxu0 %v897
        %1256 = vmatprep.subr.mxu0 %v906
        %1257 = vmatpush1.msra.mxu0 %v905
        %1258 = vmatprep.subr.mxu0 %v914
        %1259 = vmatpush1.msra.mxu0 %v913
        %1260 = vmatprep.subr.mxu0 %v922
        %1261 = vmatpush1.msra.mxu0 %v921
        %1262 = vmatprep.subr.mxu0 %v930
        %1263 = vmatpush1.msra.mxu0 %v929
        %1264 = vmatprep.subr.mxu0 %v938
        %1265 = vmatpush1.msra.mxu0 %v937
        %1266 = vmatprep.subr.mxu0 %v946
        %1267 = vmatpush1.msra.mxu0 %v945
        %1268 = vmatprep.subr.mxu0 %v954
        %1269 = vmatpush1.msra.mxu0 %v953
        %1270 = vmatprep.subr.mxu0 %v962
        %1271 = vmatpush1.msra.mxu0 %v961
        %1272 = vmatprep.subr.mxu0 %v970
        %1273 = vmatpush1.msra.mxu0 %v969
        %1274 = vmatprep.subr.mxu0 %v978
        %1275 = vmatpush1.msra.mxu0 %v977
        %1276 = vmatprep.subr.mxu0 %v986
        %1277 = vmatpush1.msra.mxu0 %v985
        %1278 = vmatprep.subr.mxu0 %v994
        %1279 = vmatpush1.msra.mxu0 %v993
        %1280 = vmatprep.subr.mxu0 %v1002
        %1281 = vmatpush1.msra.mxu0 %v1001
        %1282 = vmatprep.subr.mxu0 %v1010
        %1283 = vmatpush1.msra.mxu0 %v1009
        %1284 = vmatprep.subr.mxu0 %v1018
        %1285 = vmatpush1.msra.mxu0 %v1017
        %1286 = vmatprep.subr.mxu0 %v1026
        %1287 = vmatpush1.msra.mxu0 %v1025
        %1288 = vmatprep.subr.mxu0 %v1034
        %1289 = vmatpush1.msra.mxu0 %v1033
        %1290 = vmatprep.subr.mxu0 %v1042
        %1291 = vmatpush1.msra.mxu0 %v1041
        %1292 = vmatprep.subr.mxu0 %v1050
        %1293 = vmatpush1.msra.mxu0 %v1049
        %1294 = vmatprep.subr.mxu0 %v1058
        %1295 = vmatpush1.msra.mxu0 %v1057
        %1296 = vmatprep.subr.mxu0 %v1066
        %1297 = vmatpush1.msra.mxu0 %v1065
        %1298 = vmatprep.subr.mxu0 %v1074
        %1299 = vmatpush1.msra.mxu0 %v1073
        %1300 = vmatprep.subr.mxu0 %v1082
        %1301 = vmatpush1.msra.mxu0 %v1081
        %1302 = vmatprep.subr.mxu0 %v1090
        %1303 = vmatpush1.msra.mxu0 %v1089
        %1304 = vmatprep.subr.mxu0 %v1098
        %1305 = vmatpush1.msra.mxu0 %v1097
        %1306 = vmatprep.subr.mxu0 %v1106
        %1307 = vmatpush1.msra.mxu0 %v1105
        %1308 = vmatprep.subr.mxu0 %v1114
        %1309 = vmatpush1.msra.mxu0 %v1113
        %1310 = vmatprep.subr.mxu0 %v1122
        %1311 = vmatpush1.msra.mxu0 %v1121
        %1312 = vmatprep.mubr.f32.mxu0 %v1173
        %1313 = vmatmul.mubr.f32.gmra.mrb[0].mxu0 0.0
        %v1314 = vpop.f32.mrb[0].mxu0
        %v1315 = vadd.f32 %v1244, %v1314
        %v1316 = vpop.f32.mrb[0].mxu0
        %v1317 = vadd.f32 %v1246, %v1316
        %1318 = vdwg.mxu0
        %1319 = vmatprep.subr.mxu0 %v620
        %1320 = vmatpush1.msra.mxu0 %v619
        %1321 = vmatprep.subr.mxu0 %v628
        %1322 = vmatpush1.msra.mxu0 %v627
        %1323 = vmatprep.subr.mxu0 %v636
        %1324 = vmatpush1.msra.mxu0 %v635
        %1325 = vmatprep.subr.mxu0 %v644
        %1326 = vmatpush1.msra.mxu0 %v643
        %1327 = vmatprep.subr.mxu0 %v652
        %1328 = vmatpush1.msra.mxu0 %v651
        %1329 = vmatprep.subr.mxu0 %v660
        %1330 = vmatpush1.msra.mxu0 %v659
        %1331 = vmatprep.subr.mxu0 %v668
        %1332 = vmatpush1.msra.mxu0 %v667
        %1333 = vmatprep.subr.mxu0 %v676
        %1334 = vmatpush1.msra.mxu0 %v675
        %1335 = vmatprep.subr.mxu0 %v684
        %1336 = vmatpush1.msra.mxu0 %v683
        %1337 = vmatprep.subr.mxu0 %v692
        %1338 = vmatpush1.msra.mxu0 %v691
        %1339 = vmatprep.subr.mxu0 %v700
        %1340 = vmatpush1.msra.mxu0 %v699
        %1341 = vmatprep.subr.mxu0 %v708
        %1342 = vmatpush1.msra.mxu0 %v707
        %1343 = vmatprep.subr.mxu0 %v716
        %1344 = vmatpush1.msra.mxu0 %v715
        %1345 = vmatprep.subr.mxu0 %v724
        %1346 = vmatpush1.msra.mxu0 %v723
        %1347 = vmatprep.subr.mxu0 %v732
        %1348 = vmatpush1.msra.mxu0 %v731
        %1349 = vmatprep.subr.mxu0 %v740
        %1350 = vmatpush1.msra.mxu0 %v739
        %1351 = vmatprep.subr.mxu0 %v748
        %1352 = vmatpush1.msra.mxu0 %v747
        %1353 = vmatprep.subr.mxu0 %v756
        %1354 = vmatpush1.msra.mxu0 %v755
        %1355 = vmatprep.subr.mxu0 %v764
        %1356 = vmatpush1.msra.mxu0 %v763
        %1357 = vmatprep.subr.mxu0 %v772
        %1358 = vmatpush1.msra.mxu0 %v771
        %1359 = vmatprep.subr.mxu0 %v780
        %1360 = vmatpush1.msra.mxu0 %v779
        %1361 = vmatprep.subr.mxu0 %v788
        %1362 = vmatpush1.msra.mxu0 %v787
        %1363 = vmatprep.subr.mxu0 %v796
        %1364 = vmatpush1.msra.mxu0 %v795
        %1365 = vmatprep.subr.mxu0 %v804
        %1366 = vmatpush1.msra.mxu0 %v803
        %1367 = vmatprep.subr.mxu0 %v812
        %1368 = vmatpush1.msra.mxu0 %v811
        %1369 = vmatprep.subr.mxu0 %v820
        %1370 = vmatpush1.msra.mxu0 %v819
        %1371 = vmatprep.subr.mxu0 %v828
        %1372 = vmatpush1.msra.mxu0 %v827
        %1373 = vmatprep.subr.mxu0 %v836
        %1374 = vmatpush1.msra.mxu0 %v835
        %1375 = vmatprep.subr.mxu0 %v844
        %1376 = vmatpush1.msra.mxu0 %v843
        %1377 = vmatprep.subr.mxu0 %v852
        %1378 = vmatpush1.msra.mxu0 %v851
        %1379 = vmatprep.subr.mxu0 %v860
        %1380 = vmatpush1.msra.mxu0 %v859
        %1381 = vmatprep.subr.mxu0 %v868
        %1382 = vmatpush1.msra.mxu0 %v867
        %1383 = vmatprep.mubr.f32.mxu0 %v1171
        %1384 = vmatmul.mubr.f32.gmra.mrb[0].mxu0 %v579
        %v1385 = vpop.f32.mrb[0].mxu0
        %v1386 = vadd.f32 %v1142, %v1385
        %v1387 = vpop.f32.mrb[0].mxu0
        %v1388 = vadd.f32 %v1146, %v1387
        %1389 = vdwg.mxu0
        %1390 = vmatprep.subr.mxu0 %v876
        %1391 = vmatpush1.msra.mxu0 %v875
        %1392 = vmatprep.subr.mxu0 %v884
        %1393 = vmatpush1.msra.mxu0 %v883
        %1394 = vmatprep.subr.mxu0 %v892
        %1395 = vmatpush1.msra.mxu0 %v891
        %1396 = vmatprep.subr.mxu0 %v900
        %1397 = vmatpush1.msra.mxu0 %v899
        %1398 = vmatprep.subr.mxu0 %v908
        %1399 = vmatpush1.msra.mxu0 %v907
        %1400 = vmatprep.subr.mxu0 %v916
        %1401 = vmatpush1.msra.mxu0 %v915
        %1402 = vmatprep.subr.mxu0 %v924
        %1403 = vmatpush1.msra.mxu0 %v923
        %1404 = vmatprep.subr.mxu0 %v932
        %1405 = vmatpush1.msra.mxu0 %v931
        %1406 = vmatprep.subr.mxu0 %v940
        %1407 = vmatpush1.msra.mxu0 %v939
        %1408 = vmatprep.subr.mxu0 %v948
        %1409 = vmatpush1.msra.mxu0 %v947
        %1410 = vmatprep.subr.mxu0 %v956
        %1411 = vmatpush1.msra.mxu0 %v955
        %1412 = vmatprep.subr.mxu0 %v964
        %1413 = vmatpush1.msra.mxu0 %v963
        %1414 = vmatprep.subr.mxu0 %v972
        %1415 = vmatpush1.msra.mxu0 %v971
        %1416 = vmatprep.subr.mxu0 %v980
        %1417 = vmatpush1.msra.mxu0 %v979
        %1418 = vmatprep.subr.mxu0 %v988
        %1419 = vmatpush1.msra.mxu0 %v987
        %1420 = vmatprep.subr.mxu0 %v996
        %1421 = vmatpush1.msra.mxu0 %v995
        %1422 = vmatprep.subr.mxu0 %v1004
        %1423 = vmatpush1.msra.mxu0 %v1003
        %1424 = vmatprep.subr.mxu0 %v1012
        %1425 = vmatpush1.msra.mxu0 %v1011
        %1426 = vmatprep.subr.mxu0 %v1020
        %1427 = vmatpush1.msra.mxu0 %v1019
        %1428 = vmatprep.subr.mxu0 %v1028
        %1429 = vmatpush1.msra.mxu0 %v1027
        %1430 = vmatprep.subr.mxu0 %v1036
        %1431 = vmatpush1.msra.mxu0 %v1035
        %1432 = vmatprep.subr.mxu0 %v1044
        %1433 = vmatpush1.msra.mxu0 %v1043
        %1434 = vmatprep.subr.mxu0 %v1052
        %1435 = vmatpush1.msra.mxu0 %v1051
        %1436 = vmatprep.subr.mxu0 %v1060
        %1437 = vmatpush1.msra.mxu0 %v1059
        %1438 = vmatprep.subr.mxu0 %v1068
        %1439 = vmatpush1.msra.mxu0 %v1067
        %1440 = vmatprep.subr.mxu0 %v1076
        %1441 = vmatpush1.msra.mxu0 %v1075
        %1442 = vmatprep.subr.mxu0 %v1084
        %1443 = vmatpush1.msra.mxu0 %v1083
        %1444 = vmatprep.subr.mxu0 %v1092
        %1445 = vmatpush1.msra.mxu0 %v1091
        %1446 = vmatprep.subr.mxu0 %v1100
        %1447 = vmatpush1.msra.mxu0 %v1099
        %1448 = vmatprep.subr.mxu0 %v1108
        %1449 = vmatpush1.msra.mxu0 %v1107
        %1450 = vmatprep.subr.mxu0 %v1116
        %1451 = vmatpush1.msra.mxu0 %v1115
        %1452 = vmatprep.subr.mxu0 %v1124
        %1453 = vmatpush1.msra.mxu0 %v1123
        %1454 = vmatprep.mubr.f32.mxu0 %v1173
        %1455 = vmatmul.mubr.f32.gmra.mrb[0].mxu0 0.0
        %v1456 = vpop.f32.mrb[0].mxu0
        %v1457 = vadd.f32 %v1386, %v1456
        %v1458 = vpop.f32.mrb[0].mxu0
        %v1459 = vadd.f32 %v1388, %v1458
        %1460 = vdwg.mxu0
        %v1461 = vxor.u32 %v1315, 2147483648
        %v1462 = vxor.u32 %v1317, 2147483648
        %v1463 = vxor.u32 %v1459, 2147483648
        %v1464 = vmul.f32 %v1461, 1.442695
        %v1465 = vpow.pop %v1464
        %v1466 = vmul.f32 %v1462, 1.442695
        %v1467 = vpow.pop %v1466
        %v1468 = vmul.f32 %v1463, 1.442695
        %v1469 = vpow.pop %v1468
        %v1470 = vadd.f32 %v1465, 1.0
        %v1471 = vadd.f32 %v1467, 1.0
        %v1472 = vadd.f32 %v1469, 1.0
        %v1473 = vrcp.pop %v1470
        %v1474 = vmul.f32 1.0, %v1473
        %v1475 = vrcp.pop %v1471
        %v1476 = vmul.f32 1.0, %v1475
        %v1477 = vrcp.pop %v1472
        %v1478 = vmul.f32 1.0, %v1477
        %v1479 = vtanh.pop %v1457
        %v1480 = vmul.f32 %v1476, %v1174
        %v1481 = vmul.f32 %v1474, %v1479
        %v1482 = vadd.f32 %v1480, %v1481
        %v1483 = vtanh.pop %v1482
        %v1484 = vmul.f32 %v1478, %v1483
        %1485 = vmatprep.subr.mxu0 %v618
        %1486 = vmatpush1.msra.mxu0 %v617
        %1487 = vmatprep.subr.mxu0 %v626
        %1488 = vmatpush1.msra.mxu0 %v625
        %1489 = vmatprep.subr.mxu0 %v634
        %1490 = vmatpush1.msra.mxu0 %v633
        %1491 = vmatprep.subr.mxu0 %v642
        %1492 = vmatpush1.msra.mxu0 %v641
        %1493 = vmatprep.subr.mxu0 %v650
        %1494 = vmatpush1.msra.mxu0 %v649
        %1495 = vmatprep.subr.mxu0 %v658
        %1496 = vmatpush1.msra.mxu0 %v657
        %1497 = vmatprep.subr.mxu0 %v666
        %1498 = vmatpush1.msra.mxu0 %v665
        %1499 = vmatprep.subr.mxu0 %v674
        %1500 = vmatpush1.msra.mxu0 %v673
        %1501 = vmatprep.subr.mxu0 %v682
        %1502 = vmatpush1.msra.mxu0 %v681
        %1503 = vmatprep.subr.mxu0 %v690
        %1504 = vmatpush1.msra.mxu0 %v689
        %1505 = vmatprep.subr.mxu0 %v698
        %1506 = vmatpush1.msra.mxu0 %v697
        %1507 = vmatprep.subr.mxu0 %v706
        %1508 = vmatpush1.msra.mxu0 %v705
        %1509 = vmatprep.subr.mxu0 %v714
        %1510 = vmatpush1.msra.mxu0 %v713
        %1511 = vmatprep.subr.mxu0 %v722
        %1512 = vmatpush1.msra.mxu0 %v721
        %1513 = vmatprep.subr.mxu0 %v730
        %1514 = vmatpush1.msra.mxu0 %v729
        %1515 = vmatprep.subr.mxu0 %v738
        %1516 = vmatpush1.msra.mxu0 %v737
        %1517 = vmatprep.subr.mxu0 %v746
        %1518 = vmatpush1.msra.mxu0 %v745
        %1519 = vmatprep.subr.mxu0 %v754
        %1520 = vmatpush1.msra.mxu0 %v753
        %1521 = vmatprep.subr.mxu0 %v762
        %1522 = vmatpush1.msra.mxu0 %v761
        %1523 = vmatprep.subr.mxu0 %v770
        %1524 = vmatpush1.msra.mxu0 %v769
        %1525 = vmatprep.subr.mxu0 %v778
        %1526 = vmatpush1.msra.mxu0 %v777
        %1527 = vmatprep.subr.mxu0 %v786
        %1528 = vmatpush1.msra.mxu0 %v785
        %1529 = vmatprep.subr.mxu0 %v794
        %1530 = vmatpush1.msra.mxu0 %v793
        %1531 = vmatprep.subr.mxu0 %v802
        %1532 = vmatpush1.msra.mxu0 %v801
        %1533 = vmatprep.subr.mxu0 %v810
        %1534 = vmatpush1.msra.mxu0 %v809
        %1535 = vmatprep.subr.mxu0 %v818
        %1536 = vmatpush1.msra.mxu0 %v817
        %1537 = vmatprep.subr.mxu0 %v826
        %1538 = vmatpush1.msra.mxu0 %v825
        %1539 = vmatprep.subr.mxu0 %v834
        %1540 = vmatpush1.msra.mxu0 %v833
        %1541 = vmatprep.subr.mxu0 %v842
        %1542 = vmatpush1.msra.mxu0 %v841
        %1543 = vmatprep.subr.mxu0 %v850
        %1544 = vmatpush1.msra.mxu0 %v849
        %1545 = vmatprep.subr.mxu0 %v858
        %1546 = vmatpush1.msra.mxu0 %v857
        %1547 = vmatprep.subr.mxu0 %v866
        %1548 = vmatpush1.msra.mxu0 %v865
        %1549 = vmatprep.mubr.f32.mxu0 %v1484
        %1550 = vmatmul.mubr.f32.gmra.mrb[0].mxu0 %v584
        %v1551 = vpop.f32.mrb[0].mxu0
        %v1552 = vadd.f32 %v1134, %v1551
        %v1553 = vpop.f32.mrb[0].mxu0
        %v1554 = vadd.f32 %v1138, %v1553
        %1555 = vdwg.mxu0
        %1556 = vmatprep.subr.mxu0 %v874
        %1557 = vmatpush1.msra.mxu0 %v873
        %1558 = vmatprep.subr.mxu0 %v882
        %1559 = vmatpush1.msra.mxu0 %v881
        %1560 = vmatprep.subr.mxu0 %v890
        %1561 = vmatpush1.msra.mxu0 %v889
        %1562 = vmatprep.subr.mxu0 %v898
        %1563 = vmatpush1.msra.mxu0 %v897
        %1564 = vmatprep.subr.mxu0 %v906
        %1565 = vmatpush1.msra.mxu0 %v905
        %1566 = vmatprep.subr.mxu0 %v914
        %1567 = vmatpush1.msra.mxu0 %v913
        %1568 = vmatprep.subr.mxu0 %v922
        %1569 = vmatpush1.msra.mxu0 %v921
        %1570 = vmatprep.subr.mxu0 %v930
        %1571 = vmatpush1.msra.mxu0 %v929
        %1572 = vmatprep.subr.mxu0 %v938
        %1573 = vmatpush1.msra.mxu0 %v937
        %1574 = vmatprep.subr.mxu0 %v946
        %1575 = vmatpush1.msra.mxu0 %v945
        %1576 = vmatprep.subr.mxu0 %v954
        %1577 = vmatpush1.msra.mxu0 %v953
        %1578 = vmatprep.subr.mxu0 %v962
        %1579 = vmatpush1.msra.mxu0 %v961
        %1580 = vmatprep.subr.mxu0 %v970
        %1581 = vmatpush1.msra.mxu0 %v969
        %1582 = vmatprep.subr.mxu0 %v978
        %1583 = vmatpush1.msra.mxu0 %v977
        %1584 = vmatprep.subr.mxu0 %v986
        %1585 = vmatpush1.msra.mxu0 %v985
        %1586 = vmatprep.subr.mxu0 %v994
        %1587 = vmatpush1.msra.mxu0 %v993
        %1588 = vmatprep.subr.mxu0 %v1002
        %1589 = vmatpush1.msra.mxu0 %v1001
        %1590 = vmatprep.subr.mxu0 %v1010
        %1591 = vmatpush1.msra.mxu0 %v1009
        %1592 = vmatprep.subr.mxu0 %v1018
        %1593 = vmatpush1.msra.mxu0 %v1017
        %1594 = vmatprep.subr.mxu0 %v1026
        %1595 = vmatpush1.msra.mxu0 %v1025
        %1596 = vmatprep.subr.mxu0 %v1034
        %1597 = vmatpush1.msra.mxu0 %v1033
        %1598 = vmatprep.subr.mxu0 %v1042
        %1599 = vmatpush1.msra.mxu0 %v1041
        %1600 = vmatprep.subr.mxu0 %v1050
        %1601 = vmatpush1.msra.mxu0 %v1049
        %1602 = vmatprep.subr.mxu0 %v1058
        %1603 = vmatpush1.msra.mxu0 %v1057
        %1604 = vmatprep.subr.mxu0 %v1066
        %1605 = vmatpush1.msra.mxu0 %v1065
        %1606 = vmatprep.subr.mxu0 %v1074
        %1607 = vmatpush1.msra.mxu0 %v1073
        %1608 = vmatprep.subr.mxu0 %v1082
        %1609 = vmatpush1.msra.mxu0 %v1081
        %1610 = vmatprep.subr.mxu0 %v1090
        %1611 = vmatpush1.msra.mxu0 %v1089
        %1612 = vmatprep.subr.mxu0 %v1098
        %1613 = vmatpush1.msra.mxu0 %v1097
        %1614 = vmatprep.subr.mxu0 %v1106
        %1615 = vmatpush1.msra.mxu0 %v1105
        %1616 = vmatprep.subr.mxu0 %v1114
        %1617 = vmatpush1.msra.mxu0 %v1113
        %1618 = vmatprep.subr.mxu0 %v1122
        %1619 = vmatpush1.msra.mxu0 %v1121
        %1620 = vmatprep.mubr.f32.mxu0 %v1173
        %1621 = vmatmul.mubr.f32.gmra.mrb[0].mxu0 %v1484
        %v1622 = vpop.f32.mrb[0].mxu0
        %v1623 = vadd.f32 %v1552, %v1622
        %v1624 = vpop.f32.mrb[0].mxu0
        %v1625 = vadd.f32 %v1554, %v1624
        %1626 = vdwg.mxu0
        %1627 = vmatprep.subr.mxu0 %v620
        %1628 = vmatpush1.msra.mxu0 %v619
        %1629 = vmatprep.subr.mxu0 %v628
        %1630 = vmatpush1.msra.mxu0 %v627
        %1631 = vmatprep.subr.mxu0 %v636
        %1632 = vmatpush1.msra.mxu0 %v635
        %1633 = vmatprep.subr.mxu0 %v644
        %1634 = vmatpush1.msra.mxu0 %v643
        %1635 = vmatprep.subr.mxu0 %v652
        %1636 = vmatpush1.msra.mxu0 %v651
        %1637 = vmatprep.subr.mxu0 %v660
        %1638 = vmatpush1.msra.mxu0 %v659
        %1639 = vmatprep.subr.mxu0 %v668
        %1640 = vmatpush1.msra.mxu0 %v667
        %1641 = vmatprep.subr.mxu0 %v676
        %1642 = vmatpush1.msra.mxu0 %v675
        %1643 = vmatprep.subr.mxu0 %v684
        %1644 = vmatpush1.msra.mxu0 %v683
        %1645 = vmatprep.subr.mxu0 %v692
        %1646 = vmatpush1.msra.mxu0 %v691
        %1647 = vmatprep.subr.mxu0 %v700
        %1648 = vmatpush1.msra.mxu0 %v699
        %1649 = vmatprep.subr.mxu0 %v708
        %1650 = vmatpush1.msra.mxu0 %v707
        %1651 = vmatprep.subr.mxu0 %v716
        %1652 = vmatpush1.msra.mxu0 %v715
        %1653 = vmatprep.subr.mxu0 %v724
        %1654 = vmatpush1.msra.mxu0 %v723
        %1655 = vmatprep.subr.mxu0 %v732
        %1656 = vmatpush1.msra.mxu0 %v731
        %1657 = vmatprep.subr.mxu0 %v740
        %1658 = vmatpush1.msra.mxu0 %v739
        %1659 = vmatprep.subr.mxu0 %v748
        %1660 = vmatpush1.msra.mxu0 %v747
        %1661 = vmatprep.subr.mxu0 %v756
        %1662 = vmatpush1.msra.mxu0 %v755
        %1663 = vmatprep.subr.mxu0 %v764
        %1664 = vmatpush1.msra.mxu0 %v763
        %1665 = vmatprep.subr.mxu0 %v772
        %1666 = vmatpush1.msra.mxu0 %v771
        %1667 = vmatprep.subr.mxu0 %v780
        %1668 = vmatpush1.msra.mxu0 %v779
        %1669 = vmatprep.subr.mxu0 %v788
        %1670 = vmatpush1.msra.mxu0 %v787
        %1671 = vmatprep.subr.mxu0 %v796
        %1672 = vmatpush1.msra.mxu0 %v795
        %1673 = vmatprep.subr.mxu0 %v804
        %1674 = vmatpush1.msra.mxu0 %v803
        %1675 = vmatprep.subr.mxu0 %v812
        %1676 = vmatpush1.msra.mxu0 %v811
        %1677 = vmatprep.subr.mxu0 %v820
        %1678 = vmatpush1.msra.mxu0 %v819
        %1679 = vmatprep.subr.mxu0 %v828
        %1680 = vmatpush1.msra.mxu0 %v827
        %1681 = vmatprep.subr.mxu0 %v836
        %1682 = vmatpush1.msra.mxu0 %v835
        %1683 = vmatprep.subr.mxu0 %v844
        %1684 = vmatpush1.msra.mxu0 %v843
        %1685 = vmatprep.subr.mxu0 %v852
        %1686 = vmatpush1.msra.mxu0 %v851
        %1687 = vmatprep.subr.mxu0 %v860
        %1688 = vmatpush1.msra.mxu0 %v859
        %1689 = vmatprep.subr.mxu0 %v868
        %1690 = vmatpush1.msra.mxu0 %v867
        %1691 = vmatprep.mubr.f32.mxu0 %v1484
        %1692 = vmatmul.mubr.f32.gmra.mrb[0].mxu0 %v584
        %v1693 = vpop.f32.mrb[0].mxu0
        %v1694 = vadd.f32 %v1142, %v1693
        %v1695 = vpop.f32.mrb[0].mxu0
        %v1696 = vadd.f32 %v1146, %v1695
        %1697 = vdwg.mxu0
        %1698 = vmatprep.subr.mxu0 %v876
        %1699 = vmatpush1.msra.mxu0 %v875
        %1700 = vmatprep.subr.mxu0 %v884
        %1701 = vmatpush1.msra.mxu0 %v883
        %1702 = vmatprep.subr.mxu0 %v892
        %1703 = vmatpush1.msra.mxu0 %v891
        %1704 = vmatprep.subr.mxu0 %v900
        %1705 = vmatpush1.msra.mxu0 %v899
        %1706 = vmatprep.subr.mxu0 %v908
        %1707 = vmatpush1.msra.mxu0 %v907
        %1708 = vmatprep.subr.mxu0 %v916
        %1709 = vmatpush1.msra.mxu0 %v915
        %1710 = vmatprep.subr.mxu0 %v924
        %1711 = vmatpush1.msra.mxu0 %v923
        %1712 = vmatprep.subr.mxu0 %v932
        %1713 = vmatpush1.msra.mxu0 %v931
        %1714 = vmatprep.subr.mxu0 %v940
        %1715 = vmatpush1.msra.mxu0 %v939
        %1716 = vmatprep.subr.mxu0 %v948
        %1717 = vmatpush1.msra.mxu0 %v947
        %1718 = vmatprep.subr.mxu0 %v956
        %1719 = vmatpush1.msra.mxu0 %v955
        %1720 = vmatprep.subr.mxu0 %v964
        %1721 = vmatpush1.msra.mxu0 %v963
        %1722 = vmatprep.subr.mxu0 %v972
        %1723 = vmatpush1.msra.mxu0 %v971
        %1724 = vmatprep.subr.mxu0 %v980
        %1725 = vmatpush1.msra.mxu0 %v979
        %1726 = vmatprep.subr.mxu0 %v988
        %1727 = vmatpush1.msra.mxu0 %v987
        %1728 = vmatprep.subr.mxu0 %v996
        %1729 = vmatpush1.msra.mxu0 %v995
        %1730 = vmatprep.subr.mxu0 %v1004
        %1731 = vmatpush1.msra.mxu0 %v1003
        %1732 = vmatprep.subr.mxu0 %v1012
        %1733 = vmatpush1.msra.mxu0 %v1011
        %1734 = vmatprep.subr.mxu0 %v1020
        %1735 = vmatpush1.msra.mxu0 %v1019
        %1736 = vmatprep.subr.mxu0 %v1028
        %1737 = vmatpush1.msra.mxu0 %v1027
        %1738 = vmatprep.subr.mxu0 %v1036
        %1739 = vmatpush1.msra.mxu0 %v1035
        %1740 = vmatprep.subr.mxu0 %v1044
        %1741 = vmatpush1.msra.mxu0 %v1043
        %1742 = vmatprep.subr.mxu0 %v1052
        %1743 = vmatpush1.msra.mxu0 %v1051
        %1744 = vmatprep.subr.mxu0 %v1060
        %1745 = vmatpush1.msra.mxu0 %v1059
        %1746 = vmatprep.subr.mxu0 %v1068
        %1747 = vmatpush1.msra.mxu0 %v1067
        %1748 = vmatprep.subr.mxu0 %v1076
        %1749 = vmatpush1.msra.mxu0 %v1075
        %1750 = vmatprep.subr.mxu0 %v1084
        %1751 = vmatpush1.msra.mxu0 %v1083
        %1752 = vmatprep.subr.mxu0 %v1092
        %1753 = vmatpush1.msra.mxu0 %v1091
        %1754 = vmatprep.subr.mxu0 %v1100
        %1755 = vmatpush1.msra.mxu0 %v1099
        %1756 = vmatprep.subr.mxu0 %v1108
        %1757 = vmatpush1.msra.mxu0 %v1107
        %1758 = vmatprep.subr.mxu0 %v1116
        %1759 = vmatpush1.msra.mxu0 %v1115
        %1760 = vmatprep.subr.mxu0 %v1124
        %1761 = vmatpush1.msra.mxu0 %v1123
        %1762 = vmatprep.mubr.f32.mxu0 %v1173
        %1763 = vmatmul.mubr.f32.gmra.mrb[0].mxu0 %v1484
        %v1764 = vpop.f32.mrb[0].mxu0
        %v1765 = vadd.f32 %v1694, %v1764
        %v1766 = vpop.f32.mrb[0].mxu0
        %v1767 = vadd.f32 %v1696, %v1766
        %1768 = vdwg.mxu0
        %1769 = vmatprep.subr.mxu0 %v622
        %1770 = vmatpush1.msra.mxu0 %v621
        %1771 = vmatprep.subr.mxu0 %v630
        %1772 = vmatpush1.msra.mxu0 %v629
        %1773 = vmatprep.subr.mxu0 %v638
        %1774 = vmatpush1.msra.mxu0 %v637
        %1775 = vmatprep.subr.mxu0 %v646
        %1776 = vmatpush1.msra.mxu0 %v645
        %1777 = vmatprep.subr.mxu0 %v654
        %1778 = vmatpush1.msra.mxu0 %v653
        %1779 = vmatprep.subr.mxu0 %v662
        %1780 = vmatpush1.msra.mxu0 %v661
        %1781 = vmatprep.subr.mxu0 %v670
        %1782 = vmatpush1.msra.mxu0 %v669
        %1783 = vmatprep.subr.mxu0 %v678
        %1784 = vmatpush1.msra.mxu0 %v677
        %1785 = vmatprep.subr.mxu0 %v686
        %1786 = vmatpush1.msra.mxu0 %v685
        %1787 = vmatprep.subr.mxu0 %v694
        %1788 = vmatpush1.msra.mxu0 %v693
        %1789 = vmatprep.subr.mxu0 %v702
        %1790 = vmatpush1.msra.mxu0 %v701
        %1791 = vmatprep.subr.mxu0 %v710
        %1792 = vmatpush1.msra.mxu0 %v709
        %1793 = vmatprep.subr.mxu0 %v718
        %1794 = vmatpush1.msra.mxu0 %v717
        %1795 = vmatprep.subr.mxu0 %v726
        %1796 = vmatpush1.msra.mxu0 %v725
        %1797 = vmatprep.subr.mxu0 %v734
        %1798 = vmatpush1.msra.mxu0 %v733
        %1799 = vmatprep.subr.mxu0 %v742
        %1800 = vmatpush1.msra.mxu0 %v741
        %1801 = vmatprep.subr.mxu0 %v750
        %1802 = vmatpush1.msra.mxu0 %v749
        %1803 = vmatprep.subr.mxu0 %v758
        %1804 = vmatpush1.msra.mxu0 %v757
        %1805 = vmatprep.subr.mxu0 %v766
        %1806 = vmatpush1.msra.mxu0 %v765
        %1807 = vmatprep.subr.mxu0 %v774
        %1808 = vmatpush1.msra.mxu0 %v773
        %1809 = vmatprep.subr.mxu0 %v782
        %1810 = vmatpush1.msra.mxu0 %v781
        %1811 = vmatprep.subr.mxu0 %v790
        %1812 = vmatpush1.msra.mxu0 %v789
        %1813 = vmatprep.subr.mxu0 %v798
        %1814 = vmatpush1.msra.mxu0 %v797
        %1815 = vmatprep.subr.mxu0 %v806
        %1816 = vmatpush1.msra.mxu0 %v805
        %1817 = vmatprep.subr.mxu0 %v814
        %1818 = vmatpush1.msra.mxu0 %v813
        %1819 = vmatprep.subr.mxu0 %v822
        %1820 = vmatpush1.msra.mxu0 %v821
        %1821 = vmatprep.subr.mxu0 %v830
        %1822 = vmatpush1.msra.mxu0 %v829
        %1823 = vmatprep.subr.mxu0 %v838
        %1824 = vmatpush1.msra.mxu0 %v837
        %1825 = vmatprep.subr.mxu0 %v846
        %1826 = vmatpush1.msra.mxu0 %v845
        %1827 = vmatprep.subr.mxu0 %v854
        %1828 = vmatpush1.msra.mxu0 %v853
        %1829 = vmatprep.subr.mxu0 %v862
        %1830 = vmatpush1.msra.mxu0 %v861
        %1831 = vmatprep.subr.mxu0 %v870
        %1832 = vmatpush1.msra.mxu0 %v869
        %1833 = vmatprep.mubr.f32.mxu0 %v1484
        %1834 = vmatmul.mubr.f32.gmra.mrb[0].mxu0 %v584
        %v1835 = vpop.f32.mrb[0].mxu0
        %v1836 = vadd.f32 %v1150, %v1835
        %v1837 = vpop.f32.mrb[0].mxu0
        %v1838 = vadd.f32 %v1154, %v1837
        %1839 = vdwg.mxu0
        %1840 = vmatprep.subr.mxu0 %v878
        %1841 = vmatpush1.msra.mxu0 %v877
        %1842 = vmatprep.subr.mxu0 %v886
        %1843 = vmatpush1.msra.mxu0 %v885
        %1844 = vmatprep.subr.mxu0 %v894
        %1845 = vmatpush1.msra.mxu0 %v893
        %1846 = vmatprep.subr.mxu0 %v902
        %1847 = vmatpush1.msra.mxu0 %v901
        %1848 = vmatprep.subr.mxu0 %v910
        %1849 = vmatpush1.msra.mxu0 %v909
        %1850 = vmatprep.subr.mxu0 %v918
        %1851 = vmatpush1.msra.mxu0 %v917
        %1852 = vmatprep.subr.mxu0 %v926
        %1853 = vmatpush1.msra.mxu0 %v925
        %1854 = vmatprep.subr.mxu0 %v934
        %1855 = vmatpush1.msra.mxu0 %v933
        %1856 = vmatprep.subr.mxu0 %v942
        %1857 = vmatpush1.msra.mxu0 %v941
        %1858 = vmatprep.subr.mxu0 %v950
        %1859 = vmatpush1.msra.mxu0 %v949
        %1860 = vmatprep.subr.mxu0 %v958
        %1861 = vmatpush1.msra.mxu0 %v957
        %1862 = vmatprep.subr.mxu0 %v966
        %1863 = vmatpush1.msra.mxu0 %v965
        %1864 = vmatprep.subr.mxu0 %v974
        %1865 = vmatpush1.msra.mxu0 %v973
        %1866 = vmatprep.subr.mxu0 %v982
        %1867 = vmatpush1.msra.mxu0 %v981
        %1868 = vmatprep.subr.mxu0 %v990
        %1869 = vmatpush1.msra.mxu0 %v989
        %1870 = vmatprep.subr.mxu0 %v998
        %1871 = vmatpush1.msra.mxu0 %v997
        %1872 = vmatprep.subr.mxu0 %v1006
        %1873 = vmatpush1.msra.mxu0 %v1005
        %1874 = vmatprep.subr.mxu0 %v1014
        %1875 = vmatpush1.msra.mxu0 %v1013
        %1876 = vmatprep.subr.mxu0 %v1022
        %1877 = vmatpush1.msra.mxu0 %v1021
        %1878 = vmatprep.subr.mxu0 %v1030
        %1879 = vmatpush1.msra.mxu0 %v1029
        %1880 = vmatprep.subr.mxu0 %v1038
        %1881 = vmatpush1.msra.mxu0 %v1037
        %1882 = vmatprep.subr.mxu0 %v1046
        %1883 = vmatpush1.msra.mxu0 %v1045
        %1884 = vmatprep.subr.mxu0 %v1054
        %1885 = vmatpush1.msra.mxu0 %v1053
        %1886 = vmatprep.subr.mxu0 %v1062
        %1887 = vmatpush1.msra.mxu0 %v1061
        %1888 = vmatprep.subr.mxu0 %v1070
        %1889 = vmatpush1.msra.mxu0 %v1069
        %1890 = vmatprep.subr.mxu0 %v1078
        %1891 = vmatpush1.msra.mxu0 %v1077
        %1892 = vmatprep.subr.mxu0 %v1086
        %1893 = vmatpush1.msra.mxu0 %v1085
        %1894 = vmatprep.subr.mxu0 %v1094
        %1895 = vmatpush1.msra.mxu0 %v1093
        %1896 = vmatprep.subr.mxu0 %v1102
        %1897 = vmatpush1.msra.mxu0 %v1101
        %1898 = vmatprep.subr.mxu0 %v1110
        %1899 = vmatpush1.msra.mxu0 %v1109
        %1900 = vmatprep.subr.mxu0 %v1118
        %1901 = vmatpush1.msra.mxu0 %v1117
        %1902 = vmatprep.subr.mxu0 %v1126
        %1903 = vmatpush1.msra.mxu0 %v1125
        %1904 = vmatprep.mubr.f32.mxu0 %v1173
        %1905 = vmatmul.mubr.f32.gmra.mrb[0].mxu0 %v1484
        %v1906 = vpop.f32.mrb[0].mxu0
        %v1907 = vadd.f32 %v1836, %v1906
        %v1908 = vpop.f32.mrb[0].mxu0
        %v1909 = vadd.f32 %v1838, %v1908
        %1910 = vdwg.mxu0
        %1911 = vmatprep.subr.mxu0 %v624
        %1912 = vmatpush1.msra.mxu0 %v623
        %1913 = vmatprep.subr.mxu0 %v632
        %1914 = vmatpush1.msra.mxu0 %v631
        %1915 = vmatprep.subr.mxu0 %v640
        %1916 = vmatpush1.msra.mxu0 %v639
        %1917 = vmatprep.subr.mxu0 %v648
        %1918 = vmatpush1.msra.mxu0 %v647
        %1919 = vmatprep.subr.mxu0 %v656
        %1920 = vmatpush1.msra.mxu0 %v655
        %1921 = vmatprep.subr.mxu0 %v664
        %1922 = vmatpush1.msra.mxu0 %v663
        %1923 = vmatprep.subr.mxu0 %v672
        %1924 = vmatpush1.msra.mxu0 %v671
        %1925 = vmatprep.subr.mxu0 %v680
        %1926 = vmatpush1.msra.mxu0 %v679
        %1927 = vmatprep.subr.mxu0 %v688
        %1928 = vmatpush1.msra.mxu0 %v687
        %1929 = vmatprep.subr.mxu0 %v696
        %1930 = vmatpush1.msra.mxu0 %v695
        %1931 = vmatprep.subr.mxu0 %v704
        %1932 = vmatpush1.msra.mxu0 %v703
        %1933 = vmatprep.subr.mxu0 %v712
        %1934 = vmatpush1.msra.mxu0 %v711
        %1935 = vmatprep.subr.mxu0 %v720
        %1936 = vmatpush1.msra.mxu0 %v719
        %1937 = vmatprep.subr.mxu0 %v728
        %1938 = vmatpush1.msra.mxu0 %v727
        %1939 = vmatprep.subr.mxu0 %v736
        %1940 = vmatpush1.msra.mxu0 %v735
        %1941 = vmatprep.subr.mxu0 %v744
        %1942 = vmatpush1.msra.mxu0 %v743
        %1943 = vmatprep.subr.mxu0 %v752
        %1944 = vmatpush1.msra.mxu0 %v751
        %1945 = vmatprep.subr.mxu0 %v760
        %1946 = vmatpush1.msra.mxu0 %v759
        %1947 = vmatprep.subr.mxu0 %v768
        %1948 = vmatpush1.msra.mxu0 %v767
        %1949 = vmatprep.subr.mxu0 %v776
        %1950 = vmatpush1.msra.mxu0 %v775
        %1951 = vmatprep.subr.mxu0 %v784
        %1952 = vmatpush1.msra.mxu0 %v783
        %1953 = vmatprep.subr.mxu0 %v792
        %1954 = vmatpush1.msra.mxu0 %v791
        %1955 = vmatprep.subr.mxu0 %v800
        %1956 = vmatpush1.msra.mxu0 %v799
        %1957 = vmatprep.subr.mxu0 %v808
        %1958 = vmatpush1.msra.mxu0 %v807
        %1959 = vmatprep.subr.mxu0 %v816
        %1960 = vmatpush1.msra.mxu0 %v815
        %1961 = vmatprep.subr.mxu0 %v824
        %1962 = vmatpush1.msra.mxu0 %v823
        %1963 = vmatprep.subr.mxu0 %v832
        %1964 = vmatpush1.msra.mxu0 %v831
        %1965 = vmatprep.subr.mxu0 %v840
        %1966 = vmatpush1.msra.mxu0 %v839
        %1967 = vmatprep.subr.mxu0 %v848
        %1968 = vmatpush1.msra.mxu0 %v847
        %1969 = vmatprep.subr.mxu0 %v856
        %1970 = vmatpush1.msra.mxu0 %v855
        %1971 = vmatprep.subr.mxu0 %v864
        %1972 = vmatpush1.msra.mxu0 %v863
        %1973 = vmatprep.subr.mxu0 %v872
        %1974 = vmatpush1.msra.mxu0 %v871
        %1975 = vmatprep.mubr.f32.mxu0 %v1484
        %1976 = vmatmul.mubr.f32.gmra.mrb[0].mxu0 %v584
        %v1977 = vpop.f32.mrb[0].mxu0
        %v1978 = vadd.f32 %v1158, %v1977
        %v1979 = vpop.f32.mrb[0].mxu0
        %v1980 = vadd.f32 %v1162, %v1979
        %1981 = vdwg.mxu0
        %1982 = vmatprep.subr.mxu0 %v880
        %1983 = vmatpush1.msra.mxu0 %v879
        %1984 = vmatprep.subr.mxu0 %v888
        %1985 = vmatpush1.msra.mxu0 %v887
        %1986 = vmatprep.subr.mxu0 %v896
        %1987 = vmatpush1.msra.mxu0 %v895
        %1988 = vmatprep.subr.mxu0 %v904
        %1989 = vmatpush1.msra.mxu0 %v903
        %1990 = vmatprep.subr.mxu0 %v912
        %1991 = vmatpush1.msra.mxu0 %v911
        %1992 = vmatprep.subr.mxu0 %v920
        %1993 = vmatpush1.msra.mxu0 %v919
        %1994 = vmatprep.subr.mxu0 %v928
        %1995 = vmatpush1.msra.mxu0 %v927
        %1996 = vmatprep.subr.mxu0 %v936
        %1997 = vmatpush1.msra.mxu0 %v935
        %1998 = vmatprep.subr.mxu0 %v944
        %1999 = vmatpush1.msra.mxu0 %v943
        %2000 = vmatprep.subr.mxu0 %v952
        %2001 = vmatpush1.msra.mxu0 %v951
        %2002 = vmatprep.subr.mxu0 %v960
        %2003 = vmatpush1.msra.mxu0 %v959
        %2004 = vmatprep.subr.mxu0 %v968
        %2005 = vmatpush1.msra.mxu0 %v967
        %2006 = vmatprep.subr.mxu0 %v976
        %2007 = vmatpush1.msra.mxu0 %v975
        %2008 = vmatprep.subr.mxu0 %v984
        %2009 = vmatpush1.msra.mxu0 %v983
        %2010 = vmatprep.subr.mxu0 %v992
        %2011 = vmatpush1.msra.mxu0 %v991
        %2012 = vmatprep.subr.mxu0 %v1000
        %2013 = vmatpush1.msra.mxu0 %v999
        %2014 = vmatprep.subr.mxu0 %v1008
        %2015 = vmatpush1.msra.mxu0 %v1007
        %2016 = vmatprep.subr.mxu0 %v1016
        %2017 = vmatpush1.msra.mxu0 %v1015
        %2018 = vmatprep.subr.mxu0 %v1024
        %2019 = vmatpush1.msra.mxu0 %v1023
        %2020 = vmatprep.subr.mxu0 %v1032
        %2021 = vmatpush1.msra.mxu0 %v1031
        %2022 = vmatprep.subr.mxu0 %v1040
        %2023 = vmatpush1.msra.mxu0 %v1039
        %2024 = vmatprep.subr.mxu0 %v1048
        %2025 = vmatpush1.msra.mxu0 %v1047
        %2026 = vmatprep.subr.mxu0 %v1056
        %2027 = vmatpush1.msra.mxu0 %v1055
        %2028 = vmatprep.subr.mxu0 %v1064
        %2029 = vmatpush1.msra.mxu0 %v1063
        %2030 = vmatprep.subr.mxu0 %v1072
        %2031 = vmatpush1.msra.mxu0 %v1071
        %2032 = vmatprep.subr.mxu0 %v1080
        %2033 = vmatpush1.msra.mxu0 %v1079
        %2034 = vmatprep.subr.mxu0 %v1088
        %2035 = vmatpush1.msra.mxu0 %v1087
        %2036 = vmatprep.subr.mxu0 %v1096
        %2037 = vmatpush1.msra.mxu0 %v1095
        %2038 = vmatprep.subr.mxu0 %v1104
        %2039 = vmatpush1.msra.mxu0 %v1103
        %2040 = vmatprep.subr.mxu0 %v1112
        %2041 = vmatpush1.msra.mxu0 %v1111
        %2042 = vmatprep.subr.mxu0 %v1120
        %2043 = vmatpush1.msra.mxu0 %v1119
        %2044 = vmatprep.subr.mxu0 %v1128
        %2045 = vmatpush1.msra.mxu0 %v1127
        %2046 = vmatprep.mubr.f32.mxu0 %v1173
        %2047 = vmatmul.mubr.f32.gmra.mrb[0].mxu0 %v1484
        %v2048 = vpop.f32.mrb[0].mxu0
        %v2049 = vadd.f32 %v1978, %v2048
        %v2050 = vpop.f32.mrb[0].mxu0
        %v2051 = vadd.f32 %v1980, %v2050
        %2052 = vdwg.mxu0
        %v2053 = vxor.u32 %v1623, 2147483648
        %v2054 = vxor.u32 %v1625, 2147483648
        %v2055 = vxor.u32 %v1767, 2147483648
        %v2056 = vxor.u32 %v1907, 2147483648
        %v2057 = vxor.u32 %v1909, 2147483648
        %v2058 = vxor.u32 %v2051, 2147483648
        %v2059 = vmul.f32 %v2053, 1.442695
        %v2060 = vpow.pop %v2059
        %v2061 = vmul.f32 %v2054, 1.442695
        %v2062 = vpow.pop %v2061
        %v2063 = vmul.f32 %v2055, 1.442695
        %v2064 = vpow.pop %v2063
        %v2065 = vmul.f32 %v2056, 1.442695
        %v2066 = vpow.pop %v2065
        %v2067 = vmul.f32 %v2057, 1.442695
        %v2068 = vpow.pop %v2067
        %v2069 = vmul.f32 %v2058, 1.442695
        %v2070 = vpow.pop %v2069
        %v2071 = vadd.f32 %v2060, 1.0
        %v2072 = vadd.f32 %v2062, 1.0
        %v2073 = vadd.f32 %v2064, 1.0
        %v2074 = vadd.f32 %v2066, 1.0
        %v2075 = vadd.f32 %v2068, 1.0
        %v2076 = vadd.f32 %v2070, 1.0
        %v2077 = vrcp.pop %v2071
        %v2078 = vmul.f32 1.0, %v2077
        %v2079 = vrcp.pop %v2072
        %v2080 = vmul.f32 1.0, %v2079
        %v2081 = vrcp.pop %v2073
        %v2082 = vmul.f32 1.0, %v2081
        %v2083 = vrcp.pop %v2074
        %v2084 = vmul.f32 1.0, %v2083
        %v2085 = vrcp.pop %v2075
        %v2086 = vmul.f32 1.0, %v2085
        %v2087 = vrcp.pop %v2076
        %v2088 = vmul.f32 1.0, %v2087
        %v2089 = vtanh.pop %v1765
        %v2090 = vmul.f32 %v2080, %v1482
        %v2091 = vmul.f32 %v2078, %v2089
        %v2092 = vadd.f32 %v2090, %v2091
        %v2093 = vtanh.pop %v2092
        %v2094 = vmul.f32 %v2082, %v2093
        %v2095 = vtanh.pop %v2049
        %v2096 = vmul.f32 %v2086, %v1176
        %v2097 = vmul.f32 %v2084, %v2095
        %v2098 = vadd.f32 %v2096, %v2097
        %v2099 = vtanh.pop %v2098
        %v2100 = vmul.f32 %v2088, %v2099
        %2101 = vmatprep.subr.mxu0 %v618
        %2102 = vmatpush1.msra.mxu0 %v617
        %2103 = vmatprep.subr.mxu0 %v626
        %2104 = vmatpush1.msra.mxu0 %v625
        %2105 = vmatprep.subr.mxu0 %v634
        %2106 = vmatpush1.msra.mxu0 %v633
        %2107 = vmatprep.subr.mxu0 %v642
        %2108 = vmatpush1.msra.mxu0 %v641
        %2109 = vmatprep.subr.mxu0 %v650
        %2110 = vmatpush1.msra.mxu0 %v649
        %2111 = vmatprep.subr.mxu0 %v658
        %2112 = vmatpush1.msra.mxu0 %v657
        %2113 = vmatprep.subr.mxu0 %v666
        %2114 = vmatpush1.msra.mxu0 %v665
        %2115 = vmatprep.subr.mxu0 %v674
        %2116 = vmatpush1.msra.mxu0 %v673
        %2117 = vmatprep.subr.mxu0 %v682
        %2118 = vmatpush1.msra.mxu0 %v681
        %2119 = vmatprep.subr.mxu0 %v690
        %2120 = vmatpush1.msra.mxu0 %v689
        %2121 = vmatprep.subr.mxu0 %v698
        %2122 = vmatpush1.msra.mxu0 %v697
        %2123 = vmatprep.subr.mxu0 %v706
        %2124 = vmatpush1.msra.mxu0 %v705
        %2125 = vmatprep.subr.mxu0 %v714
        %2126 = vmatpush1.msra.mxu0 %v713
        %2127 = vmatprep.subr.mxu0 %v722
        %2128 = vmatpush1.msra.mxu0 %v721
        %2129 = vmatprep.subr.mxu0 %v730
        %2130 = vmatpush1.msra.mxu0 %v729
        %2131 = vmatprep.subr.mxu0 %v738
        %2132 = vmatpush1.msra.mxu0 %v737
        %2133 = vmatprep.subr.mxu0 %v746
        %2134 = vmatpush1.msra.mxu0 %v745
        %2135 = vmatprep.subr.mxu0 %v754
        %2136 = vmatpush1.msra.mxu0 %v753
        %2137 = vmatprep.subr.mxu0 %v762
        %2138 = vmatpush1.msra.mxu0 %v761
        %2139 = vmatprep.subr.mxu0 %v770
        %2140 = vmatpush1.msra.mxu0 %v769
        %2141 = vmatprep.subr.mxu0 %v778
        %2142 = vmatpush1.msra.mxu0 %v777
        %2143 = vmatprep.subr.mxu0 %v786
        %2144 = vmatpush1.msra.mxu0 %v785
        %2145 = vmatprep.subr.mxu0 %v794
        %2146 = vmatpush1.msra.mxu0 %v793
        %2147 = vmatprep.subr.mxu0 %v802
        %2148 = vmatpush1.msra.mxu0 %v801
        %2149 = vmatprep.subr.mxu0 %v810
        %2150 = vmatpush1.msra.mxu0 %v809
        %2151 = vmatprep.subr.mxu0 %v818
        %2152 = vmatpush1.msra.mxu0 %v817
        %2153 = vmatprep.subr.mxu0 %v826
        %2154 = vmatpush1.msra.mxu0 %v825
        %2155 = vmatprep.subr.mxu0 %v834
        %2156 = vmatpush1.msra.mxu0 %v833
        %2157 = vmatprep.subr.mxu0 %v842
        %2158 = vmatpush1.msra.mxu0 %v841
        %2159 = vmatprep.subr.mxu0 %v850
        %2160 = vmatpush1.msra.mxu0 %v849
        %2161 = vmatprep.subr.mxu0 %v858
        %2162 = vmatpush1.msra.mxu0 %v857
        %2163 = vmatprep.subr.mxu0 %v866
        %2164 = vmatpush1.msra.mxu0 %v865
        %2165 = vmatprep.mubr.f32.mxu0 %v2094
        %2166 = vmatmul.mubr.f32.gmra.mrb[0].mxu0 %v589
        %v2167 = vpop.f32.mrb[0].mxu0
        %v2168 = vadd.f32 %v1134, %v2167
        %v2169 = vpop.f32.mrb[0].mxu0
        %v2170 = vadd.f32 %v1138, %v2169
        %2171 = vdwg.mxu0
        %2172 = vmatprep.subr.mxu0 %v874
        %2173 = vmatpush1.msra.mxu0 %v873
        %2174 = vmatprep.subr.mxu0 %v882
        %2175 = vmatpush1.msra.mxu0 %v881
        %2176 = vmatprep.subr.mxu0 %v890
        %2177 = vmatpush1.msra.mxu0 %v889
        %2178 = vmatprep.subr.mxu0 %v898
        %2179 = vmatpush1.msra.mxu0 %v897
        %2180 = vmatprep.subr.mxu0 %v906
        %2181 = vmatpush1.msra.mxu0 %v905
        %2182 = vmatprep.subr.mxu0 %v914
        %2183 = vmatpush1.msra.mxu0 %v913
        %2184 = vmatprep.subr.mxu0 %v922
        %2185 = vmatpush1.msra.mxu0 %v921
        %2186 = vmatprep.subr.mxu0 %v930
        %2187 = vmatpush1.msra.mxu0 %v929
        %2188 = vmatprep.subr.mxu0 %v938
        %2189 = vmatpush1.msra.mxu0 %v937
        %2190 = vmatprep.subr.mxu0 %v946
        %2191 = vmatpush1.msra.mxu0 %v945
        %2192 = vmatprep.subr.mxu0 %v954
        %2193 = vmatpush1.msra.mxu0 %v953
        %2194 = vmatprep.subr.mxu0 %v962
        %2195 = vmatpush1.msra.mxu0 %v961
        %2196 = vmatprep.subr.mxu0 %v970
        %2197 = vmatpush1.msra.mxu0 %v969
        %2198 = vmatprep.subr.mxu0 %v978
        %2199 = vmatpush1.msra.mxu0 %v977
        %2200 = vmatprep.subr.mxu0 %v986
        %2201 = vmatpush1.msra.mxu0 %v985
        %2202 = vmatprep.subr.mxu0 %v994
        %2203 = vmatpush1.msra.mxu0 %v993
        %2204 = vmatprep.subr.mxu0 %v1002
        %2205 = vmatpush1.msra.mxu0 %v1001
        %2206 = vmatprep.subr.mxu0 %v1010
        %2207 = vmatpush1.msra.mxu0 %v1009
        %2208 = vmatprep.subr.mxu0 %v1018
        %2209 = vmatpush1.msra.mxu0 %v1017
        %2210 = vmatprep.subr.mxu0 %v1026
        %2211 = vmatpush1.msra.mxu0 %v1025
        %2212 = vmatprep.subr.mxu0 %v1034
        %2213 = vmatpush1.msra.mxu0 %v1033
        %2214 = vmatprep.subr.mxu0 %v1042
        %2215 = vmatpush1.msra.mxu0 %v1041
        %2216 = vmatprep.subr.mxu0 %v1050
        %2217 = vmatpush1.msra.mxu0 %v1049
        %2218 = vmatprep.subr.mxu0 %v1058
        %2219 = vmatpush1.msra.mxu0 %v1057
        %2220 = vmatprep.subr.mxu0 %v1066
        %2221 = vmatpush1.msra.mxu0 %v1065
        %2222 = vmatprep.subr.mxu0 %v1074
        %2223 = vmatpush1.msra.mxu0 %v1073
        %2224 = vmatprep.subr.mxu0 %v1082
        %2225 = vmatpush1.msra.mxu0 %v1081
        %2226 = vmatprep.subr.mxu0 %v1090
        %2227 = vmatpush1.msra.mxu0 %v1089
        %2228 = vmatprep.subr.mxu0 %v1098
        %2229 = vmatpush1.msra.mxu0 %v1097
        %2230 = vmatprep.subr.mxu0 %v1106
        %2231 = vmatpush1.msra.mxu0 %v1105
        %2232 = vmatprep.subr.mxu0 %v1114
        %2233 = vmatpush1.msra.mxu0 %v1113
        %2234 = vmatprep.subr.mxu0 %v1122
        %2235 = vmatpush1.msra.mxu0 %v1121
        %2236 = vmatprep.mubr.f32.mxu0 %v2100
        %2237 = vmatmul.mubr.f32.gmra.mrb[0].mxu0 %v2094
        %v2238 = vpop.f32.mrb[0].mxu0
        %v2239 = vadd.f32 %v2168, %v2238
        %v2240 = vpop.f32.mrb[0].mxu0
        %v2241 = vadd.f32 %v2170, %v2240
        %2242 = vdwg.mxu0
        %2243 = vmatprep.subr.mxu0 %v620
        %2244 = vmatpush1.msra.mxu0 %v619
        %2245 = vmatprep.subr.mxu0 %v628
        %2246 = vmatpush1.msra.mxu0 %v627
        %2247 = vmatprep.subr.mxu0 %v636
        %2248 = vmatpush1.msra.mxu0 %v635
        %2249 = vmatprep.subr.mxu0 %v644
        %2250 = vmatpush1.msra.mxu0 %v643
        %2251 = vmatprep.subr.mxu0 %v652
        %2252 = vmatpush1.msra.mxu0 %v651
        %2253 = vmatprep.subr.mxu0 %v660
        %2254 = vmatpush1.msra.mxu0 %v659
        %2255 = vmatprep.subr.mxu0 %v668
        %2256 = vmatpush1.msra.mxu0 %v667
        %2257 = vmatprep.subr.mxu0 %v676
        %2258 = vmatpush1.msra.mxu0 %v675
        %2259 = vmatprep.subr.mxu0 %v684
        %2260 = vmatpush1.msra.mxu0 %v683
        %2261 = vmatprep.subr.mxu0 %v692
        %2262 = vmatpush1.msra.mxu0 %v691
        %2263 = vmatprep.subr.mxu0 %v700
        %2264 = vmatpush1.msra.mxu0 %v699
        %2265 = vmatprep.subr.mxu0 %v708
        %2266 = vmatpush1.msra.mxu0 %v707
        %2267 = vmatprep.subr.mxu0 %v716
        %2268 = vmatpush1.msra.mxu0 %v715
        %2269 = vmatprep.subr.mxu0 %v724
        %2270 = vmatpush1.msra.mxu0 %v723
        %2271 = vmatprep.subr.mxu0 %v732
        %2272 = vmatpush1.msra.mxu0 %v731
        %2273 = vmatprep.subr.mxu0 %v740
        %2274 = vmatpush1.msra.mxu0 %v739
        %2275 = vmatprep.subr.mxu0 %v748
        %2276 = vmatpush1.msra.mxu0 %v747
        %2277 = vmatprep.subr.mxu0 %v756
        %2278 = vmatpush1.msra.mxu0 %v755
        %2279 = vmatprep.subr.mxu0 %v764
        %2280 = vmatpush1.msra.mxu0 %v763
        %2281 = vmatprep.subr.mxu0 %v772
        %2282 = vmatpush1.msra.mxu0 %v771
        %2283 = vmatprep.subr.mxu0 %v780
        %2284 = vmatpush1.msra.mxu0 %v779
        %2285 = vmatprep.subr.mxu0 %v788
        %2286 = vmatpush1.msra.mxu0 %v787
        %2287 = vmatprep.subr.mxu0 %v796
        %2288 = vmatpush1.msra.mxu0 %v795
        %2289 = vmatprep.subr.mxu0 %v804
        %2290 = vmatpush1.msra.mxu0 %v803
        %2291 = vmatprep.subr.mxu0 %v812
        %2292 = vmatpush1.msra.mxu0 %v811
        %2293 = vmatprep.subr.mxu0 %v820
        %2294 = vmatpush1.msra.mxu0 %v819
        %2295 = vmatprep.subr.mxu0 %v828
        %2296 = vmatpush1.msra.mxu0 %v827
        %2297 = vmatprep.subr.mxu0 %v836
        %2298 = vmatpush1.msra.mxu0 %v835
        %2299 = vmatprep.subr.mxu0 %v844
        %2300 = vmatpush1.msra.mxu0 %v843
        %2301 = vmatprep.subr.mxu0 %v852
        %2302 = vmatpush1.msra.mxu0 %v851
        %2303 = vmatprep.subr.mxu0 %v860
        %2304 = vmatpush1.msra.mxu0 %v859
        %2305 = vmatprep.subr.mxu0 %v868
        %2306 = vmatpush1.msra.mxu0 %v867
        %2307 = vmatprep.mubr.f32.mxu0 %v2094
        %2308 = vmatmul.mubr.f32.gmra.mrb[0].mxu0 %v589
        %v2309 = vpop.f32.mrb[0].mxu0
        %v2310 = vadd.f32 %v1142, %v2309
        %v2311 = vpop.f32.mrb[0].mxu0
        %v2312 = vadd.f32 %v1146, %v2311
        %2313 = vdwg.mxu0
        %2314 = vmatprep.subr.mxu0 %v876
        %2315 = vmatpush1.msra.mxu0 %v875
        %2316 = vmatprep.subr.mxu0 %v884
        %2317 = vmatpush1.msra.mxu0 %v883
        %2318 = vmatprep.subr.mxu0 %v892
        %2319 = vmatpush1.msra.mxu0 %v891
        %2320 = vmatprep.subr.mxu0 %v900
        %2321 = vmatpush1.msra.mxu0 %v899
        %2322 = vmatprep.subr.mxu0 %v908
        %2323 = vmatpush1.msra.mxu0 %v907
        %2324 = vmatprep.subr.mxu0 %v916
        %2325 = vmatpush1.msra.mxu0 %v915
        %2326 = vmatprep.subr.mxu0 %v924
        %2327 = vmatpush1.msra.mxu0 %v923
        %2328 = vmatprep.subr.mxu0 %v932
        %2329 = vmatpush1.msra.mxu0 %v931
        %2330 = vmatprep.subr.mxu0 %v940
        %2331 = vmatpush1.msra.mxu0 %v939
        %2332 = vmatprep.subr.mxu0 %v948
        %2333 = vmatpush1.msra.mxu0 %v947
        %2334 = vmatprep.subr.mxu0 %v956
        %2335 = vmatpush1.msra.mxu0 %v955
        %2336 = vmatprep.subr.mxu0 %v964
        %2337 = vmatpush1.msra.mxu0 %v963
        %2338 = vmatprep.subr.mxu0 %v972
        %2339 = vmatpush1.msra.mxu0 %v971
        %2340 = vmatprep.subr.mxu0 %v980
        %2341 = vmatpush1.msra.mxu0 %v979
        %2342 = vmatprep.subr.mxu0 %v988
        %2343 = vmatpush1.msra.mxu0 %v987
        %2344 = vmatprep.subr.mxu0 %v996
        %2345 = vmatpush1.msra.mxu0 %v995
        %2346 = vmatprep.subr.mxu0 %v1004
        %2347 = vmatpush1.msra.mxu0 %v1003
        %2348 = vmatprep.subr.mxu0 %v1012
        %2349 = vmatpush1.msra.mxu0 %v1011
        %2350 = vmatprep.subr.mxu0 %v1020
        %2351 = vmatpush1.msra.mxu0 %v1019
        %2352 = vmatprep.subr.mxu0 %v1028
        %2353 = vmatpush1.msra.mxu0 %v1027
        %2354 = vmatprep.subr.mxu0 %v1036
        %2355 = vmatpush1.msra.mxu0 %v1035
        %2356 = vmatprep.subr.mxu0 %v1044
        %2357 = vmatpush1.msra.mxu0 %v1043
        %2358 = vmatprep.subr.mxu0 %v1052
        %2359 = vmatpush1.msra.mxu0 %v1051
        %2360 = vmatprep.subr.mxu0 %v1060
        %2361 = vmatpush1.msra.mxu0 %v1059
        %2362 = vmatprep.subr.mxu0 %v1068
        %2363 = vmatpush1.msra.mxu0 %v1067
        %2364 = vmatprep.subr.mxu0 %v1076
        %2365 = vmatpush1.msra.mxu0 %v1075
        %2366 = vmatprep.subr.mxu0 %v1084
        %2367 = vmatpush1.msra.mxu0 %v1083
        %2368 = vmatprep.subr.mxu0 %v1092
        %2369 = vmatpush1.msra.mxu0 %v1091
        %2370 = vmatprep.subr.mxu0 %v1100
        %2371 = vmatpush1.msra.mxu0 %v1099
        %2372 = vmatprep.subr.mxu0 %v1108
        %2373 = vmatpush1.msra.mxu0 %v1107
        %2374 = vmatprep.subr.mxu0 %v1116
        %2375 = vmatpush1.msra.mxu0 %v1115
        %2376 = vmatprep.subr.mxu0 %v1124
        %2377 = vmatpush1.msra.mxu0 %v1123
        %2378 = vmatprep.mubr.f32.mxu0 %v2100
        %2379 = vmatmul.mubr.f32.gmra.mrb[0].mxu0 %v2094
        %v2380 = vpop.f32.mrb[0].mxu0
        %v2381 = vadd.f32 %v2310, %v2380
        %v2382 = vpop.f32.mrb[0].mxu0
        %v2383 = vadd.f32 %v2312, %v2382
        %2384 = vdwg.mxu0
        %2385 = vmatprep.subr.mxu0 %v622
        %2386 = vmatpush1.msra.mxu0 %v621
        %2387 = vmatprep.subr.mxu0 %v630
        %2388 = vmatpush1.msra.mxu0 %v629
        %2389 = vmatprep.subr.mxu0 %v638
        %2390 = vmatpush1.msra.mxu0 %v637
        %2391 = vmatprep.subr.mxu0 %v646
        %2392 = vmatpush1.msra.mxu0 %v645
        %2393 = vmatprep.subr.mxu0 %v654
        %2394 = vmatpush1.msra.mxu0 %v653
        %2395 = vmatprep.subr.mxu0 %v662
        %2396 = vmatpush1.msra.mxu0 %v661
        %2397 = vmatprep.subr.mxu0 %v670
        %2398 = vmatpush1.msra.mxu0 %v669
        %2399 = vmatprep.subr.mxu0 %v678
        %2400 = vmatpush1.msra.mxu0 %v677
        %2401 = vmatprep.subr.mxu0 %v686
        %2402 = vmatpush1.msra.mxu0 %v685
        %2403 = vmatprep.subr.mxu0 %v694
        %2404 = vmatpush1.msra.mxu0 %v693
        %2405 = vmatprep.subr.mxu0 %v702
        %2406 = vmatpush1.msra.mxu0 %v701
        %2407 = vmatprep.subr.mxu0 %v710
        %2408 = vmatpush1.msra.mxu0 %v709
        %2409 = vmatprep.subr.mxu0 %v718
        %2410 = vmatpush1.msra.mxu0 %v717
        %2411 = vmatprep.subr.mxu0 %v726
        %2412 = vmatpush1.msra.mxu0 %v725
        %2413 = vmatprep.subr.mxu0 %v734
        %2414 = vmatpush1.msra.mxu0 %v733
        %2415 = vmatprep.subr.mxu0 %v742
        %2416 = vmatpush1.msra.mxu0 %v741
        %2417 = vmatprep.subr.mxu0 %v750
        %2418 = vmatpush1.msra.mxu0 %v749
        %2419 = vmatprep.subr.mxu0 %v758
        %2420 = vmatpush1.msra.mxu0 %v757
        %2421 = vmatprep.subr.mxu0 %v766
        %2422 = vmatpush1.msra.mxu0 %v765
        %2423 = vmatprep.subr.mxu0 %v774
        %2424 = vmatpush1.msra.mxu0 %v773
        %2425 = vmatprep.subr.mxu0 %v782
        %2426 = vmatpush1.msra.mxu0 %v781
        %2427 = vmatprep.subr.mxu0 %v790
        %2428 = vmatpush1.msra.mxu0 %v789
        %2429 = vmatprep.subr.mxu0 %v798
        %2430 = vmatpush1.msra.mxu0 %v797
        %2431 = vmatprep.subr.mxu0 %v806
        %2432 = vmatpush1.msra.mxu0 %v805
        %2433 = vmatprep.subr.mxu0 %v814
        %2434 = vmatpush1.msra.mxu0 %v813
        %2435 = vmatprep.subr.mxu0 %v822
        %2436 = vmatpush1.msra.mxu0 %v821
        %2437 = vmatprep.subr.mxu0 %v830
        %2438 = vmatpush1.msra.mxu0 %v829
        %2439 = vmatprep.subr.mxu0 %v838
        %2440 = vmatpush1.msra.mxu0 %v837
        %2441 = vmatprep.subr.mxu0 %v846
        %2442 = vmatpush1.msra.mxu0 %v845
        %2443 = vmatprep.subr.mxu0 %v854
        %2444 = vmatpush1.msra.mxu0 %v853
        %2445 = vmatprep.subr.mxu0 %v862
        %2446 = vmatpush1.msra.mxu0 %v861
        %2447 = vmatprep.subr.mxu0 %v870
        %2448 = vmatpush1.msra.mxu0 %v869
        %2449 = vmatprep.mubr.f32.mxu0 %v2094
        %2450 = vmatmul.mubr.f32.gmra.mrb[0].mxu0 %v589
        %v2451 = vpop.f32.mrb[0].mxu0
        %v2452 = vadd.f32 %v1150, %v2451
        %v2453 = vpop.f32.mrb[0].mxu0
        %v2454 = vadd.f32 %v1154, %v2453
        %2455 = vdwg.mxu0
        %2456 = vmatprep.subr.mxu0 %v878
        %2457 = vmatpush1.msra.mxu0 %v877
        %2458 = vmatprep.subr.mxu0 %v886
        %2459 = vmatpush1.msra.mxu0 %v885
        %2460 = vmatprep.subr.mxu0 %v894
        %2461 = vmatpush1.msra.mxu0 %v893
        %2462 = vmatprep.subr.mxu0 %v902
        %2463 = vmatpush1.msra.mxu0 %v901
        %2464 = vmatprep.subr.mxu0 %v910
        %2465 = vmatpush1.msra.mxu0 %v909
        %2466 = vmatprep.subr.mxu0 %v918
        %2467 = vmatpush1.msra.mxu0 %v917
        %2468 = vmatprep.subr.mxu0 %v926
        %2469 = vmatpush1.msra.mxu0 %v925
        %2470 = vmatprep.subr.mxu0 %v934
        %2471 = vmatpush1.msra.mxu0 %v933
        %2472 = vmatprep.subr.mxu0 %v942
        %2473 = vmatpush1.msra.mxu0 %v941
        %2474 = vmatprep.subr.mxu0 %v950
        %2475 = vmatpush1.msra.mxu0 %v949
        %2476 = vmatprep.subr.mxu0 %v958
        %2477 = vmatpush1.msra.mxu0 %v957
        %2478 = vmatprep.subr.mxu0 %v966
        %2479 = vmatpush1.msra.mxu0 %v965
        %2480 = vmatprep.subr.mxu0 %v974
        %2481 = vmatpush1.msra.mxu0 %v973
        %2482 = vmatprep.subr.mxu0 %v982
        %2483 = vmatpush1.msra.mxu0 %v981
        %2484 = vmatprep.subr.mxu0 %v990
        %2485 = vmatpush1.msra.mxu0 %v989
        %2486 = vmatprep.subr.mxu0 %v998
        %2487 = vmatpush1.msra.mxu0 %v997
        %2488 = vmatprep.subr.mxu0 %v1006
        %2489 = vmatpush1.msra.mxu0 %v1005
        %2490 = vmatprep.subr.mxu0 %v1014
        %2491 = vmatpush1.msra.mxu0 %v1013
        %2492 = vmatprep.subr.mxu0 %v1022
        %2493 = vmatpush1.msra.mxu0 %v1021
        %2494 = vmatprep.subr.mxu0 %v1030
        %2495 = vmatpush1.msra.mxu0 %v1029
        %2496 = vmatprep.subr.mxu0 %v1038
        %2497 = vmatpush1.msra.mxu0 %v1037
        %2498 = vmatprep.subr.mxu0 %v1046
        %2499 = vmatpush1.msra.mxu0 %v1045
        %2500 = vmatprep.subr.mxu0 %v1054
        %2501 = vmatpush1.msra.mxu0 %v1053
        %2502 = vmatprep.subr.mxu0 %v1062
        %2503 = vmatpush1.msra.mxu0 %v1061
        %2504 = vmatprep.subr.mxu0 %v1070
        %2505 = vmatpush1.msra.mxu0 %v1069
        %2506 = vmatprep.subr.mxu0 %v1078
        %2507 = vmatpush1.msra.mxu0 %v1077
        %2508 = vmatprep.subr.mxu0 %v1086
        %2509 = vmatpush1.msra.mxu0 %v1085
        %2510 = vmatprep.subr.mxu0 %v1094
        %2511 = vmatpush1.msra.mxu0 %v1093
        %2512 = vmatprep.subr.mxu0 %v1102
        %2513 = vmatpush1.msra.mxu0 %v1101
        %2514 = vmatprep.subr.mxu0 %v1110
        %2515 = vmatpush1.msra.mxu0 %v1109
        %2516 = vmatprep.subr.mxu0 %v1118
        %2517 = vmatpush1.msra.mxu0 %v1117
        %2518 = vmatprep.subr.mxu0 %v1126
        %2519 = vmatpush1.msra.mxu0 %v1125
        %2520 = vmatprep.mubr.f32.mxu0 %v2100
        %2521 = vmatmul.mubr.f32.gmra.mrb[0].mxu0 %v2094
        %v2522 = vpop.f32.mrb[0].mxu0
        %v2523 = vadd.f32 %v2452, %v2522
        %v2524 = vpop.f32.mrb[0].mxu0
        %v2525 = vadd.f32 %v2454, %v2524
        %2526 = vdwg.mxu0
        %2527 = vmatprep.subr.mxu0 %v624
        %2528 = vmatpush1.msra.mxu0 %v623
        %2529 = vmatprep.subr.mxu0 %v632
        %2530 = vmatpush1.msra.mxu0 %v631
        %2531 = vmatprep.subr.mxu0 %v640
        %2532 = vmatpush1.msra.mxu0 %v639
        %2533 = vmatprep.subr.mxu0 %v648
        %2534 = vmatpush1.msra.mxu0 %v647
        %2535 = vmatprep.subr.mxu0 %v656
        %2536 = vmatpush1.msra.mxu0 %v655
        %2537 = vmatprep.subr.mxu0 %v664
        %2538 = vmatpush1.msra.mxu0 %v663
        %2539 = vmatprep.subr.mxu0 %v672
        %2540 = vmatpush1.msra.mxu0 %v671
        %2541 = vmatprep.subr.mxu0 %v680
        %2542 = vmatpush1.msra.mxu0 %v679
        %2543 = vmatprep.subr.mxu0 %v688
        %2544 = vmatpush1.msra.mxu0 %v687
        %2545 = vmatprep.subr.mxu0 %v696
        %2546 = vmatpush1.msra.mxu0 %v695
        %2547 = vmatprep.subr.mxu0 %v704
        %2548 = vmatpush1.msra.mxu0 %v703
        %2549 = vmatprep.subr.mxu0 %v712
        %2550 = vmatpush1.msra.mxu0 %v711
        %2551 = vmatprep.subr.mxu0 %v720
        %2552 = vmatpush1.msra.mxu0 %v719
        %2553 = vmatprep.subr.mxu0 %v728
        %2554 = vmatpush1.msra.mxu0 %v727
        %2555 = vmatprep.subr.mxu0 %v736
        %2556 = vmatpush1.msra.mxu0 %v735
        %2557 = vmatprep.subr.mxu0 %v744
        %2558 = vmatpush1.msra.mxu0 %v743
        %2559 = vmatprep.subr.mxu0 %v752
        %2560 = vmatpush1.msra.mxu0 %v751
        %2561 = vmatprep.subr.mxu0 %v760
        %2562 = vmatpush1.msra.mxu0 %v759
        %2563 = vmatprep.subr.mxu0 %v768
        %2564 = vmatpush1.msra.mxu0 %v767
        %2565 = vmatprep.subr.mxu0 %v776
        %2566 = vmatpush1.msra.mxu0 %v775
        %2567 = vmatprep.subr.mxu0 %v784
        %2568 = vmatpush1.msra.mxu0 %v783
        %2569 = vmatprep.subr.mxu0 %v792
        %2570 = vmatpush1.msra.mxu0 %v791
        %2571 = vmatprep.subr.mxu0 %v800
        %2572 = vmatpush1.msra.mxu0 %v799
        %2573 = vmatprep.subr.mxu0 %v808
        %2574 = vmatpush1.msra.mxu0 %v807
        %2575 = vmatprep.subr.mxu0 %v816
        %2576 = vmatpush1.msra.mxu0 %v815
        %2577 = vmatprep.subr.mxu0 %v824
        %2578 = vmatpush1.msra.mxu0 %v823
        %2579 = vmatprep.subr.mxu0 %v832
        %2580 = vmatpush1.msra.mxu0 %v831
        %2581 = vmatprep.subr.mxu0 %v840
        %2582 = vmatpush1.msra.mxu0 %v839
        %2583 = vmatprep.subr.mxu0 %v848
        %2584 = vmatpush1.msra.mxu0 %v847
        %2585 = vmatprep.subr.mxu0 %v856
        %2586 = vmatpush1.msra.mxu0 %v855
        %2587 = vmatprep.subr.mxu0 %v864
        %2588 = vmatpush1.msra.mxu0 %v863
        %2589 = vmatprep.subr.mxu0 %v872
        %2590 = vmatpush1.msra.mxu0 %v871
        %2591 = vmatprep.mubr.f32.mxu0 %v2094
        %2592 = vmatmul.mubr.f32.gmra.mrb[0].mxu0 %v589
        %v2593 = vpop.f32.mrb[0].mxu0
        %v2594 = vadd.f32 %v1158, %v2593
        %v2595 = vpop.f32.mrb[0].mxu0
        %v2596 = vadd.f32 %v1162, %v2595
        %2597 = vdwg.mxu0
        %2598 = vmatprep.subr.mxu0 %v880
        %2599 = vmatpush1.msra.mxu0 %v879
        %2600 = vmatprep.subr.mxu0 %v888
        %2601 = vmatpush1.msra.mxu0 %v887
        %2602 = vmatprep.subr.mxu0 %v896
        %2603 = vmatpush1.msra.mxu0 %v895
        %2604 = vmatprep.subr.mxu0 %v904
        %2605 = vmatpush1.msra.mxu0 %v903
        %2606 = vmatprep.subr.mxu0 %v912
        %2607 = vmatpush1.msra.mxu0 %v911
        %2608 = vmatprep.subr.mxu0 %v920
        %2609 = vmatpush1.msra.mxu0 %v919
        %2610 = vmatprep.subr.mxu0 %v928
        %2611 = vmatpush1.msra.mxu0 %v927
        %2612 = vmatprep.subr.mxu0 %v936
        %2613 = vmatpush1.msra.mxu0 %v935
        %2614 = vmatprep.subr.mxu0 %v944
        %2615 = vmatpush1.msra.mxu0 %v943
        %2616 = vmatprep.subr.mxu0 %v952
        %2617 = vmatpush1.msra.mxu0 %v951
        %2618 = vmatprep.subr.mxu0 %v960
        %2619 = vmatpush1.msra.mxu0 %v959
        %2620 = vmatprep.subr.mxu0 %v968
        %2621 = vmatpush1.msra.mxu0 %v967
        %2622 = vmatprep.subr.mxu0 %v976
        %2623 = vmatpush1.msra.mxu0 %v975
        %2624 = vmatprep.subr.mxu0 %v984
        %2625 = vmatpush1.msra.mxu0 %v983
        %2626 = vmatprep.subr.mxu0 %v992
        %2627 = vmatpush1.msra.mxu0 %v991
        %2628 = vmatprep.subr.mxu0 %v1000
        %2629 = vmatpush1.msra.mxu0 %v999
        %2630 = vmatprep.subr.mxu0 %v1008
        %2631 = vmatpush1.msra.mxu0 %v1007
        %2632 = vmatprep.subr.mxu0 %v1016
        %2633 = vmatpush1.msra.mxu0 %v1015
        %2634 = vmatprep.subr.mxu0 %v1024
        %2635 = vmatpush1.msra.mxu0 %v1023
        %2636 = vmatprep.subr.mxu0 %v1032
        %2637 = vmatpush1.msra.mxu0 %v1031
        %2638 = vmatprep.subr.mxu0 %v1040
        %2639 = vmatpush1.msra.mxu0 %v1039
        %2640 = vmatprep.subr.mxu0 %v1048
        %2641 = vmatpush1.msra.mxu0 %v1047
        %2642 = vmatprep.subr.mxu0 %v1056
        %2643 = vmatpush1.msra.mxu0 %v1055
        %2644 = vmatprep.subr.mxu0 %v1064
        %2645 = vmatpush1.msra.mxu0 %v1063
        %2646 = vmatprep.subr.mxu0 %v1072
        %2647 = vmatpush1.msra.mxu0 %v1071
        %2648 = vmatprep.subr.mxu0 %v1080
        %2649 = vmatpush1.msra.mxu0 %v1079
        %2650 = vmatprep.subr.mxu0 %v1088
        %2651 = vmatpush1.msra.mxu0 %v1087
        %2652 = vmatprep.subr.mxu0 %v1096
        %2653 = vmatpush1.msra.mxu0 %v1095
        %2654 = vmatprep.subr.mxu0 %v1104
        %2655 = vmatpush1.msra.mxu0 %v1103
        %2656 = vmatprep.subr.mxu0 %v1112
        %2657 = vmatpush1.msra.mxu0 %v1111
        %2658 = vmatprep.subr.mxu0 %v1120
        %2659 = vmatpush1.msra.mxu0 %v1119
        %2660 = vmatprep.subr.mxu0 %v1128
        %2661 = vmatpush1.msra.mxu0 %v1127
        %2662 = vmatprep.mubr.f32.mxu0 %v2100
        %2663 = vmatmul.mubr.f32.gmra.mrb[0].mxu0 %v2094
        %v2664 = vpop.f32.mrb[0].mxu0
        %v2665 = vadd.f32 %v2594, %v2664
        %v2666 = vpop.f32.mrb[0].mxu0
        %v2667 = vadd.f32 %v2596, %v2666
        %2668 = vdwg.mxu0
        %v2669 = vxor.u32 %v2239, 2147483648
        %v2670 = vxor.u32 %v2241, 2147483648
        %v2671 = vxor.u32 %v2383, 2147483648
        %v2672 = vxor.u32 %v2523, 2147483648
        %v2673 = vxor.u32 %v2525, 2147483648
        %v2674 = vxor.u32 %v2667, 2147483648
        %v2675 = vmul.f32 %v2669, 1.442695
        %v2676 = vpow.pop %v2675
        %v2677 = vmul.f32 %v2670, 1.442695
        %v2678 = vpow.pop %v2677
        %v2679 = vmul.f32 %v2671, 1.442695
        %v2680 = vpow.pop %v2679
        %v2681 = vmul.f32 %v2672, 1.442695
        %v2682 = vpow.pop %v2681
        %v2683 = vmul.f32 %v2673, 1.442695
        %v2684 = vpow.pop %v2683
        %v2685 = vmul.f32 %v2674, 1.442695
        %v2686 = vpow.pop %v2685
        %v2687 = vadd.f32 %v2676, 1.0
        %v2688 = vadd.f32 %v2678, 1.0
        %v2689 = vadd.f32 %v2680, 1.0
        %v2690 = vadd.f32 %v2682, 1.0
        %v2691 = vadd.f32 %v2684, 1.0
        %v2692 = vadd.f32 %v2686, 1.0
        %v2693 = vrcp.pop %v2687
        %v2694 = vmul.f32 1.0, %v2693
        %v2695 = vrcp.pop %v2688
        %v2696 = vmul.f32 1.0, %v2695
        %v2697 = vrcp.pop %v2689
        %v2698 = vmul.f32 1.0, %v2697
        %v2699 = vrcp.pop %v2690
        %v2700 = vmul.f32 1.0, %v2699
        %v2701 = vrcp.pop %v2691
        %v2702 = vmul.f32 1.0, %v2701
        %v2703 = vrcp.pop %v2692
        %v2704 = vmul.f32 1.0, %v2703
        %v2705 = vtanh.pop %v2381
        %v2706 = vmul.f32 %v2696, %v2092
        %v2707 = vmul.f32 %v2694, %v2705
        %v2708 = vadd.f32 %v2706, %v2707
        %v2709 = vtanh.pop %v2708
        %v2710 = vmul.f32 %v2698, %v2709
        %v2711 = vtanh.pop %v2665
        %v2712 = vmul.f32 %v2702, %v2098
        %v2713 = vmul.f32 %v2700, %v2711
        %v2714 = vadd.f32 %v2712, %v2713
        %v2715 = vtanh.pop %v2714
        %v2716 = vmul.f32 %v2704, %v2715
        %2717 = vmatprep.subr.mxu0 %v618
        %2718 = vmatpush1.msra.mxu0 %v617
        %2719 = vmatprep.subr.mxu0 %v626
        %2720 = vmatpush1.msra.mxu0 %v625
        %2721 = vmatprep.subr.mxu0 %v634
        %2722 = vmatpush1.msra.mxu0 %v633
        %2723 = vmatprep.subr.mxu0 %v642
        %2724 = vmatpush1.msra.mxu0 %v641
        %2725 = vmatprep.subr.mxu0 %v650
        %2726 = vmatpush1.msra.mxu0 %v649
        %2727 = vmatprep.subr.mxu0 %v658
        %2728 = vmatpush1.msra.mxu0 %v657
        %2729 = vmatprep.subr.mxu0 %v666
        %2730 = vmatpush1.msra.mxu0 %v665
        %2731 = vmatprep.subr.mxu0 %v674
        %2732 = vmatpush1.msra.mxu0 %v673
        %2733 = vmatprep.subr.mxu0 %v682
        %2734 = vmatpush1.msra.mxu0 %v681
        %2735 = vmatprep.subr.mxu0 %v690
        %2736 = vmatpush1.msra.mxu0 %v689
        %2737 = vmatprep.subr.mxu0 %v698
        %2738 = vmatpush1.msra.mxu0 %v697
        %2739 = vmatprep.subr.mxu0 %v706
        %2740 = vmatpush1.msra.mxu0 %v705
        %2741 = vmatprep.subr.mxu0 %v714
        %2742 = vmatpush1.msra.mxu0 %v713
        %2743 = vmatprep.subr.mxu0 %v722
        %2744 = vmatpush1.msra.mxu0 %v721
        %2745 = vmatprep.subr.mxu0 %v730
        %2746 = vmatpush1.msra.mxu0 %v729
        %2747 = vmatprep.subr.mxu0 %v738
        %2748 = vmatpush1.msra.mxu0 %v737
        %2749 = vmatprep.subr.mxu0 %v746
        %2750 = vmatpush1.msra.mxu0 %v745
        %2751 = vmatprep.subr.mxu0 %v754
        %2752 = vmatpush1.msra.mxu0 %v753
        %2753 = vmatprep.subr.mxu0 %v762
        %2754 = vmatpush1.msra.mxu0 %v761
        %2755 = vmatprep.subr.mxu0 %v770
        %2756 = vmatpush1.msra.mxu0 %v769
        %2757 = vmatprep.subr.mxu0 %v778
        %2758 = vmatpush1.msra.mxu0 %v777
        %2759 = vmatprep.subr.mxu0 %v786
        %2760 = vmatpush1.msra.mxu0 %v785
        %2761 = vmatprep.subr.mxu0 %v794
        %2762 = vmatpush1.msra.mxu0 %v793
        %2763 = vmatprep.subr.mxu0 %v802
        %2764 = vmatpush1.msra.mxu0 %v801
        %2765 = vmatprep.subr.mxu0 %v810
        %2766 = vmatpush1.msra.mxu0 %v809
        %2767 = vmatprep.subr.mxu0 %v818
        %2768 = vmatpush1.msra.mxu0 %v817
        %2769 = vmatprep.subr.mxu0 %v826
        %2770 = vmatpush1.msra.mxu0 %v825
        %2771 = vmatprep.subr.mxu0 %v834
        %2772 = vmatpush1.msra.mxu0 %v833
        %2773 = vmatprep.subr.mxu0 %v842
        %2774 = vmatpush1.msra.mxu0 %v841
        %2775 = vmatprep.subr.mxu0 %v850
        %2776 = vmatpush1.msra.mxu0 %v849
        %2777 = vmatprep.subr.mxu0 %v858
        %2778 = vmatpush1.msra.mxu0 %v857
        %2779 = vmatprep.subr.mxu0 %v866
        %2780 = vmatpush1.msra.mxu0 %v865
        %2781 = vmatprep.mubr.f32.mxu0 %v2710
        %2782 = vmatmul.mubr.f32.gmra.mrb[0].mxu0 %v594
        %v2783 = vpop.f32.mrb[0].mxu0
        %v2784 = vadd.f32 %v1134, %v2783
        %v2785 = vpop.f32.mrb[0].mxu0
        %v2786 = vadd.f32 %v1138, %v2785
        %2787 = vdwg.mxu0
        %2788 = vmatprep.subr.mxu0 %v874
        %2789 = vmatpush1.msra.mxu0 %v873
        %2790 = vmatprep.subr.mxu0 %v882
        %2791 = vmatpush1.msra.mxu0 %v881
        %2792 = vmatprep.subr.mxu0 %v890
        %2793 = vmatpush1.msra.mxu0 %v889
        %2794 = vmatprep.subr.mxu0 %v898
        %2795 = vmatpush1.msra.mxu0 %v897
        %2796 = vmatprep.subr.mxu0 %v906
        %2797 = vmatpush1.msra.mxu0 %v905
        %2798 = vmatprep.subr.mxu0 %v914
        %2799 = vmatpush1.msra.mxu0 %v913
        %2800 = vmatprep.subr.mxu0 %v922
        %2801 = vmatpush1.msra.mxu0 %v921
        %2802 = vmatprep.subr.mxu0 %v930
        %2803 = vmatpush1.msra.mxu0 %v929
        %2804 = vmatprep.subr.mxu0 %v938
        %2805 = vmatpush1.msra.mxu0 %v937
        %2806 = vmatprep.subr.mxu0 %v946
        %2807 = vmatpush1.msra.mxu0 %v945
        %2808 = vmatprep.subr.mxu0 %v954
        %2809 = vmatpush1.msra.mxu0 %v953
        %2810 = vmatprep.subr.mxu0 %v962
        %2811 = vmatpush1.msra.mxu0 %v961
        %2812 = vmatprep.subr.mxu0 %v970
        %2813 = vmatpush1.msra.mxu0 %v969
        %2814 = vmatprep.subr.mxu0 %v978
        %2815 = vmatpush1.msra.mxu0 %v977
        %2816 = vmatprep.subr.mxu0 %v986
        %2817 = vmatpush1.msra.mxu0 %v985
        %2818 = vmatprep.subr.mxu0 %v994
        %2819 = vmatpush1.msra.mxu0 %v993
        %2820 = vmatprep.subr.mxu0 %v1002
        %2821 = vmatpush1.msra.mxu0 %v1001
        %2822 = vmatprep.subr.mxu0 %v1010
        %2823 = vmatpush1.msra.mxu0 %v1009
        %2824 = vmatprep.subr.mxu0 %v1018
        %2825 = vmatpush1.msra.mxu0 %v1017
        %2826 = vmatprep.subr.mxu0 %v1026
        %2827 = vmatpush1.msra.mxu0 %v1025
        %2828 = vmatprep.subr.mxu0 %v1034
        %2829 = vmatpush1.msra.mxu0 %v1033
        %2830 = vmatprep.subr.mxu0 %v1042
        %2831 = vmatpush1.msra.mxu0 %v1041
        %2832 = vmatprep.subr.mxu0 %v1050
        %2833 = vmatpush1.msra.mxu0 %v1049
        %2834 = vmatprep.subr.mxu0 %v1058
        %2835 = vmatpush1.msra.mxu0 %v1057
        %2836 = vmatprep.subr.mxu0 %v1066
        %2837 = vmatpush1.msra.mxu0 %v1065
        %2838 = vmatprep.subr.mxu0 %v1074
        %2839 = vmatpush1.msra.mxu0 %v1073
        %2840 = vmatprep.subr.mxu0 %v1082
        %2841 = vmatpush1.msra.mxu0 %v1081
        %2842 = vmatprep.subr.mxu0 %v1090
        %2843 = vmatpush1.msra.mxu0 %v1089
        %2844 = vmatprep.subr.mxu0 %v1098
        %2845 = vmatpush1.msra.mxu0 %v1097
        %2846 = vmatprep.subr.mxu0 %v1106
        %2847 = vmatpush1.msra.mxu0 %v1105
        %2848 = vmatprep.subr.mxu0 %v1114
        %2849 = vmatpush1.msra.mxu0 %v1113
        %2850 = vmatprep.subr.mxu0 %v1122
        %2851 = vmatpush1.msra.mxu0 %v1121
        %2852 = vmatprep.mubr.f32.mxu0 %v2716
        %2853 = vmatmul.mubr.f32.gmra.mrb[0].mxu0 %v2710
        %v2854 = vpop.f32.mrb[0].mxu0
        %v2855 = vadd.f32 %v2784, %v2854
        %v2856 = vpop.f32.mrb[0].mxu0
        %v2857 = vadd.f32 %v2786, %v2856
        %2858 = vdwg.mxu0
        %2859 = vmatprep.subr.mxu0 %v620
        %2860 = vmatpush1.msra.mxu0 %v619
        %2861 = vmatprep.subr.mxu0 %v628
        %2862 = vmatpush1.msra.mxu0 %v627
        %2863 = vmatprep.subr.mxu0 %v636
        %2864 = vmatpush1.msra.mxu0 %v635
        %2865 = vmatprep.subr.mxu0 %v644
        %2866 = vmatpush1.msra.mxu0 %v643
        %2867 = vmatprep.subr.mxu0 %v652
        %2868 = vmatpush1.msra.mxu0 %v651
        %2869 = vmatprep.subr.mxu0 %v660
        %2870 = vmatpush1.msra.mxu0 %v659
        %2871 = vmatprep.subr.mxu0 %v668
        %2872 = vmatpush1.msra.mxu0 %v667
        %2873 = vmatprep.subr.mxu0 %v676
        %2874 = vmatpush1.msra.mxu0 %v675
        %2875 = vmatprep.subr.mxu0 %v684
        %2876 = vmatpush1.msra.mxu0 %v683
        %2877 = vmatprep.subr.mxu0 %v692
        %2878 = vmatpush1.msra.mxu0 %v691
        %2879 = vmatprep.subr.mxu0 %v700
        %2880 = vmatpush1.msra.mxu0 %v699
        %2881 = vmatprep.subr.mxu0 %v708
        %2882 = vmatpush1.msra.mxu0 %v707
        %2883 = vmatprep.subr.mxu0 %v716
        %2884 = vmatpush1.msra.mxu0 %v715
        %2885 = vmatprep.subr.mxu0 %v724
        %2886 = vmatpush1.msra.mxu0 %v723
        %2887 = vmatprep.subr.mxu0 %v732
        %2888 = vmatpush1.msra.mxu0 %v731
        %2889 = vmatprep.subr.mxu0 %v740
        %2890 = vmatpush1.msra.mxu0 %v739
        %2891 = vmatprep.subr.mxu0 %v748
        %2892 = vmatpush1.msra.mxu0 %v747
        %2893 = vmatprep.subr.mxu0 %v756
        %2894 = vmatpush1.msra.mxu0 %v755
        %2895 = vmatprep.subr.mxu0 %v764
        %2896 = vmatpush1.msra.mxu0 %v763
        %2897 = vmatprep.subr.mxu0 %v772
        %2898 = vmatpush1.msra.mxu0 %v771
        %2899 = vmatprep.subr.mxu0 %v780
        %2900 = vmatpush1.msra.mxu0 %v779
        %2901 = vmatprep.subr.mxu0 %v788
        %2902 = vmatpush1.msra.mxu0 %v787
        %2903 = vmatprep.subr.mxu0 %v796
        %2904 = vmatpush1.msra.mxu0 %v795
        %2905 = vmatprep.subr.mxu0 %v804
        %2906 = vmatpush1.msra.mxu0 %v803
        %2907 = vmatprep.subr.mxu0 %v812
        %2908 = vmatpush1.msra.mxu0 %v811
        %2909 = vmatprep.subr.mxu0 %v820
        %2910 = vmatpush1.msra.mxu0 %v819
        %2911 = vmatprep.subr.mxu0 %v828
        %2912 = vmatpush1.msra.mxu0 %v827
        %2913 = vmatprep.subr.mxu0 %v836
        %2914 = vmatpush1.msra.mxu0 %v835
        %2915 = vmatprep.subr.mxu0 %v844
        %2916 = vmatpush1.msra.mxu0 %v843
        %2917 = vmatprep.subr.mxu0 %v852
        %2918 = vmatpush1.msra.mxu0 %v851
        %2919 = vmatprep.subr.mxu0 %v860
        %2920 = vmatpush1.msra.mxu0 %v859
        %2921 = vmatprep.subr.mxu0 %v868
        %2922 = vmatpush1.msra.mxu0 %v867
        %2923 = vmatprep.mubr.f32.mxu0 %v2710
        %2924 = vmatmul.mubr.f32.gmra.mrb[0].mxu0 %v594
        %v2925 = vpop.f32.mrb[0].mxu0
        %v2926 = vadd.f32 %v1142, %v2925
        %v2927 = vpop.f32.mrb[0].mxu0
        %v2928 = vadd.f32 %v1146, %v2927
        %2929 = vdwg.mxu0
        %2930 = vmatprep.subr.mxu0 %v876
        %2931 = vmatpush1.msra.mxu0 %v875
        %2932 = vmatprep.subr.mxu0 %v884
        %2933 = vmatpush1.msra.mxu0 %v883
        %2934 = vmatprep.subr.mxu0 %v892
        %2935 = vmatpush1.msra.mxu0 %v891
        %2936 = vmatprep.subr.mxu0 %v900
        %2937 = vmatpush1.msra.mxu0 %v899
        %2938 = vmatprep.subr.mxu0 %v908
        %2939 = vmatpush1.msra.mxu0 %v907
        %2940 = vmatprep.subr.mxu0 %v916
        %2941 = vmatpush1.msra.mxu0 %v915
        %2942 = vmatprep.subr.mxu0 %v924
        %2943 = vmatpush1.msra.mxu0 %v923
        %2944 = vmatprep.subr.mxu0 %v932
        %2945 = vmatpush1.msra.mxu0 %v931
        %2946 = vmatprep.subr.mxu0 %v940
        %2947 = vmatpush1.msra.mxu0 %v939
        %2948 = vmatprep.subr.mxu0 %v948
        %2949 = vmatpush1.msra.mxu0 %v947
        %2950 = vmatprep.subr.mxu0 %v956
        %2951 = vmatpush1.msra.mxu0 %v955
        %2952 = vmatprep.subr.mxu0 %v964
        %2953 = vmatpush1.msra.mxu0 %v963
        %2954 = vmatprep.subr.mxu0 %v972
        %2955 = vmatpush1.msra.mxu0 %v971
        %2956 = vmatprep.subr.mxu0 %v980
        %2957 = vmatpush1.msra.mxu0 %v979
        %2958 = vmatprep.subr.mxu0 %v988
        %2959 = vmatpush1.msra.mxu0 %v987
        %2960 = vmatprep.subr.mxu0 %v996
        %2961 = vmatpush1.msra.mxu0 %v995
        %2962 = vmatprep.subr.mxu0 %v1004
        %2963 = vmatpush1.msra.mxu0 %v1003
        %2964 = vmatprep.subr.mxu0 %v1012
        %2965 = vmatpush1.msra.mxu0 %v1011
        %2966 = vmatprep.subr.mxu0 %v1020
        %2967 = vmatpush1.msra.mxu0 %v1019
        %2968 = vmatprep.subr.mxu0 %v1028
        %2969 = vmatpush1.msra.mxu0 %v1027
        %2970 = vmatprep.subr.mxu0 %v1036
        %2971 = vmatpush1.msra.mxu0 %v1035
        %2972 = vmatprep.subr.mxu0 %v1044
        %2973 = vmatpush1.msra.mxu0 %v1043
        %2974 = vmatprep.subr.mxu0 %v1052
        %2975 = vmatpush1.msra.mxu0 %v1051
        %2976 = vmatprep.subr.mxu0 %v1060
        %2977 = vmatpush1.msra.mxu0 %v1059
        %2978 = vmatprep.subr.mxu0 %v1068
        %2979 = vmatpush1.msra.mxu0 %v1067
        %2980 = vmatprep.subr.mxu0 %v1076
        %2981 = vmatpush1.msra.mxu0 %v1075
        %2982 = vmatprep.subr.mxu0 %v1084
        %2983 = vmatpush1.msra.mxu0 %v1083
        %2984 = vmatprep.subr.mxu0 %v1092
        %2985 = vmatpush1.msra.mxu0 %v1091
        %2986 = vmatprep.subr.mxu0 %v1100
        %2987 = vmatpush1.msra.mxu0 %v1099
        %2988 = vmatprep.subr.mxu0 %v1108
        %2989 = vmatpush1.msra.mxu0 %v1107
        %2990 = vmatprep.subr.mxu0 %v1116
        %2991 = vmatpush1.msra.mxu0 %v1115
        %2992 = vmatprep.subr.mxu0 %v1124
        %2993 = vmatpush1.msra.mxu0 %v1123
        %2994 = vmatprep.mubr.f32.mxu0 %v2716
        %2995 = vmatmul.mubr.f32.gmra.mrb[0].mxu0 %v2710
        %v2996 = vpop.f32.mrb[0].mxu0
        %v2997 = vadd.f32 %v2926, %v2996
        %v2998 = vpop.f32.mrb[0].mxu0
        %v2999 = vadd.f32 %v2928, %v2998
        %3000 = vdwg.mxu0
        %3001 = vmatprep.subr.mxu0 %v622
        %3002 = vmatpush1.msra.mxu0 %v621
        %3003 = vmatprep.subr.mxu0 %v630
        %3004 = vmatpush1.msra.mxu0 %v629
        %3005 = vmatprep.subr.mxu0 %v638
        %3006 = vmatpush1.msra.mxu0 %v637
        %3007 = vmatprep.subr.mxu0 %v646
        %3008 = vmatpush1.msra.mxu0 %v645
        %3009 = vmatprep.subr.mxu0 %v654
        %3010 = vmatpush1.msra.mxu0 %v653
        %3011 = vmatprep.subr.mxu0 %v662
        %3012 = vmatpush1.msra.mxu0 %v661
        %3013 = vmatprep.subr.mxu0 %v670
        %3014 = vmatpush1.msra.mxu0 %v669
        %3015 = vmatprep.subr.mxu0 %v678
        %3016 = vmatpush1.msra.mxu0 %v677
        %3017 = vmatprep.subr.mxu0 %v686
        %3018 = vmatpush1.msra.mxu0 %v685
        %3019 = vmatprep.subr.mxu0 %v694
        %3020 = vmatpush1.msra.mxu0 %v693
        %3021 = vmatprep.subr.mxu0 %v702
        %3022 = vmatpush1.msra.mxu0 %v701
        %3023 = vmatprep.subr.mxu0 %v710
        %3024 = vmatpush1.msra.mxu0 %v709
        %3025 = vmatprep.subr.mxu0 %v718
        %3026 = vmatpush1.msra.mxu0 %v717
        %3027 = vmatprep.subr.mxu0 %v726
        %3028 = vmatpush1.msra.mxu0 %v725
        %3029 = vmatprep.subr.mxu0 %v734
        %3030 = vmatpush1.msra.mxu0 %v733
        %3031 = vmatprep.subr.mxu0 %v742
        %3032 = vmatpush1.msra.mxu0 %v741
        %3033 = vmatprep.subr.mxu0 %v750
        %3034 = vmatpush1.msra.mxu0 %v749
        %3035 = vmatprep.subr.mxu0 %v758
        %3036 = vmatpush1.msra.mxu0 %v757
        %3037 = vmatprep.subr.mxu0 %v766
        %3038 = vmatpush1.msra.mxu0 %v765
        %3039 = vmatprep.subr.mxu0 %v774
        %3040 = vmatpush1.msra.mxu0 %v773
        %3041 = vmatprep.subr.mxu0 %v782
        %3042 = vmatpush1.msra.mxu0 %v781
        %3043 = vmatprep.subr.mxu0 %v790
        %3044 = vmatpush1.msra.mxu0 %v789
        %3045 = vmatprep.subr.mxu0 %v798
        %3046 = vmatpush1.msra.mxu0 %v797
        %3047 = vmatprep.subr.mxu0 %v806
        %3048 = vmatpush1.msra.mxu0 %v805
        %3049 = vmatprep.subr.mxu0 %v814
        %3050 = vmatpush1.msra.mxu0 %v813
        %3051 = vmatprep.subr.mxu0 %v822
        %3052 = vmatpush1.msra.mxu0 %v821
        %3053 = vmatprep.subr.mxu0 %v830
        %3054 = vmatpush1.msra.mxu0 %v829
        %3055 = vmatprep.subr.mxu0 %v838
        %3056 = vmatpush1.msra.mxu0 %v837
        %3057 = vmatprep.subr.mxu0 %v846
        %3058 = vmatpush1.msra.mxu0 %v845
        %3059 = vmatprep.subr.mxu0 %v854
        %3060 = vmatpush1.msra.mxu0 %v853
        %3061 = vmatprep.subr.mxu0 %v862
        %3062 = vmatpush1.msra.mxu0 %v861
        %3063 = vmatprep.subr.mxu0 %v870
        %3064 = vmatpush1.msra.mxu0 %v869
        %3065 = vmatprep.mubr.f32.mxu0 %v2710
        %3066 = vmatmul.mubr.f32.gmra.mrb[0].mxu0 %v594
        %v3067 = vpop.f32.mrb[0].mxu0
        %v3068 = vadd.f32 %v1150, %v3067
        %v3069 = vpop.f32.mrb[0].mxu0
        %v3070 = vadd.f32 %v1154, %v3069
        %3071 = vdwg.mxu0
        %3072 = vmatprep.subr.mxu0 %v878
        %3073 = vmatpush1.msra.mxu0 %v877
        %3074 = vmatprep.subr.mxu0 %v886
        %3075 = vmatpush1.msra.mxu0 %v885
        %3076 = vmatprep.subr.mxu0 %v894
        %3077 = vmatpush1.msra.mxu0 %v893
        %3078 = vmatprep.subr.mxu0 %v902
        %3079 = vmatpush1.msra.mxu0 %v901
        %3080 = vmatprep.subr.mxu0 %v910
        %3081 = vmatpush1.msra.mxu0 %v909
        %3082 = vmatprep.subr.mxu0 %v918
        %3083 = vmatpush1.msra.mxu0 %v917
        %3084 = vmatprep.subr.mxu0 %v926
        %3085 = vmatpush1.msra.mxu0 %v925
        %3086 = vmatprep.subr.mxu0 %v934
        %3087 = vmatpush1.msra.mxu0 %v933
        %3088 = vmatprep.subr.mxu0 %v942
        %3089 = vmatpush1.msra.mxu0 %v941
        %3090 = vmatprep.subr.mxu0 %v950
        %3091 = vmatpush1.msra.mxu0 %v949
        %3092 = vmatprep.subr.mxu0 %v958
        %3093 = vmatpush1.msra.mxu0 %v957
        %3094 = vmatprep.subr.mxu0 %v966
        %3095 = vmatpush1.msra.mxu0 %v965
        %3096 = vmatprep.subr.mxu0 %v974
        %3097 = vmatpush1.msra.mxu0 %v973
        %3098 = vmatprep.subr.mxu0 %v982
        %3099 = vmatpush1.msra.mxu0 %v981
        %3100 = vmatprep.subr.mxu0 %v990
        %3101 = vmatpush1.msra.mxu0 %v989
        %3102 = vmatprep.subr.mxu0 %v998
        %3103 = vmatpush1.msra.mxu0 %v997
        %3104 = vmatprep.subr.mxu0 %v1006
        %3105 = vmatpush1.msra.mxu0 %v1005
        %3106 = vmatprep.subr.mxu0 %v1014
        %3107 = vmatpush1.msra.mxu0 %v1013
        %3108 = vmatprep.subr.mxu0 %v1022
        %3109 = vmatpush1.msra.mxu0 %v1021
        %3110 = vmatprep.subr.mxu0 %v1030
        %3111 = vmatpush1.msra.mxu0 %v1029
        %3112 = vmatprep.subr.mxu0 %v1038
        %3113 = vmatpush1.msra.mxu0 %v1037
        %3114 = vmatprep.subr.mxu0 %v1046
        %3115 = vmatpush1.msra.mxu0 %v1045
        %3116 = vmatprep.subr.mxu0 %v1054
        %3117 = vmatpush1.msra.mxu0 %v1053
        %3118 = vmatprep.subr.mxu0 %v1062
        %3119 = vmatpush1.msra.mxu0 %v1061
        %3120 = vmatprep.subr.mxu0 %v1070
        %3121 = vmatpush1.msra.mxu0 %v1069
        %3122 = vmatprep.subr.mxu0 %v1078
        %3123 = vmatpush1.msra.mxu0 %v1077
        %3124 = vmatprep.subr.mxu0 %v1086
        %3125 = vmatpush1.msra.mxu0 %v1085
        %3126 = vmatprep.subr.mxu0 %v1094
        %3127 = vmatpush1.msra.mxu0 %v1093
        %3128 = vmatprep.subr.mxu0 %v1102
        %3129 = vmatpush1.msra.mxu0 %v1101
        %3130 = vmatprep.subr.mxu0 %v1110
        %3131 = vmatpush1.msra.mxu0 %v1109
        %3132 = vmatprep.subr.mxu0 %v1118
        %3133 = vmatpush1.msra.mxu0 %v1117
        %3134 = vmatprep.subr.mxu0 %v1126
        %3135 = vmatpush1.msra.mxu0 %v1125
        %3136 = vmatprep.mubr.f32.mxu0 %v2716
        %3137 = vmatmul.mubr.f32.gmra.mrb[0].mxu0 %v2710
        %v3138 = vpop.f32.mrb[0].mxu0
        %v3139 = vadd.f32 %v3068, %v3138
        %v3140 = vpop.f32.mrb[0].mxu0
        %v3141 = vadd.f32 %v3070, %v3140
        %3142 = vdwg.mxu0
        %3143 = vmatprep.subr.mxu0 %v624
        %3144 = vmatpush1.msra.mxu0 %v623
        %3145 = vmatprep.subr.mxu0 %v632
        %3146 = vmatpush1.msra.mxu0 %v631
        %3147 = vmatprep.subr.mxu0 %v640
        %3148 = vmatpush1.msra.mxu0 %v639
        %3149 = vmatprep.subr.mxu0 %v648
        %3150 = vmatpush1.msra.mxu0 %v647
        %3151 = vmatprep.subr.mxu0 %v656
        %3152 = vmatpush1.msra.mxu0 %v655
        %3153 = vmatprep.subr.mxu0 %v664
        %3154 = vmatpush1.msra.mxu0 %v663
        %3155 = vmatprep.subr.mxu0 %v672
        %3156 = vmatpush1.msra.mxu0 %v671
        %3157 = vmatprep.subr.mxu0 %v680
        %3158 = vmatpush1.msra.mxu0 %v679
        %3159 = vmatprep.subr.mxu0 %v688
        %3160 = vmatpush1.msra.mxu0 %v687
        %3161 = vmatprep.subr.mxu0 %v696
        %3162 = vmatpush1.msra.mxu0 %v695
        %3163 = vmatprep.subr.mxu0 %v704
        %3164 = vmatpush1.msra.mxu0 %v703
        %3165 = vmatprep.subr.mxu0 %v712
        %3166 = vmatpush1.msra.mxu0 %v711
        %3167 = vmatprep.subr.mxu0 %v720
        %3168 = vmatpush1.msra.mxu0 %v719
        %3169 = vmatprep.subr.mxu0 %v728
        %3170 = vmatpush1.msra.mxu0 %v727
        %3171 = vmatprep.subr.mxu0 %v736
        %3172 = vmatpush1.msra.mxu0 %v735
        %3173 = vmatprep.subr.mxu0 %v744
        %3174 = vmatpush1.msra.mxu0 %v743
        %3175 = vmatprep.subr.mxu0 %v752
        %3176 = vmatpush1.msra.mxu0 %v751
        %3177 = vmatprep.subr.mxu0 %v760
        %3178 = vmatpush1.msra.mxu0 %v759
        %3179 = vmatprep.subr.mxu0 %v768
        %3180 = vmatpush1.msra.mxu0 %v767
        %3181 = vmatprep.subr.mxu0 %v776
        %3182 = vmatpush1.msra.mxu0 %v775
        %3183 = vmatprep.subr.mxu0 %v784
        %3184 = vmatpush1.msra.mxu0 %v783
        %3185 = vmatprep.subr.mxu0 %v792
        %3186 = vmatpush1.msra.mxu0 %v791
        %3187 = vmatprep.subr.mxu0 %v800
        %3188 = vmatpush1.msra.mxu0 %v799
        %3189 = vmatprep.subr.mxu0 %v808
        %3190 = vmatpush1.msra.mxu0 %v807
        %3191 = vmatprep.subr.mxu0 %v816
        %3192 = vmatpush1.msra.mxu0 %v815
        %3193 = vmatprep.subr.mxu0 %v824
        %3194 = vmatpush1.msra.mxu0 %v823
        %3195 = vmatprep.subr.mxu0 %v832
        %3196 = vmatpush1.msra.mxu0 %v831
        %3197 = vmatprep.subr.mxu0 %v840
        %3198 = vmatpush1.msra.mxu0 %v839
        %3199 = vmatprep.subr.mxu0 %v848
        %3200 = vmatpush1.msra.mxu0 %v847
        %3201 = vmatprep.subr.mxu0 %v856
        %3202 = vmatpush1.msra.mxu0 %v855
        %3203 = vmatprep.subr.mxu0 %v864
        %3204 = vmatpush1.msra.mxu0 %v863
        %3205 = vmatprep.subr.mxu0 %v872
        %3206 = vmatpush1.msra.mxu0 %v871
        %3207 = vmatprep.mubr.f32.mxu0 %v2710
        %3208 = vmatmul.mubr.f32.gmra.mrb[0].mxu0 %v594
        %v3209 = vpop.f32.mrb[0].mxu0
        %v3210 = vadd.f32 %v1158, %v3209
        %v3211 = vpop.f32.mrb[0].mxu0
        %v3212 = vadd.f32 %v1162, %v3211
        %3213 = vdwg.mxu0
        %3214 = vmatprep.subr.mxu0 %v880
        %3215 = vmatpush1.msra.mxu0 %v879
        %3216 = vmatprep.subr.mxu0 %v888
        %3217 = vmatpush1.msra.mxu0 %v887
        %3218 = vmatprep.subr.mxu0 %v896
        %3219 = vmatpush1.msra.mxu0 %v895
        %3220 = vmatprep.subr.mxu0 %v904
        %3221 = vmatpush1.msra.mxu0 %v903
        %3222 = vmatprep.subr.mxu0 %v912
        %3223 = vmatpush1.msra.mxu0 %v911
        %3224 = vmatprep.subr.mxu0 %v920
        %3225 = vmatpush1.msra.mxu0 %v919
        %3226 = vmatprep.subr.mxu0 %v928
        %3227 = vmatpush1.msra.mxu0 %v927
        %3228 = vmatprep.subr.mxu0 %v936
        %3229 = vmatpush1.msra.mxu0 %v935
        %3230 = vmatprep.subr.mxu0 %v944
        %3231 = vmatpush1.msra.mxu0 %v943
        %3232 = vmatprep.subr.mxu0 %v952
        %3233 = vmatpush1.msra.mxu0 %v951
        %3234 = vmatprep.subr.mxu0 %v960
        %3235 = vmatpush1.msra.mxu0 %v959
        %3236 = vmatprep.subr.mxu0 %v968
        %3237 = vmatpush1.msra.mxu0 %v967
        %3238 = vmatprep.subr.mxu0 %v976
        %3239 = vmatpush1.msra.mxu0 %v975
        %3240 = vmatprep.subr.mxu0 %v984
        %3241 = vmatpush1.msra.mxu0 %v983
        %3242 = vmatprep.subr.mxu0 %v992
        %3243 = vmatpush1.msra.mxu0 %v991
        %3244 = vmatprep.subr.mxu0 %v1000
        %3245 = vmatpush1.msra.mxu0 %v999
        %3246 = vmatprep.subr.mxu0 %v1008
        %3247 = vmatpush1.msra.mxu0 %v1007
        %3248 = vmatprep.subr.mxu0 %v1016
        %3249 = vmatpush1.msra.mxu0 %v1015
        %3250 = vmatprep.subr.mxu0 %v1024
        %3251 = vmatpush1.msra.mxu0 %v1023
        %3252 = vmatprep.subr.mxu0 %v1032
        %3253 = vmatpush1.msra.mxu0 %v1031
        %3254 = vmatprep.subr.mxu0 %v1040
        %3255 = vmatpush1.msra.mxu0 %v1039
        %3256 = vmatprep.subr.mxu0 %v1048
        %3257 = vmatpush1.msra.mxu0 %v1047
        %3258 = vmatprep.subr.mxu0 %v1056
        %3259 = vmatpush1.msra.mxu0 %v1055
        %3260 = vmatprep.subr.mxu0 %v1064
        %3261 = vmatpush1.msra.mxu0 %v1063
        %3262 = vmatprep.subr.mxu0 %v1072
        %3263 = vmatpush1.msra.mxu0 %v1071
        %3264 = vmatprep.subr.mxu0 %v1080
        %3265 = vmatpush1.msra.mxu0 %v1079
        %3266 = vmatprep.subr.mxu0 %v1088
        %3267 = vmatpush1.msra.mxu0 %v1087
        %3268 = vmatprep.subr.mxu0 %v1096
        %3269 = vmatpush1.msra.mxu0 %v1095
        %3270 = vmatprep.subr.mxu0 %v1104
        %3271 = vmatpush1.msra.mxu0 %v1103
        %3272 = vmatprep.subr.mxu0 %v1112
        %3273 = vmatpush1.msra.mxu0 %v1111
        %3274 = vmatprep.subr.mxu0 %v1120
        %3275 = vmatpush1.msra.mxu0 %v1119
        %3276 = vmatprep.subr.mxu0 %v1128
        %3277 = vmatpush1.msra.mxu0 %v1127
        %3278 = vmatprep.mubr.f32.mxu0 %v2716
        %3279 = vmatmul.mubr.f32.gmra.mrb[0].mxu0 %v2710
        %v3280 = vpop.f32.mrb[0].mxu0
        %v3281 = vadd.f32 %v3210, %v3280
        %v3282 = vpop.f32.mrb[0].mxu0
        %v3283 = vadd.f32 %v3212, %v3282
        %3284 = vdwg.mxu0
        %v3285 = vxor.u32 %v2855, 2147483648
        %v3286 = vxor.u32 %v2857, 2147483648
        %v3287 = vxor.u32 %v2999, 2147483648
        %v3288 = vxor.u32 %v3139, 2147483648
        %v3289 = vxor.u32 %v3141, 2147483648
        %v3290 = vxor.u32 %v3283, 2147483648
        %v3291 = vmul.f32 %v3285, 1.442695
        %v3292 = vpow.pop %v3291
        %v3293 = vmul.f32 %v3286, 1.442695
        %v3294 = vpow.pop %v3293
        %v3295 = vmul.f32 %v3287, 1.442695
        %v3296 = vpow.pop %v3295
        %v3297 = vmul.f32 %v3288, 1.442695
        %v3298 = vpow.pop %v3297
        %v3299 = vmul.f32 %v3289, 1.442695
        %v3300 = vpow.pop %v3299
        %v3301 = vmul.f32 %v3290, 1.442695
        %v3302 = vpow.pop %v3301
        %v3303 = vadd.f32 %v3292, 1.0
        %v3304 = vadd.f32 %v3294, 1.0
        %v3305 = vadd.f32 %v3296, 1.0
        %v3306 = vadd.f32 %v3298, 1.0
        %v3307 = vadd.f32 %v3300, 1.0
        %v3308 = vadd.f32 %v3302, 1.0
        %v3309 = vrcp.pop %v3303
        %v3310 = vmul.f32 1.0, %v3309
        %v3311 = vrcp.pop %v3304
        %v3312 = vmul.f32 1.0, %v3311
        %v3313 = vrcp.pop %v3305
        %v3314 = vmul.f32 1.0, %v3313
        %v3315 = vrcp.pop %v3306
        %v3316 = vmul.f32 1.0, %v3315
        %v3317 = vrcp.pop %v3307
        %v3318 = vmul.f32 1.0, %v3317
        %v3319 = vrcp.pop %v3308
        %v3320 = vmul.f32 1.0, %v3319
        %v3321 = vtanh.pop %v2997
        %v3322 = vmul.f32 %v3312, %v2708
        %v3323 = vmul.f32 %v3310, %v3321
        %v3324 = vadd.f32 %v3322, %v3323
        %v3325 = vtanh.pop %v3324
        %v3326 = vmul.f32 %v3314, %v3325
        %v3327 = vtanh.pop %v3281
        %v3328 = vmul.f32 %v3318, %v2714
        %v3329 = vmul.f32 %v3316, %v3327
        %v3330 = vadd.f32 %v3328, %v3329
        %v3331 = vtanh.pop %v3330
        %v3332 = vmul.f32 %v3320, %v3331
        %3333 = vmatprep.subr.mxu0 %v618
        %3334 = vmatpush1.msra.mxu0 %v617
        %3335 = vmatprep.subr.mxu0 %v626
        %3336 = vmatpush1.msra.mxu0 %v625
        %3337 = vmatprep.subr.mxu0 %v634
        %3338 = vmatpush1.msra.mxu0 %v633
        %3339 = vmatprep.subr.mxu0 %v642
        %3340 = vmatpush1.msra.mxu0 %v641
        %3341 = vmatprep.subr.mxu0 %v650
        %3342 = vmatpush1.msra.mxu0 %v649
        %3343 = vmatprep.subr.mxu0 %v658
        %3344 = vmatpush1.msra.mxu0 %v657
        %3345 = vmatprep.subr.mxu0 %v666
        %3346 = vmatpush1.msra.mxu0 %v665
        %3347 = vmatprep.subr.mxu0 %v674
        %3348 = vmatpush1.msra.mxu0 %v673
        %3349 = vmatprep.subr.mxu0 %v682
        %3350 = vmatpush1.msra.mxu0 %v681
        %3351 = vmatprep.subr.mxu0 %v690
        %3352 = vmatpush1.msra.mxu0 %v689
        %3353 = vmatprep.subr.mxu0 %v698
        %3354 = vmatpush1.msra.mxu0 %v697
        %3355 = vmatprep.subr.mxu0 %v706
        %3356 = vmatpush1.msra.mxu0 %v705
        %3357 = vmatprep.subr.mxu0 %v714
        %3358 = vmatpush1.msra.mxu0 %v713
        %3359 = vmatprep.subr.mxu0 %v722
        %3360 = vmatpush1.msra.mxu0 %v721
        %3361 = vmatprep.subr.mxu0 %v730
        %3362 = vmatpush1.msra.mxu0 %v729
        %3363 = vmatprep.subr.mxu0 %v738
        %3364 = vmatpush1.msra.mxu0 %v737
        %3365 = vmatprep.subr.mxu0 %v746
        %3366 = vmatpush1.msra.mxu0 %v745
        %3367 = vmatprep.subr.mxu0 %v754
        %3368 = vmatpush1.msra.mxu0 %v753
        %3369 = vmatprep.subr.mxu0 %v762
        %3370 = vmatpush1.msra.mxu0 %v761
        %3371 = vmatprep.subr.mxu0 %v770
        %3372 = vmatpush1.msra.mxu0 %v769
        %3373 = vmatprep.subr.mxu0 %v778
        %3374 = vmatpush1.msra.mxu0 %v777
        %3375 = vmatprep.subr.mxu0 %v786
        %3376 = vmatpush1.msra.mxu0 %v785
        %3377 = vmatprep.subr.mxu0 %v794
        %3378 = vmatpush1.msra.mxu0 %v793
        %3379 = vmatprep.subr.mxu0 %v802
        %3380 = vmatpush1.msra.mxu0 %v801
        %3381 = vmatprep.subr.mxu0 %v810
        %3382 = vmatpush1.msra.mxu0 %v809
        %3383 = vmatprep.subr.mxu0 %v818
        %3384 = vmatpush1.msra.mxu0 %v817
        %3385 = vmatprep.subr.mxu0 %v826
        %3386 = vmatpush1.msra.mxu0 %v825
        %3387 = vmatprep.subr.mxu0 %v834
        %3388 = vmatpush1.msra.mxu0 %v833
        %3389 = vmatprep.subr.mxu0 %v842
        %3390 = vmatpush1.msra.mxu0 %v841
        %3391 = vmatprep.subr.mxu0 %v850
        %3392 = vmatpush1.msra.mxu0 %v849
        %3393 = vmatprep.subr.mxu0 %v858
        %3394 = vmatpush1.msra.mxu0 %v857
        %3395 = vmatprep.subr.mxu0 %v866
        %3396 = vmatpush1.msra.mxu0 %v865
        %3397 = vmatprep.mubr.f32.mxu0 %v3326
        %3398 = vmatmul.mubr.f32.gmra.mrb[0].mxu0 %v599
        %v3399 = vpop.f32.mrb[0].mxu0
        %v3400 = vadd.f32 %v1134, %v3399
        %v3401 = vpop.f32.mrb[0].mxu0
        %v3402 = vadd.f32 %v1138, %v3401
        %3403 = vdwg.mxu0
        %3404 = vmatprep.subr.mxu0 %v874
        %3405 = vmatpush1.msra.mxu0 %v873
        %3406 = vmatprep.subr.mxu0 %v882
        %3407 = vmatpush1.msra.mxu0 %v881
        %3408 = vmatprep.subr.mxu0 %v890
        %3409 = vmatpush1.msra.mxu0 %v889
        %3410 = vmatprep.subr.mxu0 %v898
        %3411 = vmatpush1.msra.mxu0 %v897
        %3412 = vmatprep.subr.mxu0 %v906
        %3413 = vmatpush1.msra.mxu0 %v905
        %3414 = vmatprep.subr.mxu0 %v914
        %3415 = vmatpush1.msra.mxu0 %v913
        %3416 = vmatprep.subr.mxu0 %v922
        %3417 = vmatpush1.msra.mxu0 %v921
        %3418 = vmatprep.subr.mxu0 %v930
        %3419 = vmatpush1.msra.mxu0 %v929
        %3420 = vmatprep.subr.mxu0 %v938
        %3421 = vmatpush1.msra.mxu0 %v937
        %3422 = vmatprep.subr.mxu0 %v946
        %3423 = vmatpush1.msra.mxu0 %v945
        %3424 = vmatprep.subr.mxu0 %v954
        %3425 = vmatpush1.msra.mxu0 %v953
        %3426 = vmatprep.subr.mxu0 %v962
        %3427 = vmatpush1.msra.mxu0 %v961
        %3428 = vmatprep.subr.mxu0 %v970
        %3429 = vmatpush1.msra.mxu0 %v969
        %3430 = vmatprep.subr.mxu0 %v978
        %3431 = vmatpush1.msra.mxu0 %v977
        %3432 = vmatprep.subr.mxu0 %v986
        %3433 = vmatpush1.msra.mxu0 %v985
        %3434 = vmatprep.subr.mxu0 %v994
        %3435 = vmatpush1.msra.mxu0 %v993
        %3436 = vmatprep.subr.mxu0 %v1002
        %3437 = vmatpush1.msra.mxu0 %v1001
        %3438 = vmatprep.subr.mxu0 %v1010
        %3439 = vmatpush1.msra.mxu0 %v1009
        %3440 = vmatprep.subr.mxu0 %v1018
        %3441 = vmatpush1.msra.mxu0 %v1017
        %3442 = vmatprep.subr.mxu0 %v1026
        %3443 = vmatpush1.msra.mxu0 %v1025
        %3444 = vmatprep.subr.mxu0 %v1034
        %3445 = vmatpush1.msra.mxu0 %v1033
        %3446 = vmatprep.subr.mxu0 %v1042
        %3447 = vmatpush1.msra.mxu0 %v1041
        %3448 = vmatprep.subr.mxu0 %v1050
        %3449 = vmatpush1.msra.mxu0 %v1049
        %3450 = vmatprep.subr.mxu0 %v1058
        %3451 = vmatpush1.msra.mxu0 %v1057
        %3452 = vmatprep.subr.mxu0 %v1066
        %3453 = vmatpush1.msra.mxu0 %v1065
        %3454 = vmatprep.subr.mxu0 %v1074
        %3455 = vmatpush1.msra.mxu0 %v1073
        %3456 = vmatprep.subr.mxu0 %v1082
        %3457 = vmatpush1.msra.mxu0 %v1081
        %3458 = vmatprep.subr.mxu0 %v1090
        %3459 = vmatpush1.msra.mxu0 %v1089
        %3460 = vmatprep.subr.mxu0 %v1098
        %3461 = vmatpush1.msra.mxu0 %v1097
        %3462 = vmatprep.subr.mxu0 %v1106
        %3463 = vmatpush1.msra.mxu0 %v1105
        %3464 = vmatprep.subr.mxu0 %v1114
        %3465 = vmatpush1.msra.mxu0 %v1113
        %3466 = vmatprep.subr.mxu0 %v1122
        %3467 = vmatpush1.msra.mxu0 %v1121
        %3468 = vmatprep.mubr.f32.mxu0 %v3332
        %3469 = vmatmul.mubr.f32.gmra.mrb[0].mxu0 %v3326
        %v3470 = vpop.f32.mrb[0].mxu0
        %v3471 = vadd.f32 %v3400, %v3470
        %v3472 = vpop.f32.mrb[0].mxu0
        %v3473 = vadd.f32 %v3402, %v3472
        %3474 = vdwg.mxu0
        %3475 = vmatprep.subr.mxu0 %v620
        %3476 = vmatpush1.msra.mxu0 %v619
        %3477 = vmatprep.subr.mxu0 %v628
        %3478 = vmatpush1.msra.mxu0 %v627
        %3479 = vmatprep.subr.mxu0 %v636
        %3480 = vmatpush1.msra.mxu0 %v635
        %3481 = vmatprep.subr.mxu0 %v644
        %3482 = vmatpush1.msra.mxu0 %v643
        %3483 = vmatprep.subr.mxu0 %v652
        %3484 = vmatpush1.msra.mxu0 %v651
        %3485 = vmatprep.subr.mxu0 %v660
        %3486 = vmatpush1.msra.mxu0 %v659
        %3487 = vmatprep.subr.mxu0 %v668
        %3488 = vmatpush1.msra.mxu0 %v667
        %3489 = vmatprep.subr.mxu0 %v676
        %3490 = vmatpush1.msra.mxu0 %v675
        %3491 = vmatprep.subr.mxu0 %v684
        %3492 = vmatpush1.msra.mxu0 %v683
        %3493 = vmatprep.subr.mxu0 %v692
        %3494 = vmatpush1.msra.mxu0 %v691
        %3495 = vmatprep.subr.mxu0 %v700
        %3496 = vmatpush1.msra.mxu0 %v699
        %3497 = vmatprep.subr.mxu0 %v708
        %3498 = vmatpush1.msra.mxu0 %v707
        %3499 = vmatprep.subr.mxu0 %v716
        %3500 = vmatpush1.msra.mxu0 %v715
        %3501 = vmatprep.subr.mxu0 %v724
        %3502 = vmatpush1.msra.mxu0 %v723
        %3503 = vmatprep.subr.mxu0 %v732
        %3504 = vmatpush1.msra.mxu0 %v731
        %3505 = vmatprep.subr.mxu0 %v740
        %3506 = vmatpush1.msra.mxu0 %v739
        %3507 = vmatprep.subr.mxu0 %v748
        %3508 = vmatpush1.msra.mxu0 %v747
        %3509 = vmatprep.subr.mxu0 %v756
        %3510 = vmatpush1.msra.mxu0 %v755
        %3511 = vmatprep.subr.mxu0 %v764
        %3512 = vmatpush1.msra.mxu0 %v763
        %3513 = vmatprep.subr.mxu0 %v772
        %3514 = vmatpush1.msra.mxu0 %v771
        %3515 = vmatprep.subr.mxu0 %v780
        %3516 = vmatpush1.msra.mxu0 %v779
        %3517 = vmatprep.subr.mxu0 %v788
        %3518 = vmatpush1.msra.mxu0 %v787
        %3519 = vmatprep.subr.mxu0 %v796
        %3520 = vmatpush1.msra.mxu0 %v795
        %3521 = vmatprep.subr.mxu0 %v804
        %3522 = vmatpush1.msra.mxu0 %v803
        %3523 = vmatprep.subr.mxu0 %v812
        %3524 = vmatpush1.msra.mxu0 %v811
        %3525 = vmatprep.subr.mxu0 %v820
        %3526 = vmatpush1.msra.mxu0 %v819
        %3527 = vmatprep.subr.mxu0 %v828
        %3528 = vmatpush1.msra.mxu0 %v827
        %3529 = vmatprep.subr.mxu0 %v836
        %3530 = vmatpush1.msra.mxu0 %v835
        %3531 = vmatprep.subr.mxu0 %v844
        %3532 = vmatpush1.msra.mxu0 %v843
        %3533 = vmatprep.subr.mxu0 %v852
        %3534 = vmatpush1.msra.mxu0 %v851
        %3535 = vmatprep.subr.mxu0 %v860
        %3536 = vmatpush1.msra.mxu0 %v859
        %3537 = vmatprep.subr.mxu0 %v868
        %3538 = vmatpush1.msra.mxu0 %v867
        %3539 = vmatprep.mubr.f32.mxu0 %v3326
        %3540 = vmatmul.mubr.f32.gmra.mrb[0].mxu0 %v599
        %v3541 = vpop.f32.mrb[0].mxu0
        %v3542 = vadd.f32 %v1142, %v3541
        %v3543 = vpop.f32.mrb[0].mxu0
        %v3544 = vadd.f32 %v1146, %v3543
        %3545 = vdwg.mxu0
        %3546 = vmatprep.subr.mxu0 %v876
        %3547 = vmatpush1.msra.mxu0 %v875
        %3548 = vmatprep.subr.mxu0 %v884
        %3549 = vmatpush1.msra.mxu0 %v883
        %3550 = vmatprep.subr.mxu0 %v892
        %3551 = vmatpush1.msra.mxu0 %v891
        %3552 = vmatprep.subr.mxu0 %v900
        %3553 = vmatpush1.msra.mxu0 %v899
        %3554 = vmatprep.subr.mxu0 %v908
        %3555 = vmatpush1.msra.mxu0 %v907
        %3556 = vmatprep.subr.mxu0 %v916
        %3557 = vmatpush1.msra.mxu0 %v915
        %3558 = vmatprep.subr.mxu0 %v924
        %3559 = vmatpush1.msra.mxu0 %v923
        %3560 = vmatprep.subr.mxu0 %v932
        %3561 = vmatpush1.msra.mxu0 %v931
        %3562 = vmatprep.subr.mxu0 %v940
        %3563 = vmatpush1.msra.mxu0 %v939
        %3564 = vmatprep.subr.mxu0 %v948
        %3565 = vmatpush1.msra.mxu0 %v947
        %3566 = vmatprep.subr.mxu0 %v956
        %3567 = vmatpush1.msra.mxu0 %v955
        %3568 = vmatprep.subr.mxu0 %v964
        %3569 = vmatpush1.msra.mxu0 %v963
        %3570 = vmatprep.subr.mxu0 %v972
        %3571 = vmatpush1.msra.mxu0 %v971
        %3572 = vmatprep.subr.mxu0 %v980
        %3573 = vmatpush1.msra.mxu0 %v979
        %3574 = vmatprep.subr.mxu0 %v988
        %3575 = vmatpush1.msra.mxu0 %v987
        %3576 = vmatprep.subr.mxu0 %v996
        %3577 = vmatpush1.msra.mxu0 %v995
        %3578 = vmatprep.subr.mxu0 %v1004
        %3579 = vmatpush1.msra.mxu0 %v1003
        %3580 = vmatprep.subr.mxu0 %v1012
        %3581 = vmatpush1.msra.mxu0 %v1011
        %3582 = vmatprep.subr.mxu0 %v1020
        %3583 = vmatpush1.msra.mxu0 %v1019
        %3584 = vmatprep.subr.mxu0 %v1028
        %3585 = vmatpush1.msra.mxu0 %v1027
        %3586 = vmatprep.subr.mxu0 %v1036
        %3587 = vmatpush1.msra.mxu0 %v1035
        %3588 = vmatprep.subr.mxu0 %v1044
        %3589 = vmatpush1.msra.mxu0 %v1043
        %3590 = vmatprep.subr.mxu0 %v1052
        %3591 = vmatpush1.msra.mxu0 %v1051
        %3592 = vmatprep.subr.mxu0 %v1060
        %3593 = vmatpush1.msra.mxu0 %v1059
        %3594 = vmatprep.subr.mxu0 %v1068
        %3595 = vmatpush1.msra.mxu0 %v1067
        %3596 = vmatprep.subr.mxu0 %v1076
        %3597 = vmatpush1.msra.mxu0 %v1075
        %3598 = vmatprep.subr.mxu0 %v1084
        %3599 = vmatpush1.msra.mxu0 %v1083
        %3600 = vmatprep.subr.mxu0 %v1092
        %3601 = vmatpush1.msra.mxu0 %v1091
        %3602 = vmatprep.subr.mxu0 %v1100
        %3603 = vmatpush1.msra.mxu0 %v1099
        %3604 = vmatprep.subr.mxu0 %v1108
        %3605 = vmatpush1.msra.mxu0 %v1107
        %3606 = vmatprep.subr.mxu0 %v1116
        %3607 = vmatpush1.msra.mxu0 %v1115
        %3608 = vmatprep.subr.mxu0 %v1124
        %3609 = vmatpush1.msra.mxu0 %v1123
        %3610 = vmatprep.mubr.f32.mxu0 %v3332
        %3611 = vmatmul.mubr.f32.gmra.mrb[0].mxu0 %v3326
        %v3612 = vpop.f32.mrb[0].mxu0
        %v3613 = vadd.f32 %v3542, %v3612
        %v3614 = vpop.f32.mrb[0].mxu0
        %v3615 = vadd.f32 %v3544, %v3614
        %3616 = vdwg.mxu0
        %3617 = vmatprep.subr.mxu0 %v622
        %3618 = vmatpush1.msra.mxu0 %v621
        %3619 = vmatprep.subr.mxu0 %v630
        %3620 = vmatpush1.msra.mxu0 %v629
        %3621 = vmatprep.subr.mxu0 %v638
        %3622 = vmatpush1.msra.mxu0 %v637
        %3623 = vmatprep.subr.mxu0 %v646
        %3624 = vmatpush1.msra.mxu0 %v645
        %3625 = vmatprep.subr.mxu0 %v654
        %3626 = vmatpush1.msra.mxu0 %v653
        %3627 = vmatprep.subr.mxu0 %v662
        %3628 = vmatpush1.msra.mxu0 %v661
        %3629 = vmatprep.subr.mxu0 %v670
        %3630 = vmatpush1.msra.mxu0 %v669
        %3631 = vmatprep.subr.mxu0 %v678
        %3632 = vmatpush1.msra.mxu0 %v677
        %3633 = vmatprep.subr.mxu0 %v686
        %3634 = vmatpush1.msra.mxu0 %v685
        %3635 = vmatprep.subr.mxu0 %v694
        %3636 = vmatpush1.msra.mxu0 %v693
        %3637 = vmatprep.subr.mxu0 %v702
        %3638 = vmatpush1.msra.mxu0 %v701
        %3639 = vmatprep.subr.mxu0 %v710
        %3640 = vmatpush1.msra.mxu0 %v709
        %3641 = vmatprep.subr.mxu0 %v718
        %3642 = vmatpush1.msra.mxu0 %v717
        %3643 = vmatprep.subr.mxu0 %v726
        %3644 = vmatpush1.msra.mxu0 %v725
        %3645 = vmatprep.subr.mxu0 %v734
        %3646 = vmatpush1.msra.mxu0 %v733
        %3647 = vmatprep.subr.mxu0 %v742
        %3648 = vmatpush1.msra.mxu0 %v741
        %3649 = vmatprep.subr.mxu0 %v750
        %3650 = vmatpush1.msra.mxu0 %v749
        %3651 = vmatprep.subr.mxu0 %v758
        %3652 = vmatpush1.msra.mxu0 %v757
        %3653 = vmatprep.subr.mxu0 %v766
        %3654 = vmatpush1.msra.mxu0 %v765
        %3655 = vmatprep.subr.mxu0 %v774
        %3656 = vmatpush1.msra.mxu0 %v773
        %3657 = vmatprep.subr.mxu0 %v782
        %3658 = vmatpush1.msra.mxu0 %v781
        %3659 = vmatprep.subr.mxu0 %v790
        %3660 = vmatpush1.msra.mxu0 %v789
        %3661 = vmatprep.subr.mxu0 %v798
        %3662 = vmatpush1.msra.mxu0 %v797
        %3663 = vmatprep.subr.mxu0 %v806
        %3664 = vmatpush1.msra.mxu0 %v805
        %3665 = vmatprep.subr.mxu0 %v814
        %3666 = vmatpush1.msra.mxu0 %v813
        %3667 = vmatprep.subr.mxu0 %v822
        %3668 = vmatpush1.msra.mxu0 %v821
        %3669 = vmatprep.subr.mxu0 %v830
        %3670 = vmatpush1.msra.mxu0 %v829
        %3671 = vmatprep.subr.mxu0 %v838
        %3672 = vmatpush1.msra.mxu0 %v837
        %3673 = vmatprep.subr.mxu0 %v846
        %3674 = vmatpush1.msra.mxu0 %v845
        %3675 = vmatprep.subr.mxu0 %v854
        %3676 = vmatpush1.msra.mxu0 %v853
        %3677 = vmatprep.subr.mxu0 %v862
        %3678 = vmatpush1.msra.mxu0 %v861
        %3679 = vmatprep.subr.mxu0 %v870
        %3680 = vmatpush1.msra.mxu0 %v869
        %3681 = vmatprep.mubr.f32.mxu0 %v3326
        %3682 = vmatmul.mubr.f32.gmra.mrb[0].mxu0 %v599
        %v3683 = vpop.f32.mrb[0].mxu0
        %v3684 = vadd.f32 %v1150, %v3683
        %v3685 = vpop.f32.mrb[0].mxu0
        %v3686 = vadd.f32 %v1154, %v3685
        %3687 = vdwg.mxu0
        %3688 = vmatprep.subr.mxu0 %v878
        %3689 = vmatpush1.msra.mxu0 %v877
        %3690 = vmatprep.subr.mxu0 %v886
        %3691 = vmatpush1.msra.mxu0 %v885
        %3692 = vmatprep.subr.mxu0 %v894
        %3693 = vmatpush1.msra.mxu0 %v893
        %3694 = vmatprep.subr.mxu0 %v902
        %3695 = vmatpush1.msra.mxu0 %v901
        %3696 = vmatprep.subr.mxu0 %v910
        %3697 = vmatpush1.msra.mxu0 %v909
        %3698 = vmatprep.subr.mxu0 %v918
        %3699 = vmatpush1.msra.mxu0 %v917
        %3700 = vmatprep.subr.mxu0 %v926
        %3701 = vmatpush1.msra.mxu0 %v925
        %3702 = vmatprep.subr.mxu0 %v934
        %3703 = vmatpush1.msra.mxu0 %v933
        %3704 = vmatprep.subr.mxu0 %v942
        %3705 = vmatpush1.msra.mxu0 %v941
        %3706 = vmatprep.subr.mxu0 %v950
        %3707 = vmatpush1.msra.mxu0 %v949
        %3708 = vmatprep.subr.mxu0 %v958
        %3709 = vmatpush1.msra.mxu0 %v957
        %3710 = vmatprep.subr.mxu0 %v966
        %3711 = vmatpush1.msra.mxu0 %v965
        %3712 = vmatprep.subr.mxu0 %v974
        %3713 = vmatpush1.msra.mxu0 %v973
        %3714 = vmatprep.subr.mxu0 %v982
        %3715 = vmatpush1.msra.mxu0 %v981
        %3716 = vmatprep.subr.mxu0 %v990
        %3717 = vmatpush1.msra.mxu0 %v989
        %3718 = vmatprep.subr.mxu0 %v998
        %3719 = vmatpush1.msra.mxu0 %v997
        %3720 = vmatprep.subr.mxu0 %v1006
        %3721 = vmatpush1.msra.mxu0 %v1005
        %3722 = vmatprep.subr.mxu0 %v1014
        %3723 = vmatpush1.msra.mxu0 %v1013
        %3724 = vmatprep.subr.mxu0 %v1022
        %3725 = vmatpush1.msra.mxu0 %v1021
        %3726 = vmatprep.subr.mxu0 %v1030
        %3727 = vmatpush1.msra.mxu0 %v1029
        %3728 = vmatprep.subr.mxu0 %v1038
        %3729 = vmatpush1.msra.mxu0 %v1037
        %3730 = vmatprep.subr.mxu0 %v1046
        %3731 = vmatpush1.msra.mxu0 %v1045
        %3732 = vmatprep.subr.mxu0 %v1054
        %3733 = vmatpush1.msra.mxu0 %v1053
        %3734 = vmatprep.subr.mxu0 %v1062
        %3735 = vmatpush1.msra.mxu0 %v1061
        %3736 = vmatprep.subr.mxu0 %v1070
        %3737 = vmatpush1.msra.mxu0 %v1069
        %3738 = vmatprep.subr.mxu0 %v1078
        %3739 = vmatpush1.msra.mxu0 %v1077
        %3740 = vmatprep.subr.mxu0 %v1086
        %3741 = vmatpush1.msra.mxu0 %v1085
        %3742 = vmatprep.subr.mxu0 %v1094
        %3743 = vmatpush1.msra.mxu0 %v1093
        %3744 = vmatprep.subr.mxu0 %v1102
        %3745 = vmatpush1.msra.mxu0 %v1101
        %3746 = vmatprep.subr.mxu0 %v1110
        %3747 = vmatpush1.msra.mxu0 %v1109
        %3748 = vmatprep.subr.mxu0 %v1118
        %3749 = vmatpush1.msra.mxu0 %v1117
        %3750 = vmatprep.subr.mxu0 %v1126
        %3751 = vmatpush1.msra.mxu0 %v1125
        %3752 = vmatprep.mubr.f32.mxu0 %v3332
        %3753 = vmatmul.mubr.f32.gmra.mrb[0].mxu0 %v3326
        %v3754 = vpop.f32.mrb[0].mxu0
        %v3755 = vadd.f32 %v3684, %v3754
        %v3756 = vpop.f32.mrb[0].mxu0
        %v3757 = vadd.f32 %v3686, %v3756
        %3758 = vdwg.mxu0
        %3759 = vmatprep.subr.mxu0 %v624
        %3760 = vmatpush1.msra.mxu0 %v623
        %3761 = vmatprep.subr.mxu0 %v632
        %3762 = vmatpush1.msra.mxu0 %v631
        %3763 = vmatprep.subr.mxu0 %v640
        %3764 = vmatpush1.msra.mxu0 %v639
        %3765 = vmatprep.subr.mxu0 %v648
        %3766 = vmatpush1.msra.mxu0 %v647
        %3767 = vmatprep.subr.mxu0 %v656
        %3768 = vmatpush1.msra.mxu0 %v655
        %3769 = vmatprep.subr.mxu0 %v664
        %3770 = vmatpush1.msra.mxu0 %v663
        %3771 = vmatprep.subr.mxu0 %v672
        %3772 = vmatpush1.msra.mxu0 %v671
        %3773 = vmatprep.subr.mxu0 %v680
        %3774 = vmatpush1.msra.mxu0 %v679
        %3775 = vmatprep.subr.mxu0 %v688
        %3776 = vmatpush1.msra.mxu0 %v687
        %3777 = vmatprep.subr.mxu0 %v696
        %3778 = vmatpush1.msra.mxu0 %v695
        %3779 = vmatprep.subr.mxu0 %v704
        %3780 = vmatpush1.msra.mxu0 %v703
        %3781 = vmatprep.subr.mxu0 %v712
        %3782 = vmatpush1.msra.mxu0 %v711
        %3783 = vmatprep.subr.mxu0 %v720
        %3784 = vmatpush1.msra.mxu0 %v719
        %3785 = vmatprep.subr.mxu0 %v728
        %3786 = vmatpush1.msra.mxu0 %v727
        %3787 = vmatprep.subr.mxu0 %v736
        %3788 = vmatpush1.msra.mxu0 %v735
        %3789 = vmatprep.subr.mxu0 %v744
        %3790 = vmatpush1.msra.mxu0 %v743
        %3791 = vmatprep.subr.mxu0 %v752
        %3792 = vmatpush1.msra.mxu0 %v751
        %3793 = vmatprep.subr.mxu0 %v760
        %3794 = vmatpush1.msra.mxu0 %v759
        %3795 = vmatprep.subr.mxu0 %v768
        %3796 = vmatpush1.msra.mxu0 %v767
        %3797 = vmatprep.subr.mxu0 %v776
        %3798 = vmatpush1.msra.mxu0 %v775
        %3799 = vmatprep.subr.mxu0 %v784
        %3800 = vmatpush1.msra.mxu0 %v783
        %3801 = vmatprep.subr.mxu0 %v792
        %3802 = vmatpush1.msra.mxu0 %v791
        %3803 = vmatprep.subr.mxu0 %v800
        %3804 = vmatpush1.msra.mxu0 %v799
        %3805 = vmatprep.subr.mxu0 %v808
        %3806 = vmatpush1.msra.mxu0 %v807
        %3807 = vmatprep.subr.mxu0 %v816
        %3808 = vmatpush1.msra.mxu0 %v815
        %3809 = vmatprep.subr.mxu0 %v824
        %3810 = vmatpush1.msra.mxu0 %v823
        %3811 = vmatprep.subr.mxu0 %v832
        %3812 = vmatpush1.msra.mxu0 %v831
        %3813 = vmatprep.subr.mxu0 %v840
        %3814 = vmatpush1.msra.mxu0 %v839
        %3815 = vmatprep.subr.mxu0 %v848
        %3816 = vmatpush1.msra.mxu0 %v847
        %3817 = vmatprep.subr.mxu0 %v856
        %3818 = vmatpush1.msra.mxu0 %v855
        %3819 = vmatprep.subr.mxu0 %v864
        %3820 = vmatpush1.msra.mxu0 %v863
        %3821 = vmatprep.subr.mxu0 %v872
        %3822 = vmatpush1.msra.mxu0 %v871
        %3823 = vmatprep.mubr.f32.mxu0 %v3326
        %3824 = vmatmul.mubr.f32.gmra.mrb[0].mxu0 %v599
        %v3825 = vpop.f32.mrb[0].mxu0
        %v3826 = vadd.f32 %v1158, %v3825
        %v3827 = vpop.f32.mrb[0].mxu0
        %v3828 = vadd.f32 %v1162, %v3827
        %3829 = vdwg.mxu0
        %3830 = vmatprep.subr.mxu0 %v880
        %3831 = vmatpush1.msra.mxu0 %v879
        %3832 = vmatprep.subr.mxu0 %v888
        %3833 = vmatpush1.msra.mxu0 %v887
        %3834 = vmatprep.subr.mxu0 %v896
        %3835 = vmatpush1.msra.mxu0 %v895
        %3836 = vmatprep.subr.mxu0 %v904
        %3837 = vmatpush1.msra.mxu0 %v903
        %3838 = vmatprep.subr.mxu0 %v912
        %3839 = vmatpush1.msra.mxu0 %v911
        %3840 = vmatprep.subr.mxu0 %v920
        %3841 = vmatpush1.msra.mxu0 %v919
        %3842 = vmatprep.subr.mxu0 %v928
        %3843 = vmatpush1.msra.mxu0 %v927
        %3844 = vmatprep.subr.mxu0 %v936
        %3845 = vmatpush1.msra.mxu0 %v935
        %3846 = vmatprep.subr.mxu0 %v944
        %3847 = vmatpush1.msra.mxu0 %v943
        %3848 = vmatprep.subr.mxu0 %v952
        %3849 = vmatpush1.msra.mxu0 %v951
        %3850 = vmatprep.subr.mxu0 %v960
        %3851 = vmatpush1.msra.mxu0 %v959
        %3852 = vmatprep.subr.mxu0 %v968
        %3853 = vmatpush1.msra.mxu0 %v967
        %3854 = vmatprep.subr.mxu0 %v976
        %3855 = vmatpush1.msra.mxu0 %v975
        %3856 = vmatprep.subr.mxu0 %v984
        %3857 = vmatpush1.msra.mxu0 %v983
        %3858 = vmatprep.subr.mxu0 %v992
        %3859 = vmatpush1.msra.mxu0 %v991
        %3860 = vmatprep.subr.mxu0 %v1000
        %3861 = vmatpush1.msra.mxu0 %v999
        %3862 = vmatprep.subr.mxu0 %v1008
        %3863 = vmatpush1.msra.mxu0 %v1007
        %3864 = vmatprep.subr.mxu0 %v1016
        %3865 = vmatpush1.msra.mxu0 %v1015
        %3866 = vmatprep.subr.mxu0 %v1024
        %3867 = vmatpush1.msra.mxu0 %v1023
        %3868 = vmatprep.subr.mxu0 %v1032
        %3869 = vmatpush1.msra.mxu0 %v1031
        %3870 = vmatprep.subr.mxu0 %v1040
        %3871 = vmatpush1.msra.mxu0 %v1039
        %3872 = vmatprep.subr.mxu0 %v1048
        %3873 = vmatpush1.msra.mxu0 %v1047
        %3874 = vmatprep.subr.mxu0 %v1056
        %3875 = vmatpush1.msra.mxu0 %v1055
        %3876 = vmatprep.subr.mxu0 %v1064
        %3877 = vmatpush1.msra.mxu0 %v1063
        %3878 = vmatprep.subr.mxu0 %v1072
        %3879 = vmatpush1.msra.mxu0 %v1071
        %3880 = vmatprep.subr.mxu0 %v1080
        %3881 = vmatpush1.msra.mxu0 %v1079
        %3882 = vmatprep.subr.mxu0 %v1088
        %3883 = vmatpush1.msra.mxu0 %v1087
        %3884 = vmatprep.subr.mxu0 %v1096
        %3885 = vmatpush1.msra.mxu0 %v1095
        %3886 = vmatprep.subr.mxu0 %v1104
        %3887 = vmatpush1.msra.mxu0 %v1103
        %3888 = vmatprep.subr.mxu0 %v1112
        %3889 = vmatpush1.msra.mxu0 %v1111
        %3890 = vmatprep.subr.mxu0 %v1120
        %3891 = vmatpush1.msra.mxu0 %v1119
        %3892 = vmatprep.subr.mxu0 %v1128
        %3893 = vmatpush1.msra.mxu0 %v1127
        %3894 = vmatprep.mubr.f32.mxu0 %v3332
        %3895 = vmatmul.mubr.f32.gmra.mrb[0].mxu0 %v3326
        %v3896 = vpop.f32.mrb[0].mxu0
        %v3897 = vadd.f32 %v3826, %v3896
        %v3898 = vpop.f32.mrb[0].mxu0
        %v3899 = vadd.f32 %v3828, %v3898
        %3900 = vdwg.mxu0
        %v3901 = vxor.u32 %v3471, 2147483648
        %v3902 = vxor.u32 %v3473, 2147483648
        %v3903 = vxor.u32 %v3615, 2147483648
        %v3904 = vxor.u32 %v3755, 2147483648
        %v3905 = vxor.u32 %v3757, 2147483648
        %v3906 = vxor.u32 %v3899, 2147483648
        %v3907 = vmul.f32 %v3901, 1.442695
        %v3908 = vpow.pop %v3907
        %v3909 = vmul.f32 %v3902, 1.442695
        %v3910 = vpow.pop %v3909
        %v3911 = vmul.f32 %v3903, 1.442695
        %v3912 = vpow.pop %v3911
        %v3913 = vmul.f32 %v3904, 1.442695
        %v3914 = vpow.pop %v3913
        %v3915 = vmul.f32 %v3905, 1.442695
        %v3916 = vpow.pop %v3915
        %v3917 = vmul.f32 %v3906, 1.442695
        %v3918 = vpow.pop %v3917
        %v3919 = vadd.f32 %v3908, 1.0
        %v3920 = vadd.f32 %v3910, 1.0
        %v3921 = vadd.f32 %v3912, 1.0
        %v3922 = vadd.f32 %v3914, 1.0
        %v3923 = vadd.f32 %v3916, 1.0
        %v3924 = vadd.f32 %v3918, 1.0
        %v3925 = vrcp.pop %v3919
        %v3926 = vmul.f32 1.0, %v3925
        %v3927 = vrcp.pop %v3920
        %v3928 = vmul.f32 1.0, %v3927
        %v3929 = vrcp.pop %v3921
        %v3930 = vmul.f32 1.0, %v3929
        %v3931 = vrcp.pop %v3922
        %v3932 = vmul.f32 1.0, %v3931
        %v3933 = vrcp.pop %v3923
        %v3934 = vmul.f32 1.0, %v3933
        %v3935 = vrcp.pop %v3924
        %v3936 = vmul.f32 1.0, %v3935
        %v3937 = vtanh.pop %v3613
        %v3938 = vmul.f32 %v3928, %v3324
        %v3939 = vmul.f32 %v3926, %v3937
        %v3940 = vadd.f32 %v3938, %v3939
        %v3941 = vtanh.pop %v3940
        %v3942 = vmul.f32 %v3930, %v3941
        %v3943 = vtanh.pop %v3897
        %v3944 = vmul.f32 %v3934, %v3330
        %v3945 = vmul.f32 %v3932, %v3943
        %v3946 = vadd.f32 %v3944, %v3945
        %v3947 = vtanh.pop %v3946
        %v3948 = vmul.f32 %v3936, %v3947
        %3949 = vmatprep.subr.mxu0 %v618
        %3950 = vmatpush1.msra.mxu0 %v617
        %3951 = vmatprep.subr.mxu0 %v626
        %3952 = vmatpush1.msra.mxu0 %v625
        %3953 = vmatprep.subr.mxu0 %v634
        %3954 = vmatpush1.msra.mxu0 %v633
        %3955 = vmatprep.subr.mxu0 %v642
        %3956 = vmatpush1.msra.mxu0 %v641
        %3957 = vmatprep.subr.mxu0 %v650
        %3958 = vmatpush1.msra.mxu0 %v649
        %3959 = vmatprep.subr.mxu0 %v658
        %3960 = vmatpush1.msra.mxu0 %v657
        %3961 = vmatprep.subr.mxu0 %v666
        %3962 = vmatpush1.msra.mxu0 %v665
        %3963 = vmatprep.subr.mxu0 %v674
        %3964 = vmatpush1.msra.mxu0 %v673
        %3965 = vmatprep.subr.mxu0 %v682
        %3966 = vmatpush1.msra.mxu0 %v681
        %3967 = vmatprep.subr.mxu0 %v690
        %3968 = vmatpush1.msra.mxu0 %v689
        %3969 = vmatprep.subr.mxu0 %v698
        %3970 = vmatpush1.msra.mxu0 %v697
        %3971 = vmatprep.subr.mxu0 %v706
        %3972 = vmatpush1.msra.mxu0 %v705
        %3973 = vmatprep.subr.mxu0 %v714
        %3974 = vmatpush1.msra.mxu0 %v713
        %3975 = vmatprep.subr.mxu0 %v722
        %3976 = vmatpush1.msra.mxu0 %v721
        %3977 = vmatprep.subr.mxu0 %v730
        %3978 = vmatpush1.msra.mxu0 %v729
        %3979 = vmatprep.subr.mxu0 %v738
        %3980 = vmatpush1.msra.mxu0 %v737
        %3981 = vmatprep.subr.mxu0 %v746
        %3982 = vmatpush1.msra.mxu0 %v745
        %3983 = vmatprep.subr.mxu0 %v754
        %3984 = vmatpush1.msra.mxu0 %v753
        %3985 = vmatprep.subr.mxu0 %v762
        %3986 = vmatpush1.msra.mxu0 %v761
        %3987 = vmatprep.subr.mxu0 %v770
        %3988 = vmatpush1.msra.mxu0 %v769
        %3989 = vmatprep.subr.mxu0 %v778
        %3990 = vmatpush1.msra.mxu0 %v777
        %3991 = vmatprep.subr.mxu0 %v786
        %3992 = vmatpush1.msra.mxu0 %v785
        %3993 = vmatprep.subr.mxu0 %v794
        %3994 = vmatpush1.msra.mxu0 %v793
        %3995 = vmatprep.subr.mxu0 %v802
        %3996 = vmatpush1.msra.mxu0 %v801
        %3997 = vmatprep.subr.mxu0 %v810
        %3998 = vmatpush1.msra.mxu0 %v809
        %3999 = vmatprep.subr.mxu0 %v818
        %4000 = vmatpush1.msra.mxu0 %v817
        %4001 = vmatprep.subr.mxu0 %v826
        %4002 = vmatpush1.msra.mxu0 %v825
        %4003 = vmatprep.subr.mxu0 %v834
        %4004 = vmatpush1.msra.mxu0 %v833
        %4005 = vmatprep.subr.mxu0 %v842
        %4006 = vmatpush1.msra.mxu0 %v841
        %4007 = vmatprep.subr.mxu0 %v850
        %4008 = vmatpush1.msra.mxu0 %v849
        %4009 = vmatprep.subr.mxu0 %v858
        %4010 = vmatpush1.msra.mxu0 %v857
        %4011 = vmatprep.subr.mxu0 %v866
        %4012 = vmatpush1.msra.mxu0 %v865
        %4013 = vmatprep.mubr.f32.mxu0 %v3942
        %4014 = vmatmul.mubr.f32.gmra.mrb[0].mxu0 %v604
        %v4015 = vpop.f32.mrb[0].mxu0
        %v4016 = vadd.f32 %v1134, %v4015
        %v4017 = vpop.f32.mrb[0].mxu0
        %v4018 = vadd.f32 %v1138, %v4017
        %4019 = vdwg.mxu0
        %4020 = vmatprep.subr.mxu0 %v874
        %4021 = vmatpush1.msra.mxu0 %v873
        %4022 = vmatprep.subr.mxu0 %v882
        %4023 = vmatpush1.msra.mxu0 %v881
        %4024 = vmatprep.subr.mxu0 %v890
        %4025 = vmatpush1.msra.mxu0 %v889
        %4026 = vmatprep.subr.mxu0 %v898
        %4027 = vmatpush1.msra.mxu0 %v897
        %4028 = vmatprep.subr.mxu0 %v906
        %4029 = vmatpush1.msra.mxu0 %v905
        %4030 = vmatprep.subr.mxu0 %v914
        %4031 = vmatpush1.msra.mxu0 %v913
        %4032 = vmatprep.subr.mxu0 %v922
        %4033 = vmatpush1.msra.mxu0 %v921
        %4034 = vmatprep.subr.mxu0 %v930
        %4035 = vmatpush1.msra.mxu0 %v929
        %4036 = vmatprep.subr.mxu0 %v938
        %4037 = vmatpush1.msra.mxu0 %v937
        %4038 = vmatprep.subr.mxu0 %v946
        %4039 = vmatpush1.msra.mxu0 %v945
        %4040 = vmatprep.subr.mxu0 %v954
        %4041 = vmatpush1.msra.mxu0 %v953
        %4042 = vmatprep.subr.mxu0 %v962
        %4043 = vmatpush1.msra.mxu0 %v961
        %4044 = vmatprep.subr.mxu0 %v970
        %4045 = vmatpush1.msra.mxu0 %v969
        %4046 = vmatprep.subr.mxu0 %v978
        %4047 = vmatpush1.msra.mxu0 %v977
        %4048 = vmatprep.subr.mxu0 %v986
        %4049 = vmatpush1.msra.mxu0 %v985
        %4050 = vmatprep.subr.mxu0 %v994
        %4051 = vmatpush1.msra.mxu0 %v993
        %4052 = vmatprep.subr.mxu0 %v1002
        %4053 = vmatpush1.msra.mxu0 %v1001
        %4054 = vmatprep.subr.mxu0 %v1010
        %4055 = vmatpush1.msra.mxu0 %v1009
        %4056 = vmatprep.subr.mxu0 %v1018
        %4057 = vmatpush1.msra.mxu0 %v1017
        %4058 = vmatprep.subr.mxu0 %v1026
        %4059 = vmatpush1.msra.mxu0 %v1025
        %4060 = vmatprep.subr.mxu0 %v1034
        %4061 = vmatpush1.msra.mxu0 %v1033
        %4062 = vmatprep.subr.mxu0 %v1042
        %4063 = vmatpush1.msra.mxu0 %v1041
        %4064 = vmatprep.subr.mxu0 %v1050
        %4065 = vmatpush1.msra.mxu0 %v1049
        %4066 = vmatprep.subr.mxu0 %v1058
        %4067 = vmatpush1.msra.mxu0 %v1057
        %4068 = vmatprep.subr.mxu0 %v1066
        %4069 = vmatpush1.msra.mxu0 %v1065
        %4070 = vmatprep.subr.mxu0 %v1074
        %4071 = vmatpush1.msra.mxu0 %v1073
        %4072 = vmatprep.subr.mxu0 %v1082
        %4073 = vmatpush1.msra.mxu0 %v1081
        %4074 = vmatprep.subr.mxu0 %v1090
        %4075 = vmatpush1.msra.mxu0 %v1089
        %4076 = vmatprep.subr.mxu0 %v1098
        %4077 = vmatpush1.msra.mxu0 %v1097
        %4078 = vmatprep.subr.mxu0 %v1106
        %4079 = vmatpush1.msra.mxu0 %v1105
        %4080 = vmatprep.subr.mxu0 %v1114
        %4081 = vmatpush1.msra.mxu0 %v1113
        %4082 = vmatprep.subr.mxu0 %v1122
        %4083 = vmatpush1.msra.mxu0 %v1121
        %4084 = vmatprep.mubr.f32.mxu0 %v3948
        %4085 = vmatmul.mubr.f32.gmra.mrb[0].mxu0 %v3942
        %v4086 = vpop.f32.mrb[0].mxu0
        %v4087 = vadd.f32 %v4016, %v4086
        %v4088 = vpop.f32.mrb[0].mxu0
        %v4089 = vadd.f32 %v4018, %v4088
        %4090 = vdwg.mxu0
        %4091 = vmatprep.subr.mxu0 %v620
        %4092 = vmatpush1.msra.mxu0 %v619
        %4093 = vmatprep.subr.mxu0 %v628
        %4094 = vmatpush1.msra.mxu0 %v627
        %4095 = vmatprep.subr.mxu0 %v636
        %4096 = vmatpush1.msra.mxu0 %v635
        %4097 = vmatprep.subr.mxu0 %v644
        %4098 = vmatpush1.msra.mxu0 %v643
        %4099 = vmatprep.subr.mxu0 %v652
        %4100 = vmatpush1.msra.mxu0 %v651
        %4101 = vmatprep.subr.mxu0 %v660
        %4102 = vmatpush1.msra.mxu0 %v659
        %4103 = vmatprep.subr.mxu0 %v668
        %4104 = vmatpush1.msra.mxu0 %v667
        %4105 = vmatprep.subr.mxu0 %v676
        %4106 = vmatpush1.msra.mxu0 %v675
        %4107 = vmatprep.subr.mxu0 %v684
        %4108 = vmatpush1.msra.mxu0 %v683
        %4109 = vmatprep.subr.mxu0 %v692
        %4110 = vmatpush1.msra.mxu0 %v691
        %4111 = vmatprep.subr.mxu0 %v700
        %4112 = vmatpush1.msra.mxu0 %v699
        %4113 = vmatprep.subr.mxu0 %v708
        %4114 = vmatpush1.msra.mxu0 %v707
        %4115 = vmatprep.subr.mxu0 %v716
        %4116 = vmatpush1.msra.mxu0 %v715
        %4117 = vmatprep.subr.mxu0 %v724
        %4118 = vmatpush1.msra.mxu0 %v723
        %4119 = vmatprep.subr.mxu0 %v732
        %4120 = vmatpush1.msra.mxu0 %v731
        %4121 = vmatprep.subr.mxu0 %v740
        %4122 = vmatpush1.msra.mxu0 %v739
        %4123 = vmatprep.subr.mxu0 %v748
        %4124 = vmatpush1.msra.mxu0 %v747
        %4125 = vmatprep.subr.mxu0 %v756
        %4126 = vmatpush1.msra.mxu0 %v755
        %4127 = vmatprep.subr.mxu0 %v764
        %4128 = vmatpush1.msra.mxu0 %v763
        %4129 = vmatprep.subr.mxu0 %v772
        %4130 = vmatpush1.msra.mxu0 %v771
        %4131 = vmatprep.subr.mxu0 %v780
        %4132 = vmatpush1.msra.mxu0 %v779
        %4133 = vmatprep.subr.mxu0 %v788
        %4134 = vmatpush1.msra.mxu0 %v787
        %4135 = vmatprep.subr.mxu0 %v796
        %4136 = vmatpush1.msra.mxu0 %v795
        %4137 = vmatprep.subr.mxu0 %v804
        %4138 = vmatpush1.msra.mxu0 %v803
        %4139 = vmatprep.subr.mxu0 %v812
        %4140 = vmatpush1.msra.mxu0 %v811
        %4141 = vmatprep.subr.mxu0 %v820
        %4142 = vmatpush1.msra.mxu0 %v819
        %4143 = vmatprep.subr.mxu0 %v828
        %4144 = vmatpush1.msra.mxu0 %v827
        %4145 = vmatprep.subr.mxu0 %v836
        %4146 = vmatpush1.msra.mxu0 %v835
        %4147 = vmatprep.subr.mxu0 %v844
        %4148 = vmatpush1.msra.mxu0 %v843
        %4149 = vmatprep.subr.mxu0 %v852
        %4150 = vmatpush1.msra.mxu0 %v851
        %4151 = vmatprep.subr.mxu0 %v860
        %4152 = vmatpush1.msra.mxu0 %v859
        %4153 = vmatprep.subr.mxu0 %v868
        %4154 = vmatpush1.msra.mxu0 %v867
        %4155 = vmatprep.mubr.f32.mxu0 %v3942
        %4156 = vmatmul.mubr.f32.gmra.mrb[0].mxu0 %v604
        %v4157 = vpop.f32.mrb[0].mxu0
        %v4158 = vadd.f32 %v1142, %v4157
        %v4159 = vpop.f32.mrb[0].mxu0
        %v4160 = vadd.f32 %v1146, %v4159
        %4161 = vdwg.mxu0
        %4162 = vmatprep.subr.mxu0 %v876
        %4163 = vmatpush1.msra.mxu0 %v875
        %4164 = vmatprep.subr.mxu0 %v884
        %4165 = vmatpush1.msra.mxu0 %v883
        %4166 = vmatprep.subr.mxu0 %v892
        %4167 = vmatpush1.msra.mxu0 %v891
        %4168 = vmatprep.subr.mxu0 %v900
        %4169 = vmatpush1.msra.mxu0 %v899
        %4170 = vmatprep.subr.mxu0 %v908
        %4171 = vmatpush1.msra.mxu0 %v907
        %4172 = vmatprep.subr.mxu0 %v916
        %4173 = vmatpush1.msra.mxu0 %v915
        %4174 = vmatprep.subr.mxu0 %v924
        %4175 = vmatpush1.msra.mxu0 %v923
        %4176 = vmatprep.subr.mxu0 %v932
        %4177 = vmatpush1.msra.mxu0 %v931
        %4178 = vmatprep.subr.mxu0 %v940
        %4179 = vmatpush1.msra.mxu0 %v939
        %4180 = vmatprep.subr.mxu0 %v948
        %4181 = vmatpush1.msra.mxu0 %v947
        %4182 = vmatprep.subr.mxu0 %v956
        %4183 = vmatpush1.msra.mxu0 %v955
        %4184 = vmatprep.subr.mxu0 %v964
        %4185 = vmatpush1.msra.mxu0 %v963
        %4186 = vmatprep.subr.mxu0 %v972
        %4187 = vmatpush1.msra.mxu0 %v971
        %4188 = vmatprep.subr.mxu0 %v980
        %4189 = vmatpush1.msra.mxu0 %v979
        %4190 = vmatprep.subr.mxu0 %v988
        %4191 = vmatpush1.msra.mxu0 %v987
        %4192 = vmatprep.subr.mxu0 %v996
        %4193 = vmatpush1.msra.mxu0 %v995
        %4194 = vmatprep.subr.mxu0 %v1004
        %4195 = vmatpush1.msra.mxu0 %v1003
        %4196 = vmatprep.subr.mxu0 %v1012
        %4197 = vmatpush1.msra.mxu0 %v1011
        %4198 = vmatprep.subr.mxu0 %v1020
        %4199 = vmatpush1.msra.mxu0 %v1019
        %4200 = vmatprep.subr.mxu0 %v1028
        %4201 = vmatpush1.msra.mxu0 %v1027
        %4202 = vmatprep.subr.mxu0 %v1036
        %4203 = vmatpush1.msra.mxu0 %v1035
        %4204 = vmatprep.subr.mxu0 %v1044
        %4205 = vmatpush1.msra.mxu0 %v1043
        %4206 = vmatprep.subr.mxu0 %v1052
        %4207 = vmatpush1.msra.mxu0 %v1051
        %4208 = vmatprep.subr.mxu0 %v1060
        %4209 = vmatpush1.msra.mxu0 %v1059
        %4210 = vmatprep.subr.mxu0 %v1068
        %4211 = vmatpush1.msra.mxu0 %v1067
        %4212 = vmatprep.subr.mxu0 %v1076
        %4213 = vmatpush1.msra.mxu0 %v1075
        %4214 = vmatprep.subr.mxu0 %v1084
        %4215 = vmatpush1.msra.mxu0 %v1083
        %4216 = vmatprep.subr.mxu0 %v1092
        %4217 = vmatpush1.msra.mxu0 %v1091
        %4218 = vmatprep.subr.mxu0 %v1100
        %4219 = vmatpush1.msra.mxu0 %v1099
        %4220 = vmatprep.subr.mxu0 %v1108
        %4221 = vmatpush1.msra.mxu0 %v1107
        %4222 = vmatprep.subr.mxu0 %v1116
        %4223 = vmatpush1.msra.mxu0 %v1115
        %4224 = vmatprep.subr.mxu0 %v1124
        %4225 = vmatpush1.msra.mxu0 %v1123
        %4226 = vmatprep.mubr.f32.mxu0 %v3948
        %4227 = vmatmul.mubr.f32.gmra.mrb[0].mxu0 %v3942
        %v4228 = vpop.f32.mrb[0].mxu0
        %v4229 = vadd.f32 %v4158, %v4228
        %v4230 = vpop.f32.mrb[0].mxu0
        %v4231 = vadd.f32 %v4160, %v4230
        %4232 = vdwg.mxu0
        %4233 = vmatprep.subr.mxu0 %v622
        %4234 = vmatpush1.msra.mxu0 %v621
        %4235 = vmatprep.subr.mxu0 %v630
        %4236 = vmatpush1.msra.mxu0 %v629
        %4237 = vmatprep.subr.mxu0 %v638
        %4238 = vmatpush1.msra.mxu0 %v637
        %4239 = vmatprep.subr.mxu0 %v646
        %4240 = vmatpush1.msra.mxu0 %v645
        %4241 = vmatprep.subr.mxu0 %v654
        %4242 = vmatpush1.msra.mxu0 %v653
        %4243 = vmatprep.subr.mxu0 %v662
        %4244 = vmatpush1.msra.mxu0 %v661
        %4245 = vmatprep.subr.mxu0 %v670
        %4246 = vmatpush1.msra.mxu0 %v669
        %4247 = vmatprep.subr.mxu0 %v678
        %4248 = vmatpush1.msra.mxu0 %v677
        %4249 = vmatprep.subr.mxu0 %v686
        %4250 = vmatpush1.msra.mxu0 %v685
        %4251 = vmatprep.subr.mxu0 %v694
        %4252 = vmatpush1.msra.mxu0 %v693
        %4253 = vmatprep.subr.mxu0 %v702
        %4254 = vmatpush1.msra.mxu0 %v701
        %4255 = vmatprep.subr.mxu0 %v710
        %4256 = vmatpush1.msra.mxu0 %v709
        %4257 = vmatprep.subr.mxu0 %v718
        %4258 = vmatpush1.msra.mxu0 %v717
        %4259 = vmatprep.subr.mxu0 %v726
        %4260 = vmatpush1.msra.mxu0 %v725
        %4261 = vmatprep.subr.mxu0 %v734
        %4262 = vmatpush1.msra.mxu0 %v733
        %4263 = vmatprep.subr.mxu0 %v742
        %4264 = vmatpush1.msra.mxu0 %v741
        %4265 = vmatprep.subr.mxu0 %v750
        %4266 = vmatpush1.msra.mxu0 %v749
        %4267 = vmatprep.subr.mxu0 %v758
        %4268 = vmatpush1.msra.mxu0 %v757
        %4269 = vmatprep.subr.mxu0 %v766
        %4270 = vmatpush1.msra.mxu0 %v765
        %4271 = vmatprep.subr.mxu0 %v774
        %4272 = vmatpush1.msra.mxu0 %v773
        %4273 = vmatprep.subr.mxu0 %v782
        %4274 = vmatpush1.msra.mxu0 %v781
        %4275 = vmatprep.subr.mxu0 %v790
        %4276 = vmatpush1.msra.mxu0 %v789
        %4277 = vmatprep.subr.mxu0 %v798
        %4278 = vmatpush1.msra.mxu0 %v797
        %4279 = vmatprep.subr.mxu0 %v806
        %4280 = vmatpush1.msra.mxu0 %v805
        %4281 = vmatprep.subr.mxu0 %v814
        %4282 = vmatpush1.msra.mxu0 %v813
        %4283 = vmatprep.subr.mxu0 %v822
        %4284 = vmatpush1.msra.mxu0 %v821
        %4285 = vmatprep.subr.mxu0 %v830
        %4286 = vmatpush1.msra.mxu0 %v829
        %4287 = vmatprep.subr.mxu0 %v838
        %4288 = vmatpush1.msra.mxu0 %v837
        %4289 = vmatprep.subr.mxu0 %v846
        %4290 = vmatpush1.msra.mxu0 %v845
        %4291 = vmatprep.subr.mxu0 %v854
        %4292 = vmatpush1.msra.mxu0 %v853
        %4293 = vmatprep.subr.mxu0 %v862
        %4294 = vmatpush1.msra.mxu0 %v861
        %4295 = vmatprep.subr.mxu0 %v870
        %4296 = vmatpush1.msra.mxu0 %v869
        %4297 = vmatprep.mubr.f32.mxu0 %v3942
        %4298 = vmatmul.mubr.f32.gmra.mrb[0].mxu0 %v604
        %v4299 = vpop.f32.mrb[0].mxu0
        %v4300 = vadd.f32 %v1150, %v4299
        %v4301 = vpop.f32.mrb[0].mxu0
        %v4302 = vadd.f32 %v1154, %v4301
        %4303 = vdwg.mxu0
        %4304 = vmatprep.subr.mxu0 %v878
        %4305 = vmatpush1.msra.mxu0 %v877
        %4306 = vmatprep.subr.mxu0 %v886
        %4307 = vmatpush1.msra.mxu0 %v885
        %4308 = vmatprep.subr.mxu0 %v894
        %4309 = vmatpush1.msra.mxu0 %v893
        %4310 = vmatprep.subr.mxu0 %v902
        %4311 = vmatpush1.msra.mxu0 %v901
        %4312 = vmatprep.subr.mxu0 %v910
        %4313 = vmatpush1.msra.mxu0 %v909
        %4314 = vmatprep.subr.mxu0 %v918
        %4315 = vmatpush1.msra.mxu0 %v917
        %4316 = vmatprep.subr.mxu0 %v926
        %4317 = vmatpush1.msra.mxu0 %v925
        %4318 = vmatprep.subr.mxu0 %v934
        %4319 = vmatpush1.msra.mxu0 %v933
        %4320 = vmatprep.subr.mxu0 %v942
        %4321 = vmatpush1.msra.mxu0 %v941
        %4322 = vmatprep.subr.mxu0 %v950
        %4323 = vmatpush1.msra.mxu0 %v949
        %4324 = vmatprep.subr.mxu0 %v958
        %4325 = vmatpush1.msra.mxu0 %v957
        %4326 = vmatprep.subr.mxu0 %v966
        %4327 = vmatpush1.msra.mxu0 %v965
        %4328 = vmatprep.subr.mxu0 %v974
        %4329 = vmatpush1.msra.mxu0 %v973
        %4330 = vmatprep.subr.mxu0 %v982
        %4331 = vmatpush1.msra.mxu0 %v981
        %4332 = vmatprep.subr.mxu0 %v990
        %4333 = vmatpush1.msra.mxu0 %v989
        %4334 = vmatprep.subr.mxu0 %v998
        %4335 = vmatpush1.msra.mxu0 %v997
        %4336 = vmatprep.subr.mxu0 %v1006
        %4337 = vmatpush1.msra.mxu0 %v1005
        %4338 = vmatprep.subr.mxu0 %v1014
        %4339 = vmatpush1.msra.mxu0 %v1013
        %4340 = vmatprep.subr.mxu0 %v1022
        %4341 = vmatpush1.msra.mxu0 %v1021
        %4342 = vmatprep.subr.mxu0 %v1030
        %4343 = vmatpush1.msra.mxu0 %v1029
        %4344 = vmatprep.subr.mxu0 %v1038
        %4345 = vmatpush1.msra.mxu0 %v1037
        %4346 = vmatprep.subr.mxu0 %v1046
        %4347 = vmatpush1.msra.mxu0 %v1045
        %4348 = vmatprep.subr.mxu0 %v1054
        %4349 = vmatpush1.msra.mxu0 %v1053
        %4350 = vmatprep.subr.mxu0 %v1062
        %4351 = vmatpush1.msra.mxu0 %v1061
        %4352 = vmatprep.subr.mxu0 %v1070
        %4353 = vmatpush1.msra.mxu0 %v1069
        %4354 = vmatprep.subr.mxu0 %v1078
        %4355 = vmatpush1.msra.mxu0 %v1077
        %4356 = vmatprep.subr.mxu0 %v1086
        %4357 = vmatpush1.msra.mxu0 %v1085
        %4358 = vmatprep.subr.mxu0 %v1094
        %4359 = vmatpush1.msra.mxu0 %v1093
        %4360 = vmatprep.subr.mxu0 %v1102
        %4361 = vmatpush1.msra.mxu0 %v1101
        %4362 = vmatprep.subr.mxu0 %v1110
        %4363 = vmatpush1.msra.mxu0 %v1109
        %4364 = vmatprep.subr.mxu0 %v1118
        %4365 = vmatpush1.msra.mxu0 %v1117
        %4366 = vmatprep.subr.mxu0 %v1126
        %4367 = vmatpush1.msra.mxu0 %v1125
        %4368 = vmatprep.mubr.f32.mxu0 %v3948
        %4369 = vmatmul.mubr.f32.gmra.mrb[0].mxu0 %v3942
        %v4370 = vpop.f32.mrb[0].mxu0
        %v4371 = vadd.f32 %v4300, %v4370
        %v4372 = vpop.f32.mrb[0].mxu0
        %v4373 = vadd.f32 %v4302, %v4372
        %4374 = vdwg.mxu0
        %4375 = vmatprep.subr.mxu0 %v624
        %4376 = vmatpush1.msra.mxu0 %v623
        %4377 = vmatprep.subr.mxu0 %v632
        %4378 = vmatpush1.msra.mxu0 %v631
        %4379 = vmatprep.subr.mxu0 %v640
        %4380 = vmatpush1.msra.mxu0 %v639
        %4381 = vmatprep.subr.mxu0 %v648
        %4382 = vmatpush1.msra.mxu0 %v647
        %4383 = vmatprep.subr.mxu0 %v656
        %4384 = vmatpush1.msra.mxu0 %v655
        %4385 = vmatprep.subr.mxu0 %v664
        %4386 = vmatpush1.msra.mxu0 %v663
        %4387 = vmatprep.subr.mxu0 %v672
        %4388 = vmatpush1.msra.mxu0 %v671
        %4389 = vmatprep.subr.mxu0 %v680
        %4390 = vmatpush1.msra.mxu0 %v679
        %4391 = vmatprep.subr.mxu0 %v688
        %4392 = vmatpush1.msra.mxu0 %v687
        %4393 = vmatprep.subr.mxu0 %v696
        %4394 = vmatpush1.msra.mxu0 %v695
        %4395 = vmatprep.subr.mxu0 %v704
        %4396 = vmatpush1.msra.mxu0 %v703
        %4397 = vmatprep.subr.mxu0 %v712
        %4398 = vmatpush1.msra.mxu0 %v711
        %4399 = vmatprep.subr.mxu0 %v720
        %4400 = vmatpush1.msra.mxu0 %v719
        %4401 = vmatprep.subr.mxu0 %v728
        %4402 = vmatpush1.msra.mxu0 %v727
        %4403 = vmatprep.subr.mxu0 %v736
        %4404 = vmatpush1.msra.mxu0 %v735
        %4405 = vmatprep.subr.mxu0 %v744
        %4406 = vmatpush1.msra.mxu0 %v743
        %4407 = vmatprep.subr.mxu0 %v752
        %4408 = vmatpush1.msra.mxu0 %v751
        %4409 = vmatprep.subr.mxu0 %v760
        %4410 = vmatpush1.msra.mxu0 %v759
        %4411 = vmatprep.subr.mxu0 %v768
        %4412 = vmatpush1.msra.mxu0 %v767
        %4413 = vmatprep.subr.mxu0 %v776
        %4414 = vmatpush1.msra.mxu0 %v775
        %4415 = vmatprep.subr.mxu0 %v784
        %4416 = vmatpush1.msra.mxu0 %v783
        %4417 = vmatprep.subr.mxu0 %v792
        %4418 = vmatpush1.msra.mxu0 %v791
        %4419 = vmatprep.subr.mxu0 %v800
        %4420 = vmatpush1.msra.mxu0 %v799
        %4421 = vmatprep.subr.mxu0 %v808
        %4422 = vmatpush1.msra.mxu0 %v807
        %4423 = vmatprep.subr.mxu0 %v816
        %4424 = vmatpush1.msra.mxu0 %v815
        %4425 = vmatprep.subr.mxu0 %v824
        %4426 = vmatpush1.msra.mxu0 %v823
        %4427 = vmatprep.subr.mxu0 %v832
        %4428 = vmatpush1.msra.mxu0 %v831
        %4429 = vmatprep.subr.mxu0 %v840
        %4430 = vmatpush1.msra.mxu0 %v839
        %4431 = vmatprep.subr.mxu0 %v848
        %4432 = vmatpush1.msra.mxu0 %v847
        %4433 = vmatprep.subr.mxu0 %v856
        %4434 = vmatpush1.msra.mxu0 %v855
        %4435 = vmatprep.subr.mxu0 %v864
        %4436 = vmatpush1.msra.mxu0 %v863
        %4437 = vmatprep.subr.mxu0 %v872
        %4438 = vmatpush1.msra.mxu0 %v871
        %4439 = vmatprep.mubr.f32.mxu0 %v3942
        %4440 = vmatmul.mubr.f32.gmra.mrb[0].mxu0 %v604
        %v4441 = vpop.f32.mrb[0].mxu0
        %v4442 = vadd.f32 %v1158, %v4441
        %v4443 = vpop.f32.mrb[0].mxu0
        %v4444 = vadd.f32 %v1162, %v4443
        %4445 = vdwg.mxu0
        %4446 = vmatprep.subr.mxu0 %v880
        %4447 = vmatpush1.msra.mxu0 %v879
        %4448 = vmatprep.subr.mxu0 %v888
        %4449 = vmatpush1.msra.mxu0 %v887
        %4450 = vmatprep.subr.mxu0 %v896
        %4451 = vmatpush1.msra.mxu0 %v895
        %4452 = vmatprep.subr.mxu0 %v904
        %4453 = vmatpush1.msra.mxu0 %v903
        %4454 = vmatprep.subr.mxu0 %v912
        %4455 = vmatpush1.msra.mxu0 %v911
        %4456 = vmatprep.subr.mxu0 %v920
        %4457 = vmatpush1.msra.mxu0 %v919
        %4458 = vmatprep.subr.mxu0 %v928
        %4459 = vmatpush1.msra.mxu0 %v927
        %4460 = vmatprep.subr.mxu0 %v936
        %4461 = vmatpush1.msra.mxu0 %v935
        %4462 = vmatprep.subr.mxu0 %v944
        %4463 = vmatpush1.msra.mxu0 %v943
        %4464 = vmatprep.subr.mxu0 %v952
        %4465 = vmatpush1.msra.mxu0 %v951
        %4466 = vmatprep.subr.mxu0 %v960
        %4467 = vmatpush1.msra.mxu0 %v959
        %4468 = vmatprep.subr.mxu0 %v968
        %4469 = vmatpush1.msra.mxu0 %v967
        %4470 = vmatprep.subr.mxu0 %v976
        %4471 = vmatpush1.msra.mxu0 %v975
        %4472 = vmatprep.subr.mxu0 %v984
        %4473 = vmatpush1.msra.mxu0 %v983
        %4474 = vmatprep.subr.mxu0 %v992
        %4475 = vmatpush1.msra.mxu0 %v991
        %4476 = vmatprep.subr.mxu0 %v1000
        %4477 = vmatpush1.msra.mxu0 %v999
        %4478 = vmatprep.subr.mxu0 %v1008
        %4479 = vmatpush1.msra.mxu0 %v1007
        %4480 = vmatprep.subr.mxu0 %v1016
        %4481 = vmatpush1.msra.mxu0 %v1015
        %4482 = vmatprep.subr.mxu0 %v1024
        %4483 = vmatpush1.msra.mxu0 %v1023
        %4484 = vmatprep.subr.mxu0 %v1032
        %4485 = vmatpush1.msra.mxu0 %v1031
        %4486 = vmatprep.subr.mxu0 %v1040
        %4487 = vmatpush1.msra.mxu0 %v1039
        %4488 = vmatprep.subr.mxu0 %v1048
        %4489 = vmatpush1.msra.mxu0 %v1047
        %4490 = vmatprep.subr.mxu0 %v1056
        %4491 = vmatpush1.msra.mxu0 %v1055
        %4492 = vmatprep.subr.mxu0 %v1064
        %4493 = vmatpush1.msra.mxu0 %v1063
        %4494 = vmatprep.subr.mxu0 %v1072
        %4495 = vmatpush1.msra.mxu0 %v1071
        %4496 = vmatprep.subr.mxu0 %v1080
        %4497 = vmatpush1.msra.mxu0 %v1079
        %4498 = vmatprep.subr.mxu0 %v1088
        %4499 = vmatpush1.msra.mxu0 %v1087
        %4500 = vmatprep.subr.mxu0 %v1096
        %4501 = vmatpush1.msra.mxu0 %v1095
        %4502 = vmatprep.subr.mxu0 %v1104
        %4503 = vmatpush1.msra.mxu0 %v1103
        %4504 = vmatprep.subr.mxu0 %v1112
        %4505 = vmatpush1.msra.mxu0 %v1111
        %4506 = vmatprep.subr.mxu0 %v1120
        %4507 = vmatpush1.msra.mxu0 %v1119
        %4508 = vmatprep.subr.mxu0 %v1128
        %4509 = vmatpush1.msra.mxu0 %v1127
        %4510 = vmatprep.mubr.f32.mxu0 %v3948
        %4511 = vmatmul.mubr.f32.gmra.mrb[0].mxu0 %v3942
        %v4512 = vpop.f32.mrb[0].mxu0
        %v4513 = vadd.f32 %v4442, %v4512
        %v4514 = vpop.f32.mrb[0].mxu0
        %v4515 = vadd.f32 %v4444, %v4514
        %4516 = vdwg.mxu0
        %v4517 = vxor.u32 %v4087, 2147483648
        %v4518 = vxor.u32 %v4089, 2147483648
        %v4519 = vxor.u32 %v4231, 2147483648
        %v4520 = vxor.u32 %v4371, 2147483648
        %v4521 = vxor.u32 %v4373, 2147483648
        %v4522 = vxor.u32 %v4515, 2147483648
        %v4523 = vmul.f32 %v4517, 1.442695
        %v4524 = vpow.pop %v4523
        %v4525 = vmul.f32 %v4518, 1.442695
        %v4526 = vpow.pop %v4525
        %v4527 = vmul.f32 %v4519, 1.442695
        %v4528 = vpow.pop %v4527
        %v4529 = vmul.f32 %v4520, 1.442695
        %v4530 = vpow.pop %v4529
        %v4531 = vmul.f32 %v4521, 1.442695
        %v4532 = vpow.pop %v4531
        %v4533 = vmul.f32 %v4522, 1.442695
        %v4534 = vpow.pop %v4533
        %v4535 = vadd.f32 %v4524, 1.0
        %v4536 = vadd.f32 %v4526, 1.0
        %v4537 = vadd.f32 %v4528, 1.0
        %v4538 = vadd.f32 %v4530, 1.0
        %v4539 = vadd.f32 %v4532, 1.0
        %v4540 = vadd.f32 %v4534, 1.0
        %v4541 = vrcp.pop %v4535
        %v4542 = vmul.f32 1.0, %v4541
        %v4543 = vrcp.pop %v4536
        %v4544 = vmul.f32 1.0, %v4543
        %v4545 = vrcp.pop %v4537
        %v4546 = vmul.f32 1.0, %v4545
        %v4547 = vrcp.pop %v4538
        %v4548 = vmul.f32 1.0, %v4547
        %v4549 = vrcp.pop %v4539
        %v4550 = vmul.f32 1.0, %v4549
        %v4551 = vrcp.pop %v4540
        %v4552 = vmul.f32 1.0, %v4551
        %v4553 = vtanh.pop %v4229
        %v4554 = vmul.f32 %v4544, %v3940
        %v4555 = vmul.f32 %v4542, %v4553
        %v4556 = vadd.f32 %v4554, %v4555
        %v4557 = vtanh.pop %v4556
        %v4558 = vmul.f32 %v4546, %v4557
        %v4559 = vtanh.pop %v4513
        %v4560 = vmul.f32 %v4550, %v3946
        %v4561 = vmul.f32 %v4548, %v4559
        %v4562 = vadd.f32 %v4560, %v4561
        %v4563 = vtanh.pop %v4562
        %v4564 = vmul.f32 %v4552, %v4563
        %4565 = vmatprep.subr.mxu0 %v618
        %4566 = vmatpush1.msra.mxu0 %v617
        %4567 = vmatprep.subr.mxu0 %v626
        %4568 = vmatpush1.msra.mxu0 %v625
        %4569 = vmatprep.subr.mxu0 %v634
        %4570 = vmatpush1.msra.mxu0 %v633
        %4571 = vmatprep.subr.mxu0 %v642
        %4572 = vmatpush1.msra.mxu0 %v641
        %4573 = vmatprep.subr.mxu0 %v650
        %4574 = vmatpush1.msra.mxu0 %v649
        %4575 = vmatprep.subr.mxu0 %v658
        %4576 = vmatpush1.msra.mxu0 %v657
        %4577 = vmatprep.subr.mxu0 %v666
        %4578 = vmatpush1.msra.mxu0 %v665
        %4579 = vmatprep.subr.mxu0 %v674
        %4580 = vmatpush1.msra.mxu0 %v673
        %4581 = vmatprep.subr.mxu0 %v682
        %4582 = vmatpush1.msra.mxu0 %v681
        %4583 = vmatprep.subr.mxu0 %v690
        %4584 = vmatpush1.msra.mxu0 %v689
        %4585 = vmatprep.subr.mxu0 %v698
        %4586 = vmatpush1.msra.mxu0 %v697
        %4587 = vmatprep.subr.mxu0 %v706
        %4588 = vmatpush1.msra.mxu0 %v705
        %4589 = vmatprep.subr.mxu0 %v714
        %4590 = vmatpush1.msra.mxu0 %v713
        %4591 = vmatprep.subr.mxu0 %v722
        %4592 = vmatpush1.msra.mxu0 %v721
        %4593 = vmatprep.subr.mxu0 %v730
        %4594 = vmatpush1.msra.mxu0 %v729
        %4595 = vmatprep.subr.mxu0 %v738
        %4596 = vmatpush1.msra.mxu0 %v737
        %4597 = vmatprep.subr.mxu0 %v746
        %4598 = vmatpush1.msra.mxu0 %v745
        %4599 = vmatprep.subr.mxu0 %v754
        %4600 = vmatpush1.msra.mxu0 %v753
        %4601 = vmatprep.subr.mxu0 %v762
        %4602 = vmatpush1.msra.mxu0 %v761
        %4603 = vmatprep.subr.mxu0 %v770
        %4604 = vmatpush1.msra.mxu0 %v769
        %4605 = vmatprep.subr.mxu0 %v778
        %4606 = vmatpush1.msra.mxu0 %v777
        %4607 = vmatprep.subr.mxu0 %v786
        %4608 = vmatpush1.msra.mxu0 %v785
        %4609 = vmatprep.subr.mxu0 %v794
        %4610 = vmatpush1.msra.mxu0 %v793
        %4611 = vmatprep.subr.mxu0 %v802
        %4612 = vmatpush1.msra.mxu0 %v801
        %4613 = vmatprep.subr.mxu0 %v810
        %4614 = vmatpush1.msra.mxu0 %v809
        %4615 = vmatprep.subr.mxu0 %v818
        %4616 = vmatpush1.msra.mxu0 %v817
        %4617 = vmatprep.subr.mxu0 %v826
        %4618 = vmatpush1.msra.mxu0 %v825
        %4619 = vmatprep.subr.mxu0 %v834
        %4620 = vmatpush1.msra.mxu0 %v833
        %4621 = vmatprep.subr.mxu0 %v842
        %4622 = vmatpush1.msra.mxu0 %v841
        %4623 = vmatprep.subr.mxu0 %v850
        %4624 = vmatpush1.msra.mxu0 %v849
        %4625 = vmatprep.subr.mxu0 %v858
        %4626 = vmatpush1.msra.mxu0 %v857
        %4627 = vmatprep.subr.mxu0 %v866
        %4628 = vmatpush1.msra.mxu0 %v865
        %4629 = vmatprep.mubr.f32.mxu0 %v4558
        %4630 = vmatmul.mubr.f32.gmra.mrb[0].mxu0 %v609
        %v4631 = vpop.f32.mrb[0].mxu0
        %v4632 = vadd.f32 %v1134, %v4631
        %v4633 = vpop.f32.mrb[0].mxu0
        %v4634 = vadd.f32 %v1138, %v4633
        %4635 = vdwg.mxu0
        %4636 = vmatprep.subr.mxu0 %v874
        %4637 = vmatpush1.msra.mxu0 %v873
        %4638 = vmatprep.subr.mxu0 %v882
        %4639 = vmatpush1.msra.mxu0 %v881
        %4640 = vmatprep.subr.mxu0 %v890
        %4641 = vmatpush1.msra.mxu0 %v889
        %4642 = vmatprep.subr.mxu0 %v898
        %4643 = vmatpush1.msra.mxu0 %v897
        %4644 = vmatprep.subr.mxu0 %v906
        %4645 = vmatpush1.msra.mxu0 %v905
        %4646 = vmatprep.subr.mxu0 %v914
        %4647 = vmatpush1.msra.mxu0 %v913
        %4648 = vmatprep.subr.mxu0 %v922
        %4649 = vmatpush1.msra.mxu0 %v921
        %4650 = vmatprep.subr.mxu0 %v930
        %4651 = vmatpush1.msra.mxu0 %v929
        %4652 = vmatprep.subr.mxu0 %v938
        %4653 = vmatpush1.msra.mxu0 %v937
        %4654 = vmatprep.subr.mxu0 %v946
        %4655 = vmatpush1.msra.mxu0 %v945
        %4656 = vmatprep.subr.mxu0 %v954
        %4657 = vmatpush1.msra.mxu0 %v953
        %4658 = vmatprep.subr.mxu0 %v962
        %4659 = vmatpush1.msra.mxu0 %v961
        %4660 = vmatprep.subr.mxu0 %v970
        %4661 = vmatpush1.msra.mxu0 %v969
        %4662 = vmatprep.subr.mxu0 %v978
        %4663 = vmatpush1.msra.mxu0 %v977
        %4664 = vmatprep.subr.mxu0 %v986
        %4665 = vmatpush1.msra.mxu0 %v985
        %4666 = vmatprep.subr.mxu0 %v994
        %4667 = vmatpush1.msra.mxu0 %v993
        %4668 = vmatprep.subr.mxu0 %v1002
        %4669 = vmatpush1.msra.mxu0 %v1001
        %4670 = vmatprep.subr.mxu0 %v1010
        %4671 = vmatpush1.msra.mxu0 %v1009
        %4672 = vmatprep.subr.mxu0 %v1018
        %4673 = vmatpush1.msra.mxu0 %v1017
        %4674 = vmatprep.subr.mxu0 %v1026
        %4675 = vmatpush1.msra.mxu0 %v1025
        %4676 = vmatprep.subr.mxu0 %v1034
        %4677 = vmatpush1.msra.mxu0 %v1033
        %4678 = vmatprep.subr.mxu0 %v1042
        %4679 = vmatpush1.msra.mxu0 %v1041
        %4680 = vmatprep.subr.mxu0 %v1050
        %4681 = vmatpush1.msra.mxu0 %v1049
        %4682 = vmatprep.subr.mxu0 %v1058
        %4683 = vmatpush1.msra.mxu0 %v1057
        %4684 = vmatprep.subr.mxu0 %v1066
        %4685 = vmatpush1.msra.mxu0 %v1065
        %4686 = vmatprep.subr.mxu0 %v1074
        %4687 = vmatpush1.msra.mxu0 %v1073
        %4688 = vmatprep.subr.mxu0 %v1082
        %4689 = vmatpush1.msra.mxu0 %v1081
        %4690 = vmatprep.subr.mxu0 %v1090
        %4691 = vmatpush1.msra.mxu0 %v1089
        %4692 = vmatprep.subr.mxu0 %v1098
        %4693 = vmatpush1.msra.mxu0 %v1097
        %4694 = vmatprep.subr.mxu0 %v1106
        %4695 = vmatpush1.msra.mxu0 %v1105
        %4696 = vmatprep.subr.mxu0 %v1114
        %4697 = vmatpush1.msra.mxu0 %v1113
        %4698 = vmatprep.subr.mxu0 %v1122
        %4699 = vmatpush1.msra.mxu0 %v1121
        %4700 = vmatprep.mubr.f32.mxu0 %v4564
        %4701 = vmatmul.mubr.f32.gmra.mrb[0].mxu0 %v4558
        %v4702 = vpop.f32.mrb[0].mxu0
        %v4703 = vadd.f32 %v4632, %v4702
        %v4704 = vpop.f32.mrb[0].mxu0
        %v4705 = vadd.f32 %v4634, %v4704
        %4706 = vdwg.mxu0
        %4707 = vmatprep.subr.mxu0 %v620
        %4708 = vmatpush1.msra.mxu0 %v619
        %4709 = vmatprep.subr.mxu0 %v628
        %4710 = vmatpush1.msra.mxu0 %v627
        %4711 = vmatprep.subr.mxu0 %v636
        %4712 = vmatpush1.msra.mxu0 %v635
        %4713 = vmatprep.subr.mxu0 %v644
        %4714 = vmatpush1.msra.mxu0 %v643
        %4715 = vmatprep.subr.mxu0 %v652
        %4716 = vmatpush1.msra.mxu0 %v651
        %4717 = vmatprep.subr.mxu0 %v660
        %4718 = vmatpush1.msra.mxu0 %v659
        %4719 = vmatprep.subr.mxu0 %v668
        %4720 = vmatpush1.msra.mxu0 %v667
        %4721 = vmatprep.subr.mxu0 %v676
        %4722 = vmatpush1.msra.mxu0 %v675
        %4723 = vmatprep.subr.mxu0 %v684
        %4724 = vmatpush1.msra.mxu0 %v683
        %4725 = vmatprep.subr.mxu0 %v692
        %4726 = vmatpush1.msra.mxu0 %v691
        %4727 = vmatprep.subr.mxu0 %v700
        %4728 = vmatpush1.msra.mxu0 %v699
        %4729 = vmatprep.subr.mxu0 %v708
        %4730 = vmatpush1.msra.mxu0 %v707
        %4731 = vmatprep.subr.mxu0 %v716
        %4732 = vmatpush1.msra.mxu0 %v715
        %4733 = vmatprep.subr.mxu0 %v724
        %4734 = vmatpush1.msra.mxu0 %v723
        %4735 = vmatprep.subr.mxu0 %v732
        %4736 = vmatpush1.msra.mxu0 %v731
        %4737 = vmatprep.subr.mxu0 %v740
        %4738 = vmatpush1.msra.mxu0 %v739
        %4739 = vmatprep.subr.mxu0 %v748
        %4740 = vmatpush1.msra.mxu0 %v747
        %4741 = vmatprep.subr.mxu0 %v756
        %4742 = vmatpush1.msra.mxu0 %v755
        %4743 = vmatprep.subr.mxu0 %v764
        %4744 = vmatpush1.msra.mxu0 %v763
        %4745 = vmatprep.subr.mxu0 %v772
        %4746 = vmatpush1.msra.mxu0 %v771
        %4747 = vmatprep.subr.mxu0 %v780
        %4748 = vmatpush1.msra.mxu0 %v779
        %4749 = vmatprep.subr.mxu0 %v788
        %4750 = vmatpush1.msra.mxu0 %v787
        %4751 = vmatprep.subr.mxu0 %v796
        %4752 = vmatpush1.msra.mxu0 %v795
        %4753 = vmatprep.subr.mxu0 %v804
        %4754 = vmatpush1.msra.mxu0 %v803
        %4755 = vmatprep.subr.mxu0 %v812
        %4756 = vmatpush1.msra.mxu0 %v811
        %4757 = vmatprep.subr.mxu0 %v820
        %4758 = vmatpush1.msra.mxu0 %v819
        %4759 = vmatprep.subr.mxu0 %v828
        %4760 = vmatpush1.msra.mxu0 %v827
        %4761 = vmatprep.subr.mxu0 %v836
        %4762 = vmatpush1.msra.mxu0 %v835
        %4763 = vmatprep.subr.mxu0 %v844
        %4764 = vmatpush1.msra.mxu0 %v843
        %4765 = vmatprep.subr.mxu0 %v852
        %4766 = vmatpush1.msra.mxu0 %v851
        %4767 = vmatprep.subr.mxu0 %v860
        %4768 = vmatpush1.msra.mxu0 %v859
        %4769 = vmatprep.subr.mxu0 %v868
        %4770 = vmatpush1.msra.mxu0 %v867
        %4771 = vmatprep.mubr.f32.mxu0 %v4558
        %4772 = vmatmul.mubr.f32.gmra.mrb[0].mxu0 %v609
        %v4773 = vpop.f32.mrb[0].mxu0
        %v4774 = vadd.f32 %v1142, %v4773
        %v4775 = vpop.f32.mrb[0].mxu0
        %v4776 = vadd.f32 %v1146, %v4775
        %4777 = vdwg.mxu0
        %4778 = vmatprep.subr.mxu0 %v876
        %4779 = vmatpush1.msra.mxu0 %v875
        %4780 = vmatprep.subr.mxu0 %v884
        %4781 = vmatpush1.msra.mxu0 %v883
        %4782 = vmatprep.subr.mxu0 %v892
        %4783 = vmatpush1.msra.mxu0 %v891
        %4784 = vmatprep.subr.mxu0 %v900
        %4785 = vmatpush1.msra.mxu0 %v899
        %4786 = vmatprep.subr.mxu0 %v908
        %4787 = vmatpush1.msra.mxu0 %v907
        %4788 = vmatprep.subr.mxu0 %v916
        %4789 = vmatpush1.msra.mxu0 %v915
        %4790 = vmatprep.subr.mxu0 %v924
        %4791 = vmatpush1.msra.mxu0 %v923
        %4792 = vmatprep.subr.mxu0 %v932
        %4793 = vmatpush1.msra.mxu0 %v931
        %4794 = vmatprep.subr.mxu0 %v940
        %4795 = vmatpush1.msra.mxu0 %v939
        %4796 = vmatprep.subr.mxu0 %v948
        %4797 = vmatpush1.msra.mxu0 %v947
        %4798 = vmatprep.subr.mxu0 %v956
        %4799 = vmatpush1.msra.mxu0 %v955
        %4800 = vmatprep.subr.mxu0 %v964
        %4801 = vmatpush1.msra.mxu0 %v963
        %4802 = vmatprep.subr.mxu0 %v972
        %4803 = vmatpush1.msra.mxu0 %v971
        %4804 = vmatprep.subr.mxu0 %v980
        %4805 = vmatpush1.msra.mxu0 %v979
        %4806 = vmatprep.subr.mxu0 %v988
        %4807 = vmatpush1.msra.mxu0 %v987
        %4808 = vmatprep.subr.mxu0 %v996
        %4809 = vmatpush1.msra.mxu0 %v995
        %4810 = vmatprep.subr.mxu0 %v1004
        %4811 = vmatpush1.msra.mxu0 %v1003
        %4812 = vmatprep.subr.mxu0 %v1012
        %4813 = vmatpush1.msra.mxu0 %v1011
        %4814 = vmatprep.subr.mxu0 %v1020
        %4815 = vmatpush1.msra.mxu0 %v1019
        %4816 = vmatprep.subr.mxu0 %v1028
        %4817 = vmatpush1.msra.mxu0 %v1027
        %4818 = vmatprep.subr.mxu0 %v1036
        %4819 = vmatpush1.msra.mxu0 %v1035
        %4820 = vmatprep.subr.mxu0 %v1044
        %4821 = vmatpush1.msra.mxu0 %v1043
        %4822 = vmatprep.subr.mxu0 %v1052
        %4823 = vmatpush1.msra.mxu0 %v1051
        %4824 = vmatprep.subr.mxu0 %v1060
        %4825 = vmatpush1.msra.mxu0 %v1059
        %4826 = vmatprep.subr.mxu0 %v1068
        %4827 = vmatpush1.msra.mxu0 %v1067
        %4828 = vmatprep.subr.mxu0 %v1076
        %4829 = vmatpush1.msra.mxu0 %v1075
        %4830 = vmatprep.subr.mxu0 %v1084
        %4831 = vmatpush1.msra.mxu0 %v1083
        %4832 = vmatprep.subr.mxu0 %v1092
        %4833 = vmatpush1.msra.mxu0 %v1091
        %4834 = vmatprep.subr.mxu0 %v1100
        %4835 = vmatpush1.msra.mxu0 %v1099
        %4836 = vmatprep.subr.mxu0 %v1108
        %4837 = vmatpush1.msra.mxu0 %v1107
        %4838 = vmatprep.subr.mxu0 %v1116
        %4839 = vmatpush1.msra.mxu0 %v1115
        %4840 = vmatprep.subr.mxu0 %v1124
        %4841 = vmatpush1.msra.mxu0 %v1123
        %4842 = vmatprep.mubr.f32.mxu0 %v4564
        %4843 = vmatmul.mubr.f32.gmra.mrb[0].mxu0 %v4558
        %v4844 = vpop.f32.mrb[0].mxu0
        %v4845 = vadd.f32 %v4774, %v4844
        %v4846 = vpop.f32.mrb[0].mxu0
        %v4847 = vadd.f32 %v4776, %v4846
        %4848 = vdwg.mxu0
        %4849 = vmatprep.subr.mxu0 %v622
        %4850 = vmatpush1.msra.mxu0 %v621
        %4851 = vmatprep.subr.mxu0 %v630
        %4852 = vmatpush1.msra.mxu0 %v629
        %4853 = vmatprep.subr.mxu0 %v638
        %4854 = vmatpush1.msra.mxu0 %v637
        %4855 = vmatprep.subr.mxu0 %v646
        %4856 = vmatpush1.msra.mxu0 %v645
        %4857 = vmatprep.subr.mxu0 %v654
        %4858 = vmatpush1.msra.mxu0 %v653
        %4859 = vmatprep.subr.mxu0 %v662
        %4860 = vmatpush1.msra.mxu0 %v661
        %4861 = vmatprep.subr.mxu0 %v670
        %4862 = vmatpush1.msra.mxu0 %v669
        %4863 = vmatprep.subr.mxu0 %v678
        %4864 = vmatpush1.msra.mxu0 %v677
        %4865 = vmatprep.subr.mxu0 %v686
        %4866 = vmatpush1.msra.mxu0 %v685
        %4867 = vmatprep.subr.mxu0 %v694
        %4868 = vmatpush1.msra.mxu0 %v693
        %4869 = vmatprep.subr.mxu0 %v702
        %4870 = vmatpush1.msra.mxu0 %v701
        %4871 = vmatprep.subr.mxu0 %v710
        %4872 = vmatpush1.msra.mxu0 %v709
        %4873 = vmatprep.subr.mxu0 %v718
        %4874 = vmatpush1.msra.mxu0 %v717
        %4875 = vmatprep.subr.mxu0 %v726
        %4876 = vmatpush1.msra.mxu0 %v725
        %4877 = vmatprep.subr.mxu0 %v734
        %4878 = vmatpush1.msra.mxu0 %v733
        %4879 = vmatprep.subr.mxu0 %v742
        %4880 = vmatpush1.msra.mxu0 %v741
        %4881 = vmatprep.subr.mxu0 %v750
        %4882 = vmatpush1.msra.mxu0 %v749
        %4883 = vmatprep.subr.mxu0 %v758
        %4884 = vmatpush1.msra.mxu0 %v757
        %4885 = vmatprep.subr.mxu0 %v766
        %4886 = vmatpush1.msra.mxu0 %v765
        %4887 = vmatprep.subr.mxu0 %v774
        %4888 = vmatpush1.msra.mxu0 %v773
        %4889 = vmatprep.subr.mxu0 %v782
        %4890 = vmatpush1.msra.mxu0 %v781
        %4891 = vmatprep.subr.mxu0 %v790
        %4892 = vmatpush1.msra.mxu0 %v789
        %4893 = vmatprep.subr.mxu0 %v798
        %4894 = vmatpush1.msra.mxu0 %v797
        %4895 = vmatprep.subr.mxu0 %v806
        %4896 = vmatpush1.msra.mxu0 %v805
        %4897 = vmatprep.subr.mxu0 %v814
        %4898 = vmatpush1.msra.mxu0 %v813
        %4899 = vmatprep.subr.mxu0 %v822
        %4900 = vmatpush1.msra.mxu0 %v821
        %4901 = vmatprep.subr.mxu0 %v830
        %4902 = vmatpush1.msra.mxu0 %v829
        %4903 = vmatprep.subr.mxu0 %v838
        %4904 = vmatpush1.msra.mxu0 %v837
        %4905 = vmatprep.subr.mxu0 %v846
        %4906 = vmatpush1.msra.mxu0 %v845
        %4907 = vmatprep.subr.mxu0 %v854
        %4908 = vmatpush1.msra.mxu0 %v853
        %4909 = vmatprep.subr.mxu0 %v862
        %4910 = vmatpush1.msra.mxu0 %v861
        %4911 = vmatprep.subr.mxu0 %v870
        %4912 = vmatpush1.msra.mxu0 %v869
        %4913 = vmatprep.mubr.f32.mxu0 %v4558
        %4914 = vmatmul.mubr.f32.gmra.mrb[0].mxu0 %v609
        %v4915 = vpop.f32.mrb[0].mxu0
        %v4916 = vadd.f32 %v1150, %v4915
        %v4917 = vpop.f32.mrb[0].mxu0
        %v4918 = vadd.f32 %v1154, %v4917
        %4919 = vdwg.mxu0
        %4920 = vmatprep.subr.mxu0 %v878
        %4921 = vmatpush1.msra.mxu0 %v877
        %4922 = vmatprep.subr.mxu0 %v886
        %4923 = vmatpush1.msra.mxu0 %v885
        %4924 = vmatprep.subr.mxu0 %v894
        %4925 = vmatpush1.msra.mxu0 %v893
        %4926 = vmatprep.subr.mxu0 %v902
        %4927 = vmatpush1.msra.mxu0 %v901
        %4928 = vmatprep.subr.mxu0 %v910
        %4929 = vmatpush1.msra.mxu0 %v909
        %4930 = vmatprep.subr.mxu0 %v918
        %4931 = vmatpush1.msra.mxu0 %v917
        %4932 = vmatprep.subr.mxu0 %v926
        %4933 = vmatpush1.msra.mxu0 %v925
        %4934 = vmatprep.subr.mxu0 %v934
        %4935 = vmatpush1.msra.mxu0 %v933
        %4936 = vmatprep.subr.mxu0 %v942
        %4937 = vmatpush1.msra.mxu0 %v941
        %4938 = vmatprep.subr.mxu0 %v950
        %4939 = vmatpush1.msra.mxu0 %v949
        %4940 = vmatprep.subr.mxu0 %v958
        %4941 = vmatpush1.msra.mxu0 %v957
        %4942 = vmatprep.subr.mxu0 %v966
        %4943 = vmatpush1.msra.mxu0 %v965
        %4944 = vmatprep.subr.mxu0 %v974
        %4945 = vmatpush1.msra.mxu0 %v973
        %4946 = vmatprep.subr.mxu0 %v982
        %4947 = vmatpush1.msra.mxu0 %v981
        %4948 = vmatprep.subr.mxu0 %v990
        %4949 = vmatpush1.msra.mxu0 %v989
        %4950 = vmatprep.subr.mxu0 %v998
        %4951 = vmatpush1.msra.mxu0 %v997
        %4952 = vmatprep.subr.mxu0 %v1006
        %4953 = vmatpush1.msra.mxu0 %v1005
        %4954 = vmatprep.subr.mxu0 %v1014
        %4955 = vmatpush1.msra.mxu0 %v1013
        %4956 = vmatprep.subr.mxu0 %v1022
        %4957 = vmatpush1.msra.mxu0 %v1021
        %4958 = vmatprep.subr.mxu0 %v1030
        %4959 = vmatpush1.msra.mxu0 %v1029
        %4960 = vmatprep.subr.mxu0 %v1038
        %4961 = vmatpush1.msra.mxu0 %v1037
        %4962 = vmatprep.subr.mxu0 %v1046
        %4963 = vmatpush1.msra.mxu0 %v1045
        %4964 = vmatprep.subr.mxu0 %v1054
        %4965 = vmatpush1.msra.mxu0 %v1053
        %4966 = vmatprep.subr.mxu0 %v1062
        %4967 = vmatpush1.msra.mxu0 %v1061
        %4968 = vmatprep.subr.mxu0 %v1070
        %4969 = vmatpush1.msra.mxu0 %v1069
        %4970 = vmatprep.subr.mxu0 %v1078
        %4971 = vmatpush1.msra.mxu0 %v1077
        %4972 = vmatprep.subr.mxu0 %v1086
        %4973 = vmatpush1.msra.mxu0 %v1085
        %4974 = vmatprep.subr.mxu0 %v1094
        %4975 = vmatpush1.msra.mxu0 %v1093
        %4976 = vmatprep.subr.mxu0 %v1102
        %4977 = vmatpush1.msra.mxu0 %v1101
        %4978 = vmatprep.subr.mxu0 %v1110
        %4979 = vmatpush1.msra.mxu0 %v1109
        %4980 = vmatprep.subr.mxu0 %v1118
        %4981 = vmatpush1.msra.mxu0 %v1117
        %4982 = vmatprep.subr.mxu0 %v1126
        %4983 = vmatpush1.msra.mxu0 %v1125
        %4984 = vmatprep.mubr.f32.mxu0 %v4564
        %4985 = vmatmul.mubr.f32.gmra.mrb[0].mxu0 %v4558
        %v4986 = vpop.f32.mrb[0].mxu0
        %v4987 = vadd.f32 %v4916, %v4986
        %v4988 = vpop.f32.mrb[0].mxu0
        %v4989 = vadd.f32 %v4918, %v4988
        %4990 = vdwg.mxu0
        %4991 = vmatprep.subr.mxu0 %v624
        %4992 = vmatpush1.msra.mxu0 %v623
        %4993 = vmatprep.subr.mxu0 %v632
        %4994 = vmatpush1.msra.mxu0 %v631
        %4995 = vmatprep.subr.mxu0 %v640
        %4996 = vmatpush1.msra.mxu0 %v639
        %4997 = vmatprep.subr.mxu0 %v648
        %4998 = vmatpush1.msra.mxu0 %v647
        %4999 = vmatprep.subr.mxu0 %v656
        %5000 = vmatpush1.msra.mxu0 %v655
        %5001 = vmatprep.subr.mxu0 %v664
        %5002 = vmatpush1.msra.mxu0 %v663
        %5003 = vmatprep.subr.mxu0 %v672
        %5004 = vmatpush1.msra.mxu0 %v671
        %5005 = vmatprep.subr.mxu0 %v680
        %5006 = vmatpush1.msra.mxu0 %v679
        %5007 = vmatprep.subr.mxu0 %v688
        %5008 = vmatpush1.msra.mxu0 %v687
        %5009 = vmatprep.subr.mxu0 %v696
        %5010 = vmatpush1.msra.mxu0 %v695
        %5011 = vmatprep.subr.mxu0 %v704
        %5012 = vmatpush1.msra.mxu0 %v703
        %5013 = vmatprep.subr.mxu0 %v712
        %5014 = vmatpush1.msra.mxu0 %v711
        %5015 = vmatprep.subr.mxu0 %v720
        %5016 = vmatpush1.msra.mxu0 %v719
        %5017 = vmatprep.subr.mxu0 %v728
        %5018 = vmatpush1.msra.mxu0 %v727
        %5019 = vmatprep.subr.mxu0 %v736
        %5020 = vmatpush1.msra.mxu0 %v735
        %5021 = vmatprep.subr.mxu0 %v744
        %5022 = vmatpush1.msra.mxu0 %v743
        %5023 = vmatprep.subr.mxu0 %v752
        %5024 = vmatpush1.msra.mxu0 %v751
        %5025 = vmatprep.subr.mxu0 %v760
        %5026 = vmatpush1.msra.mxu0 %v759
        %5027 = vmatprep.subr.mxu0 %v768
        %5028 = vmatpush1.msra.mxu0 %v767
        %5029 = vmatprep.subr.mxu0 %v776
        %5030 = vmatpush1.msra.mxu0 %v775
        %5031 = vmatprep.subr.mxu0 %v784
        %5032 = vmatpush1.msra.mxu0 %v783
        %5033 = vmatprep.subr.mxu0 %v792
        %5034 = vmatpush1.msra.mxu0 %v791
        %5035 = vmatprep.subr.mxu0 %v800
        %5036 = vmatpush1.msra.mxu0 %v799
        %5037 = vmatprep.subr.mxu0 %v808
        %5038 = vmatpush1.msra.mxu0 %v807
        %5039 = vmatprep.subr.mxu0 %v816
        %5040 = vmatpush1.msra.mxu0 %v815
        %5041 = vmatprep.subr.mxu0 %v824
        %5042 = vmatpush1.msra.mxu0 %v823
        %5043 = vmatprep.subr.mxu0 %v832
        %5044 = vmatpush1.msra.mxu0 %v831
        %5045 = vmatprep.subr.mxu0 %v840
        %5046 = vmatpush1.msra.mxu0 %v839
        %5047 = vmatprep.subr.mxu0 %v848
        %5048 = vmatpush1.msra.mxu0 %v847
        %5049 = vmatprep.subr.mxu0 %v856
        %5050 = vmatpush1.msra.mxu0 %v855
        %5051 = vmatprep.subr.mxu0 %v864
        %5052 = vmatpush1.msra.mxu0 %v863
        %5053 = vmatprep.subr.mxu0 %v872
        %5054 = vmatpush1.msra.mxu0 %v871
        %5055 = vmatprep.mubr.f32.mxu0 %v4558
        %5056 = vmatmul.mubr.f32.gmra.mrb[0].mxu0 %v609
        %v5057 = vpop.f32.mrb[0].mxu0
        %v5058 = vadd.f32 %v1158, %v5057
        %v5059 = vpop.f32.mrb[0].mxu0
        %v5060 = vadd.f32 %v1162, %v5059
        %5061 = vdwg.mxu0
        %5062 = vmatprep.subr.mxu0 %v880
        %5063 = vmatpush1.msra.mxu0 %v879
        %5064 = vmatprep.subr.mxu0 %v888
        %5065 = vmatpush1.msra.mxu0 %v887
        %5066 = vmatprep.subr.mxu0 %v896
        %5067 = vmatpush1.msra.mxu0 %v895
        %5068 = vmatprep.subr.mxu0 %v904
        %5069 = vmatpush1.msra.mxu0 %v903
        %5070 = vmatprep.subr.mxu0 %v912
        %5071 = vmatpush1.msra.mxu0 %v911
        %5072 = vmatprep.subr.mxu0 %v920
        %5073 = vmatpush1.msra.mxu0 %v919
        %5074 = vmatprep.subr.mxu0 %v928
        %5075 = vmatpush1.msra.mxu0 %v927
        %5076 = vmatprep.subr.mxu0 %v936
        %5077 = vmatpush1.msra.mxu0 %v935
        %5078 = vmatprep.subr.mxu0 %v944
        %5079 = vmatpush1.msra.mxu0 %v943
        %5080 = vmatprep.subr.mxu0 %v952
        %5081 = vmatpush1.msra.mxu0 %v951
        %5082 = vmatprep.subr.mxu0 %v960
        %5083 = vmatpush1.msra.mxu0 %v959
        %5084 = vmatprep.subr.mxu0 %v968
        %5085 = vmatpush1.msra.mxu0 %v967
        %5086 = vmatprep.subr.mxu0 %v976
        %5087 = vmatpush1.msra.mxu0 %v975
        %5088 = vmatprep.subr.mxu0 %v984
        %5089 = vmatpush1.msra.mxu0 %v983
        %5090 = vmatprep.subr.mxu0 %v992
        %5091 = vmatpush1.msra.mxu0 %v991
        %5092 = vmatprep.subr.mxu0 %v1000
        %5093 = vmatpush1.msra.mxu0 %v999
        %5094 = vmatprep.subr.mxu0 %v1008
        %5095 = vmatpush1.msra.mxu0 %v1007
        %5096 = vmatprep.subr.mxu0 %v1016
        %5097 = vmatpush1.msra.mxu0 %v1015
        %5098 = vmatprep.subr.mxu0 %v1024
        %5099 = vmatpush1.msra.mxu0 %v1023
        %5100 = vmatprep.subr.mxu0 %v1032
        %5101 = vmatpush1.msra.mxu0 %v1031
        %5102 = vmatprep.subr.mxu0 %v1040
        %5103 = vmatpush1.msra.mxu0 %v1039
        %5104 = vmatprep.subr.mxu0 %v1048
        %5105 = vmatpush1.msra.mxu0 %v1047
        %5106 = vmatprep.subr.mxu0 %v1056
        %5107 = vmatpush1.msra.mxu0 %v1055
        %5108 = vmatprep.subr.mxu0 %v1064
        %5109 = vmatpush1.msra.mxu0 %v1063
        %5110 = vmatprep.subr.mxu0 %v1072
        %5111 = vmatpush1.msra.mxu0 %v1071
        %5112 = vmatprep.subr.mxu0 %v1080
        %5113 = vmatpush1.msra.mxu0 %v1079
        %5114 = vmatprep.subr.mxu0 %v1088
        %5115 = vmatpush1.msra.mxu0 %v1087
        %5116 = vmatprep.subr.mxu0 %v1096
        %5117 = vmatpush1.msra.mxu0 %v1095
        %5118 = vmatprep.subr.mxu0 %v1104
        %5119 = vmatpush1.msra.mxu0 %v1103
        %5120 = vmatprep.subr.mxu0 %v1112
        %5121 = vmatpush1.msra.mxu0 %v1111
        %5122 = vmatprep.subr.mxu0 %v1120
        %5123 = vmatpush1.msra.mxu0 %v1119
        %5124 = vmatprep.subr.mxu0 %v1128
        %5125 = vmatpush1.msra.mxu0 %v1127
        %5126 = vmatprep.mubr.f32.mxu0 %v4564
        %5127 = vmatmul.mubr.f32.gmra.mrb[0].mxu0 %v4558
        %v5128 = vpop.f32.mrb[0].mxu0
        %v5129 = vadd.f32 %v5058, %v5128
        %v5130 = vpop.f32.mrb[0].mxu0
        %v5131 = vadd.f32 %v5060, %v5130
        %5132 = vdwg.mxu0
        %v5133 = vxor.u32 %v4703, 2147483648
        %v5134 = vxor.u32 %v4705, 2147483648
        %v5135 = vxor.u32 %v4847, 2147483648
        %v5136 = vxor.u32 %v4987, 2147483648
        %v5137 = vxor.u32 %v4989, 2147483648
        %v5138 = vxor.u32 %v5131, 2147483648
        %v5139 = vmul.f32 %v5133, 1.442695
        %v5140 = vpow.pop %v5139
        %v5141 = vmul.f32 %v5134, 1.442695
        %v5142 = vpow.pop %v5141
        %v5143 = vmul.f32 %v5135, 1.442695
        %v5144 = vpow.pop %v5143
        %v5145 = vmul.f32 %v5136, 1.442695
        %v5146 = vpow.pop %v5145
        %v5147 = vmul.f32 %v5137, 1.442695
        %v5148 = vpow.pop %v5147
        %v5149 = vmul.f32 %v5138, 1.442695
        %v5150 = vpow.pop %v5149
        %v5151 = vadd.f32 %v5140, 1.0
        %v5152 = vadd.f32 %v5142, 1.0
        %v5153 = vadd.f32 %v5144, 1.0
        %v5154 = vadd.f32 %v5146, 1.0
        %v5155 = vadd.f32 %v5148, 1.0
        %v5156 = vadd.f32 %v5150, 1.0
        %v5157 = vrcp.pop %v5151
        %v5158 = vmul.f32 1.0, %v5157
        %v5159 = vrcp.pop %v5152
        %v5160 = vmul.f32 1.0, %v5159
        %v5161 = vrcp.pop %v5153
        %v5162 = vmul.f32 1.0, %v5161
        %v5163 = vrcp.pop %v5154
        %v5164 = vmul.f32 1.0, %v5163
        %v5165 = vrcp.pop %v5155
        %v5166 = vmul.f32 1.0, %v5165
        %v5167 = vrcp.pop %v5156
        %v5168 = vmul.f32 1.0, %v5167
        %v5169 = vtanh.pop %v4845
        %v5170 = vmul.f32 %v5160, %v4556
        %v5171 = vmul.f32 %v5158, %v5169
        %v5172 = vadd.f32 %v5170, %v5171
        %v5173 = vtanh.pop %v5172
        %v5174 = vmul.f32 %v5162, %v5173
        %v5175 = vtanh.pop %v5129
        %v5176 = vmul.f32 %v5166, %v4562
        %v5177 = vmul.f32 %v5164, %v5175
        %v5178 = vadd.f32 %v5176, %v5177
        %v5179 = vtanh.pop %v5178
        %v5180 = vmul.f32 %v5168, %v5179
        %5181 = vmatprep.subr.mxu0 %v618
        %5182 = vmatpush1.msra.mxu0 %v617
        %5183 = vmatprep.subr.mxu0 %v626
        %5184 = vmatpush1.msra.mxu0 %v625
        %5185 = vmatprep.subr.mxu0 %v634
        %5186 = vmatpush1.msra.mxu0 %v633
        %5187 = vmatprep.subr.mxu0 %v642
        %5188 = vmatpush1.msra.mxu0 %v641
        %5189 = vmatprep.subr.mxu0 %v650
        %5190 = vmatpush1.msra.mxu0 %v649
        %5191 = vmatprep.subr.mxu0 %v658
        %5192 = vmatpush1.msra.mxu0 %v657
        %5193 = vmatprep.subr.mxu0 %v666
        %5194 = vmatpush1.msra.mxu0 %v665
        %5195 = vmatprep.subr.mxu0 %v674
        %5196 = vmatpush1.msra.mxu0 %v673
        %5197 = vmatprep.subr.mxu0 %v682
        %5198 = vmatpush1.msra.mxu0 %v681
        %5199 = vmatprep.subr.mxu0 %v690
        %5200 = vmatpush1.msra.mxu0 %v689
        %5201 = vmatprep.subr.mxu0 %v698
        %5202 = vmatpush1.msra.mxu0 %v697
        %5203 = vmatprep.subr.mxu0 %v706
        %5204 = vmatpush1.msra.mxu0 %v705
        %5205 = vmatprep.subr.mxu0 %v714
        %5206 = vmatpush1.msra.mxu0 %v713
        %5207 = vmatprep.subr.mxu0 %v722
        %5208 = vmatpush1.msra.mxu0 %v721
        %5209 = vmatprep.subr.mxu0 %v730
        %5210 = vmatpush1.msra.mxu0 %v729
        %5211 = vmatprep.subr.mxu0 %v738
        %5212 = vmatpush1.msra.mxu0 %v737
        %5213 = vmatprep.subr.mxu0 %v746
        %5214 = vmatpush1.msra.mxu0 %v745
        %5215 = vmatprep.subr.mxu0 %v754
        %5216 = vmatpush1.msra.mxu0 %v753
        %5217 = vmatprep.subr.mxu0 %v762
        %5218 = vmatpush1.msra.mxu0 %v761
        %5219 = vmatprep.subr.mxu0 %v770
        %5220 = vmatpush1.msra.mxu0 %v769
        %5221 = vmatprep.subr.mxu0 %v778
        %5222 = vmatpush1.msra.mxu0 %v777
        %5223 = vmatprep.subr.mxu0 %v786
        %5224 = vmatpush1.msra.mxu0 %v785
        %5225 = vmatprep.subr.mxu0 %v794
        %5226 = vmatpush1.msra.mxu0 %v793
        %5227 = vmatprep.subr.mxu0 %v802
        %5228 = vmatpush1.msra.mxu0 %v801
        %5229 = vmatprep.subr.mxu0 %v810
        %5230 = vmatpush1.msra.mxu0 %v809
        %5231 = vmatprep.subr.mxu0 %v818
        %5232 = vmatpush1.msra.mxu0 %v817
        %5233 = vmatprep.subr.mxu0 %v826
        %5234 = vmatpush1.msra.mxu0 %v825
        %5235 = vmatprep.subr.mxu0 %v834
        %5236 = vmatpush1.msra.mxu0 %v833
        %5237 = vmatprep.subr.mxu0 %v842
        %5238 = vmatpush1.msra.mxu0 %v841
        %5239 = vmatprep.subr.mxu0 %v850
        %5240 = vmatpush1.msra.mxu0 %v849
        %5241 = vmatprep.subr.mxu0 %v858
        %5242 = vmatpush1.msra.mxu0 %v857
        %5243 = vmatprep.subr.mxu0 %v866
        %5244 = vmatpush1.msra.mxu0 %v865
        %5245 = vmatprep.mubr.f32.mxu0 %v5174
        %5246 = vmatmul.mubr.f32.gmra.mrb[0].mxu0 %v614
        %v5247 = vpop.f32.mrb[0].mxu0
        %v5248 = vadd.f32 %v1134, %v5247
        %v5249 = vpop.f32.mrb[0].mxu0
        %v5250 = vadd.f32 %v1138, %v5249
        %5251 = vdwg.mxu0
        %5252 = vmatprep.subr.mxu0 %v874
        %5253 = vmatpush1.msra.mxu0 %v873
        %5254 = vmatprep.subr.mxu0 %v882
        %5255 = vmatpush1.msra.mxu0 %v881
        %5256 = vmatprep.subr.mxu0 %v890
        %5257 = vmatpush1.msra.mxu0 %v889
        %5258 = vmatprep.subr.mxu0 %v898
        %5259 = vmatpush1.msra.mxu0 %v897
        %5260 = vmatprep.subr.mxu0 %v906
        %5261 = vmatpush1.msra.mxu0 %v905
        %5262 = vmatprep.subr.mxu0 %v914
        %5263 = vmatpush1.msra.mxu0 %v913
        %5264 = vmatprep.subr.mxu0 %v922
        %5265 = vmatpush1.msra.mxu0 %v921
        %5266 = vmatprep.subr.mxu0 %v930
        %5267 = vmatpush1.msra.mxu0 %v929
        %5268 = vmatprep.subr.mxu0 %v938
        %5269 = vmatpush1.msra.mxu0 %v937
        %5270 = vmatprep.subr.mxu0 %v946
        %5271 = vmatpush1.msra.mxu0 %v945
        %5272 = vmatprep.subr.mxu0 %v954
        %5273 = vmatpush1.msra.mxu0 %v953
        %5274 = vmatprep.subr.mxu0 %v962
        %5275 = vmatpush1.msra.mxu0 %v961
        %5276 = vmatprep.subr.mxu0 %v970
        %5277 = vmatpush1.msra.mxu0 %v969
        %5278 = vmatprep.subr.mxu0 %v978
        %5279 = vmatpush1.msra.mxu0 %v977
        %5280 = vmatprep.subr.mxu0 %v986
        %5281 = vmatpush1.msra.mxu0 %v985
        %5282 = vmatprep.subr.mxu0 %v994
        %5283 = vmatpush1.msra.mxu0 %v993
        %5284 = vmatprep.subr.mxu0 %v1002
        %5285 = vmatpush1.msra.mxu0 %v1001
        %5286 = vmatprep.subr.mxu0 %v1010
        %5287 = vmatpush1.msra.mxu0 %v1009
        %5288 = vmatprep.subr.mxu0 %v1018
        %5289 = vmatpush1.msra.mxu0 %v1017
        %5290 = vmatprep.subr.mxu0 %v1026
        %5291 = vmatpush1.msra.mxu0 %v1025
        %5292 = vmatprep.subr.mxu0 %v1034
        %5293 = vmatpush1.msra.mxu0 %v1033
        %5294 = vmatprep.subr.mxu0 %v1042
        %5295 = vmatpush1.msra.mxu0 %v1041
        %5296 = vmatprep.subr.mxu0 %v1050
        %5297 = vmatpush1.msra.mxu0 %v1049
        %5298 = vmatprep.subr.mxu0 %v1058
        %5299 = vmatpush1.msra.mxu0 %v1057
        %5300 = vmatprep.subr.mxu0 %v1066
        %5301 = vmatpush1.msra.mxu0 %v1065
        %5302 = vmatprep.subr.mxu0 %v1074
        %5303 = vmatpush1.msra.mxu0 %v1073
        %5304 = vmatprep.subr.mxu0 %v1082
        %5305 = vmatpush1.msra.mxu0 %v1081
        %5306 = vmatprep.subr.mxu0 %v1090
        %5307 = vmatpush1.msra.mxu0 %v1089
        %5308 = vmatprep.subr.mxu0 %v1098
        %5309 = vmatpush1.msra.mxu0 %v1097
        %5310 = vmatprep.subr.mxu0 %v1106
        %5311 = vmatpush1.msra.mxu0 %v1105
        %5312 = vmatprep.subr.mxu0 %v1114
        %5313 = vmatpush1.msra.mxu0 %v1113
        %5314 = vmatprep.subr.mxu0 %v1122
        %5315 = vmatpush1.msra.mxu0 %v1121
        %5316 = vmatprep.mubr.f32.mxu0 %v5180
        %5317 = vmatmul.mubr.f32.gmra.mrb[0].mxu0 %v5174
        %v5318 = vpop.f32.mrb[0].mxu0
        %v5319 = vadd.f32 %v5248, %v5318
        %v5320 = vpop.f32.mrb[0].mxu0
        %v5321 = vadd.f32 %v5250, %v5320
        %5322 = vdwg.mxu0
        %5323 = vmatprep.subr.mxu0 %v620
        %5324 = vmatpush1.msra.mxu0 %v619
        %5325 = vmatprep.subr.mxu0 %v628
        %5326 = vmatpush1.msra.mxu0 %v627
        %5327 = vmatprep.subr.mxu0 %v636
        %5328 = vmatpush1.msra.mxu0 %v635
        %5329 = vmatprep.subr.mxu0 %v644
        %5330 = vmatpush1.msra.mxu0 %v643
        %5331 = vmatprep.subr.mxu0 %v652
        %5332 = vmatpush1.msra.mxu0 %v651
        %5333 = vmatprep.subr.mxu0 %v660
        %5334 = vmatpush1.msra.mxu0 %v659
        %5335 = vmatprep.subr.mxu0 %v668
        %5336 = vmatpush1.msra.mxu0 %v667
        %5337 = vmatprep.subr.mxu0 %v676
        %5338 = vmatpush1.msra.mxu0 %v675
        %5339 = vmatprep.subr.mxu0 %v684
        %5340 = vmatpush1.msra.mxu0 %v683
        %5341 = vmatprep.subr.mxu0 %v692
        %5342 = vmatpush1.msra.mxu0 %v691
        %5343 = vmatprep.subr.mxu0 %v700
        %5344 = vmatpush1.msra.mxu0 %v699
        %5345 = vmatprep.subr.mxu0 %v708
        %5346 = vmatpush1.msra.mxu0 %v707
        %5347 = vmatprep.subr.mxu0 %v716
        %5348 = vmatpush1.msra.mxu0 %v715
        %5349 = vmatprep.subr.mxu0 %v724
        %5350 = vmatpush1.msra.mxu0 %v723
        %5351 = vmatprep.subr.mxu0 %v732
        %5352 = vmatpush1.msra.mxu0 %v731
        %5353 = vmatprep.subr.mxu0 %v740
        %5354 = vmatpush1.msra.mxu0 %v739
        %5355 = vmatprep.subr.mxu0 %v748
        %5356 = vmatpush1.msra.mxu0 %v747
        %5357 = vmatprep.subr.mxu0 %v756
        %5358 = vmatpush1.msra.mxu0 %v755
        %5359 = vmatprep.subr.mxu0 %v764
        %5360 = vmatpush1.msra.mxu0 %v763
        %5361 = vmatprep.subr.mxu0 %v772
        %5362 = vmatpush1.msra.mxu0 %v771
        %5363 = vmatprep.subr.mxu0 %v780
        %5364 = vmatpush1.msra.mxu0 %v779
        %5365 = vmatprep.subr.mxu0 %v788
        %5366 = vmatpush1.msra.mxu0 %v787
        %5367 = vmatprep.subr.mxu0 %v796
        %5368 = vmatpush1.msra.mxu0 %v795
        %5369 = vmatprep.subr.mxu0 %v804
        %5370 = vmatpush1.msra.mxu0 %v803
        %5371 = vmatprep.subr.mxu0 %v812
        %5372 = vmatpush1.msra.mxu0 %v811
        %5373 = vmatprep.subr.mxu0 %v820
        %5374 = vmatpush1.msra.mxu0 %v819
        %5375 = vmatprep.subr.mxu0 %v828
        %5376 = vmatpush1.msra.mxu0 %v827
        %5377 = vmatprep.subr.mxu0 %v836
        %5378 = vmatpush1.msra.mxu0 %v835
        %5379 = vmatprep.subr.mxu0 %v844
        %5380 = vmatpush1.msra.mxu0 %v843
        %5381 = vmatprep.subr.mxu0 %v852
        %5382 = vmatpush1.msra.mxu0 %v851
        %5383 = vmatprep.subr.mxu0 %v860
        %5384 = vmatpush1.msra.mxu0 %v859
        %5385 = vmatprep.subr.mxu0 %v868
        %5386 = vmatpush1.msra.mxu0 %v867
        %5387 = vmatprep.mubr.f32.mxu0 %v5174
        %5388 = vmatmul.mubr.f32.gmra.mrb[0].mxu0 %v614
        %v5389 = vpop.f32.mrb[0].mxu0
        %v5390 = vadd.f32 %v1142, %v5389
        %v5391 = vpop.f32.mrb[0].mxu0
        %v5392 = vadd.f32 %v1146, %v5391
        %5393 = vdwg.mxu0
        %5394 = vmatprep.subr.mxu0 %v876
        %5395 = vmatpush1.msra.mxu0 %v875
        %5396 = vmatprep.subr.mxu0 %v884
        %5397 = vmatpush1.msra.mxu0 %v883
        %5398 = vmatprep.subr.mxu0 %v892
        %5399 = vmatpush1.msra.mxu0 %v891
        %5400 = vmatprep.subr.mxu0 %v900
        %5401 = vmatpush1.msra.mxu0 %v899
        %5402 = vmatprep.subr.mxu0 %v908
        %5403 = vmatpush1.msra.mxu0 %v907
        %5404 = vmatprep.subr.mxu0 %v916
        %5405 = vmatpush1.msra.mxu0 %v915
        %5406 = vmatprep.subr.mxu0 %v924
        %5407 = vmatpush1.msra.mxu0 %v923
        %5408 = vmatprep.subr.mxu0 %v932
        %5409 = vmatpush1.msra.mxu0 %v931
        %5410 = vmatprep.subr.mxu0 %v940
        %5411 = vmatpush1.msra.mxu0 %v939
        %5412 = vmatprep.subr.mxu0 %v948
        %5413 = vmatpush1.msra.mxu0 %v947
        %5414 = vmatprep.subr.mxu0 %v956
        %5415 = vmatpush1.msra.mxu0 %v955
        %5416 = vmatprep.subr.mxu0 %v964
        %5417 = vmatpush1.msra.mxu0 %v963
        %5418 = vmatprep.subr.mxu0 %v972
        %5419 = vmatpush1.msra.mxu0 %v971
        %5420 = vmatprep.subr.mxu0 %v980
        %5421 = vmatpush1.msra.mxu0 %v979
        %5422 = vmatprep.subr.mxu0 %v988
        %5423 = vmatpush1.msra.mxu0 %v987
        %5424 = vmatprep.subr.mxu0 %v996
        %5425 = vmatpush1.msra.mxu0 %v995
        %5426 = vmatprep.subr.mxu0 %v1004
        %5427 = vmatpush1.msra.mxu0 %v1003
        %5428 = vmatprep.subr.mxu0 %v1012
        %5429 = vmatpush1.msra.mxu0 %v1011
        %5430 = vmatprep.subr.mxu0 %v1020
        %5431 = vmatpush1.msra.mxu0 %v1019
        %5432 = vmatprep.subr.mxu0 %v1028
        %5433 = vmatpush1.msra.mxu0 %v1027
        %5434 = vmatprep.subr.mxu0 %v1036
        %5435 = vmatpush1.msra.mxu0 %v1035
        %5436 = vmatprep.subr.mxu0 %v1044
        %5437 = vmatpush1.msra.mxu0 %v1043
        %5438 = vmatprep.subr.mxu0 %v1052
        %5439 = vmatpush1.msra.mxu0 %v1051
        %5440 = vmatprep.subr.mxu0 %v1060
        %5441 = vmatpush1.msra.mxu0 %v1059
        %5442 = vmatprep.subr.mxu0 %v1068
        %5443 = vmatpush1.msra.mxu0 %v1067
        %5444 = vmatprep.subr.mxu0 %v1076
        %5445 = vmatpush1.msra.mxu0 %v1075
        %5446 = vmatprep.subr.mxu0 %v1084
        %5447 = vmatpush1.msra.mxu0 %v1083
        %5448 = vmatprep.subr.mxu0 %v1092
        %5449 = vmatpush1.msra.mxu0 %v1091
        %5450 = vmatprep.subr.mxu0 %v1100
        %5451 = vmatpush1.msra.mxu0 %v1099
        %5452 = vmatprep.subr.mxu0 %v1108
        %5453 = vmatpush1.msra.mxu0 %v1107
        %5454 = vmatprep.subr.mxu0 %v1116
        %5455 = vmatpush1.msra.mxu0 %v1115
        %5456 = vmatprep.subr.mxu0 %v1124
        %5457 = vmatpush1.msra.mxu0 %v1123
        %5458 = vmatprep.mubr.f32.mxu0 %v5180
        %5459 = vmatmul.mubr.f32.gmra.mrb[0].mxu0 %v5174
        %v5460 = vpop.f32.mrb[0].mxu0
        %v5461 = vadd.f32 %v5390, %v5460
        %v5462 = vpop.f32.mrb[0].mxu0
        %v5463 = vadd.f32 %v5392, %v5462
        %5464 = vdwg.mxu0
        %5465 = vmatprep.subr.mxu0 %v622
        %5466 = vmatpush1.msra.mxu0 %v621
        %5467 = vmatprep.subr.mxu0 %v630
        %5468 = vmatpush1.msra.mxu0 %v629
        %5469 = vmatprep.subr.mxu0 %v638
        %5470 = vmatpush1.msra.mxu0 %v637
        %5471 = vmatprep.subr.mxu0 %v646
        %5472 = vmatpush1.msra.mxu0 %v645
        %5473 = vmatprep.subr.mxu0 %v654
        %5474 = vmatpush1.msra.mxu0 %v653
        %5475 = vmatprep.subr.mxu0 %v662
        %5476 = vmatpush1.msra.mxu0 %v661
        %5477 = vmatprep.subr.mxu0 %v670
        %5478 = vmatpush1.msra.mxu0 %v669
        %5479 = vmatprep.subr.mxu0 %v678
        %5480 = vmatpush1.msra.mxu0 %v677
        %5481 = vmatprep.subr.mxu0 %v686
        %5482 = vmatpush1.msra.mxu0 %v685
        %5483 = vmatprep.subr.mxu0 %v694
        %5484 = vmatpush1.msra.mxu0 %v693
        %5485 = vmatprep.subr.mxu0 %v702
        %5486 = vmatpush1.msra.mxu0 %v701
        %5487 = vmatprep.subr.mxu0 %v710
        %5488 = vmatpush1.msra.mxu0 %v709
        %5489 = vmatprep.subr.mxu0 %v718
        %5490 = vmatpush1.msra.mxu0 %v717
        %5491 = vmatprep.subr.mxu0 %v726
        %5492 = vmatpush1.msra.mxu0 %v725
        %5493 = vmatprep.subr.mxu0 %v734
        %5494 = vmatpush1.msra.mxu0 %v733
        %5495 = vmatprep.subr.mxu0 %v742
        %5496 = vmatpush1.msra.mxu0 %v741
        %5497 = vmatprep.subr.mxu0 %v750
        %5498 = vmatpush1.msra.mxu0 %v749
        %5499 = vmatprep.subr.mxu0 %v758
        %5500 = vmatpush1.msra.mxu0 %v757
        %5501 = vmatprep.subr.mxu0 %v766
        %5502 = vmatpush1.msra.mxu0 %v765
        %5503 = vmatprep.subr.mxu0 %v774
        %5504 = vmatpush1.msra.mxu0 %v773
        %5505 = vmatprep.subr.mxu0 %v782
        %5506 = vmatpush1.msra.mxu0 %v781
        %5507 = vmatprep.subr.mxu0 %v790
        %5508 = vmatpush1.msra.mxu0 %v789
        %5509 = vmatprep.subr.mxu0 %v798
        %5510 = vmatpush1.msra.mxu0 %v797
        %5511 = vmatprep.subr.mxu0 %v806
        %5512 = vmatpush1.msra.mxu0 %v805
        %5513 = vmatprep.subr.mxu0 %v814
        %5514 = vmatpush1.msra.mxu0 %v813
        %5515 = vmatprep.subr.mxu0 %v822
        %5516 = vmatpush1.msra.mxu0 %v821
        %5517 = vmatprep.subr.mxu0 %v830
        %5518 = vmatpush1.msra.mxu0 %v829
        %5519 = vmatprep.subr.mxu0 %v838
        %5520 = vmatpush1.msra.mxu0 %v837
        %5521 = vmatprep.subr.mxu0 %v846
        %5522 = vmatpush1.msra.mxu0 %v845
        %5523 = vmatprep.subr.mxu0 %v854
        %5524 = vmatpush1.msra.mxu0 %v853
        %5525 = vmatprep.subr.mxu0 %v862
        %5526 = vmatpush1.msra.mxu0 %v861
        %5527 = vmatprep.subr.mxu0 %v870
        %5528 = vmatpush1.msra.mxu0 %v869
        %5529 = vmatprep.mubr.f32.mxu0 %v5174
        %5530 = vmatmul.mubr.f32.gmra.mrb[0].mxu0 %v614
        %v5531 = vpop.f32.mrb[0].mxu0
        %v5532 = vadd.f32 %v1150, %v5531
        %v5533 = vpop.f32.mrb[0].mxu0
        %v5534 = vadd.f32 %v1154, %v5533
        %5535 = vdwg.mxu0
        %5536 = vmatprep.subr.mxu0 %v878
        %5537 = vmatpush1.msra.mxu0 %v877
        %5538 = vmatprep.subr.mxu0 %v886
        %5539 = vmatpush1.msra.mxu0 %v885
        %5540 = vmatprep.subr.mxu0 %v894
        %5541 = vmatpush1.msra.mxu0 %v893
        %5542 = vmatprep.subr.mxu0 %v902
        %5543 = vmatpush1.msra.mxu0 %v901
        %5544 = vmatprep.subr.mxu0 %v910
        %5545 = vmatpush1.msra.mxu0 %v909
        %5546 = vmatprep.subr.mxu0 %v918
        %5547 = vmatpush1.msra.mxu0 %v917
        %5548 = vmatprep.subr.mxu0 %v926
        %5549 = vmatpush1.msra.mxu0 %v925
        %5550 = vmatprep.subr.mxu0 %v934
        %5551 = vmatpush1.msra.mxu0 %v933
        %5552 = vmatprep.subr.mxu0 %v942
        %5553 = vmatpush1.msra.mxu0 %v941
        %5554 = vmatprep.subr.mxu0 %v950
        %5555 = vmatpush1.msra.mxu0 %v949
        %5556 = vmatprep.subr.mxu0 %v958
        %5557 = vmatpush1.msra.mxu0 %v957
        %5558 = vmatprep.subr.mxu0 %v966
        %5559 = vmatpush1.msra.mxu0 %v965
        %5560 = vmatprep.subr.mxu0 %v974
        %5561 = vmatpush1.msra.mxu0 %v973
        %5562 = vmatprep.subr.mxu0 %v982
        %5563 = vmatpush1.msra.mxu0 %v981
        %5564 = vmatprep.subr.mxu0 %v990
        %5565 = vmatpush1.msra.mxu0 %v989
        %5566 = vmatprep.subr.mxu0 %v998
        %5567 = vmatpush1.msra.mxu0 %v997
        %5568 = vmatprep.subr.mxu0 %v1006
        %5569 = vmatpush1.msra.mxu0 %v1005
        %5570 = vmatprep.subr.mxu0 %v1014
        %5571 = vmatpush1.msra.mxu0 %v1013
        %5572 = vmatprep.subr.mxu0 %v1022
        %5573 = vmatpush1.msra.mxu0 %v1021
        %5574 = vmatprep.subr.mxu0 %v1030
        %5575 = vmatpush1.msra.mxu0 %v1029
        %5576 = vmatprep.subr.mxu0 %v1038
        %5577 = vmatpush1.msra.mxu0 %v1037
        %5578 = vmatprep.subr.mxu0 %v1046
        %5579 = vmatpush1.msra.mxu0 %v1045
        %5580 = vmatprep.subr.mxu0 %v1054
        %5581 = vmatpush1.msra.mxu0 %v1053
        %5582 = vmatprep.subr.mxu0 %v1062
        %5583 = vmatpush1.msra.mxu0 %v1061
        %5584 = vmatprep.subr.mxu0 %v1070
        %5585 = vmatpush1.msra.mxu0 %v1069
        %5586 = vmatprep.subr.mxu0 %v1078
        %5587 = vmatpush1.msra.mxu0 %v1077
        %5588 = vmatprep.subr.mxu0 %v1086
        %5589 = vmatpush1.msra.mxu0 %v1085
        %5590 = vmatprep.subr.mxu0 %v1094
        %5591 = vmatpush1.msra.mxu0 %v1093
        %5592 = vmatprep.subr.mxu0 %v1102
        %5593 = vmatpush1.msra.mxu0 %v1101
        %5594 = vmatprep.subr.mxu0 %v1110
        %5595 = vmatpush1.msra.mxu0 %v1109
        %5596 = vmatprep.subr.mxu0 %v1118
        %5597 = vmatpush1.msra.mxu0 %v1117
        %5598 = vmatprep.subr.mxu0 %v1126
        %5599 = vmatpush1.msra.mxu0 %v1125
        %5600 = vmatprep.mubr.f32.mxu0 %v5180
        %5601 = vmatmul.mubr.f32.gmra.mrb[0].mxu0 %v5174
        %v5602 = vpop.f32.mrb[0].mxu0
        %v5603 = vadd.f32 %v5532, %v5602
        %v5604 = vpop.f32.mrb[0].mxu0
        %v5605 = vadd.f32 %v5534, %v5604
        %5606 = vdwg.mxu0
        %5607 = vmatprep.subr.mxu0 %v624
        %5608 = vmatpush1.msra.mxu0 %v623
        %5609 = vmatprep.subr.mxu0 %v632
        %5610 = vmatpush1.msra.mxu0 %v631
        %5611 = vmatprep.subr.mxu0 %v640
        %5612 = vmatpush1.msra.mxu0 %v639
        %5613 = vmatprep.subr.mxu0 %v648
        %5614 = vmatpush1.msra.mxu0 %v647
        %5615 = vmatprep.subr.mxu0 %v656
        %5616 = vmatpush1.msra.mxu0 %v655
        %5617 = vmatprep.subr.mxu0 %v664
        %5618 = vmatpush1.msra.mxu0 %v663
        %5619 = vmatprep.subr.mxu0 %v672
        %5620 = vmatpush1.msra.mxu0 %v671
        %5621 = vmatprep.subr.mxu0 %v680
        %5622 = vmatpush1.msra.mxu0 %v679
        %5623 = vmatprep.subr.mxu0 %v688
        %5624 = vmatpush1.msra.mxu0 %v687
        %5625 = vmatprep.subr.mxu0 %v696
        %5626 = vmatpush1.msra.mxu0 %v695
        %5627 = vmatprep.subr.mxu0 %v704
        %5628 = vmatpush1.msra.mxu0 %v703
        %5629 = vmatprep.subr.mxu0 %v712
        %5630 = vmatpush1.msra.mxu0 %v711
        %5631 = vmatprep.subr.mxu0 %v720
        %5632 = vmatpush1.msra.mxu0 %v719
        %5633 = vmatprep.subr.mxu0 %v728
        %5634 = vmatpush1.msra.mxu0 %v727
        %5635 = vmatprep.subr.mxu0 %v736
        %5636 = vmatpush1.msra.mxu0 %v735
        %5637 = vmatprep.subr.mxu0 %v744
        %5638 = vmatpush1.msra.mxu0 %v743
        %5639 = vmatprep.subr.mxu0 %v752
        %5640 = vmatpush1.msra.mxu0 %v751
        %5641 = vmatprep.subr.mxu0 %v760
        %5642 = vmatpush1.msra.mxu0 %v759
        %5643 = vmatprep.subr.mxu0 %v768
        %5644 = vmatpush1.msra.mxu0 %v767
        %5645 = vmatprep.subr.mxu0 %v776
        %5646 = vmatpush1.msra.mxu0 %v775
        %5647 = vmatprep.subr.mxu0 %v784
        %5648 = vmatpush1.msra.mxu0 %v783
        %5649 = vmatprep.subr.mxu0 %v792
        %5650 = vmatpush1.msra.mxu0 %v791
        %5651 = vmatprep.subr.mxu0 %v800
        %5652 = vmatpush1.msra.mxu0 %v799
        %5653 = vmatprep.subr.mxu0 %v808
        %5654 = vmatpush1.msra.mxu0 %v807
        %5655 = vmatprep.subr.mxu0 %v816
        %5656 = vmatpush1.msra.mxu0 %v815
        %5657 = vmatprep.subr.mxu0 %v824
        %5658 = vmatpush1.msra.mxu0 %v823
        %5659 = vmatprep.subr.mxu0 %v832
        %5660 = vmatpush1.msra.mxu0 %v831
        %5661 = vmatprep.subr.mxu0 %v840
        %5662 = vmatpush1.msra.mxu0 %v839
        %5663 = vmatprep.subr.mxu0 %v848
        %5664 = vmatpush1.msra.mxu0 %v847
        %5665 = vmatprep.subr.mxu0 %v856
        %5666 = vmatpush1.msra.mxu0 %v855
        %5667 = vmatprep.subr.mxu0 %v864
        %5668 = vmatpush1.msra.mxu0 %v863
        %5669 = vmatprep.subr.mxu0 %v872
        %5670 = vmatpush1.msra.mxu0 %v871
        %5671 = vmatprep.mubr.f32.mxu0 %v5174
        %5672 = vmatmul.mubr.f32.gmra.mrb[0].mxu0 %v614
        %v5673 = vpop.f32.mrb[0].mxu0
        %v5674 = vadd.f32 %v1158, %v5673
        %v5675 = vpop.f32.mrb[0].mxu0
        %v5676 = vadd.f32 %v1162, %v5675
        %5677 = vdwg.mxu0
        %5678 = vmatprep.subr.mxu0 %v880
        %5679 = vmatpush1.msra.mxu0 %v879
        %5680 = vmatprep.subr.mxu0 %v888
        %5681 = vmatpush1.msra.mxu0 %v887
        %5682 = vmatprep.subr.mxu0 %v896
        %5683 = vmatpush1.msra.mxu0 %v895
        %5684 = vmatprep.subr.mxu0 %v904
        %5685 = vmatpush1.msra.mxu0 %v903
        %5686 = vmatprep.subr.mxu0 %v912
        %5687 = vmatpush1.msra.mxu0 %v911
        %5688 = vmatprep.subr.mxu0 %v920
        %5689 = vmatpush1.msra.mxu0 %v919
        %5690 = vmatprep.subr.mxu0 %v928
        %5691 = vmatpush1.msra.mxu0 %v927
        %5692 = vmatprep.subr.mxu0 %v936
        %5693 = vmatpush1.msra.mxu0 %v935
        %5694 = vmatprep.subr.mxu0 %v944
        %5695 = vmatpush1.msra.mxu0 %v943
        %5696 = vmatprep.subr.mxu0 %v952
        %5697 = vmatpush1.msra.mxu0 %v951
        %5698 = vmatprep.subr.mxu0 %v960
        %5699 = vmatpush1.msra.mxu0 %v959
        %5700 = vmatprep.subr.mxu0 %v968
        %5701 = vmatpush1.msra.mxu0 %v967
        %5702 = vmatprep.subr.mxu0 %v976
        %5703 = vmatpush1.msra.mxu0 %v975
        %5704 = vmatprep.subr.mxu0 %v984
        %5705 = vmatpush1.msra.mxu0 %v983
        %5706 = vmatprep.subr.mxu0 %v992
        %5707 = vmatpush1.msra.mxu0 %v991
        %5708 = vmatprep.subr.mxu0 %v1000
        %5709 = vmatpush1.msra.mxu0 %v999
        %5710 = vmatprep.subr.mxu0 %v1008
        %5711 = vmatpush1.msra.mxu0 %v1007
        %5712 = vmatprep.subr.mxu0 %v1016
        %5713 = vmatpush1.msra.mxu0 %v1015
        %5714 = vmatprep.subr.mxu0 %v1024
        %5715 = vmatpush1.msra.mxu0 %v1023
        %5716 = vmatprep.subr.mxu0 %v1032
        %5717 = vmatpush1.msra.mxu0 %v1031
        %5718 = vmatprep.subr.mxu0 %v1040
        %5719 = vmatpush1.msra.mxu0 %v1039
        %5720 = vmatprep.subr.mxu0 %v1048
        %5721 = vmatpush1.msra.mxu0 %v1047
        %5722 = vmatprep.subr.mxu0 %v1056
        %5723 = vmatpush1.msra.mxu0 %v1055
        %5724 = vmatprep.subr.mxu0 %v1064
        %5725 = vmatpush1.msra.mxu0 %v1063
        %5726 = vmatprep.subr.mxu0 %v1072
        %5727 = vmatpush1.msra.mxu0 %v1071
        %5728 = vmatprep.subr.mxu0 %v1080
        %5729 = vmatpush1.msra.mxu0 %v1079
        %5730 = vmatprep.subr.mxu0 %v1088
        %5731 = vmatpush1.msra.mxu0 %v1087
        %5732 = vmatprep.subr.mxu0 %v1096
        %5733 = vmatpush1.msra.mxu0 %v1095
        %5734 = vmatprep.subr.mxu0 %v1104
        %5735 = vmatpush1.msra.mxu0 %v1103
        %5736 = vmatprep.subr.mxu0 %v1112
        %5737 = vmatpush1.msra.mxu0 %v1111
        %5738 = vmatprep.subr.mxu0 %v1120
        %5739 = vmatpush1.msra.mxu0 %v1119
        %5740 = vmatprep.subr.mxu0 %v1128
        %5741 = vmatpush1.msra.mxu0 %v1127
        %5742 = vmatprep.mubr.f32.mxu0 %v5180
        %5743 = vmatmul.mubr.f32.gmra.mrb[0].mxu0 %v5174
        %v5744 = vpop.f32.mrb[0].mxu0
        %v5745 = vadd.f32 %v5674, %v5744
        %v5746 = vpop.f32.mrb[0].mxu0
        %v5747 = vadd.f32 %v5676, %v5746
        %5748 = vdwg.mxu0
        %v5749 = vxor.u32 %v5319, 2147483648
        %v5750 = vxor.u32 %v5321, 2147483648
        %v5751 = vxor.u32 %v5463, 2147483648
        %v5752 = vxor.u32 %v5603, 2147483648
        %v5753 = vxor.u32 %v5605, 2147483648
        %v5754 = vxor.u32 %v5747, 2147483648
        %v5755 = vmul.f32 %v5749, 1.442695
        %v5756 = vpow.pop %v5755
        %v5757 = vmul.f32 %v5750, 1.442695
        %v5758 = vpow.pop %v5757
        %v5759 = vmul.f32 %v5751, 1.442695
        %v5760 = vpow.pop %v5759
        %v5761 = vmul.f32 %v5752, 1.442695
        %v5762 = vpow.pop %v5761
        %v5763 = vmul.f32 %v5753, 1.442695
        %v5764 = vpow.pop %v5763
        %v5765 = vmul.f32 %v5754, 1.442695
        %v5766 = vpow.pop %v5765
        %v5767 = vadd.f32 %v5756, 1.0
        %v5768 = vadd.f32 %v5758, 1.0
        %v5769 = vadd.f32 %v5760, 1.0
        %v5770 = vadd.f32 %v5762, 1.0
        %v5771 = vadd.f32 %v5764, 1.0
        %v5772 = vadd.f32 %v5766, 1.0
        %v5773 = vrcp.pop %v5767
        %v5774 = vmul.f32 1.0, %v5773
        %v5775 = vrcp.pop %v5768
        %v5776 = vmul.f32 1.0, %v5775
        %v5777 = vrcp.pop %v5769
        %v5778 = vmul.f32 1.0, %v5777
        %v5779 = vrcp.pop %v5770
        %v5780 = vmul.f32 1.0, %v5779
        %v5781 = vrcp.pop %v5771
        %v5782 = vmul.f32 1.0, %v5781
        %v5783 = vrcp.pop %v5772
        %v5784 = vmul.f32 1.0, %v5783
        %v5785 = vtanh.pop %v5461
        %v5786 = vmul.f32 %v5776, %v5172
        %v5787 = vmul.f32 %v5774, %v5785
        %v5788 = vadd.f32 %v5786, %v5787
        %v5789 = vtanh.pop %v5788
        %v5790 = vmul.f32 %v5778, %v5789
        %v5791 = vtanh.pop %v5745
        %v5792 = vmul.f32 %v5782, %v5178
        %v5793 = vmul.f32 %v5780, %v5791
        %v5794 = vadd.f32 %v5792, %v5793
        %v5795 = vtanh.pop %v5794
        %v5796 = vmul.f32 %v5784, %v5795
        %5797 = vmatprep.subr.mxu0 %v622
        %5798 = vmatpush1.msra.mxu0 %v621
        %5799 = vmatprep.subr.mxu0 %v630
        %5800 = vmatpush1.msra.mxu0 %v629
        %5801 = vmatprep.subr.mxu0 %v638
        %5802 = vmatpush1.msra.mxu0 %v637
        %5803 = vmatprep.subr.mxu0 %v646
        %5804 = vmatpush1.msra.mxu0 %v645
        %5805 = vmatprep.subr.mxu0 %v654
        %5806 = vmatpush1.msra.mxu0 %v653
        %5807 = vmatprep.subr.mxu0 %v662
        %5808 = vmatpush1.msra.mxu0 %v661
        %5809 = vmatprep.subr.mxu0 %v670
        %5810 = vmatpush1.msra.mxu0 %v669
        %5811 = vmatprep.subr.mxu0 %v678
        %5812 = vmatpush1.msra.mxu0 %v677
        %5813 = vmatprep.subr.mxu0 %v686
        %5814 = vmatpush1.msra.mxu0 %v685
        %5815 = vmatprep.subr.mxu0 %v694
        %5816 = vmatpush1.msra.mxu0 %v693
        %5817 = vmatprep.subr.mxu0 %v702
        %5818 = vmatpush1.msra.mxu0 %v701
        %5819 = vmatprep.subr.mxu0 %v710
        %5820 = vmatpush1.msra.mxu0 %v709
        %5821 = vmatprep.subr.mxu0 %v718
        %5822 = vmatpush1.msra.mxu0 %v717
        %5823 = vmatprep.subr.mxu0 %v726
        %5824 = vmatpush1.msra.mxu0 %v725
        %5825 = vmatprep.subr.mxu0 %v734
        %5826 = vmatpush1.msra.mxu0 %v733
        %5827 = vmatprep.subr.mxu0 %v742
        %5828 = vmatpush1.msra.mxu0 %v741
        %5829 = vmatprep.subr.mxu0 %v750
        %5830 = vmatpush1.msra.mxu0 %v749
        %5831 = vmatprep.subr.mxu0 %v758
        %5832 = vmatpush1.msra.mxu0 %v757
        %5833 = vmatprep.subr.mxu0 %v766
        %5834 = vmatpush1.msra.mxu0 %v765
        %5835 = vmatprep.subr.mxu0 %v774
        %5836 = vmatpush1.msra.mxu0 %v773
        %5837 = vmatprep.subr.mxu0 %v782
        %5838 = vmatpush1.msra.mxu0 %v781
        %5839 = vmatprep.subr.mxu0 %v790
        %5840 = vmatpush1.msra.mxu0 %v789
        %5841 = vmatprep.subr.mxu0 %v798
        %5842 = vmatpush1.msra.mxu0 %v797
        %5843 = vmatprep.subr.mxu0 %v806
        %5844 = vmatpush1.msra.mxu0 %v805
        %5845 = vmatprep.subr.mxu0 %v814
        %5846 = vmatpush1.msra.mxu0 %v813
        %5847 = vmatprep.subr.mxu0 %v822
        %5848 = vmatpush1.msra.mxu0 %v821
        %5849 = vmatprep.subr.mxu0 %v830
        %5850 = vmatpush1.msra.mxu0 %v829
        %5851 = vmatprep.subr.mxu0 %v838
        %5852 = vmatpush1.msra.mxu0 %v837
        %5853 = vmatprep.subr.mxu0 %v846
        %5854 = vmatpush1.msra.mxu0 %v845
        %5855 = vmatprep.subr.mxu0 %v854
        %5856 = vmatpush1.msra.mxu0 %v853
        %5857 = vmatprep.subr.mxu0 %v862
        %5858 = vmatpush1.msra.mxu0 %v861
        %5859 = vmatprep.subr.mxu0 %v870
        %5860 = vmatpush1.msra.mxu0 %v869
        %5861 = vmatprep.mubr.f32.mxu0 %v5790
        %5862 = vmatmul.mubr.f32.gmra.mrb[0].mxu0 0.0
        %v5863 = vpop.f32.mrb[0].mxu0
        %v5864 = vadd.f32 %v1150, %v5863
        %v5865 = vpop.f32.mrb[0].mxu0
        %v5866 = vadd.f32 %v1154, %v5865
        %5867 = vdwg.mxu0
        %5868 = vmatprep.subr.mxu0 %v878
        %5869 = vmatpush1.msra.mxu0 %v877
        %5870 = vmatprep.subr.mxu0 %v886
        %5871 = vmatpush1.msra.mxu0 %v885
        %5872 = vmatprep.subr.mxu0 %v894
        %5873 = vmatpush1.msra.mxu0 %v893
        %5874 = vmatprep.subr.mxu0 %v902
        %5875 = vmatpush1.msra.mxu0 %v901
        %5876 = vmatprep.subr.mxu0 %v910
        %5877 = vmatpush1.msra.mxu0 %v909
        %5878 = vmatprep.subr.mxu0 %v918
        %5879 = vmatpush1.msra.mxu0 %v917
        %5880 = vmatprep.subr.mxu0 %v926
        %5881 = vmatpush1.msra.mxu0 %v925
        %5882 = vmatprep.subr.mxu0 %v934
        %5883 = vmatpush1.msra.mxu0 %v933
        %5884 = vmatprep.subr.mxu0 %v942
        %5885 = vmatpush1.msra.mxu0 %v941
        %5886 = vmatprep.subr.mxu0 %v950
        %5887 = vmatpush1.msra.mxu0 %v949
        %5888 = vmatprep.subr.mxu0 %v958
        %5889 = vmatpush1.msra.mxu0 %v957
        %5890 = vmatprep.subr.mxu0 %v966
        %5891 = vmatpush1.msra.mxu0 %v965
        %5892 = vmatprep.subr.mxu0 %v974
        %5893 = vmatpush1.msra.mxu0 %v973
        %5894 = vmatprep.subr.mxu0 %v982
        %5895 = vmatpush1.msra.mxu0 %v981
        %5896 = vmatprep.subr.mxu0 %v990
        %5897 = vmatpush1.msra.mxu0 %v989
        %5898 = vmatprep.subr.mxu0 %v998
        %5899 = vmatpush1.msra.mxu0 %v997
        %5900 = vmatprep.subr.mxu0 %v1006
        %5901 = vmatpush1.msra.mxu0 %v1005
        %5902 = vmatprep.subr.mxu0 %v1014
        %5903 = vmatpush1.msra.mxu0 %v1013
        %5904 = vmatprep.subr.mxu0 %v1022
        %5905 = vmatpush1.msra.mxu0 %v1021
        %5906 = vmatprep.subr.mxu0 %v1030
        %5907 = vmatpush1.msra.mxu0 %v1029
        %5908 = vmatprep.subr.mxu0 %v1038
        %5909 = vmatpush1.msra.mxu0 %v1037
        %5910 = vmatprep.subr.mxu0 %v1046
        %5911 = vmatpush1.msra.mxu0 %v1045
        %5912 = vmatprep.subr.mxu0 %v1054
        %5913 = vmatpush1.msra.mxu0 %v1053
        %5914 = vmatprep.subr.mxu0 %v1062
        %5915 = vmatpush1.msra.mxu0 %v1061
        %5916 = vmatprep.subr.mxu0 %v1070
        %5917 = vmatpush1.msra.mxu0 %v1069
        %5918 = vmatprep.subr.mxu0 %v1078
        %5919 = vmatpush1.msra.mxu0 %v1077
        %5920 = vmatprep.subr.mxu0 %v1086
        %5921 = vmatpush1.msra.mxu0 %v1085
        %5922 = vmatprep.subr.mxu0 %v1094
        %5923 = vmatpush1.msra.mxu0 %v1093
        %5924 = vmatprep.subr.mxu0 %v1102
        %5925 = vmatpush1.msra.mxu0 %v1101
        %5926 = vmatprep.subr.mxu0 %v1110
        %5927 = vmatpush1.msra.mxu0 %v1109
        %5928 = vmatprep.subr.mxu0 %v1118
        %5929 = vmatpush1.msra.mxu0 %v1117
        %5930 = vmatprep.subr.mxu0 %v1126
        %5931 = vmatpush1.msra.mxu0 %v1125
        %5932 = vmatprep.mubr.f32.mxu0 %v5796
        %5933 = vmatmul.mubr.f32.gmra.mrb[0].mxu0 %v5790
        %v5934 = vpop.f32.mrb[0].mxu0
        %v5935 = vadd.f32 %v5864, %v5934
        %v5936 = vpop.f32.mrb[0].mxu0
        %v5937 = vadd.f32 %v5866, %v5936
        %5938 = vdwg.mxu0
        %5939 = vmatprep.subr.mxu0 %v624
        %5940 = vmatpush1.msra.mxu0 %v623
        %5941 = vmatprep.subr.mxu0 %v632
        %5942 = vmatpush1.msra.mxu0 %v631
        %5943 = vmatprep.subr.mxu0 %v640
        %5944 = vmatpush1.msra.mxu0 %v639
        %5945 = vmatprep.subr.mxu0 %v648
        %5946 = vmatpush1.msra.mxu0 %v647
        %5947 = vmatprep.subr.mxu0 %v656
        %5948 = vmatpush1.msra.mxu0 %v655
        %5949 = vmatprep.subr.mxu0 %v664
        %5950 = vmatpush1.msra.mxu0 %v663
        %5951 = vmatprep.subr.mxu0 %v672
        %5952 = vmatpush1.msra.mxu0 %v671
        %5953 = vmatprep.subr.mxu0 %v680
        %5954 = vmatpush1.msra.mxu0 %v679
        %5955 = vmatprep.subr.mxu0 %v688
        %5956 = vmatpush1.msra.mxu0 %v687
        %5957 = vmatprep.subr.mxu0 %v696
        %5958 = vmatpush1.msra.mxu0 %v695
        %5959 = vmatprep.subr.mxu0 %v704
        %5960 = vmatpush1.msra.mxu0 %v703
        %5961 = vmatprep.subr.mxu0 %v712
        %5962 = vmatpush1.msra.mxu0 %v711
        %5963 = vmatprep.subr.mxu0 %v720
        %5964 = vmatpush1.msra.mxu0 %v719
        %5965 = vmatprep.subr.mxu0 %v728
        %5966 = vmatpush1.msra.mxu0 %v727
        %5967 = vmatprep.subr.mxu0 %v736
        %5968 = vmatpush1.msra.mxu0 %v735
        %5969 = vmatprep.subr.mxu0 %v744
        %5970 = vmatpush1.msra.mxu0 %v743
        %5971 = vmatprep.subr.mxu0 %v752
        %5972 = vmatpush1.msra.mxu0 %v751
        %5973 = vmatprep.subr.mxu0 %v760
        %5974 = vmatpush1.msra.mxu0 %v759
        %5975 = vmatprep.subr.mxu0 %v768
        %5976 = vmatpush1.msra.mxu0 %v767
        %5977 = vmatprep.subr.mxu0 %v776
        %5978 = vmatpush1.msra.mxu0 %v775
        %5979 = vmatprep.subr.mxu0 %v784
        %5980 = vmatpush1.msra.mxu0 %v783
        %5981 = vmatprep.subr.mxu0 %v792
        %5982 = vmatpush1.msra.mxu0 %v791
        %5983 = vmatprep.subr.mxu0 %v800
        %5984 = vmatpush1.msra.mxu0 %v799
        %5985 = vmatprep.subr.mxu0 %v808
        %5986 = vmatpush1.msra.mxu0 %v807
        %5987 = vmatprep.subr.mxu0 %v816
        %5988 = vmatpush1.msra.mxu0 %v815
        %5989 = vmatprep.subr.mxu0 %v824
        %5990 = vmatpush1.msra.mxu0 %v823
        %5991 = vmatprep.subr.mxu0 %v832
        %5992 = vmatpush1.msra.mxu0 %v831
        %5993 = vmatprep.subr.mxu0 %v840
        %5994 = vmatpush1.msra.mxu0 %v839
        %5995 = vmatprep.subr.mxu0 %v848
        %5996 = vmatpush1.msra.mxu0 %v847
        %5997 = vmatprep.subr.mxu0 %v856
        %5998 = vmatpush1.msra.mxu0 %v855
        %5999 = vmatprep.subr.mxu0 %v864
        %6000 = vmatpush1.msra.mxu0 %v863
        %6001 = vmatprep.subr.mxu0 %v872
        %6002 = vmatpush1.msra.mxu0 %v871
        %6003 = vmatprep.mubr.f32.mxu0 %v5790
        %6004 = vmatmul.mubr.f32.gmra.mrb[0].mxu0 0.0
        %v6005 = vpop.f32.mrb[0].mxu0
        %v6006 = vadd.f32 %v1158, %v6005
        %v6007 = vpop.f32.mrb[0].mxu0
        %v6008 = vadd.f32 %v1162, %v6007
        %6009 = vdwg.mxu0
        %6010 = vmatprep.subr.mxu0 %v880
        %6011 = vmatpush1.msra.mxu0 %v879
        %6012 = vmatprep.subr.mxu0 %v888
        %6013 = vmatpush1.msra.mxu0 %v887
        %6014 = vmatprep.subr.mxu0 %v896
        %6015 = vmatpush1.msra.mxu0 %v895
        %6016 = vmatprep.subr.mxu0 %v904
        %6017 = vmatpush1.msra.mxu0 %v903
        %6018 = vmatprep.subr.mxu0 %v912
        %6019 = vmatpush1.msra.mxu0 %v911
        %6020 = vmatprep.subr.mxu0 %v920
        %6021 = vmatpush1.msra.mxu0 %v919
        %6022 = vmatprep.subr.mxu0 %v928
        %6023 = vmatpush1.msra.mxu0 %v927
        %6024 = vmatprep.subr.mxu0 %v936
        %6025 = vmatpush1.msra.mxu0 %v935
        %6026 = vmatprep.subr.mxu0 %v944
        %6027 = vmatpush1.msra.mxu0 %v943
        %6028 = vmatprep.subr.mxu0 %v952
        %6029 = vmatpush1.msra.mxu0 %v951
        %6030 = vmatprep.subr.mxu0 %v960
        %6031 = vmatpush1.msra.mxu0 %v959
        %6032 = vmatprep.subr.mxu0 %v968
        %6033 = vmatpush1.msra.mxu0 %v967
        %6034 = vmatprep.subr.mxu0 %v976
        %6035 = vmatpush1.msra.mxu0 %v975
        %6036 = vmatprep.subr.mxu0 %v984
        %6037 = vmatpush1.msra.mxu0 %v983
        %6038 = vmatprep.subr.mxu0 %v992
        %6039 = vmatpush1.msra.mxu0 %v991
        %6040 = vmatprep.subr.mxu0 %v1000
        %6041 = vmatpush1.msra.mxu0 %v999
        %6042 = vmatprep.subr.mxu0 %v1008
        %6043 = vmatpush1.msra.mxu0 %v1007
        %6044 = vmatprep.subr.mxu0 %v1016
        %6045 = vmatpush1.msra.mxu0 %v1015
        %6046 = vmatprep.subr.mxu0 %v1024
        %6047 = vmatpush1.msra.mxu0 %v1023
        %6048 = vmatprep.subr.mxu0 %v1032
        %6049 = vmatpush1.msra.mxu0 %v1031
        %6050 = vmatprep.subr.mxu0 %v1040
        %6051 = vmatpush1.msra.mxu0 %v1039
        %6052 = vmatprep.subr.mxu0 %v1048
        %6053 = vmatpush1.msra.mxu0 %v1047
        %6054 = vmatprep.subr.mxu0 %v1056
        %6055 = vmatpush1.msra.mxu0 %v1055
        %6056 = vmatprep.subr.mxu0 %v1064
        %6057 = vmatpush1.msra.mxu0 %v1063
        %6058 = vmatprep.subr.mxu0 %v1072
        %6059 = vmatpush1.msra.mxu0 %v1071
        %6060 = vmatprep.subr.mxu0 %v1080
        %6061 = vmatpush1.msra.mxu0 %v1079
        %6062 = vmatprep.subr.mxu0 %v1088
        %6063 = vmatpush1.msra.mxu0 %v1087
        %6064 = vmatprep.subr.mxu0 %v1096
        %6065 = vmatpush1.msra.mxu0 %v1095
        %6066 = vmatprep.subr.mxu0 %v1104
        %6067 = vmatpush1.msra.mxu0 %v1103
        %6068 = vmatprep.subr.mxu0 %v1112
        %6069 = vmatpush1.msra.mxu0 %v1111
        %6070 = vmatprep.subr.mxu0 %v1120
        %6071 = vmatpush1.msra.mxu0 %v1119
        %6072 = vmatprep.subr.mxu0 %v1128
        %6073 = vmatpush1.msra.mxu0 %v1127
        %6074 = vmatprep.mubr.f32.mxu0 %v5796
        %6075 = vmatmul.mubr.f32.gmra.mrb[0].mxu0 %v5790
        %v6076 = vpop.f32.mrb[0].mxu0
        %v6077 = vadd.f32 %v6006, %v6076
        %v6078 = vpop.f32.mrb[0].mxu0
        %v6079 = vadd.f32 %v6008, %v6078
        %6080 = vdwg.mxu0
        %v6081 = vxor.u32 %v5935, 2147483648
        %v6082 = vxor.u32 %v5937, 2147483648
        %v6083 = vxor.u32 %v6079, 2147483648
        %v6084 = vmul.f32 %v6081, 1.442695
        %v6085 = vpow.pop %v6084
        %v6086 = vmul.f32 %v6082, 1.442695
        %v6087 = vpow.pop %v6086
        %v6088 = vmul.f32 %v6083, 1.442695
        %v6089 = vpow.pop %v6088
        %v6090 = vadd.f32 %v6085, 1.0
        %v6091 = vadd.f32 %v6087, 1.0
        %v6092 = vadd.f32 %v6089, 1.0
        %v6093 = vrcp.pop %v6090
        %v6094 = vmul.f32 1.0, %v6093
        %v6095 = vrcp.pop %v6091
        %v6096 = vmul.f32 1.0, %v6095
        %v6097 = vrcp.pop %v6092
        %v6098 = vmul.f32 1.0, %v6097
        %v6099 = vtanh.pop %v6077
        %v6100 = vmul.f32 %v6096, %v5794
        %v6101 = vmul.f32 %v6094, %v6099
        %v6102 = vadd.f32 %v6100, %v6101
        %v6103 = vtanh.pop %v6102
        %v6104 = vmul.f32 %v6098, %v6103
        %v6105 = vld [vmem:[#allocation11] sm:$0xff]
        %v6106 = vld [vmem:[#allocation11 + $0x8] sm:$0xff]
        %v6107 = vld [vmem:[#allocation11 + $0x10] sm:$0xff]
        %v6108 = vld [vmem:[#allocation11 + $0x18] sm:$0xff]
        %v6109 = vld [vmem:[#allocation11 + $0x20] sm:$0xff]
        %v6110 = vld [vmem:[#allocation11 + $0x28] sm:$0xff]
        %v6111 = vld [vmem:[#allocation11 + $0x30] sm:$0xff]
        %v6112 = vld [vmem:[#allocation11 + $0x38] sm:$0xff]
        %v6113 = vld [vmem:[#allocation11 + $0x40] sm:$0xff]
        %v6114 = vld [vmem:[#allocation11 + $0x48] sm:$0xff]
        %v6115 = vld [vmem:[#allocation11 + $0x50] sm:$0xff]
        %v6116 = vld [vmem:[#allocation11 + $0x58] sm:$0xff]
        %v6117 = vld [vmem:[#allocation11 + $0x60] sm:$0xff]
        %v6118 = vld [vmem:[#allocation11 + $0x68] sm:$0xff]
        %v6119 = vld [vmem:[#allocation11 + $0x70] sm:$0xff]
        %v6120 = vld [vmem:[#allocation11 + $0x78] sm:$0xff]
        %v6121 = vld [vmem:[#allocation13] sm:$0x1]
        %v6123 = vlaneseq
        %v6124 = vshrl.u32 %v6123, 7
        %v6125 = vsub.s32 0, %v6124
        %v6126 = vrot.slane %v6121, %v6125
        %6128 = vmatprep.subr.mxu0 0.0
        %6129 = vmatpush1.msra.mxu0 %v6105
        %6130 = vmatprep.subr.mxu0 0.0
        %6131 = vmatpush1.msra.mxu0 %v6106
        %6132 = vmatprep.subr.mxu0 0.0
        %6133 = vmatpush1.msra.mxu0 %v6107
        %6134 = vmatprep.subr.mxu0 0.0
        %6135 = vmatpush1.msra.mxu0 %v6108
        %6136 = vmatprep.subr.mxu0 0.0
        %6137 = vmatpush1.msra.mxu0 %v6109
        %6138 = vmatprep.subr.mxu0 0.0
        %6139 = vmatpush1.msra.mxu0 %v6110
        %6140 = vmatprep.subr.mxu0 0.0
        %6141 = vmatpush1.msra.mxu0 %v6111
        %6142 = vmatprep.subr.mxu0 0.0
        %6143 = vmatpush1.msra.mxu0 %v6112
        %6144 = vmatprep.subr.mxu0 0.0
        %6145 = vmatpush1.msra.mxu0 %v6113
        %6146 = vmatprep.subr.mxu0 0.0
        %6147 = vmatpush1.msra.mxu0 %v6114
        %6148 = vmatprep.subr.mxu0 0.0
        %6149 = vmatpush1.msra.mxu0 %v6115
        %6150 = vmatprep.subr.mxu0 0.0
        %6151 = vmatpush1.msra.mxu0 %v6116
        %6152 = vmatprep.subr.mxu0 0.0
        %6153 = vmatpush1.msra.mxu0 %v6117
        %6154 = vmatprep.subr.mxu0 0.0
        %6155 = vmatpush1.msra.mxu0 %v6118
        %6156 = vmatprep.subr.mxu0 0.0
        %6157 = vmatpush1.msra.mxu0 %v6119
        %6158 = vmatprep.subr.mxu0 0.0
        %6159 = vmatpush1.msra.mxu0 %v6120
        %6160 = vmatprep.subr.mxu0 0.0
        %6161 = vmatpush1.msra.mxu0 0.0
        %6162 = vmatprep.subr.mxu0 0.0
        %6163 = vmatpush1.msra.mxu0 0.0
        %6164 = vmatprep.subr.mxu0 0.0
        %6165 = vmatpush1.msra.mxu0 0.0
        %6166 = vmatprep.subr.mxu0 0.0
        %6167 = vmatpush1.msra.mxu0 0.0
        %6168 = vmatprep.subr.mxu0 0.0
        %6169 = vmatpush1.msra.mxu0 0.0
        %6170 = vmatprep.subr.mxu0 0.0
        %6171 = vmatpush1.msra.mxu0 0.0
        %6172 = vmatprep.subr.mxu0 0.0
        %6173 = vmatpush1.msra.mxu0 0.0
        %6174 = vmatprep.subr.mxu0 0.0
        %6175 = vmatpush1.msra.mxu0 0.0
        %6176 = vmatprep.subr.mxu0 0.0
        %6177 = vmatpush1.msra.mxu0 0.0
        %6178 = vmatprep.subr.mxu0 0.0
        %6179 = vmatpush1.msra.mxu0 0.0
        %6180 = vmatprep.subr.mxu0 0.0
        %6181 = vmatpush1.msra.mxu0 0.0
        %6182 = vmatprep.subr.mxu0 0.0
        %6183 = vmatpush1.msra.mxu0 0.0
        %6184 = vmatprep.subr.mxu0 0.0
        %6185 = vmatpush1.msra.mxu0 0.0
        %6186 = vmatprep.subr.mxu0 0.0
        %6187 = vmatpush1.msra.mxu0 0.0
        %6188 = vmatprep.subr.mxu0 0.0
        %6189 = vmatpush1.msra.mxu0 0.0
        %6190 = vmatprep.subr.mxu0 0.0
        %6191 = vmatpush1.msra.mxu0 0.0
        %6192 = vmatprep.mubr.f32.mxu0 0.0
        %6193 = vmatmul.mubr.f32.gmra.mrb[0].mxu0 %v6104
        %v6194 = vpop.f32.mrb[0].mxu0
        %v6195 = vadd.f32 %v6126, %v6194
        %v6196 = vpop.f32.mrb[0].mxu0
        %6197 = vdwg.mxu0
        %6198 = vmax.xlane.f32.xlu0 %v6195
        %v6199 = vpop.xlane.xlu0 %6198
        %v6200 = vsub.f32 %v6195, %v6199
        %v6201 = vmul.f32 %v6200, 1.442695
        %v6202 = vpow.pop %v6201
        %6203 = vadd.xlane.f32.xlu0 %v6202
        %v6204 = vpop.xlane.xlu0 %6203
        %v6205 = vlog2.pop %v6204
        %v6206 = vmul.f32 %v6205, 0.6931472
        %v6207 = vadd.f32 %v6206, %v6199
        %v6208 = vsub.f32 %v6195, %v6207
        %6209 = vst [vmem:[%s440] sm:$0xff] %v6208
        %s6210 = sand.u32 %s219, 1
        %s6211 = scalar_lea.sflag [#allocation4], %s6210
        %s6212 = sand.u32 %s219, 1
        %s6213 = smul.addr %s6212, 8
        %s6214 = scalar_lea.vmem [#allocation14], %s6213
        // Predicated region
        $region81: #{tpu_custom_call.1} parent=51 // pred_check
          %p6215 = pneg %p229
        $region82: #{tpu_custom_call.1} parent=51 // pred_check_branch
          %6217 = sbr.rel (%p6215) target = $region84
        $region83: #{tpu_custom_call.1} parent=51 // pred_region
          %s6219 = ssub.s32 128, 128
          %6220 = vsyncadd %s6211, %s6219
          %s6221 = smul.addr %s28, 128
          %s6222 = scalar_lea.hbm %s8, %s6221
          %s6224 = sshll.u32 %s6214, 4
          %s6225 = int_to_ptr.vmem [resolvable:$true] %s6224
          %6227 = dma.vmem_to_hbm [thread:$0]  %s6225, 128, %s6222, %s6211
        $region84: #{tpu_custom_call.1} parent=51 // pred_fallthru
          _
      $region52: #{tpu_custom_call.1} parent=5 // pred_fallthru
        _
      %p6228 = scmp.le.s32.totalorder 2, %s23
      // Predicated region
      $region85: #{tpu_custom_call.1} parent=5 // pred_check
        %p6229 = pneg %p6228
      $region86: #{tpu_custom_call.1} parent=5 // pred_check_branch
        %6231 = sbr.rel (%p6229) target = $region88
      $region87: #{tpu_custom_call.1} parent=5 // pred_region
        %s6232 = ssub.s32 %s23, 2
        // Predicated region
        $region89: #{tpu_custom_call.1} parent=87 // pred_check
          %p6233 = pneg %p235
        $region90: #{tpu_custom_call.1} parent=87 // pred_check_branch
          %6235 = sbr.rel (%p6233) target = $region92
        $region91: #{tpu_custom_call.1} parent=87 // pred_region
          %s6236 = sand.u32 %s220, 1
          %s6237 = scalar_lea.sflag [#allocation4], %s6236
          %s6238 = sand.u32 %s220, 1
          %s6239 = smul.addr %s6238, 8
          %s6240 = scalar_lea.vmem [#allocation14], %s6239
          %6241 = dma.done %s6237, 128
        $region92: #{tpu_custom_call.1} parent=87 // pred_fallthru
          _
      $region88: #{tpu_custom_call.1} parent=5 // pred_fallthru
        _
    $region6: #{tpu_custom_call.1} parent=1 // loop_footer
      %s27 = sadd.s32 1, %s23
    $region7: #{tpu_custom_call.1} parent=1 // loop_footer_branch
      %22 = sbr.rel target = $region3
    $region8: #{tpu_custom_call.1} parent=1 // loop_exit
      _
    %6242 = vsyncpa [#allocation3], 1
    %s6243 = scalar_lea.sflag [#allocation3], 1
    %6244 = vsyncpa %s6243, 1
    %6245 = vsyncpa [#allocation6], 1
    %6246 = vsyncpa [#allocation9], 1
    %s6247 = scalar_lea.sflag [#allocation9], 1
    %6248 = vsyncpa %s6247, 1
    %6249 = vsyncpa [#allocation12], 1
    %6250 = vsyncpa [#allocation4], 1
    %s6251 = scalar_lea.sflag [#allocation4], 1
    %6252 = vsyncpa %s6251, 1

</llo_original>
